<compile_context>
chip_gen: v5e
topology: v5e:2x2
jax: 0.10.0
libtpu: 0.0.40
codegen_flags: <defaults>
</compile_context>

<pallas_src>
import functools

import jax
import jax.numpy as jnp
from jax import lax
from jax.experimental import pallas as pl
from jax.experimental.pallas import tpu as pltpu


def _rte_attention_kernel(y_ref, bias_ref, h_ref, wy_ref, wh_ref, wa_ref,
                          wp_ref, wx_ref, hstar_ref, alpha_ref, *, t_chunk):
    T, Bb, D = y_ref.shape
    tc = t_chunk
    nchunks = T // tc
    unroll = nchunks <= 8

    h = h_ref[...]                        # (Bb, D)   (bf16 or f32)
    wa = wa_ref[...]                      # (1, D)    f32

    # h @ W_h once per batch tile (small matmul, f32 accumulation).
    wh = jnp.dot(h, wh_ref[...], preferred_element_type=jnp.float32)   # (Bb, D) f32

    # ---- Phase 1: raw attention logits, T-chunk at a time -----------------------
    # The (tc, Bb, D) tanh intermediate never exists at full (T, Bb, D) size.
    # Raw logits are staged in the alpha output block (resident VMEM) -> no scratch.
    def logits_chunk(c, carry):
        t0 = pl.multiple_of(c * tc, tc)
        yc = y_ref[pl.ds(t0, tc)]                                       # (tc, Bb, D)
        m = jnp.tanh(
            jnp.dot(yc.reshape(tc * Bb, D), wy_ref[...],
                    preferred_element_type=jnp.float32).reshape(tc, Bb, D)
            + wh[None, :, :])
        alpha_ref[pl.ds(t0, tc), :] = (
            jnp.sum(m * wa[None, :, :], axis=-1) + bias_ref[pl.ds(t0, tc), :])
        return carry

    lax.fori_loop(0, nchunks, logits_chunk, 0, unroll=unroll)

    # ---- Phase 2: softmax over T (sublane axis), EUP approx reciprocal ----------
    logits = alpha_ref[...]                                             # (T, Bb) f32
    logits = logits - jnp.max(logits, axis=0, keepdims=True)
    e = jnp.exp(logits)
    alpha = e * pl.reciprocal(jnp.sum(e, axis=0, keepdims=True), approx=True)
    alpha_ref[...] = alpha

    # ---- Phase 3: r = sum_t alpha[t, b] * y[t, b, :], chunk-accumulated on VPU --
    def r_chunk(c, r_acc):
        t0 = pl.multiple_of(c * tc, tc)
        yc = y_ref[pl.ds(t0, tc)].astype(jnp.float32)
        ac = alpha_ref[pl.ds(t0, tc), :]
        return r_acc + jnp.sum(ac[:, :, None] * yc, axis=0)

    r = lax.fori_loop(0, nchunks, r_chunk,
                      jnp.zeros((Bb, D), jnp.float32), unroll=unroll)

    # ---- combine_last: tanh(r @ W_p + h @ W_x), two small un-fused matmuls ------
    hstar = jnp.tanh(
        jnp.dot(r.astype(wp_ref.dtype), wp_ref[...],
                preferred_element_type=jnp.float32)
        + jnp.dot(h, wx_ref[...], preferred_element_type=jnp.float32))
    hstar_ref[...] = hstar.astype(hstar_ref.dtype)


def rte_attention_forward(y, mask_y, h, params, *, use_bf16=True):
    """y: (T, B, D), mask_y: (T, B), h: (B, D) -> (h_star: (B, D), alpha: (B, T)).

    use_bf16=True (default) casts matmul operands to bf16 with f32 accumulation;
    W_alpha, the mask bias and the softmax stay f32.
    """
    T, B, D = y.shape
    bb = 128                                  # lane-dense alpha/bias tiles; >=2 grid steps for B >= 256
    Bp = -(-B // bb) * bb
    tc = 8 if T % 8 == 0 else T               # in-kernel sequence chunk (must divide T)

    y = y.astype(jnp.float32)
    h = h.astype(jnp.float32)
    mask_y = mask_y.astype(jnp.float32)
    if Bp != B:
        pad = Bp - B
        y = jnp.pad(y, ((0, 0), (0, pad), (0, 0)))
        mask_y = jnp.pad(mask_y, ((0, 0), (0, pad)))   # padded columns fully masked
        h = jnp.pad(h, ((0, pad), (0, 0)))

    bias = (-1000.0) * (1.0 - mask_y)                                      # (T, Bp) f32
    wa_row = jnp.transpose(params['W_alpha'], (1, 0)).astype(jnp.float32)  # (1, D)  f32
    w_y, w_h = params['W_y'], params['W_h']
    w_p, w_x = params['W_p'], params['W_x']

    if use_bf16:
        y_in, h_in = y.astype(jnp.bfloat16), h.astype(jnp.bfloat16)
        w_y, w_h = w_y.astype(jnp.bfloat16), w_h.astype(jnp.bfloat16)
        w_p, w_x = w_p.astype(jnp.bfloat16), w_x.astype(jnp.bfloat16)
    else:
        y_in, h_in = y, h
        w_y, w_h = w_y.astype(jnp.float32), w_h.astype(jnp.float32)
        w_p, w_x = w_p.astype(jnp.float32), w_x.astype(jnp.float32)

    in_specs = [
        pl.BlockSpec((T, bb, D), lambda b: (0, b, 0)),     # y
        pl.BlockSpec((T, bb), lambda b: (0, b)),           # additive mask bias (f32)
        pl.BlockSpec((bb, D), lambda b: (b, 0)),           # h
        pl.BlockSpec((D, D), lambda b: (0, 0)),            # W_y  (constant block -> resident)
        pl.BlockSpec((D, D), lambda b: (0, 0)),            # W_h
        pl.BlockSpec((1, D), lambda b: (0, 0)),            # W_alpha^T (f32)
        pl.BlockSpec((D, D), lambda b: (0, 0)),            # W_p
        pl.BlockSpec((D, D), lambda b: (0, 0)),            # W_x
    ]
    out_specs = (
        pl.BlockSpec((bb, D), lambda b: (b, 0)),           # h_star (Bp, D)
        pl.BlockSpec((T, bb), lambda b: (0, b)),           # alpha  (T, Bp)
    )
    out_shape = (jax.ShapeDtypeStruct((Bp, D), jnp.float32),
                 jax.ShapeDtypeStruct((T, Bp), jnp.float32))

    itemsize = 2 if use_bf16 else 4
    cost = pl.CostEstimate(
        flops=2 * T * Bp * D * D + 3 * 2 * Bp * D * D + 4 * T * Bp * D,
        transcendentals=T * Bp * D + Bp * D + 2 * T * Bp,
        bytes_accessed=itemsize * (T * Bp * D + Bp * D + 4 * D * D)
                       + 4 * (2 * T * Bp + D + Bp * D),
    )

    h_star, alpha_tb = pl.pallas_call(
        functools.partial(_rte_attention_kernel, t_chunk=tc),
        out_shape=out_shape,
        grid=(Bp // bb,),
        in_specs=in_specs,
        out_specs=out_specs,
        cost_estimate=cost,
        compiler_params=pltpu.CompilerParams(
            dimension_semantics=("parallel",)),
    )(y_in, bias, h_in, w_y, w_h, wa_row, w_p, w_x)

    # Slice off batch padding; only the tiny (T, B) alpha is transposed back.
    return h_star[:B], jnp.transpose(alpha_tb[:, :B], (1, 0))


def rte_attention_reference(y, mask_y, h, params):
    """Pure-JAX mirror of the PyTorch forward (batch-first), exact f32."""
    yb = jnp.transpose(y, (1, 0, 2))
    mb = jnp.transpose(mask_y, (1, 0))
    Wy = jnp.einsum('btd,de->bte', yb, params['W_y'], precision='highest')
    Wh = jnp.dot(h, params['W_h'], precision='highest')
    M = jnp.tanh(Wy + Wh[:, None, :])
    logits = jnp.einsum('btd,dk->btk', M, params['W_alpha'],
                        precision='highest')[..., 0]
    logits = logits + (-1000.0) * (1.0 - mb)
    alpha = jax.nn.softmax(logits, axis=1)
    r = jnp.einsum('bt,btd->bd', alpha, yb, precision='highest')
    h_star = jnp.tanh(jnp.dot(r, params['W_p'], precision='highest')
                      + jnp.dot(h, params['W_x'], precision='highest'))
    return h_star, alpha


if __name__ == "__main__":
    T, B, D = 16, 8, 128        # T=16 exercises the 2-chunk in-kernel sequence loop
    key = jax.random.PRNGKey(0)
    ks = jax.random.split(key, 8)

    # Weights scaled by 1/sqrt(D) so the tanh/softmax stay in a numerically
    # meaningful regime for the comparison (forward semantics are init-independent;
    # the module itself uses torch.randn).  W_r exists in the module but is unused
    # in forward; kept only for shape fidelity.
    scale = D ** -0.5
    params = {
        'W_y': scale * jax.random.normal(ks[0], (D, D), jnp.float32),
        'W_h': scale * jax.random.normal(ks[1], (D, D), jnp.float32),
        'W_r': scale * jax.random.normal(ks[2], (D, D), jnp.float32),   # unused in forward
        'W_alpha': scale * jax.random.normal(ks[3], (D, 1), jnp.float32),
        'W_x': scale * jax.random.normal(ks[4], (D, D), jnp.float32),
        'W_p': scale * jax.random.normal(ks[5], (D, D), jnp.float32),
    }

    y = jax.random.normal(ks[6], (T, B, D), jnp.float32)        # T x batch x dim
    h = jax.random.normal(ks[7], (B, D), jnp.float32)           # batch x dim
    lengths = jnp.array([16, 11, 3, 9, 16, 2, 13, 7], dtype=jnp.int32)
    mask_y = (jnp.arange(T)[:, None] < lengths[None, :]).astype(jnp.float32)

    h_ref, a_ref = rte_attention_reference(y, mask_y, h, params)

    # Exact-f32 operand path: tight check against the highest-precision reference.
    h_star, alpha = jax.block_until_ready(
        rte_attention_forward(y, mask_y, h, params, use_bf16=False))
    assert h_star.shape == (B, D) and alpha.shape == (B, T)
    assert bool(jnp.allclose(h_star, h_ref, atol=2e-2, rtol=2e-2))
    assert bool(jnp.allclose(alpha, a_ref, atol=2e-2, rtol=2e-2))

    # Default bf16-operand path (f32 accumulation): loose sanity check only.
    h_bf, a_bf = jax.block_until_ready(rte_attention_forward(y, mask_y, h, params))
    assert h_bf.shape == (B, D) and a_bf.shape == (B, T)
    assert bool(jnp.allclose(h_bf, h_ref, atol=1e-1, rtol=1e-1))
    assert bool(jnp.allclose(a_bf, a_ref, atol=1e-1, rtol=1e-1))

    print("KERNEL_OK")
</pallas_src>

<mosaic_0001>
module attributes {stable_mosaic.version = 11 : i64} {
  func.func @_rte_attention_kernel(%arg0: i32, %arg1: memref<16x128x128xf32, #tpu.memory_space<vmem>>, %arg2: memref<16x128xf32, #tpu.memory_space<vmem>>, %arg3: memref<128x128xf32, #tpu.memory_space<vmem>>, %arg4: memref<128x128xf32, #tpu.memory_space<vmem>>, %arg5: memref<128x128xf32, #tpu.memory_space<vmem>>, %arg6: memref<1x128xf32, #tpu.memory_space<vmem>>, %arg7: memref<128x128xf32, #tpu.memory_space<vmem>>, %arg8: memref<128x128xf32, #tpu.memory_space<vmem>>, %arg9: memref<128x128xf32, #tpu.memory_space<vmem>>, %arg10: memref<16x128xf32, #tpu.memory_space<vmem>>) attributes {dimension_semantics = [#tpu.dimension_semantics<parallel>], iteration_bounds = array<i64: 1>, scalar_prefetch = 0 : i64, scratch_operands = 0 : i64, tpu.core_type = #tpu.core_type<tc>, window_params = [{transform_indices = @transform_0, window_bounds = array<i64: 16, 128, 128>}, {transform_indices = @transform_1, window_bounds = array<i64: 16, 128>}, {transform_indices = @transform_2, window_bounds = array<i64: 128, 128>}, {pipeline_mode = #tpu.pipeline_mode<synchronous>, transform_indices = @transform_3, window_bounds = array<i64: 128, 128>}, {pipeline_mode = #tpu.pipeline_mode<synchronous>, transform_indices = @transform_4, window_bounds = array<i64: 128, 128>}, {pipeline_mode = #tpu.pipeline_mode<synchronous>, transform_indices = @transform_5, window_bounds = array<i64: 1, 128>}, {pipeline_mode = #tpu.pipeline_mode<synchronous>, transform_indices = @transform_6, window_bounds = array<i64: 128, 128>}, {pipeline_mode = #tpu.pipeline_mode<synchronous>, transform_indices = @transform_7, window_bounds = array<i64: 128, 128>}, {transform_indices = @transform_8, window_bounds = array<i64: 128, 128>}, {transform_indices = @transform_9, window_bounds = array<i64: 16, 128>}]} {
    %c0 = arith.constant 0 : index
    %c0_0 = arith.constant 0 : index
    %0 = vector.load %arg3[%c0, %c0_0] : memref<128x128xf32, #tpu.memory_space<vmem>>, vector<128x128xf32>
    %c0_1 = arith.constant 0 : index
    %c0_2 = arith.constant 0 : index
    %1 = vector.load %arg6[%c0_1, %c0_2] : memref<1x128xf32, #tpu.memory_space<vmem>>, vector<1x128xf32>
    %c0_3 = arith.constant 0 : index
    %c0_4 = arith.constant 0 : index
    %2 = vector.load %arg5[%c0_3, %c0_4] : memref<128x128xf32, #tpu.memory_space<vmem>>, vector<128x128xf32>
    %cst = arith.constant dense<0.000000e+00> : vector<128x128xf32>
    %3 = tpu.matmul %0, %2, %cst {dimension_numbers = #tpu.dot_dimension_numbers<[1], [0], [0], [1], [0, 0, 1, 1], [], []>} : vector<128x128xf32>, vector<128x128xf32>, vector<128x128xf32> -> vector<128x128xf32>
    %c0_i32 = arith.constant 0 : i32
    %c8_i32 = arith.constant 8 : i32
    %4 = arith.muli %c0_i32, %c8_i32 : i32
    %5 = tpu.assume_multiple %4, 8 : i32
    %6 = arith.index_cast %5 : i32 to index
    %c0_5 = arith.constant 0 : index
    %c0_6 = arith.constant 0 : index
    %7 = vector.load %arg1[%6, %c0_5, %c0_6] : memref<16x128x128xf32, #tpu.memory_space<vmem>>, vector<8x128x128xf32>
    %8 = vector.shape_cast %7 : vector<8x128x128xf32> to vector<1024x128xf32>
    %c0_7 = arith.constant 0 : index
    %c0_8 = arith.constant 0 : index
    %9 = vector.load %arg4[%c0_7, %c0_8] : memref<128x128xf32, #tpu.memory_space<vmem>>, vector<128x128xf32>
    %cst_9 = arith.constant dense<0.000000e+00> : vector<1024x128xf32>
    %10 = tpu.matmul %8, %9, %cst_9 {dimension_numbers = #tpu.dot_dimension_numbers<[1], [0], [0], [1], [0, 0, 1, 1], [], []>} : vector<1024x128xf32>, vector<128x128xf32>, vector<1024x128xf32> -> vector<1024x128xf32>
    %11 = vector.shape_cast %10 : vector<1024x128xf32> to vector<8x128x128xf32>
    %12 = vector.shape_cast %3 : vector<128x128xf32> to vector<1x128x128xf32>
    %13 = vector.broadcast %12 : vector<1x128x128xf32> to vector<8x128x128xf32>
    %14 = arith.addf %11, %13 : vector<8x128x128xf32>
    %15 = math.tanh %14 : vector<8x128x128xf32>
    %16 = vector.shape_cast %1 : vector<1x128xf32> to vector<1x1x128xf32>
    %17 = vector.broadcast %16 : vector<1x1x128xf32> to vector<8x128x128xf32>
    %18 = arith.mulf %15, %17 : vector<8x128x128xf32>
    %cst_10 = arith.constant dense<0.000000e+00> : vector<8x128xf32>
    %19 = vector.multi_reduction <add>, %18, %cst_10 [2] : vector<8x128x128xf32> to vector<8x128xf32>
    %20 = arith.index_cast %5 : i32 to index
    %c0_11 = arith.constant 0 : index
    %21 = vector.load %arg2[%20, %c0_11] : memref<16x128xf32, #tpu.memory_space<vmem>>, vector<8x128xf32>
    %22 = arith.addf %19, %21 : vector<8x128xf32>
    %23 = arith.index_cast %5 : i32 to index
    %c0_12 = arith.constant 0 : index
    %24 = vector.load %arg10[%23, %c0_12] : memref<16x128xf32, #tpu.memory_space<vmem>>, vector<8x128xf32>
    tpu.vector_store %arg10[%23, %c0_12], %22 {strides = array<i32>} : memref<16x128xf32, #tpu.memory_space<vmem>>, vector<8x128xf32>,
    %c1_i32 = arith.constant 1 : i32
    %c8_i32_13 = arith.constant 8 : i32
    %25 = arith.muli %c1_i32, %c8_i32_13 : i32
    %26 = tpu.assume_multiple %25, 8 : i32
    %27 = arith.index_cast %26 : i32 to index
    %c0_14 = arith.constant 0 : index
    %c0_15 = arith.constant 0 : index
    %28 = vector.load %arg1[%27, %c0_14, %c0_15] : memref<16x128x128xf32, #tpu.memory_space<vmem>>, vector<8x128x128xf32>
    %29 = vector.shape_cast %28 : vector<8x128x128xf32> to vector<1024x128xf32>
    %c0_16 = arith.constant 0 : index
    %c0_17 = arith.constant 0 : index
    %30 = vector.load %arg4[%c0_16, %c0_17] : memref<128x128xf32, #tpu.memory_space<vmem>>, vector<128x128xf32>
    %cst_18 = arith.constant dense<0.000000e+00> : vector<1024x128xf32>
    %31 = tpu.matmul %29, %30, %cst_18 {dimension_numbers = #tpu.dot_dimension_numbers<[1], [0], [0], [1], [0, 0, 1, 1], [], []>} : vector<1024x128xf32>, vector<128x128xf32>, vector<1024x128xf32> -> vector<1024x128xf32>
    %32 = vector.shape_cast %31 : vector<1024x128xf32> to vector<8x128x128xf32>
    %33 = vector.shape_cast %3 : vector<128x128xf32> to vector<1x128x128xf32>
    %34 = vector.broadcast %33 : vector<1x128x128xf32> to vector<8x128x128xf32>
    %35 = arith.addf %32, %34 : vector<8x128x128xf32>
    %36 = math.tanh %35 : vector<8x128x128xf32>
    %37 = vector.shape_cast %1 : vector<1x128xf32> to vector<1x1x128xf32>
    %38 = vector.broadcast %37 : vector<1x1x128xf32> to vector<8x128x128xf32>
    %39 = arith.mulf %36, %38 : vector<8x128x128xf32>
    %cst_19 = arith.constant dense<0.000000e+00> : vector<8x128xf32>
    %40 = vector.multi_reduction <add>, %39, %cst_19 [2] : vector<8x128x128xf32> to vector<8x128xf32>
    %41 = arith.index_cast %26 : i32 to index
    %c0_20 = arith.constant 0 : index
    %42 = vector.load %arg2[%41, %c0_20] : memref<16x128xf32, #tpu.memory_space<vmem>>, vector<8x128xf32>
    %43 = arith.addf %40, %42 : vector<8x128xf32>
    %44 = arith.index_cast %26 : i32 to index
    %c0_21 = arith.constant 0 : index
    %45 = vector.load %arg10[%44, %c0_21] : memref<16x128xf32, #tpu.memory_space<vmem>>, vector<8x128xf32>
    tpu.vector_store %arg10[%44, %c0_21], %43 {strides = array<i32>} : memref<16x128xf32, #tpu.memory_space<vmem>>, vector<8x128xf32>,
    %c2_i32 = arith.constant 2 : i32
    %c0_22 = arith.constant 0 : index
    %c0_23 = arith.constant 0 : index
    %46 = vector.load %arg10[%c0_22, %c0_23] : memref<16x128xf32, #tpu.memory_space<vmem>>, vector<16x128xf32>
    %cst_24 = arith.constant dense<0xFF800000> : vector<128xf32>
    %47 = vector.multi_reduction <maximumf>, %46, %cst_24 [0] : vector<16x128xf32> to vector<128xf32>
    %48 = vector.shape_cast %47 : vector<128xf32> to vector<1x128xf32>
    %49 = vector.broadcast %48 : vector<1x128xf32> to vector<16x128xf32>
    %50 = arith.subf %46, %49 : vector<16x128xf32>
    %51 = math.exp %50 : vector<16x128xf32>
    %cst_25 = arith.constant dense<0.000000e+00> : vector<128xf32>
    %52 = vector.multi_reduction <add>, %51, %cst_25 [0] : vector<16x128xf32> to vector<128xf32>
    %53 = vector.shape_cast %52 : vector<128xf32> to vector<1x128xf32>
    %54 = tpu.reciprocal %53 {approx = true} : vector<1x128xf32> -> vector<1x128xf32>
    %55 = vector.broadcast %54 : vector<1x128xf32> to vector<16x128xf32>
    %56 = arith.mulf %51, %55 : vector<16x128xf32>
    %c0_26 = arith.constant 0 : index
    %c0_27 = arith.constant 0 : index
    %57 = vector.load %arg10[%c0_26, %c0_27] : memref<16x128xf32, #tpu.memory_space<vmem>>, vector<16x128xf32>
    tpu.vector_store %arg10[%c0_26, %c0_27], %56 {strides = array<i32>} : memref<16x128xf32, #tpu.memory_space<vmem>>, vector<16x128xf32>,
    %cst_28 = arith.constant 0.000000e+00 : f32
    %58 = vector.broadcast %cst_28 : f32 to vector<128x128xf32>
    %c0_i32_29 = arith.constant 0 : i32
    %c8_i32_30 = arith.constant 8 : i32
    %59 = arith.muli %c0_i32_29, %c8_i32_30 : i32
    %60 = tpu.assume_multiple %59, 8 : i32
    %61 = arith.index_cast %60 : i32 to index
    %c0_31 = arith.constant 0 : index
    %c0_32 = arith.constant 0 : index
    %62 = vector.load %arg1[%61, %c0_31, %c0_32] : memref<16x128x128xf32, #tpu.memory_space<vmem>>, vector<8x128x128xf32>
    %63 = arith.index_cast %60 : i32 to index
    %c0_33 = arith.constant 0 : index
    %64 = vector.load %arg10[%63, %c0_33] : memref<16x128xf32, #tpu.memory_space<vmem>>, vector<8x128xf32>
    %65 = vector.shape_cast %64 : vector<8x128xf32> to vector<8x128x1xf32>
    %66 = vector.broadcast %65 : vector<8x128x1xf32> to vector<8x128x128xf32>
    %67 = arith.mulf %66, %62 : vector<8x128x128xf32>
    %cst_34 = arith.constant dense<0.000000e+00> : vector<128x128xf32>
    %68 = vector.multi_reduction <add>, %67, %cst_34 [0] : vector<8x128x128xf32> to vector<128x128xf32>
    %69 = arith.addf %58, %68 : vector<128x128xf32>
    %c1_i32_35 = arith.constant 1 : i32
    %c8_i32_36 = arith.constant 8 : i32
    %70 = arith.muli %c1_i32_35, %c8_i32_36 : i32
    %71 = tpu.assume_multiple %70, 8 : i32
    %72 = arith.index_cast %71 : i32 to index
    %c0_37 = arith.constant 0 : index
    %c0_38 = arith.constant 0 : index
    %73 = vector.load %arg1[%72, %c0_37, %c0_38] : memref<16x128x128xf32, #tpu.memory_space<vmem>>, vector<8x128x128xf32>
    %74 = arith.index_cast %71 : i32 to index
    %c0_39 = arith.constant 0 : index
    %75 = vector.load %arg10[%74, %c0_39] : memref<16x128xf32, #tpu.memory_space<vmem>>, vector<8x128xf32>
    %76 = vector.shape_cast %75 : vector<8x128xf32> to vector<8x128x1xf32>
    %77 = vector.broadcast %76 : vector<8x128x1xf32> to vector<8x128x128xf32>
    %78 = arith.mulf %77, %73 : vector<8x128x128xf32>
    %cst_40 = arith.constant dense<0.000000e+00> : vector<128x128xf32>
    %79 = vector.multi_reduction <add>, %78, %cst_40 [0] : vector<8x128x128xf32> to vector<128x128xf32>
    %80 = arith.addf %69, %79 : vector<128x128xf32>
    %c2_i32_41 = arith.constant 2 : i32
    %c0_42 = arith.constant 0 : index
    %c0_43 = arith.constant 0 : index
    %81 = vector.load %arg7[%c0_42, %c0_43] : memref<128x128xf32, #tpu.memory_space<vmem>>, vector<128x128xf32>
    %cst_44 = arith.constant dense<0.000000e+00> : vector<128x128xf32>
    %82 = tpu.matmul %80, %81, %cst_44 {dimension_numbers = #tpu.dot_dimension_numbers<[1], [0], [0], [1], [0, 0, 1, 1], [], []>} : vector<128x128xf32>, vector<128x128xf32>, vector<128x128xf32> -> vector<128x128xf32>
    %c0_45 = arith.constant 0 : index
    %c0_46 = arith.constant 0 : index
    %83 = vector.load %arg8[%c0_45, %c0_46] : memref<128x128xf32, #tpu.memory_space<vmem>>, vector<128x128xf32>
    %cst_47 = arith.constant dense<0.000000e+00> : vector<128x128xf32>
    %84 = tpu.matmul %0, %83, %cst_47 {dimension_numbers = #tpu.dot_dimension_numbers<[1], [0], [0], [1], [0, 0, 1, 1], [], []>} : vector<128x128xf32>, vector<128x128xf32>, vector<128x128xf32> -> vector<128x128xf32>
    %85 = arith.addf %82, %84 : vector<128x128xf32>
    %86 = math.tanh %85 : vector<128x128xf32>
    %c0_48 = arith.constant 0 : index
    %c0_49 = arith.constant 0 : index
    %87 = vector.load %arg9[%c0_48, %c0_49] : memref<128x128xf32, #tpu.memory_space<vmem>>, vector<128x128xf32>
    tpu.vector_store %arg9[%c0_48, %c0_49], %86 {strides = array<i32>} : memref<128x128xf32, #tpu.memory_space<vmem>>, vector<128x128xf32>,
    return
  }
  func.func @transform_0(%arg0: i32) -> (i32, i32, i32) {
    %c0_i32 = arith.constant 0 : i32
    %c0_i32_0 = arith.constant 0 : i32
    %c0_i32_1 = arith.constant 0 : i32
    return %c0_i32, %arg0, %c0_i32_0 : i32, i32, i32
  }
  func.func @transform_1(%arg0: i32) -> (i32, i32) {
    %c0_i32 = arith.constant 0 : i32
    %c0_i32_0 = arith.constant 0 : i32
    return %c0_i32, %arg0 : i32, i32
  }
  func.func @transform_2(%arg0: i32) -> (i32, i32) {
    %c0_i32 = arith.constant 0 : i32
    %c0_i32_0 = arith.constant 0 : i32
    return %arg0, %c0_i32 : i32, i32
  }
  func.func @transform_3(%arg0: i32) -> (i32, i32) {
    %c0_i32 = arith.constant 0 : i32
    %c0_i32_0 = arith.constant 0 : i32
    %c0_i32_1 = arith.constant 0 : i32
    return %c0_i32, %c0_i32_0 : i32, i32
  }
  func.func @transform_4(%arg0: i32) -> (i32, i32) {
    %c0_i32 = arith.constant 0 : i32
    %c0_i32_0 = arith.constant 0 : i32
    %c0_i32_1 = arith.constant 0 : i32
    return %c0_i32, %c0_i32_0 : i32, i32
  }
  func.func @transform_5(%arg0: i32) -> (i32, i32) {
    %c0_i32 = arith.constant 0 : i32
    %c0_i32_0 = arith.constant 0 : i32
    %c0_i32_1 = arith.constant 0 : i32
    return %c0_i32, %c0_i32_0 : i32, i32
  }
  func.func @transform_6(%arg0: i32) -> (i32, i32) {
    %c0_i32 = arith.constant 0 : i32
    %c0_i32_0 = arith.constant 0 : i32
    %c0_i32_1 = arith.constant 0 : i32
    return %c0_i32, %c0_i32_0 : i32, i32
  }
  func.func @transform_7(%arg0: i32) -> (i32, i32) {
    %c0_i32 = arith.constant 0 : i32
    %c0_i32_0 = arith.constant 0 : i32
    %c0_i32_1 = arith.constant 0 : i32
    return %c0_i32, %c0_i32_0 : i32, i32
  }
  func.func @transform_8(%arg0: i32) -> (i32, i32) {
    %c0_i32 = arith.constant 0 : i32
    %c0_i32_0 = arith.constant 0 : i32
    return %arg0, %c0_i32 : i32, i32
  }
  func.func @transform_9(%arg0: i32) -> (i32, i32) {
    %c0_i32 = arith.constant 0 : i32
    %c0_i32_0 = arith.constant 0 : i32
    return %c0_i32, %arg0 : i32, i32
  }
}

</mosaic_0001>

<llo_original>
// kernel: tpu_custom_call.1
$region0: #{tpu_custom_call.1}
  #allocation0 [shape = 'u32[]', space=smem, size = 0x4, offset = 0x4, fixed_abs, tag = 'smem constant byte address 0x4 - core index']
  #allocation1 [shape = 'u32[72,128]{1,0:T(1,128)}', space=vmem, size = 0x9000, scoped, tag = 'internal scratch']
  %s0 = inlined_call_operand.hbm [shape: f32[16,128,128], index: 0, kind: input, shape index: {}]
  %s1 = inlined_call_operand.hbm [shape: f32[16,128], index: 1, kind: input, shape index: {}]
  %s2 = inlined_call_operand.hbm [shape: f32[128,128], index: 2, kind: input, shape index: {}]
  %s3 = inlined_call_operand.hbm [shape: f32[128,128], index: 3, kind: input, shape index: {}]
  %s4 = inlined_call_operand.hbm [shape: f32[128,128], index: 4, kind: input, shape index: {}]
  %s5 = inlined_call_operand.vmem [shape: f32[1,128], index: 5, kind: input, shape index: {}]
  %s6 = inlined_call_operand.hbm [shape: f32[128,128], index: 6, kind: input, shape index: {}]
  %s7 = inlined_call_operand.hbm [shape: f32[128,128], index: 7, kind: input, shape index: {}]
  %s8 = inlined_call_operand.hbm [shape: f32[128,128], index: 8, kind: output, shape index: {0}]
  %s9 = inlined_call_operand.hbm [shape: f32[16,128], index: 9, kind: output, shape index: {1}]
  %10 = xla_tuple %s8, %s9
  %s11 = sld [smem:[#allocation0]]
  $region78: #{tpu_custom_call.1} parent=0
    _
  %s13 = ssub.s32 1, %s11
  %s14 = scalar_select 0, %s13, %s11
  $region1: #{tpu_custom_call.1} parent=0
    #allocation2 [shape = 'u8[1048576]{0}', space=vmem, size = 0x100000, scoped, tag = 'input window, operand 0, single buffered']
    #allocation3 [shape = 's32[1]{0}', space=sflag, size = 0x4, scoped, tag = 'scoped memory for tpu_custom_call.1']
    #allocation4 [shape = 's32[1]{0}', space=sflag, size = 0x4, scoped, tag = 'scoped memory for tpu_custom_call.1']
    #allocation5 [shape = 'u8[8192]{0}', space=vmem, size = 0x2000, scoped, tag = 'input window, operand 1, single buffered']
    #allocation6 [shape = 's32[1]{0}', space=sflag, size = 0x4, scoped, tag = 'scoped memory for tpu_custom_call.1']
    #allocation7 [shape = 'u8[65536]{0}', space=vmem, size = 0x10000, scoped, tag = 'input window, operand 2, single buffered']
    #allocation8 [shape = 'u8[65536]{0}', space=vmem, size = 0x10000, scoped, tag = 'input window, operand 3, single buffered']
    #allocation9 [shape = 's32[1]{0}', space=sflag, size = 0x4, scoped, tag = 'scoped memory for tpu_custom_call.1']
    #allocation10 [shape = 'u8[65536]{0}', space=vmem, size = 0x10000, scoped, tag = 'input window, operand 4, single buffered']
    #allocation11 [shape = 'u8[65536]{0}', space=vmem, size = 0x10000, scoped, tag = 'input window, operand 6, single buffered']
    #allocation12 [shape = 's32[1]{0}', space=sflag, size = 0x4, scoped, tag = 'scoped memory for tpu_custom_call.1']
    #allocation13 [shape = 'u8[65536]{0}', space=vmem, size = 0x10000, scoped, tag = 'input window, operand 7, single buffered']
    #allocation14 [shape = 'u8[65536]{0}', space=vmem, size = 0x10000, scoped, tag = 'output window, operand 0, single buffered']
    #allocation15 [shape = 'u8[8192]{0}', space=vmem, size = 0x2000, scoped, tag = 'output window, operand 1, single buffered']
    #allocation16 [shape = 's32[1]{0}', space=sflag, size = 0x4, scoped, tag = 'scoped memory for tpu_custom_call.1']
    %15 = vsyncpa [#allocation3], 0
    %16 = vsyncpa [#allocation6], 0
    %17 = vsyncpa [#allocation9], 0
    %18 = vsyncpa [#allocation12], 0
    %19 = vsyncpa [#allocation4], 0
    %20 = vsyncpa [#allocation16], 0
    // Predicated region
    $region2: #{tpu_custom_call.1} parent=1 // pred_check
      _
    $region3: #{tpu_custom_call.1} parent=1 // pred_check_branch
      %22 = sbr.rel (0) target = $region5
    $region4: #{tpu_custom_call.1} parent=1 // pred_region
      %24 = vsyncadd [#allocation3], 0
      %s25 = sshll.u32 %s0, 4
      %s26 = int_to_ptr.hbm [resolvable:$true] %s25
      %s27 = sshll.u32 [#allocation2], 4
      %s28 = int_to_ptr.vmem [resolvable:$true] %s27
      %33 = dma.hbm_to_vmem [thread:$0]  %s26, 32768, %s28, [#allocation3], 128, 128, 8
    $region5: #{tpu_custom_call.1} parent=1 // pred_fallthru
      _
    // Predicated region
    $region6: #{tpu_custom_call.1} parent=1 // pred_check
      _
    $region7: #{tpu_custom_call.1} parent=1 // pred_check_branch
      %35 = sbr.rel (0) target = $region9
    $region8: #{tpu_custom_call.1} parent=1 // pred_region
      %37 = vsyncadd [#allocation6], 0
      %s38 = sshll.u32 %s1, 4
      %s39 = int_to_ptr.hbm [resolvable:$true] %s38
      %s40 = sshll.u32 [#allocation5], 4
      %s41 = int_to_ptr.vmem [resolvable:$true] %s40
      %46 = dma.hbm_to_vmem [thread:$0]  %s39, 256, %s41, [#allocation6], 128, 128, 8
    $region9: #{tpu_custom_call.1} parent=1 // pred_fallthru
      _
    // Predicated region
    $region10: #{tpu_custom_call.1} parent=1 // pred_check
      _
    $region11: #{tpu_custom_call.1} parent=1 // pred_check_branch
      %48 = sbr.rel (0) target = $region13
    $region12: #{tpu_custom_call.1} parent=1 // pred_region
      %50 = vsyncadd [#allocation6], 0
      %s51 = sshll.u32 %s2, 4
      %s52 = int_to_ptr.hbm [resolvable:$true] %s51
      %s53 = sshll.u32 [#allocation7], 4
      %s54 = int_to_ptr.vmem [resolvable:$true] %s53
      %59 = dma.hbm_to_vmem [thread:$0]  %s52, 2048, %s54, [#allocation6], 128, 128, 8
    $region13: #{tpu_custom_call.1} parent=1 // pred_fallthru
      _
    // Predicated region
    $region14: #{tpu_custom_call.1} parent=1 // pred_check
      _
    $region15: #{tpu_custom_call.1} parent=1 // pred_check_branch
      %61 = sbr.rel (0) target = $region17
    $region16: #{tpu_custom_call.1} parent=1 // pred_region
      %63 = vsyncadd [#allocation9], 0
      %s64 = sshll.u32 %s3, 4
      %s65 = int_to_ptr.hbm [resolvable:$true] %s64
      %s66 = sshll.u32 [#allocation8], 4
      %s67 = int_to_ptr.vmem [resolvable:$true] %s66
      %72 = dma.hbm_to_vmem [thread:$0]  %s65, 2048, %s67, [#allocation9], 128, 128, 8
    $region17: #{tpu_custom_call.1} parent=1 // pred_fallthru
      _
    // Predicated region
    $region18: #{tpu_custom_call.1} parent=1 // pred_check
      _
    $region19: #{tpu_custom_call.1} parent=1 // pred_check_branch
      %74 = sbr.rel (0) target = $region21
    $region20: #{tpu_custom_call.1} parent=1 // pred_region
      %76 = vsyncadd [#allocation9], 0
      %s77 = sshll.u32 %s4, 4
      %s78 = int_to_ptr.hbm [resolvable:$true] %s77
      %s79 = sshll.u32 [#allocation10], 4
      %s80 = int_to_ptr.vmem [resolvable:$true] %s79
      %85 = dma.hbm_to_vmem [thread:$0]  %s78, 2048, %s80, [#allocation9], 128, 128, 8
    $region21: #{tpu_custom_call.1} parent=1 // pred_fallthru
      _
    // Predicated region
    $region22: #{tpu_custom_call.1} parent=1 // pred_check
      _
    $region23: #{tpu_custom_call.1} parent=1 // pred_check_branch
      %87 = sbr.rel (0) target = $region25
    $region24: #{tpu_custom_call.1} parent=1 // pred_region
      _
    $region25: #{tpu_custom_call.1} parent=1 // pred_fallthru
      _
    // Predicated region
    $region26: #{tpu_custom_call.1} parent=1 // pred_check
      _
    $region27: #{tpu_custom_call.1} parent=1 // pred_check_branch
      %89 = sbr.rel (0) target = $region29
    $region28: #{tpu_custom_call.1} parent=1 // pred_region
      %91 = vsyncadd [#allocation12], 0
      %s92 = sshll.u32 %s6, 4
      %s93 = int_to_ptr.hbm [resolvable:$true] %s92
      %s94 = sshll.u32 [#allocation11], 4
      %s95 = int_to_ptr.vmem [resolvable:$true] %s94
      %100 = dma.hbm_to_vmem [thread:$0]  %s93, 2048, %s95, [#allocation12], 128, 128, 8
    $region29: #{tpu_custom_call.1} parent=1 // pred_fallthru
      _
    // Predicated region
    $region30: #{tpu_custom_call.1} parent=1 // pred_check
      _
    $region31: #{tpu_custom_call.1} parent=1 // pred_check_branch
      %102 = sbr.rel (0) target = $region33
    $region32: #{tpu_custom_call.1} parent=1 // pred_region
      %104 = vsyncadd [#allocation12], 0
      %s105 = sshll.u32 %s7, 4
      %s106 = int_to_ptr.hbm [resolvable:$true] %s105
      %s107 = sshll.u32 [#allocation13], 4
      %s108 = int_to_ptr.vmem [resolvable:$true] %s107
      %113 = dma.hbm_to_vmem [thread:$0]  %s106, 2048, %s108, [#allocation12], 128, 128, 8
    $region33: #{tpu_custom_call.1} parent=1 // pred_fallthru
      _
    // Predicated region
    $region34: #{tpu_custom_call.1} parent=1 // pred_check
      _
    $region35: #{tpu_custom_call.1} parent=1 // pred_check_branch
      %115 = sbr.rel (0) target = $region37
    $region36: #{tpu_custom_call.1} parent=1 // pred_region
      %117 = dma.done [#allocation3], 32768
    $region37: #{tpu_custom_call.1} parent=1 // pred_fallthru
      _
    // Predicated region
    $region38: #{tpu_custom_call.1} parent=1 // pred_check
      _
    $region39: #{tpu_custom_call.1} parent=1 // pred_check_branch
      %119 = sbr.rel (0) target = $region41
    $region40: #{tpu_custom_call.1} parent=1 // pred_region
      %121 = dma.done [#allocation6], 256
    $region41: #{tpu_custom_call.1} parent=1 // pred_fallthru
      _
    // Predicated region
    $region42: #{tpu_custom_call.1} parent=1 // pred_check
      _
    $region43: #{tpu_custom_call.1} parent=1 // pred_check_branch
      %123 = sbr.rel (0) target = $region45
    $region44: #{tpu_custom_call.1} parent=1 // pred_region
      %125 = dma.done [#allocation6], 2048
    $region45: #{tpu_custom_call.1} parent=1 // pred_fallthru
      _
    // Predicated region
    $region46: #{tpu_custom_call.1} parent=1 // pred_check
      _
    $region47: #{tpu_custom_call.1} parent=1 // pred_check_branch
      %127 = sbr.rel (0) target = $region49
    $region48: #{tpu_custom_call.1} parent=1 // pred_region
      %129 = dma.done [#allocation9], 2048
    $region49: #{tpu_custom_call.1} parent=1 // pred_fallthru
      _
    // Predicated region
    $region50: #{tpu_custom_call.1} parent=1 // pred_check
      _
    $region51: #{tpu_custom_call.1} parent=1 // pred_check_branch
      %131 = sbr.rel (0) target = $region53
    $region52: #{tpu_custom_call.1} parent=1 // pred_region
      %133 = dma.done [#allocation9], 2048
    $region53: #{tpu_custom_call.1} parent=1 // pred_fallthru
      _
    // Predicated region
    $region54: #{tpu_custom_call.1} parent=1 // pred_check
      _
    $region55: #{tpu_custom_call.1} parent=1 // pred_check_branch
      %135 = sbr.rel (0) target = $region57
    $region56: #{tpu_custom_call.1} parent=1 // pred_region
      %137 = dma.done [#allocation12], 2048
    $region57: #{tpu_custom_call.1} parent=1 // pred_fallthru
      _
    // Predicated region
    $region58: #{tpu_custom_call.1} parent=1 // pred_check
      _
    $region59: #{tpu_custom_call.1} parent=1 // pred_check_branch
      %139 = sbr.rel (0) target = $region61
    $region60: #{tpu_custom_call.1} parent=1 // pred_region
      %141 = dma.done [#allocation12], 2048
    $region61: #{tpu_custom_call.1} parent=1 // pred_fallthru
      _
    %v142 = vld [vmem:[#allocation7] sm:$0xff]
    %v143 = vld [vmem:[#allocation7 + $0x8] sm:$0xff]
    %v144 = vld [vmem:[#allocation7 + $0x10] sm:$0xff]
    %v145 = vld [vmem:[#allocation7 + $0x18] sm:$0xff]
    %v146 = vld [vmem:[#allocation7 + $0x20] sm:$0xff]
    %v147 = vld [vmem:[#allocation7 + $0x28] sm:$0xff]
    %v148 = vld [vmem:[#allocation7 + $0x30] sm:$0xff]
    %v149 = vld [vmem:[#allocation7 + $0x38] sm:$0xff]
    %v150 = vld [vmem:[#allocation7 + $0x40] sm:$0xff]
    %v151 = vld [vmem:[#allocation7 + $0x48] sm:$0xff]
    %v152 = vld [vmem:[#allocation7 + $0x50] sm:$0xff]
    %v153 = vld [vmem:[#allocation7 + $0x58] sm:$0xff]
    %v154 = vld [vmem:[#allocation7 + $0x60] sm:$0xff]
    %v155 = vld [vmem:[#allocation7 + $0x68] sm:$0xff]
    %v156 = vld [vmem:[#allocation7 + $0x70] sm:$0xff]
    %v157 = vld [vmem:[#allocation7 + $0x78] sm:$0xff]
    %v158 = vld [vmem:[%s5] sm:$0x1]
    %v159 = vld [vmem:[#allocation10] sm:$0xff]
    %v160 = vld [vmem:[#allocation10 + $0x8] sm:$0xff]
    %v161 = vld [vmem:[#allocation10 + $0x10] sm:$0xff]
    %v162 = vld [vmem:[#allocation10 + $0x18] sm:$0xff]
    %v163 = vld [vmem:[#allocation10 + $0x20] sm:$0xff]
    %v164 = vld [vmem:[#allocation10 + $0x28] sm:$0xff]
    %v165 = vld [vmem:[#allocation10 + $0x30] sm:$0xff]
    %v166 = vld [vmem:[#allocation10 + $0x38] sm:$0xff]
    %v167 = vld [vmem:[#allocation10 + $0x40] sm:$0xff]
    %v168 = vld [vmem:[#allocation10 + $0x48] sm:$0xff]
    %v169 = vld [vmem:[#allocation10 + $0x50] sm:$0xff]
    %v170 = vld [vmem:[#allocation10 + $0x58] sm:$0xff]
    %v171 = vld [vmem:[#allocation10 + $0x60] sm:$0xff]
    %v172 = vld [vmem:[#allocation10 + $0x68] sm:$0xff]
    %v173 = vld [vmem:[#allocation10 + $0x70] sm:$0xff]
    %v174 = vld [vmem:[#allocation10 + $0x78] sm:$0xff]
    %175 = vmatpush.msra.mxu0 %v174
    %176 = vmatpush.msra.mxu0 %v173
    %177 = vmatpush.msra.mxu0 %v172
    %178 = vmatpush.msra.mxu0 %v171
    %179 = vmatpush.msra.mxu0 %v170
    %180 = vmatpush.msra.mxu0 %v169
    %181 = vmatpush.msra.mxu0 %v168
    %182 = vmatpush.msra.mxu0 %v167
    %183 = vmatpush.msra.mxu0 %v166
    %184 = vmatpush.msra.mxu0 %v165
    %185 = vmatpush.msra.mxu0 %v164
    %186 = vmatpush.msra.mxu0 %v163
    %187 = vmatpush.msra.mxu0 %v162
    %188 = vmatpush.msra.mxu0 %v161
    %189 = vmatpush.msra.mxu0 %v160
    %190 = vmatpush.msra.mxu0 %v159
    %191 = vmatmul.f32.gmra.mxu0 %v142
    %v192 = vpop.f32.mrf.mxu0
    %v193 = vadd.f32 0.0, %v192
    %194 = vmatmul.f32.gmra.mxu0 %v143
    %v195 = vpop.f32.mrf.mxu0
    %v196 = vadd.f32 0.0, %v195
    %197 = vmatmul.f32.gmra.mxu0 %v144
    %v198 = vpop.f32.mrf.mxu0
    %v199 = vadd.f32 0.0, %v198
    %200 = vmatmul.f32.gmra.mxu0 %v145
    %v201 = vpop.f32.mrf.mxu0
    %v202 = vadd.f32 0.0, %v201
    %203 = vmatmul.f32.gmra.mxu0 %v146
    %v204 = vpop.f32.mrf.mxu0
    %v205 = vadd.f32 0.0, %v204
    %206 = vmatmul.f32.gmra.mxu0 %v147
    %v207 = vpop.f32.mrf.mxu0
    %v208 = vadd.f32 0.0, %v207
    %209 = vmatmul.f32.gmra.mxu0 %v148
    %v210 = vpop.f32.mrf.mxu0
    %v211 = vadd.f32 0.0, %v210
    %212 = vmatmul.f32.gmra.mxu0 %v149
    %v213 = vpop.f32.mrf.mxu0
    %v214 = vadd.f32 0.0, %v213
    %215 = vmatmul.f32.gmra.mxu0 %v150
    %v216 = vpop.f32.mrf.mxu0
    %v217 = vadd.f32 0.0, %v216
    %218 = vmatmul.f32.gmra.mxu0 %v151
    %v219 = vpop.f32.mrf.mxu0
    %v220 = vadd.f32 0.0, %v219
    %221 = vmatmul.f32.gmra.mxu0 %v152
    %v222 = vpop.f32.mrf.mxu0
    %v223 = vadd.f32 0.0, %v222
    %224 = vmatmul.f32.gmra.mxu0 %v153
    %v225 = vpop.f32.mrf.mxu0
    %v226 = vadd.f32 0.0, %v225
    %227 = vmatmul.f32.gmra.mxu0 %v154
    %v228 = vpop.f32.mrf.mxu0
    %v229 = vadd.f32 0.0, %v228
    %230 = vmatmul.f32.gmra.mxu0 %v155
    %v231 = vpop.f32.mrf.mxu0
    %v232 = vadd.f32 0.0, %v231
    %233 = vmatmul.f32.gmra.mxu0 %v156
    %v234 = vpop.f32.mrf.mxu0
    %v235 = vadd.f32 0.0, %v234
    %236 = vmatmul.f32.gmra.mxu0 %v157
    %v237 = vpop.f32.mrf.mxu0
    %v238 = vadd.f32 0.0, %v237
    %239 = vdwg.mxu0
    %s240 = smul.u32 0, 128
    %s241 = scalar_lea.vmem [#allocation2], %s240
    %v242 = vld [vmem:[%s241] sm:$0xff]
    %v243 = vld [vmem:[%s241 + $0x8] sm:$0xff]
    %v244 = vld [vmem:[%s241 + $0x10] sm:$0xff]
    %v245 = vld [vmem:[%s241 + $0x18] sm:$0xff]
    %v246 = vld [vmem:[%s241 + $0x20] sm:$0xff]
    %v247 = vld [vmem:[%s241 + $0x28] sm:$0xff]
    %v248 = vld [vmem:[%s241 + $0x30] sm:$0xff]
    %v249 = vld [vmem:[%s241 + $0x38] sm:$0xff]
    %v250 = vld [vmem:[%s241 + $0x40] sm:$0xff]
    %v251 = vld [vmem:[%s241 + $0x48] sm:$0xff]
    %v252 = vld [vmem:[%s241 + $0x50] sm:$0xff]
    %v253 = vld [vmem:[%s241 + $0x58] sm:$0xff]
    %v254 = vld [vmem:[%s241 + $0x60] sm:$0xff]
    %v255 = vld [vmem:[%s241 + $0x68] sm:$0xff]
    %v256 = vld [vmem:[%s241 + $0x70] sm:$0xff]
    %v257 = vld [vmem:[%s241 + $0x78] sm:$0xff]
    %v258 = vld [vmem:[%s241 + $0x80] sm:$0xff]
    %v259 = vld [vmem:[%s241 + $0x88] sm:$0xff]
    %v260 = vld [vmem:[%s241 + $0x90] sm:$0xff]
    %v261 = vld [vmem:[%s241 + $0x98] sm:$0xff]
    %v262 = vld [vmem:[%s241 + $0xa0] sm:$0xff]
    %v263 = vld [vmem:[%s241 + $0xa8] sm:$0xff]
    %v264 = vld [vmem:[%s241 + $0xb0] sm:$0xff]
    %v265 = vld [vmem:[%s241 + $0xb8] sm:$0xff]
    %v266 = vld [vmem:[%s241 + $0xc0] sm:$0xff]
    %v267 = vld [vmem:[%s241 + $0xc8] sm:$0xff]
    %v268 = vld [vmem:[%s241 + $0xd0] sm:$0xff]
    %v269 = vld [vmem:[%s241 + $0xd8] sm:$0xff]
    %v270 = vld [vmem:[%s241 + $0xe0] sm:$0xff]
    %v271 = vld [vmem:[%s241 + $0xe8] sm:$0xff]
    %v272 = vld [vmem:[%s241 + $0xf0] sm:$0xff]
    %v273 = vld [vmem:[%s241 + $0xf8] sm:$0xff]
    %v274 = vld [vmem:[%s241 + $0x100] sm:$0xff]
    %v275 = vld [vmem:[%s241 + $0x108] sm:$0xff]
    %v276 = vld [vmem:[%s241 + $0x110] sm:$0xff]
    %v277 = vld [vmem:[%s241 + $0x118] sm:$0xff]
    %v278 = vld [vmem:[%s241 + $0x120] sm:$0xff]
    %v279 = vld [vmem:[%s241 + $0x128] sm:$0xff]
    %v280 = vld [vmem:[%s241 + $0x130] sm:$0xff]
    %v281 = vld [vmem:[%s241 + $0x138] sm:$0xff]
    %v282 = vld [vmem:[%s241 + $0x140] sm:$0xff]
    %v283 = vld [vmem:[%s241 + $0x148] sm:$0xff]
    %v284 = vld [vmem:[%s241 + $0x150] sm:$0xff]
    %v285 = vld [vmem:[%s241 + $0x158] sm:$0xff]
    %v286 = vld [vmem:[%s241 + $0x160] sm:$0xff]
    %v287 = vld [vmem:[%s241 + $0x168] sm:$0xff]
    %v288 = vld [vmem:[%s241 + $0x170] sm:$0xff]
    %v289 = vld [vmem:[%s241 + $0x178] sm:$0xff]
    %v290 = vld [vmem:[%s241 + $0x180] sm:$0xff]
    %v291 = vld [vmem:[%s241 + $0x188] sm:$0xff]
    %v292 = vld [vmem:[%s241 + $0x190] sm:$0xff]
    %v293 = vld [vmem:[%s241 + $0x198] sm:$0xff]
    %v294 = vld [vmem:[%s241 + $0x1a0] sm:$0xff]
    %v295 = vld [vmem:[%s241 + $0x1a8] sm:$0xff]
    %v296 = vld [vmem:[%s241 + $0x1b0] sm:$0xff]
    %v297 = vld [vmem:[%s241 + $0x1b8] sm:$0xff]
    %v298 = vld [vmem:[%s241 + $0x1c0] sm:$0xff]
    %v299 = vld [vmem:[%s241 + $0x1c8] sm:$0xff]
    %v300 = vld [vmem:[%s241 + $0x1d0] sm:$0xff]
    %v301 = vld [vmem:[%s241 + $0x1d8] sm:$0xff]
    %v302 = vld [vmem:[%s241 + $0x1e0] sm:$0xff]
    %v303 = vld [vmem:[%s241 + $0x1e8] sm:$0xff]
    %v304 = vld [vmem:[%s241 + $0x1f0] sm:$0xff]
    %v305 = vld [vmem:[%s241 + $0x1f8] sm:$0xff]
    %v306 = vld [vmem:[%s241 + $0x200] sm:$0xff]
    %v307 = vld [vmem:[%s241 + $0x208] sm:$0xff]
    %v308 = vld [vmem:[%s241 + $0x210] sm:$0xff]
    %v309 = vld [vmem:[%s241 + $0x218] sm:$0xff]
    %v310 = vld [vmem:[%s241 + $0x220] sm:$0xff]
    %v311 = vld [vmem:[%s241 + $0x228] sm:$0xff]
    %v312 = vld [vmem:[%s241 + $0x230] sm:$0xff]
    %v313 = vld [vmem:[%s241 + $0x238] sm:$0xff]
    %v314 = vld [vmem:[%s241 + $0x240] sm:$0xff]
    %v315 = vld [vmem:[%s241 + $0x248] sm:$0xff]
    %v316 = vld [vmem:[%s241 + $0x250] sm:$0xff]
    %v317 = vld [vmem:[%s241 + $0x258] sm:$0xff]
    %v318 = vld [vmem:[%s241 + $0x260] sm:$0xff]
    %v319 = vld [vmem:[%s241 + $0x268] sm:$0xff]
    %v320 = vld [vmem:[%s241 + $0x270] sm:$0xff]
    %v321 = vld [vmem:[%s241 + $0x278] sm:$0xff]
    %v322 = vld [vmem:[%s241 + $0x280] sm:$0xff]
    %v323 = vld [vmem:[%s241 + $0x288] sm:$0xff]
    %v324 = vld [vmem:[%s241 + $0x290] sm:$0xff]
    %v325 = vld [vmem:[%s241 + $0x298] sm:$0xff]
    %v326 = vld [vmem:[%s241 + $0x2a0] sm:$0xff]
    %v327 = vld [vmem:[%s241 + $0x2a8] sm:$0xff]
    %v328 = vld [vmem:[%s241 + $0x2b0] sm:$0xff]
    %v329 = vld [vmem:[%s241 + $0x2b8] sm:$0xff]
    %v330 = vld [vmem:[%s241 + $0x2c0] sm:$0xff]
    %v331 = vld [vmem:[%s241 + $0x2c8] sm:$0xff]
    %v332 = vld [vmem:[%s241 + $0x2d0] sm:$0xff]
    %v333 = vld [vmem:[%s241 + $0x2d8] sm:$0xff]
    %v334 = vld [vmem:[%s241 + $0x2e0] sm:$0xff]
    %v335 = vld [vmem:[%s241 + $0x2e8] sm:$0xff]
    %v336 = vld [vmem:[%s241 + $0x2f0] sm:$0xff]
    %v337 = vld [vmem:[%s241 + $0x2f8] sm:$0xff]
    %v338 = vld [vmem:[%s241 + $0x300] sm:$0xff]
    %v339 = vld [vmem:[%s241 + $0x308] sm:$0xff]
    %v340 = vld [vmem:[%s241 + $0x310] sm:$0xff]
    %v341 = vld [vmem:[%s241 + $0x318] sm:$0xff]
    %v342 = vld [vmem:[%s241 + $0x320] sm:$0xff]
    %v343 = vld [vmem:[%s241 + $0x328] sm:$0xff]
    %v344 = vld [vmem:[%s241 + $0x330] sm:$0xff]
    %v345 = vld [vmem:[%s241 + $0x338] sm:$0xff]
    %v346 = vld [vmem:[%s241 + $0x340] sm:$0xff]
    %v347 = vld [vmem:[%s241 + $0x348] sm:$0xff]
    %v348 = vld [vmem:[%s241 + $0x350] sm:$0xff]
    %v349 = vld [vmem:[%s241 + $0x358] sm:$0xff]
    %v350 = vld [vmem:[%s241 + $0x360] sm:$0xff]
    %v351 = vld [vmem:[%s241 + $0x368] sm:$0xff]
    %v352 = vld [vmem:[%s241 + $0x370] sm:$0xff]
    %v353 = vld [vmem:[%s241 + $0x378] sm:$0xff]
    %v354 = vld [vmem:[%s241 + $0x380] sm:$0xff]
    %v355 = vld [vmem:[%s241 + $0x388] sm:$0xff]
    %v356 = vld [vmem:[%s241 + $0x390] sm:$0xff]
    %v357 = vld [vmem:[%s241 + $0x398] sm:$0xff]
    %v358 = vld [vmem:[%s241 + $0x3a0] sm:$0xff]
    %v359 = vld [vmem:[%s241 + $0x3a8] sm:$0xff]
    %v360 = vld [vmem:[%s241 + $0x3b0] sm:$0xff]
    %v361 = vld [vmem:[%s241 + $0x3b8] sm:$0xff]
    %v362 = vld [vmem:[%s241 + $0x3c0] sm:$0xff]
    %v363 = vld [vmem:[%s241 + $0x3c8] sm:$0xff]
    %v364 = vld [vmem:[%s241 + $0x3d0] sm:$0xff]
    %v365 = vld [vmem:[%s241 + $0x3d8] sm:$0xff]
    %v366 = vld [vmem:[%s241 + $0x3e0] sm:$0xff]
    %v367 = vld [vmem:[%s241 + $0x3e8] sm:$0xff]
    %v368 = vld [vmem:[%s241 + $0x3f0] sm:$0xff]
    %v369 = vld [vmem:[%s241 + $0x3f8] sm:$0xff]
    %v370 = vld [vmem:[#allocation8] sm:$0xff]
    %v371 = vld [vmem:[#allocation8 + $0x8] sm:$0xff]
    %v372 = vld [vmem:[#allocation8 + $0x10] sm:$0xff]
    %v373 = vld [vmem:[#allocation8 + $0x18] sm:$0xff]
    %v374 = vld [vmem:[#allocation8 + $0x20] sm:$0xff]
    %v375 = vld [vmem:[#allocation8 + $0x28] sm:$0xff]
    %v376 = vld [vmem:[#allocation8 + $0x30] sm:$0xff]
    %v377 = vld [vmem:[#allocation8 + $0x38] sm:$0xff]
    %v378 = vld [vmem:[#allocation8 + $0x40] sm:$0xff]
    %v379 = vld [vmem:[#allocation8 + $0x48] sm:$0xff]
    %v380 = vld [vmem:[#allocation8 + $0x50] sm:$0xff]
    %v381 = vld [vmem:[#allocation8 + $0x58] sm:$0xff]
    %v382 = vld [vmem:[#allocation8 + $0x60] sm:$0xff]
    %v383 = vld [vmem:[#allocation8 + $0x68] sm:$0xff]
    %v384 = vld [vmem:[#allocation8 + $0x70] sm:$0xff]
    %v385 = vld [vmem:[#allocation8 + $0x78] sm:$0xff]
    %386 = vmatpush.msra.mxu0 %v385
    %387 = vmatpush.msra.mxu0 %v384
    %388 = vmatpush.msra.mxu0 %v383
    %389 = vmatpush.msra.mxu0 %v382
    %390 = vmatpush.msra.mxu0 %v381
    %391 = vmatpush.msra.mxu0 %v380
    %392 = vmatpush.msra.mxu0 %v379
    %393 = vmatpush.msra.mxu0 %v378
    %394 = vmatpush.msra.mxu0 %v377
    %395 = vmatpush.msra.mxu0 %v376
    %396 = vmatpush.msra.mxu0 %v375
    %397 = vmatpush.msra.mxu0 %v374
    %398 = vmatpush.msra.mxu0 %v373
    %399 = vmatpush.msra.mxu0 %v372
    %400 = vmatpush.msra.mxu0 %v371
    %401 = vmatpush.msra.mxu0 %v370
    %402 = vmatmul.f32.gmra.mxu0 %v242
    %v403 = vpop.f32.mrf.mxu0
    %v404 = vadd.f32 0.0, %v403
    %405 = vmatmul.f32.gmra.mxu0 %v243
    %v406 = vpop.f32.mrf.mxu0
    %v407 = vadd.f32 0.0, %v406
    %408 = vmatmul.f32.gmra.mxu0 %v244
    %v409 = vpop.f32.mrf.mxu0
    %v410 = vadd.f32 0.0, %v409
    %411 = vmatmul.f32.gmra.mxu0 %v245
    %v412 = vpop.f32.mrf.mxu0
    %v413 = vadd.f32 0.0, %v412
    %414 = vmatmul.f32.gmra.mxu0 %v246
    %v415 = vpop.f32.mrf.mxu0
    %v416 = vadd.f32 0.0, %v415
    %417 = vmatmul.f32.gmra.mxu0 %v247
    %v418 = vpop.f32.mrf.mxu0
    %v419 = vadd.f32 0.0, %v418
    %420 = vmatmul.f32.gmra.mxu0 %v248
    %v421 = vpop.f32.mrf.mxu0
    %v422 = vadd.f32 0.0, %v421
    %423 = vmatmul.f32.gmra.mxu0 %v249
    %v424 = vpop.f32.mrf.mxu0
    %v425 = vadd.f32 0.0, %v424
    %426 = vmatmul.f32.gmra.mxu0 %v250
    %v427 = vpop.f32.mrf.mxu0
    %v428 = vadd.f32 0.0, %v427
    %429 = vmatmul.f32.gmra.mxu0 %v251
    %v430 = vpop.f32.mrf.mxu0
    %v431 = vadd.f32 0.0, %v430
    %432 = vmatmul.f32.gmra.mxu0 %v252
    %v433 = vpop.f32.mrf.mxu0
    %v434 = vadd.f32 0.0, %v433
    %435 = vmatmul.f32.gmra.mxu0 %v253
    %v436 = vpop.f32.mrf.mxu0
    %v437 = vadd.f32 0.0, %v436
    %438 = vmatmul.f32.gmra.mxu0 %v254
    %v439 = vpop.f32.mrf.mxu0
    %v440 = vadd.f32 0.0, %v439
    %441 = vmatmul.f32.gmra.mxu0 %v255
    %v442 = vpop.f32.mrf.mxu0
    %v443 = vadd.f32 0.0, %v442
    %444 = vmatmul.f32.gmra.mxu0 %v256
    %v445 = vpop.f32.mrf.mxu0
    %v446 = vadd.f32 0.0, %v445
    %447 = vmatmul.f32.gmra.mxu0 %v257
    %v448 = vpop.f32.mrf.mxu0
    %v449 = vadd.f32 0.0, %v448
    %450 = vmatmul.f32.gmra.mxu0 %v258
    %v451 = vpop.f32.mrf.mxu0
    %v452 = vadd.f32 0.0, %v451
    %453 = vmatmul.f32.gmra.mxu0 %v259
    %v454 = vpop.f32.mrf.mxu0
    %v455 = vadd.f32 0.0, %v454
    %456 = vmatmul.f32.gmra.mxu0 %v260
    %v457 = vpop.f32.mrf.mxu0
    %v458 = vadd.f32 0.0, %v457
    %459 = vmatmul.f32.gmra.mxu0 %v261
    %v460 = vpop.f32.mrf.mxu0
    %v461 = vadd.f32 0.0, %v460
    %462 = vmatmul.f32.gmra.mxu0 %v262
    %v463 = vpop.f32.mrf.mxu0
    %v464 = vadd.f32 0.0, %v463
    %465 = vmatmul.f32.gmra.mxu0 %v263
    %v466 = vpop.f32.mrf.mxu0
    %v467 = vadd.f32 0.0, %v466
    %468 = vmatmul.f32.gmra.mxu0 %v264
    %v469 = vpop.f32.mrf.mxu0
    %v470 = vadd.f32 0.0, %v469
    %471 = vmatmul.f32.gmra.mxu0 %v265
    %v472 = vpop.f32.mrf.mxu0
    %v473 = vadd.f32 0.0, %v472
    %474 = vmatmul.f32.gmra.mxu0 %v266
    %v475 = vpop.f32.mrf.mxu0
    %v476 = vadd.f32 0.0, %v475
    %477 = vmatmul.f32.gmra.mxu0 %v267
    %v478 = vpop.f32.mrf.mxu0
    %v479 = vadd.f32 0.0, %v478
    %480 = vmatmul.f32.gmra.mxu0 %v268
    %v481 = vpop.f32.mrf.mxu0
    %v482 = vadd.f32 0.0, %v481
    %483 = vmatmul.f32.gmra.mxu0 %v269
    %v484 = vpop.f32.mrf.mxu0
    %v485 = vadd.f32 0.0, %v484
    %486 = vmatmul.f32.gmra.mxu0 %v270
    %v487 = vpop.f32.mrf.mxu0
    %v488 = vadd.f32 0.0, %v487
    %489 = vmatmul.f32.gmra.mxu0 %v271
    %v490 = vpop.f32.mrf.mxu0
    %v491 = vadd.f32 0.0, %v490
    %492 = vmatmul.f32.gmra.mxu0 %v272
    %v493 = vpop.f32.mrf.mxu0
    %v494 = vadd.f32 0.0, %v493
    %495 = vmatmul.f32.gmra.mxu0 %v273
    %v496 = vpop.f32.mrf.mxu0
    %v497 = vadd.f32 0.0, %v496
    %498 = vmatmul.f32.gmra.mxu0 %v274
    %v499 = vpop.f32.mrf.mxu0
    %v500 = vadd.f32 0.0, %v499
    %501 = vmatmul.f32.gmra.mxu0 %v275
    %v502 = vpop.f32.mrf.mxu0
    %v503 = vadd.f32 0.0, %v502
    %504 = vmatmul.f32.gmra.mxu0 %v276
    %v505 = vpop.f32.mrf.mxu0
    %v506 = vadd.f32 0.0, %v505
    %507 = vmatmul.f32.gmra.mxu0 %v277
    %v508 = vpop.f32.mrf.mxu0
    %v509 = vadd.f32 0.0, %v508
    %510 = vmatmul.f32.gmra.mxu0 %v278
    %v511 = vpop.f32.mrf.mxu0
    %v512 = vadd.f32 0.0, %v511
    %513 = vmatmul.f32.gmra.mxu0 %v279
    %v514 = vpop.f32.mrf.mxu0
    %v515 = vadd.f32 0.0, %v514
    %516 = vmatmul.f32.gmra.mxu0 %v280
    %v517 = vpop.f32.mrf.mxu0
    %v518 = vadd.f32 0.0, %v517
    %519 = vmatmul.f32.gmra.mxu0 %v281
    %v520 = vpop.f32.mrf.mxu0
    %v521 = vadd.f32 0.0, %v520
    %522 = vmatmul.f32.gmra.mxu0 %v282
    %v523 = vpop.f32.mrf.mxu0
    %v524 = vadd.f32 0.0, %v523
    %525 = vmatmul.f32.gmra.mxu0 %v283
    %v526 = vpop.f32.mrf.mxu0
    %v527 = vadd.f32 0.0, %v526
    %528 = vmatmul.f32.gmra.mxu0 %v284
    %v529 = vpop.f32.mrf.mxu0
    %v530 = vadd.f32 0.0, %v529
    %531 = vmatmul.f32.gmra.mxu0 %v285
    %v532 = vpop.f32.mrf.mxu0
    %v533 = vadd.f32 0.0, %v532
    %534 = vmatmul.f32.gmra.mxu0 %v286
    %v535 = vpop.f32.mrf.mxu0
    %v536 = vadd.f32 0.0, %v535
    %537 = vmatmul.f32.gmra.mxu0 %v287
    %v538 = vpop.f32.mrf.mxu0
    %v539 = vadd.f32 0.0, %v538
    %540 = vmatmul.f32.gmra.mxu0 %v288
    %v541 = vpop.f32.mrf.mxu0
    %v542 = vadd.f32 0.0, %v541
    %543 = vmatmul.f32.gmra.mxu0 %v289
    %v544 = vpop.f32.mrf.mxu0
    %v545 = vadd.f32 0.0, %v544
    %546 = vmatmul.f32.gmra.mxu0 %v290
    %v547 = vpop.f32.mrf.mxu0
    %v548 = vadd.f32 0.0, %v547
    %549 = vmatmul.f32.gmra.mxu0 %v291
    %v550 = vpop.f32.mrf.mxu0
    %v551 = vadd.f32 0.0, %v550
    %552 = vmatmul.f32.gmra.mxu0 %v292
    %v553 = vpop.f32.mrf.mxu0
    %v554 = vadd.f32 0.0, %v553
    %555 = vmatmul.f32.gmra.mxu0 %v293
    %v556 = vpop.f32.mrf.mxu0
    %v557 = vadd.f32 0.0, %v556
    %558 = vmatmul.f32.gmra.mxu0 %v294
    %v559 = vpop.f32.mrf.mxu0
    %v560 = vadd.f32 0.0, %v559
    %561 = vmatmul.f32.gmra.mxu0 %v295
    %v562 = vpop.f32.mrf.mxu0
    %v563 = vadd.f32 0.0, %v562
    %564 = vmatmul.f32.gmra.mxu0 %v296
    %v565 = vpop.f32.mrf.mxu0
    %v566 = vadd.f32 0.0, %v565
    %567 = vmatmul.f32.gmra.mxu0 %v297
    %v568 = vpop.f32.mrf.mxu0
    %v569 = vadd.f32 0.0, %v568
    %570 = vmatmul.f32.gmra.mxu0 %v298
    %v571 = vpop.f32.mrf.mxu0
    %v572 = vadd.f32 0.0, %v571
    %573 = vmatmul.f32.gmra.mxu0 %v299
    %v574 = vpop.f32.mrf.mxu0
    %v575 = vadd.f32 0.0, %v574
    %576 = vmatmul.f32.gmra.mxu0 %v300
    %v577 = vpop.f32.mrf.mxu0
    %v578 = vadd.f32 0.0, %v577
    %579 = vmatmul.f32.gmra.mxu0 %v301
    %v580 = vpop.f32.mrf.mxu0
    %v581 = vadd.f32 0.0, %v580
    %582 = vmatmul.f32.gmra.mxu0 %v302
    %v583 = vpop.f32.mrf.mxu0
    %v584 = vadd.f32 0.0, %v583
    %585 = vmatmul.f32.gmra.mxu0 %v303
    %v586 = vpop.f32.mrf.mxu0
    %v587 = vadd.f32 0.0, %v586
    %588 = vmatmul.f32.gmra.mxu0 %v304
    %v589 = vpop.f32.mrf.mxu0
    %v590 = vadd.f32 0.0, %v589
    %591 = vmatmul.f32.gmra.mxu0 %v305
    %v592 = vpop.f32.mrf.mxu0
    %v593 = vadd.f32 0.0, %v592
    %594 = vmatmul.f32.gmra.mxu0 %v306
    %v595 = vpop.f32.mrf.mxu0
    %v596 = vadd.f32 0.0, %v595
    %597 = vmatmul.f32.gmra.mxu0 %v307
    %v598 = vpop.f32.mrf.mxu0
    %v599 = vadd.f32 0.0, %v598
    %600 = vmatmul.f32.gmra.mxu0 %v308
    %v601 = vpop.f32.mrf.mxu0
    %v602 = vadd.f32 0.0, %v601
    %603 = vmatmul.f32.gmra.mxu0 %v309
    %v604 = vpop.f32.mrf.mxu0
    %v605 = vadd.f32 0.0, %v604
    %606 = vmatmul.f32.gmra.mxu0 %v310
    %v607 = vpop.f32.mrf.mxu0
    %v608 = vadd.f32 0.0, %v607
    %609 = vmatmul.f32.gmra.mxu0 %v311
    %v610 = vpop.f32.mrf.mxu0
    %v611 = vadd.f32 0.0, %v610
    %612 = vmatmul.f32.gmra.mxu0 %v312
    %v613 = vpop.f32.mrf.mxu0
    %v614 = vadd.f32 0.0, %v613
    %615 = vmatmul.f32.gmra.mxu0 %v313
    %v616 = vpop.f32.mrf.mxu0
    %v617 = vadd.f32 0.0, %v616
    %618 = vmatmul.f32.gmra.mxu0 %v314
    %v619 = vpop.f32.mrf.mxu0
    %v620 = vadd.f32 0.0, %v619
    %621 = vmatmul.f32.gmra.mxu0 %v315
    %v622 = vpop.f32.mrf.mxu0
    %v623 = vadd.f32 0.0, %v622
    %624 = vmatmul.f32.gmra.mxu0 %v316
    %v625 = vpop.f32.mrf.mxu0
    %v626 = vadd.f32 0.0, %v625
    %627 = vmatmul.f32.gmra.mxu0 %v317
    %v628 = vpop.f32.mrf.mxu0
    %v629 = vadd.f32 0.0, %v628
    %630 = vmatmul.f32.gmra.mxu0 %v318
    %v631 = vpop.f32.mrf.mxu0
    %v632 = vadd.f32 0.0, %v631
    %633 = vmatmul.f32.gmra.mxu0 %v319
    %v634 = vpop.f32.mrf.mxu0
    %v635 = vadd.f32 0.0, %v634
    %636 = vmatmul.f32.gmra.mxu0 %v320
    %v637 = vpop.f32.mrf.mxu0
    %v638 = vadd.f32 0.0, %v637
    %639 = vmatmul.f32.gmra.mxu0 %v321
    %v640 = vpop.f32.mrf.mxu0
    %v641 = vadd.f32 0.0, %v640
    %642 = vmatmul.f32.gmra.mxu0 %v322
    %v643 = vpop.f32.mrf.mxu0
    %v644 = vadd.f32 0.0, %v643
    %645 = vmatmul.f32.gmra.mxu0 %v323
    %v646 = vpop.f32.mrf.mxu0
    %v647 = vadd.f32 0.0, %v646
    %648 = vmatmul.f32.gmra.mxu0 %v324
    %v649 = vpop.f32.mrf.mxu0
    %v650 = vadd.f32 0.0, %v649
    %651 = vmatmul.f32.gmra.mxu0 %v325
    %v652 = vpop.f32.mrf.mxu0
    %v653 = vadd.f32 0.0, %v652
    %654 = vmatmul.f32.gmra.mxu0 %v326
    %v655 = vpop.f32.mrf.mxu0
    %v656 = vadd.f32 0.0, %v655
    %657 = vmatmul.f32.gmra.mxu0 %v327
    %v658 = vpop.f32.mrf.mxu0
    %v659 = vadd.f32 0.0, %v658
    %660 = vmatmul.f32.gmra.mxu0 %v328
    %v661 = vpop.f32.mrf.mxu0
    %v662 = vadd.f32 0.0, %v661
    %663 = vmatmul.f32.gmra.mxu0 %v329
    %v664 = vpop.f32.mrf.mxu0
    %v665 = vadd.f32 0.0, %v664
    %666 = vmatmul.f32.gmra.mxu0 %v330
    %v667 = vpop.f32.mrf.mxu0
    %v668 = vadd.f32 0.0, %v667
    %669 = vmatmul.f32.gmra.mxu0 %v331
    %v670 = vpop.f32.mrf.mxu0
    %v671 = vadd.f32 0.0, %v670
    %672 = vmatmul.f32.gmra.mxu0 %v332
    %v673 = vpop.f32.mrf.mxu0
    %v674 = vadd.f32 0.0, %v673
    %675 = vmatmul.f32.gmra.mxu0 %v333
    %v676 = vpop.f32.mrf.mxu0
    %v677 = vadd.f32 0.0, %v676
    %678 = vmatmul.f32.gmra.mxu0 %v334
    %v679 = vpop.f32.mrf.mxu0
    %v680 = vadd.f32 0.0, %v679
    %681 = vmatmul.f32.gmra.mxu0 %v335
    %v682 = vpop.f32.mrf.mxu0
    %v683 = vadd.f32 0.0, %v682
    %684 = vmatmul.f32.gmra.mxu0 %v336
    %v685 = vpop.f32.mrf.mxu0
    %v686 = vadd.f32 0.0, %v685
    %687 = vmatmul.f32.gmra.mxu0 %v337
    %v688 = vpop.f32.mrf.mxu0
    %v689 = vadd.f32 0.0, %v688
    %690 = vmatmul.f32.gmra.mxu0 %v338
    %v691 = vpop.f32.mrf.mxu0
    %v692 = vadd.f32 0.0, %v691
    %693 = vmatmul.f32.gmra.mxu0 %v339
    %v694 = vpop.f32.mrf.mxu0
    %v695 = vadd.f32 0.0, %v694
    %696 = vmatmul.f32.gmra.mxu0 %v340
    %v697 = vpop.f32.mrf.mxu0
    %v698 = vadd.f32 0.0, %v697
    %699 = vmatmul.f32.gmra.mxu0 %v341
    %v700 = vpop.f32.mrf.mxu0
    %v701 = vadd.f32 0.0, %v700
    %702 = vmatmul.f32.gmra.mxu0 %v342
    %v703 = vpop.f32.mrf.mxu0
    %v704 = vadd.f32 0.0, %v703
    %705 = vmatmul.f32.gmra.mxu0 %v343
    %v706 = vpop.f32.mrf.mxu0
    %v707 = vadd.f32 0.0, %v706
    %708 = vmatmul.f32.gmra.mxu0 %v344
    %v709 = vpop.f32.mrf.mxu0
    %v710 = vadd.f32 0.0, %v709
    %711 = vmatmul.f32.gmra.mxu0 %v345
    %v712 = vpop.f32.mrf.mxu0
    %v713 = vadd.f32 0.0, %v712
    %714 = vmatmul.f32.gmra.mxu0 %v346
    %v715 = vpop.f32.mrf.mxu0
    %v716 = vadd.f32 0.0, %v715
    %717 = vmatmul.f32.gmra.mxu0 %v347
    %v718 = vpop.f32.mrf.mxu0
    %v719 = vadd.f32 0.0, %v718
    %720 = vmatmul.f32.gmra.mxu0 %v348
    %v721 = vpop.f32.mrf.mxu0
    %v722 = vadd.f32 0.0, %v721
    %723 = vmatmul.f32.gmra.mxu0 %v349
    %v724 = vpop.f32.mrf.mxu0
    %v725 = vadd.f32 0.0, %v724
    %726 = vmatmul.f32.gmra.mxu0 %v350
    %v727 = vpop.f32.mrf.mxu0
    %v728 = vadd.f32 0.0, %v727
    %729 = vmatmul.f32.gmra.mxu0 %v351
    %v730 = vpop.f32.mrf.mxu0
    %v731 = vadd.f32 0.0, %v730
    %732 = vmatmul.f32.gmra.mxu0 %v352
    %v733 = vpop.f32.mrf.mxu0
    %v734 = vadd.f32 0.0, %v733
    %735 = vmatmul.f32.gmra.mxu0 %v353
    %v736 = vpop.f32.mrf.mxu0
    %v737 = vadd.f32 0.0, %v736
    %738 = vmatmul.f32.gmra.mxu0 %v354
    %v739 = vpop.f32.mrf.mxu0
    %v740 = vadd.f32 0.0, %v739
    %741 = vmatmul.f32.gmra.mxu0 %v355
    %v742 = vpop.f32.mrf.mxu0
    %v743 = vadd.f32 0.0, %v742
    %744 = vmatmul.f32.gmra.mxu0 %v356
    %v745 = vpop.f32.mrf.mxu0
    %v746 = vadd.f32 0.0, %v745
    %747 = vmatmul.f32.gmra.mxu0 %v357
    %v748 = vpop.f32.mrf.mxu0
    %v749 = vadd.f32 0.0, %v748
    %750 = vmatmul.f32.gmra.mxu0 %v358
    %v751 = vpop.f32.mrf.mxu0
    %v752 = vadd.f32 0.0, %v751
    %753 = vmatmul.f32.gmra.mxu0 %v359
    %v754 = vpop.f32.mrf.mxu0
    %v755 = vadd.f32 0.0, %v754
    %756 = vmatmul.f32.gmra.mxu0 %v360
    %v757 = vpop.f32.mrf.mxu0
    %v758 = vadd.f32 0.0, %v757
    %759 = vmatmul.f32.gmra.mxu0 %v361
    %v760 = vpop.f32.mrf.mxu0
    %v761 = vadd.f32 0.0, %v760
    %762 = vmatmul.f32.gmra.mxu0 %v362
    %v763 = vpop.f32.mrf.mxu0
    %v764 = vadd.f32 0.0, %v763
    %765 = vmatmul.f32.gmra.mxu0 %v363
    %v766 = vpop.f32.mrf.mxu0
    %v767 = vadd.f32 0.0, %v766
    %768 = vmatmul.f32.gmra.mxu0 %v364
    %v769 = vpop.f32.mrf.mxu0
    %v770 = vadd.f32 0.0, %v769
    %771 = vmatmul.f32.gmra.mxu0 %v365
    %v772 = vpop.f32.mrf.mxu0
    %v773 = vadd.f32 0.0, %v772
    %774 = vmatmul.f32.gmra.mxu0 %v366
    %v775 = vpop.f32.mrf.mxu0
    %v776 = vadd.f32 0.0, %v775
    %777 = vmatmul.f32.gmra.mxu0 %v367
    %v778 = vpop.f32.mrf.mxu0
    %v779 = vadd.f32 0.0, %v778
    %780 = vmatmul.f32.gmra.mxu0 %v368
    %v781 = vpop.f32.mrf.mxu0
    %v782 = vadd.f32 0.0, %v781
    %783 = vmatmul.f32.gmra.mxu0 %v369
    %v784 = vpop.f32.mrf.mxu0
    %v785 = vadd.f32 0.0, %v784
    %786 = vdwg.mxu0
    %v787 = vadd.f32 %v404, %v193
    %v788 = vadd.f32 %v407, %v196
    %v789 = vadd.f32 %v410, %v199
    %v790 = vadd.f32 %v413, %v202
    %v791 = vadd.f32 %v416, %v205
    %v792 = vadd.f32 %v419, %v208
    %v793 = vadd.f32 %v422, %v211
    %v794 = vadd.f32 %v425, %v214
    %v795 = vadd.f32 %v428, %v217
    %v796 = vadd.f32 %v431, %v220
    %v797 = vadd.f32 %v434, %v223
    %v798 = vadd.f32 %v437, %v226
    %v799 = vadd.f32 %v440, %v229
    %v800 = vadd.f32 %v443, %v232
    %v801 = vadd.f32 %v446, %v235
    %v802 = vadd.f32 %v449, %v238
    %v803 = vadd.f32 %v452, %v193
    %v804 = vadd.f32 %v455, %v196
    %v805 = vadd.f32 %v458, %v199
    %v806 = vadd.f32 %v461, %v202
    %v807 = vadd.f32 %v464, %v205
    %v808 = vadd.f32 %v467, %v208
    %v809 = vadd.f32 %v470, %v211
    %v810 = vadd.f32 %v473, %v214
    %v811 = vadd.f32 %v476, %v217
    %v812 = vadd.f32 %v479, %v220
    %v813 = vadd.f32 %v482, %v223
    %v814 = vadd.f32 %v485, %v226
    %v815 = vadd.f32 %v488, %v229
    %v816 = vadd.f32 %v491, %v232
    %v817 = vadd.f32 %v494, %v235
    %v818 = vadd.f32 %v497, %v238
    %v819 = vadd.f32 %v500, %v193
    %v820 = vadd.f32 %v503, %v196
    %v821 = vadd.f32 %v506, %v199
    %v822 = vadd.f32 %v509, %v202
    %v823 = vadd.f32 %v512, %v205
    %v824 = vadd.f32 %v515, %v208
    %v825 = vadd.f32 %v518, %v211
    %v826 = vadd.f32 %v521, %v214
    %v827 = vadd.f32 %v524, %v217
    %v828 = vadd.f32 %v527, %v220
    %v829 = vadd.f32 %v530, %v223
    %v830 = vadd.f32 %v533, %v226
    %v831 = vadd.f32 %v536, %v229
    %v832 = vadd.f32 %v539, %v232
    %v833 = vadd.f32 %v542, %v235
    %v834 = vadd.f32 %v545, %v238
    %v835 = vadd.f32 %v548, %v193
    %v836 = vadd.f32 %v551, %v196
    %v837 = vadd.f32 %v554, %v199
    %v838 = vadd.f32 %v557, %v202
    %v839 = vadd.f32 %v560, %v205
    %v840 = vadd.f32 %v563, %v208
    %v841 = vadd.f32 %v566, %v211
    %v842 = vadd.f32 %v569, %v214
    %v843 = vadd.f32 %v572, %v217
    %v844 = vadd.f32 %v575, %v220
    %v845 = vadd.f32 %v578, %v223
    %v846 = vadd.f32 %v581, %v226
    %v847 = vadd.f32 %v584, %v229
    %v848 = vadd.f32 %v587, %v232
    %v849 = vadd.f32 %v590, %v235
    %v850 = vadd.f32 %v593, %v238
    %v851 = vadd.f32 %v596, %v193
    %v852 = vadd.f32 %v599, %v196
    %v853 = vadd.f32 %v602, %v199
    %v854 = vadd.f32 %v605, %v202
    %v855 = vadd.f32 %v608, %v205
    %v856 = vadd.f32 %v611, %v208
    %v857 = vadd.f32 %v614, %v211
    %v858 = vadd.f32 %v617, %v214
    %v859 = vadd.f32 %v620, %v217
    %v860 = vadd.f32 %v623, %v220
    %v861 = vadd.f32 %v626, %v223
    %v862 = vadd.f32 %v629, %v226
    %v863 = vadd.f32 %v632, %v229
    %v864 = vadd.f32 %v635, %v232
    %v865 = vadd.f32 %v638, %v235
    %v866 = vadd.f32 %v641, %v238
    %v867 = vadd.f32 %v644, %v193
    %v868 = vadd.f32 %v647, %v196
    %v869 = vadd.f32 %v650, %v199
    %v870 = vadd.f32 %v653, %v202
    %v871 = vadd.f32 %v656, %v205
    %v872 = vadd.f32 %v659, %v208
    %v873 = vadd.f32 %v662, %v211
    %v874 = vadd.f32 %v665, %v214
    %v875 = vadd.f32 %v668, %v217
    %v876 = vadd.f32 %v671, %v220
    %v877 = vadd.f32 %v674, %v223
    %v878 = vadd.f32 %v677, %v226
    %v879 = vadd.f32 %v680, %v229
    %v880 = vadd.f32 %v683, %v232
    %v881 = vadd.f32 %v686, %v235
    %v882 = vadd.f32 %v689, %v238
    %v883 = vadd.f32 %v692, %v193
    %v884 = vadd.f32 %v695, %v196
    %v885 = vadd.f32 %v698, %v199
    %v886 = vadd.f32 %v701, %v202
    %v887 = vadd.f32 %v704, %v205
    %v888 = vadd.f32 %v707, %v208
    %v889 = vadd.f32 %v710, %v211
    %v890 = vadd.f32 %v713, %v214
    %v891 = vadd.f32 %v716, %v217
    %v892 = vadd.f32 %v719, %v220
    %v893 = vadd.f32 %v722, %v223
    %v894 = vadd.f32 %v725, %v226
    %v895 = vadd.f32 %v728, %v229
    %v896 = vadd.f32 %v731, %v232
    %v897 = vadd.f32 %v734, %v235
    %v898 = vadd.f32 %v737, %v238
    %v899 = vadd.f32 %v740, %v193
    %v900 = vadd.f32 %v743, %v196
    %v901 = vadd.f32 %v746, %v199
    %v902 = vadd.f32 %v749, %v202
    %v903 = vadd.f32 %v752, %v205
    %v904 = vadd.f32 %v755, %v208
    %v905 = vadd.f32 %v758, %v211
    %v906 = vadd.f32 %v761, %v214
    %v907 = vadd.f32 %v764, %v217
    %v908 = vadd.f32 %v767, %v220
    %v909 = vadd.f32 %v770, %v223
    %v910 = vadd.f32 %v773, %v226
    %v911 = vadd.f32 %v776, %v229
    %v912 = vadd.f32 %v779, %v232
    %v913 = vadd.f32 %v782, %v235
    %v914 = vadd.f32 %v785, %v238
    %v915 = vtanh.pop %v787
    %v916 = vtanh.pop %v788
    %v917 = vtanh.pop %v789
    %v918 = vtanh.pop %v790
    %v919 = vtanh.pop %v791
    %v920 = vtanh.pop %v792
    %v921 = vtanh.pop %v793
    %v922 = vtanh.pop %v794
    %v923 = vtanh.pop %v795
    %v924 = vtanh.pop %v796
    %v925 = vtanh.pop %v797
    %v926 = vtanh.pop %v798
    %v927 = vtanh.pop %v799
    %v928 = vtanh.pop %v800
    %v929 = vtanh.pop %v801
    %v930 = vtanh.pop %v802
    %v931 = vtanh.pop %v803
    %v932 = vtanh.pop %v804
    %v933 = vtanh.pop %v805
    %v934 = vtanh.pop %v806
    %v935 = vtanh.pop %v807
    %v936 = vtanh.pop %v808
    %v937 = vtanh.pop %v809
    %v938 = vtanh.pop %v810
    %v939 = vtanh.pop %v811
    %v940 = vtanh.pop %v812
    %v941 = vtanh.pop %v813
    %v942 = vtanh.pop %v814
    %v943 = vtanh.pop %v815
    %v944 = vtanh.pop %v816
    %v945 = vtanh.pop %v817
    %v946 = vtanh.pop %v818
    %v947 = vtanh.pop %v819
    %v948 = vtanh.pop %v820
    %v949 = vtanh.pop %v821
    %v950 = vtanh.pop %v822
    %v951 = vtanh.pop %v823
    %v952 = vtanh.pop %v824
    %v953 = vtanh.pop %v825
    %v954 = vtanh.pop %v826
    %v955 = vtanh.pop %v827
    %v956 = vtanh.pop %v828
    %v957 = vtanh.pop %v829
    %v958 = vtanh.pop %v830
    %v959 = vtanh.pop %v831
    %v960 = vtanh.pop %v832
    %v961 = vtanh.pop %v833
    %v962 = vtanh.pop %v834
    %v963 = vtanh.pop %v835
    %v964 = vtanh.pop %v836
    %v965 = vtanh.pop %v837
    %v966 = vtanh.pop %v838
    %v967 = vtanh.pop %v839
    %v968 = vtanh.pop %v840
    %v969 = vtanh.pop %v841
    %v970 = vtanh.pop %v842
    %v971 = vtanh.pop %v843
    %v972 = vtanh.pop %v844
    %v973 = vtanh.pop %v845
    %v974 = vtanh.pop %v846
    %v975 = vtanh.pop %v847
    %v976 = vtanh.pop %v848
    %v977 = vtanh.pop %v849
    %v978 = vtanh.pop %v850
    %v979 = vtanh.pop %v851
    %v980 = vtanh.pop %v852
    %v981 = vtanh.pop %v853
    %v982 = vtanh.pop %v854
    %v983 = vtanh.pop %v855
    %v984 = vtanh.pop %v856
    %v985 = vtanh.pop %v857
    %v986 = vtanh.pop %v858
    %v987 = vtanh.pop %v859
    %v988 = vtanh.pop %v860
    %v989 = vtanh.pop %v861
    %v990 = vtanh.pop %v862
    %v991 = vtanh.pop %v863
    %v992 = vtanh.pop %v864
    %v993 = vtanh.pop %v865
    %v994 = vtanh.pop %v866
    %v995 = vtanh.pop %v867
    %v996 = vtanh.pop %v868
    %v997 = vtanh.pop %v869
    %v998 = vtanh.pop %v870
    %v999 = vtanh.pop %v871
    %v1000 = vtanh.pop %v872
    %v1001 = vtanh.pop %v873
    %v1002 = vtanh.pop %v874
    %v1003 = vtanh.pop %v875
    %v1004 = vtanh.pop %v876
    %v1005 = vtanh.pop %v877
    %v1006 = vtanh.pop %v878
    %v1007 = vtanh.pop %v879
    %v1008 = vtanh.pop %v880
    %v1009 = vtanh.pop %v881
    %v1010 = vtanh.pop %v882
    %v1011 = vtanh.pop %v883
    %v1012 = vtanh.pop %v884
    %v1013 = vtanh.pop %v885
    %v1014 = vtanh.pop %v886
    %v1015 = vtanh.pop %v887
    %v1016 = vtanh.pop %v888
    %v1017 = vtanh.pop %v889
    %v1018 = vtanh.pop %v890
    %v1019 = vtanh.pop %v891
    %v1020 = vtanh.pop %v892
    %v1021 = vtanh.pop %v893
    %v1022 = vtanh.pop %v894
    %v1023 = vtanh.pop %v895
    %v1024 = vtanh.pop %v896
    %v1025 = vtanh.pop %v897
    %v1026 = vtanh.pop %v898
    %v1027 = vtanh.pop %v899
    %v1028 = vtanh.pop %v900
    %v1029 = vtanh.pop %v901
    %v1030 = vtanh.pop %v902
    %v1031 = vtanh.pop %v903
    %v1032 = vtanh.pop %v904
    %v1033 = vtanh.pop %v905
    %v1034 = vtanh.pop %v906
    %v1035 = vtanh.pop %v907
    %v1036 = vtanh.pop %v908
    %v1037 = vtanh.pop %v909
    %v1038 = vtanh.pop %v910
    %v1039 = vtanh.pop %v911
    %v1040 = vtanh.pop %v912
    %v1041 = vtanh.pop %v913
    %v1042 = vtanh.pop %v914
    %v1044 = vperm.slane %v158, 0
    %v1046 = vmul.f32 %v915, %v1044
    %v1047 = vmul.f32 %v916, %v1044
    %v1048 = vmul.f32 %v917, %v1044
    %v1049 = vmul.f32 %v918, %v1044
    %v1050 = vmul.f32 %v919, %v1044
    %v1051 = vmul.f32 %v920, %v1044
    %v1052 = vmul.f32 %v921, %v1044
    %v1053 = vmul.f32 %v922, %v1044
    %v1054 = vmul.f32 %v923, %v1044
    %v1055 = vmul.f32 %v924, %v1044
    %v1056 = vmul.f32 %v925, %v1044
    %v1057 = vmul.f32 %v926, %v1044
    %v1058 = vmul.f32 %v927, %v1044
    %v1059 = vmul.f32 %v928, %v1044
    %v1060 = vmul.f32 %v929, %v1044
    %v1061 = vmul.f32 %v930, %v1044
    %v1062 = vmul.f32 %v931, %v1044
    %v1063 = vmul.f32 %v932, %v1044
    %v1064 = vmul.f32 %v933, %v1044
    %v1065 = vmul.f32 %v934, %v1044
    %v1066 = vmul.f32 %v935, %v1044
    %v1067 = vmul.f32 %v936, %v1044
    %v1068 = vmul.f32 %v937, %v1044
    %v1069 = vmul.f32 %v938, %v1044
    %v1070 = vmul.f32 %v939, %v1044
    %v1071 = vmul.f32 %v940, %v1044
    %v1072 = vmul.f32 %v941, %v1044
    %v1073 = vmul.f32 %v942, %v1044
    %v1074 = vmul.f32 %v943, %v1044
    %v1075 = vmul.f32 %v944, %v1044
    %v1076 = vmul.f32 %v945, %v1044
    %v1077 = vmul.f32 %v946, %v1044
    %v1078 = vmul.f32 %v947, %v1044
    %v1079 = vmul.f32 %v948, %v1044
    %v1080 = vmul.f32 %v949, %v1044
    %v1081 = vmul.f32 %v950, %v1044
    %v1082 = vmul.f32 %v951, %v1044
    %v1083 = vmul.f32 %v952, %v1044
    %v1084 = vmul.f32 %v953, %v1044
    %v1085 = vmul.f32 %v954, %v1044
    %v1086 = vmul.f32 %v955, %v1044
    %v1087 = vmul.f32 %v956, %v1044
    %v1088 = vmul.f32 %v957, %v1044
    %v1089 = vmul.f32 %v958, %v1044
    %v1090 = vmul.f32 %v959, %v1044
    %v1091 = vmul.f32 %v960, %v1044
    %v1092 = vmul.f32 %v961, %v1044
    %v1093 = vmul.f32 %v962, %v1044
    %v1094 = vmul.f32 %v963, %v1044
    %v1095 = vmul.f32 %v964, %v1044
    %v1096 = vmul.f32 %v965, %v1044
    %v1097 = vmul.f32 %v966, %v1044
    %v1098 = vmul.f32 %v967, %v1044
    %v1099 = vmul.f32 %v968, %v1044
    %v1100 = vmul.f32 %v969, %v1044
    %v1101 = vmul.f32 %v970, %v1044
    %v1102 = vmul.f32 %v971, %v1044
    %v1103 = vmul.f32 %v972, %v1044
    %v1104 = vmul.f32 %v973, %v1044
    %v1105 = vmul.f32 %v974, %v1044
    %v1106 = vmul.f32 %v975, %v1044
    %v1107 = vmul.f32 %v976, %v1044
    %v1108 = vmul.f32 %v977, %v1044
    %v1109 = vmul.f32 %v978, %v1044
    %v1110 = vmul.f32 %v979, %v1044
    %v1111 = vmul.f32 %v980, %v1044
    %v1112 = vmul.f32 %v981, %v1044
    %v1113 = vmul.f32 %v982, %v1044
    %v1114 = vmul.f32 %v983, %v1044
    %v1115 = vmul.f32 %v984, %v1044
    %v1116 = vmul.f32 %v985, %v1044
    %v1117 = vmul.f32 %v986, %v1044
    %v1118 = vmul.f32 %v987, %v1044
    %v1119 = vmul.f32 %v988, %v1044
    %v1120 = vmul.f32 %v989, %v1044
    %v1121 = vmul.f32 %v990, %v1044
    %v1122 = vmul.f32 %v991, %v1044
    %v1123 = vmul.f32 %v992, %v1044
    %v1124 = vmul.f32 %v993, %v1044
    %v1125 = vmul.f32 %v994, %v1044
    %v1126 = vmul.f32 %v995, %v1044
    %v1127 = vmul.f32 %v996, %v1044
    %v1128 = vmul.f32 %v997, %v1044
    %v1129 = vmul.f32 %v998, %v1044
    %v1130 = vmul.f32 %v999, %v1044
    %v1131 = vmul.f32 %v1000, %v1044
    %v1132 = vmul.f32 %v1001, %v1044
    %v1133 = vmul.f32 %v1002, %v1044
    %v1134 = vmul.f32 %v1003, %v1044
    %v1135 = vmul.f32 %v1004, %v1044
    %v1136 = vmul.f32 %v1005, %v1044
    %v1137 = vmul.f32 %v1006, %v1044
    %v1138 = vmul.f32 %v1007, %v1044
    %v1139 = vmul.f32 %v1008, %v1044
    %v1140 = vmul.f32 %v1009, %v1044
    %v1141 = vmul.f32 %v1010, %v1044
    %v1142 = vmul.f32 %v1011, %v1044
    %v1143 = vmul.f32 %v1012, %v1044
    %v1144 = vmul.f32 %v1013, %v1044
    %v1145 = vmul.f32 %v1014, %v1044
    %v1146 = vmul.f32 %v1015, %v1044
    %v1147 = vmul.f32 %v1016, %v1044
    %v1148 = vmul.f32 %v1017, %v1044
    %v1149 = vmul.f32 %v1018, %v1044
    %v1150 = vmul.f32 %v1019, %v1044
    %v1151 = vmul.f32 %v1020, %v1044
    %v1152 = vmul.f32 %v1021, %v1044
    %v1153 = vmul.f32 %v1022, %v1044
    %v1154 = vmul.f32 %v1023, %v1044
    %v1155 = vmul.f32 %v1024, %v1044
    %v1156 = vmul.f32 %v1025, %v1044
    %v1157 = vmul.f32 %v1026, %v1044
    %v1158 = vmul.f32 %v1027, %v1044
    %v1159 = vmul.f32 %v1028, %v1044
    %v1160 = vmul.f32 %v1029, %v1044
    %v1161 = vmul.f32 %v1030, %v1044
    %v1162 = vmul.f32 %v1031, %v1044
    %v1163 = vmul.f32 %v1032, %v1044
    %v1164 = vmul.f32 %v1033, %v1044
    %v1165 = vmul.f32 %v1034, %v1044
    %v1166 = vmul.f32 %v1035, %v1044
    %v1167 = vmul.f32 %v1036, %v1044
    %v1168 = vmul.f32 %v1037, %v1044
    %v1169 = vmul.f32 %v1038, %v1044
    %v1170 = vmul.f32 %v1039, %v1044
    %v1171 = vmul.f32 %v1040, %v1044
    %v1172 = vmul.f32 %v1041, %v1044
    %v1173 = vmul.f32 %v1042, %v1044
    %1174 = vadd.xlane.f32.xlu0 %v1046
    %v1175 = vpop.xlane.xlu0 %1174
    %1176 = vadd.xlane.f32.xlu0 %v1047
    %v1177 = vpop.xlane.xlu0 %1176
    %1178 = vadd.xlane.f32.xlu0 %v1048
    %v1179 = vpop.xlane.xlu0 %1178
    %1180 = vadd.xlane.f32.xlu0 %v1049
    %v1181 = vpop.xlane.xlu0 %1180
    %1182 = vadd.xlane.f32.xlu0 %v1050
    %v1183 = vpop.xlane.xlu0 %1182
    %1184 = vadd.xlane.f32.xlu0 %v1051
    %v1185 = vpop.xlane.xlu0 %1184
    %1186 = vadd.xlane.f32.xlu0 %v1052
    %v1187 = vpop.xlane.xlu0 %1186
    %1188 = vadd.xlane.f32.xlu0 %v1053
    %v1189 = vpop.xlane.xlu0 %1188
    %1190 = vadd.xlane.f32.xlu0 %v1054
    %v1191 = vpop.xlane.xlu0 %1190
    %1192 = vadd.xlane.f32.xlu0 %v1055
    %v1193 = vpop.xlane.xlu0 %1192
    %1194 = vadd.xlane.f32.xlu0 %v1056
    %v1195 = vpop.xlane.xlu0 %1194
    %1196 = vadd.xlane.f32.xlu0 %v1057
    %v1197 = vpop.xlane.xlu0 %1196
    %1198 = vadd.xlane.f32.xlu0 %v1058
    %v1199 = vpop.xlane.xlu0 %1198
    %1200 = vadd.xlane.f32.xlu0 %v1059
    %v1201 = vpop.xlane.xlu0 %1200
    %1202 = vadd.xlane.f32.xlu0 %v1060
    %v1203 = vpop.xlane.xlu0 %1202
    %1204 = vadd.xlane.f32.xlu0 %v1061
    %v1205 = vpop.xlane.xlu0 %1204
    %1206 = vadd.xlane.f32.xlu0 %v1062
    %v1207 = vpop.xlane.xlu0 %1206
    %1208 = vadd.xlane.f32.xlu0 %v1063
    %v1209 = vpop.xlane.xlu0 %1208
    %1210 = vadd.xlane.f32.xlu0 %v1064
    %v1211 = vpop.xlane.xlu0 %1210
    %1212 = vadd.xlane.f32.xlu0 %v1065
    %v1213 = vpop.xlane.xlu0 %1212
    %1214 = vadd.xlane.f32.xlu0 %v1066
    %v1215 = vpop.xlane.xlu0 %1214
    %1216 = vadd.xlane.f32.xlu0 %v1067
    %v1217 = vpop.xlane.xlu0 %1216
    %1218 = vadd.xlane.f32.xlu0 %v1068
    %v1219 = vpop.xlane.xlu0 %1218
    %1220 = vadd.xlane.f32.xlu0 %v1069
    %v1221 = vpop.xlane.xlu0 %1220
    %1222 = vadd.xlane.f32.xlu0 %v1070
    %v1223 = vpop.xlane.xlu0 %1222
    %1224 = vadd.xlane.f32.xlu0 %v1071
    %v1225 = vpop.xlane.xlu0 %1224
    %1226 = vadd.xlane.f32.xlu0 %v1072
    %v1227 = vpop.xlane.xlu0 %1226
    %1228 = vadd.xlane.f32.xlu0 %v1073
    %v1229 = vpop.xlane.xlu0 %1228
    %1230 = vadd.xlane.f32.xlu0 %v1074
    %v1231 = vpop.xlane.xlu0 %1230
    %1232 = vadd.xlane.f32.xlu0 %v1075
    %v1233 = vpop.xlane.xlu0 %1232
    %1234 = vadd.xlane.f32.xlu0 %v1076
    %v1235 = vpop.xlane.xlu0 %1234
    %1236 = vadd.xlane.f32.xlu0 %v1077
    %v1237 = vpop.xlane.xlu0 %1236
    %1238 = vadd.xlane.f32.xlu0 %v1078
    %v1239 = vpop.xlane.xlu0 %1238
    %1240 = vadd.xlane.f32.xlu0 %v1079
    %v1241 = vpop.xlane.xlu0 %1240
    %1242 = vadd.xlane.f32.xlu0 %v1080
    %v1243 = vpop.xlane.xlu0 %1242
    %1244 = vadd.xlane.f32.xlu0 %v1081
    %v1245 = vpop.xlane.xlu0 %1244
    %1246 = vadd.xlane.f32.xlu0 %v1082
    %v1247 = vpop.xlane.xlu0 %1246
    %1248 = vadd.xlane.f32.xlu0 %v1083
    %v1249 = vpop.xlane.xlu0 %1248
    %1250 = vadd.xlane.f32.xlu0 %v1084
    %v1251 = vpop.xlane.xlu0 %1250
    %1252 = vadd.xlane.f32.xlu0 %v1085
    %v1253 = vpop.xlane.xlu0 %1252
    %1254 = vadd.xlane.f32.xlu0 %v1086
    %v1255 = vpop.xlane.xlu0 %1254
    %1256 = vadd.xlane.f32.xlu0 %v1087
    %v1257 = vpop.xlane.xlu0 %1256
    %1258 = vadd.xlane.f32.xlu0 %v1088
    %v1259 = vpop.xlane.xlu0 %1258
    %1260 = vadd.xlane.f32.xlu0 %v1089
    %v1261 = vpop.xlane.xlu0 %1260
    %1262 = vadd.xlane.f32.xlu0 %v1090
    %v1263 = vpop.xlane.xlu0 %1262
    %1264 = vadd.xlane.f32.xlu0 %v1091
    %v1265 = vpop.xlane.xlu0 %1264
    %1266 = vadd.xlane.f32.xlu0 %v1092
    %v1267 = vpop.xlane.xlu0 %1266
    %1268 = vadd.xlane.f32.xlu0 %v1093
    %v1269 = vpop.xlane.xlu0 %1268
    %1270 = vadd.xlane.f32.xlu0 %v1094
    %v1271 = vpop.xlane.xlu0 %1270
    %1272 = vadd.xlane.f32.xlu0 %v1095
    %v1273 = vpop.xlane.xlu0 %1272
    %1274 = vadd.xlane.f32.xlu0 %v1096
    %v1275 = vpop.xlane.xlu0 %1274
    %1276 = vadd.xlane.f32.xlu0 %v1097
    %v1277 = vpop.xlane.xlu0 %1276
    %1278 = vadd.xlane.f32.xlu0 %v1098
    %v1279 = vpop.xlane.xlu0 %1278
    %1280 = vadd.xlane.f32.xlu0 %v1099
    %v1281 = vpop.xlane.xlu0 %1280
    %1282 = vadd.xlane.f32.xlu0 %v1100
    %v1283 = vpop.xlane.xlu0 %1282
    %1284 = vadd.xlane.f32.xlu0 %v1101
    %v1285 = vpop.xlane.xlu0 %1284
    %1286 = vadd.xlane.f32.xlu0 %v1102
    %v1287 = vpop.xlane.xlu0 %1286
    %1288 = vadd.xlane.f32.xlu0 %v1103
    %v1289 = vpop.xlane.xlu0 %1288
    %1290 = vadd.xlane.f32.xlu0 %v1104
    %v1291 = vpop.xlane.xlu0 %1290
    %1292 = vadd.xlane.f32.xlu0 %v1105
    %v1293 = vpop.xlane.xlu0 %1292
    %1294 = vadd.xlane.f32.xlu0 %v1106
    %v1295 = vpop.xlane.xlu0 %1294
    %1296 = vadd.xlane.f32.xlu0 %v1107
    %v1297 = vpop.xlane.xlu0 %1296
    %1298 = vadd.xlane.f32.xlu0 %v1108
    %v1299 = vpop.xlane.xlu0 %1298
    %1300 = vadd.xlane.f32.xlu0 %v1109
    %v1301 = vpop.xlane.xlu0 %1300
    %1302 = vadd.xlane.f32.xlu0 %v1110
    %v1303 = vpop.xlane.xlu0 %1302
    %1304 = vadd.xlane.f32.xlu0 %v1111
    %v1305 = vpop.xlane.xlu0 %1304
    %1306 = vadd.xlane.f32.xlu0 %v1112
    %v1307 = vpop.xlane.xlu0 %1306
    %1308 = vadd.xlane.f32.xlu0 %v1113
    %v1309 = vpop.xlane.xlu0 %1308
    %1310 = vadd.xlane.f32.xlu0 %v1114
    %v1311 = vpop.xlane.xlu0 %1310
    %1312 = vadd.xlane.f32.xlu0 %v1115
    %v1313 = vpop.xlane.xlu0 %1312
    %1314 = vadd.xlane.f32.xlu0 %v1116
    %v1315 = vpop.xlane.xlu0 %1314
    %1316 = vadd.xlane.f32.xlu0 %v1117
    %v1317 = vpop.xlane.xlu0 %1316
    %1318 = vadd.xlane.f32.xlu0 %v1118
    %v1319 = vpop.xlane.xlu0 %1318
    %1320 = vadd.xlane.f32.xlu0 %v1119
    %v1321 = vpop.xlane.xlu0 %1320
    %1322 = vadd.xlane.f32.xlu0 %v1120
    %v1323 = vpop.xlane.xlu0 %1322
    %1324 = vadd.xlane.f32.xlu0 %v1121
    %v1325 = vpop.xlane.xlu0 %1324
    %1326 = vadd.xlane.f32.xlu0 %v1122
    %v1327 = vpop.xlane.xlu0 %1326
    %1328 = vadd.xlane.f32.xlu0 %v1123
    %v1329 = vpop.xlane.xlu0 %1328
    %1330 = vadd.xlane.f32.xlu0 %v1124
    %v1331 = vpop.xlane.xlu0 %1330
    %1332 = vadd.xlane.f32.xlu0 %v1125
    %v1333 = vpop.xlane.xlu0 %1332
    %1334 = vadd.xlane.f32.xlu0 %v1126
    %v1335 = vpop.xlane.xlu0 %1334
    %1336 = vadd.xlane.f32.xlu0 %v1127
    %v1337 = vpop.xlane.xlu0 %1336
    %1338 = vadd.xlane.f32.xlu0 %v1128
    %v1339 = vpop.xlane.xlu0 %1338
    %1340 = vadd.xlane.f32.xlu0 %v1129
    %v1341 = vpop.xlane.xlu0 %1340
    %1342 = vadd.xlane.f32.xlu0 %v1130
    %v1343 = vpop.xlane.xlu0 %1342
    %1344 = vadd.xlane.f32.xlu0 %v1131
    %v1345 = vpop.xlane.xlu0 %1344
    %1346 = vadd.xlane.f32.xlu0 %v1132
    %v1347 = vpop.xlane.xlu0 %1346
    %1348 = vadd.xlane.f32.xlu0 %v1133
    %v1349 = vpop.xlane.xlu0 %1348
    %1350 = vadd.xlane.f32.xlu0 %v1134
    %v1351 = vpop.xlane.xlu0 %1350
    %1352 = vadd.xlane.f32.xlu0 %v1135
    %v1353 = vpop.xlane.xlu0 %1352
    %1354 = vadd.xlane.f32.xlu0 %v1136
    %v1355 = vpop.xlane.xlu0 %1354
    %1356 = vadd.xlane.f32.xlu0 %v1137
    %v1357 = vpop.xlane.xlu0 %1356
    %1358 = vadd.xlane.f32.xlu0 %v1138
    %v1359 = vpop.xlane.xlu0 %1358
    %1360 = vadd.xlane.f32.xlu0 %v1139
    %v1361 = vpop.xlane.xlu0 %1360
    %1362 = vadd.xlane.f32.xlu0 %v1140
    %v1363 = vpop.xlane.xlu0 %1362
    %1364 = vadd.xlane.f32.xlu0 %v1141
    %v1365 = vpop.xlane.xlu0 %1364
    %1366 = vadd.xlane.f32.xlu0 %v1142
    %v1367 = vpop.xlane.xlu0 %1366
    %1368 = vadd.xlane.f32.xlu0 %v1143
    %v1369 = vpop.xlane.xlu0 %1368
    %1370 = vadd.xlane.f32.xlu0 %v1144
    %v1371 = vpop.xlane.xlu0 %1370
    %1372 = vadd.xlane.f32.xlu0 %v1145
    %v1373 = vpop.xlane.xlu0 %1372
    %1374 = vadd.xlane.f32.xlu0 %v1146
    %v1375 = vpop.xlane.xlu0 %1374
    %1376 = vadd.xlane.f32.xlu0 %v1147
    %v1377 = vpop.xlane.xlu0 %1376
    %1378 = vadd.xlane.f32.xlu0 %v1148
    %v1379 = vpop.xlane.xlu0 %1378
    %1380 = vadd.xlane.f32.xlu0 %v1149
    %v1381 = vpop.xlane.xlu0 %1380
    %1382 = vadd.xlane.f32.xlu0 %v1150
    %v1383 = vpop.xlane.xlu0 %1382
    %1384 = vadd.xlane.f32.xlu0 %v1151
    %v1385 = vpop.xlane.xlu0 %1384
    %1386 = vadd.xlane.f32.xlu0 %v1152
    %v1387 = vpop.xlane.xlu0 %1386
    %1388 = vadd.xlane.f32.xlu0 %v1153
    %v1389 = vpop.xlane.xlu0 %1388
    %1390 = vadd.xlane.f32.xlu0 %v1154
    %v1391 = vpop.xlane.xlu0 %1390
    %1392 = vadd.xlane.f32.xlu0 %v1155
    %v1393 = vpop.xlane.xlu0 %1392
    %1394 = vadd.xlane.f32.xlu0 %v1156
    %v1395 = vpop.xlane.xlu0 %1394
    %1396 = vadd.xlane.f32.xlu0 %v1157
    %v1397 = vpop.xlane.xlu0 %1396
    %1398 = vadd.xlane.f32.xlu0 %v1158
    %v1399 = vpop.xlane.xlu0 %1398
    %1400 = vadd.xlane.f32.xlu0 %v1159
    %v1401 = vpop.xlane.xlu0 %1400
    %1402 = vadd.xlane.f32.xlu0 %v1160
    %v1403 = vpop.xlane.xlu0 %1402
    %1404 = vadd.xlane.f32.xlu0 %v1161
    %v1405 = vpop.xlane.xlu0 %1404
    %1406 = vadd.xlane.f32.xlu0 %v1162
    %v1407 = vpop.xlane.xlu0 %1406
    %1408 = vadd.xlane.f32.xlu0 %v1163
    %v1409 = vpop.xlane.xlu0 %1408
    %1410 = vadd.xlane.f32.xlu0 %v1164
    %v1411 = vpop.xlane.xlu0 %1410
    %1412 = vadd.xlane.f32.xlu0 %v1165
    %v1413 = vpop.xlane.xlu0 %1412
    %1414 = vadd.xlane.f32.xlu0 %v1166
    %v1415 = vpop.xlane.xlu0 %1414
    %1416 = vadd.xlane.f32.xlu0 %v1167
    %v1417 = vpop.xlane.xlu0 %1416
    %1418 = vadd.xlane.f32.xlu0 %v1168
    %v1419 = vpop.xlane.xlu0 %1418
    %1420 = vadd.xlane.f32.xlu0 %v1169
    %v1421 = vpop.xlane.xlu0 %1420
    %1422 = vadd.xlane.f32.xlu0 %v1170
    %v1423 = vpop.xlane.xlu0 %1422
    %1424 = vadd.xlane.f32.xlu0 %v1171
    %v1425 = vpop.xlane.xlu0 %1424
    %1426 = vadd.xlane.f32.xlu0 %v1172
    %v1427 = vpop.xlane.xlu0 %1426
    %1428 = vadd.xlane.f32.xlu0 %v1173
    %v1429 = vpop.xlane.xlu0 %1428
    %v1430 = vld [vmem:[#allocation5] sm:$0xff]
    %v1432 = vperm.slane %v1430, 0
    %v1433 = vlaneseq
    %v1434 = vshrl.u32 %v1433, 7
    %1436 = vset.pattern.permute.xlu0 %v1434
    %1437 = vperm.xlu0 %1436, %v1432
    %v1438 = vpop.permute.xlu0 %1437
    %v1439 = vlaneseq
    %v1440 = vshrl.u32 %v1439, 7
    %v1441 = vadd.s32 %v1440, 8
    %1442 = vset.pattern.permute.xlu0 %v1441
    %1443 = vperm.xlu0 %1442, %v1432
    %v1444 = vpop.permute.xlu0 %1443
    %v1445 = vlaneseq
    %v1446 = vshrl.u32 %v1445, 7
    %v1447 = vadd.s32 %v1446, 16
    %1448 = vset.pattern.permute.xlu0 %v1447
    %1449 = vperm.xlu0 %1448, %v1432
    %v1450 = vpop.permute.xlu0 %1449
    %v1451 = vlaneseq
    %v1452 = vshrl.u32 %v1451, 7
    %v1453 = vadd.s32 %v1452, 24
    %1454 = vset.pattern.permute.xlu0 %v1453
    %1455 = vperm.xlu0 %1454, %v1432
    %v1456 = vpop.permute.xlu0 %1455
    %v1457 = vlaneseq
    %v1458 = vshrl.u32 %v1457, 7
    %v1459 = vadd.s32 %v1458, 32
    %1460 = vset.pattern.permute.xlu0 %v1459
    %1461 = vperm.xlu0 %1460, %v1432
    %v1462 = vpop.permute.xlu0 %1461
    %v1463 = vlaneseq
    %v1464 = vshrl.u32 %v1463, 7
    %v1465 = vadd.s32 %v1464, 40
    %1466 = vset.pattern.permute.xlu0 %v1465
    %1467 = vperm.xlu0 %1466, %v1432
    %v1468 = vpop.permute.xlu0 %1467
    %v1469 = vlaneseq
    %v1470 = vshrl.u32 %v1469, 7
    %v1471 = vadd.s32 %v1470, 48
    %1472 = vset.pattern.permute.xlu0 %v1471
    %1473 = vperm.xlu0 %1472, %v1432
    %v1474 = vpop.permute.xlu0 %1473
    %v1475 = vlaneseq
    %v1476 = vshrl.u32 %v1475, 7
    %v1477 = vadd.s32 %v1476, 56
    %1478 = vset.pattern.permute.xlu0 %v1477
    %1479 = vperm.xlu0 %1478, %v1432
    %v1480 = vpop.permute.xlu0 %1479
    %v1481 = vlaneseq
    %v1482 = vshrl.u32 %v1481, 7
    %v1483 = vadd.s32 %v1482, 64
    %1484 = vset.pattern.permute.xlu0 %v1483
    %1485 = vperm.xlu0 %1484, %v1432
    %v1486 = vpop.permute.xlu0 %1485
    %v1487 = vlaneseq
    %v1488 = vshrl.u32 %v1487, 7
    %v1489 = vadd.s32 %v1488, 72
    %1490 = vset.pattern.permute.xlu0 %v1489
    %1491 = vperm.xlu0 %1490, %v1432
    %v1492 = vpop.permute.xlu0 %1491
    %v1493 = vlaneseq
    %v1494 = vshrl.u32 %v1493, 7
    %v1495 = vadd.s32 %v1494, 80
    %1496 = vset.pattern.permute.xlu0 %v1495
    %1497 = vperm.xlu0 %1496, %v1432
    %v1498 = vpop.permute.xlu0 %1497
    %v1499 = vlaneseq
    %v1500 = vshrl.u32 %v1499, 7
    %v1501 = vadd.s32 %v1500, 88
    %1502 = vset.pattern.permute.xlu0 %v1501
    %1503 = vperm.xlu0 %1502, %v1432
    %v1504 = vpop.permute.xlu0 %1503
    %v1505 = vlaneseq
    %v1506 = vshrl.u32 %v1505, 7
    %v1507 = vadd.s32 %v1506, 96
    %1508 = vset.pattern.permute.xlu0 %v1507
    %1509 = vperm.xlu0 %1508, %v1432
    %v1510 = vpop.permute.xlu0 %1509
    %v1511 = vlaneseq
    %v1512 = vshrl.u32 %v1511, 7
    %v1513 = vadd.s32 %v1512, 104
    %1514 = vset.pattern.permute.xlu0 %v1513
    %1515 = vperm.xlu0 %1514, %v1432
    %v1516 = vpop.permute.xlu0 %1515
    %v1517 = vlaneseq
    %v1518 = vshrl.u32 %v1517, 7
    %v1519 = vadd.s32 %v1518, 112
    %1520 = vset.pattern.permute.xlu0 %v1519
    %1521 = vperm.xlu0 %1520, %v1432
    %v1522 = vpop.permute.xlu0 %1521
    %v1523 = vlaneseq
    %v1524 = vshrl.u32 %v1523, 7
    %v1525 = vadd.s32 %v1524, 120
    %1526 = vset.pattern.permute.xlu0 %v1525
    %1527 = vperm.xlu0 %1526, %v1432
    %v1528 = vpop.permute.xlu0 %1527
    %v1529 = vperm.slane %v1430, 1
    %v1530 = vlaneseq
    %v1531 = vshrl.u32 %v1530, 7
    %1533 = vset.pattern.permute.xlu0 %v1531
    %1534 = vperm.xlu0 %1533, %v1529
    %v1535 = vpop.permute.xlu0 %1534
    %v1536 = vlaneseq
    %v1537 = vshrl.u32 %v1536, 7
    %v1538 = vadd.s32 %v1537, 8
    %1539 = vset.pattern.permute.xlu0 %v1538
    %1540 = vperm.xlu0 %1539, %v1529
    %v1541 = vpop.permute.xlu0 %1540
    %v1542 = vlaneseq
    %v1543 = vshrl.u32 %v1542, 7
    %v1544 = vadd.s32 %v1543, 16
    %1545 = vset.pattern.permute.xlu0 %v1544
    %1546 = vperm.xlu0 %1545, %v1529
    %v1547 = vpop.permute.xlu0 %1546
    %v1548 = vlaneseq
    %v1549 = vshrl.u32 %v1548, 7
    %v1550 = vadd.s32 %v1549, 24
    %1551 = vset.pattern.permute.xlu0 %v1550
    %1552 = vperm.xlu0 %1551, %v1529
    %v1553 = vpop.permute.xlu0 %1552
    %v1554 = vlaneseq
    %v1555 = vshrl.u32 %v1554, 7
    %v1556 = vadd.s32 %v1555, 32
    %1557 = vset.pattern.permute.xlu0 %v1556
    %1558 = vperm.xlu0 %1557, %v1529
    %v1559 = vpop.permute.xlu0 %1558
    %v1560 = vlaneseq
    %v1561 = vshrl.u32 %v1560, 7
    %v1562 = vadd.s32 %v1561, 40
    %1563 = vset.pattern.permute.xlu0 %v1562
    %1564 = vperm.xlu0 %1563, %v1529
    %v1565 = vpop.permute.xlu0 %1564
    %v1566 = vlaneseq
    %v1567 = vshrl.u32 %v1566, 7
    %v1568 = vadd.s32 %v1567, 48
    %1569 = vset.pattern.permute.xlu0 %v1568
    %1570 = vperm.xlu0 %1569, %v1529
    %v1571 = vpop.permute.xlu0 %1570
    %v1572 = vlaneseq
    %v1573 = vshrl.u32 %v1572, 7
    %v1574 = vadd.s32 %v1573, 56
    %1575 = vset.pattern.permute.xlu0 %v1574
    %1576 = vperm.xlu0 %1575, %v1529
    %v1577 = vpop.permute.xlu0 %1576
    %v1578 = vlaneseq
    %v1579 = vshrl.u32 %v1578, 7
    %v1580 = vadd.s32 %v1579, 64
    %1581 = vset.pattern.permute.xlu0 %v1580
    %1582 = vperm.xlu0 %1581, %v1529
    %v1583 = vpop.permute.xlu0 %1582
    %v1584 = vlaneseq
    %v1585 = vshrl.u32 %v1584, 7
    %v1586 = vadd.s32 %v1585, 72
    %1587 = vset.pattern.permute.xlu0 %v1586
    %1588 = vperm.xlu0 %1587, %v1529
    %v1589 = vpop.permute.xlu0 %1588
    %v1590 = vlaneseq
    %v1591 = vshrl.u32 %v1590, 7
    %v1592 = vadd.s32 %v1591, 80
    %1593 = vset.pattern.permute.xlu0 %v1592
    %1594 = vperm.xlu0 %1593, %v1529
    %v1595 = vpop.permute.xlu0 %1594
    %v1596 = vlaneseq
    %v1597 = vshrl.u32 %v1596, 7
    %v1598 = vadd.s32 %v1597, 88
    %1599 = vset.pattern.permute.xlu0 %v1598
    %1600 = vperm.xlu0 %1599, %v1529
    %v1601 = vpop.permute.xlu0 %1600
    %v1602 = vlaneseq
    %v1603 = vshrl.u32 %v1602, 7
    %v1604 = vadd.s32 %v1603, 96
    %1605 = vset.pattern.permute.xlu0 %v1604
    %1606 = vperm.xlu0 %1605, %v1529
    %v1607 = vpop.permute.xlu0 %1606
    %v1608 = vlaneseq
    %v1609 = vshrl.u32 %v1608, 7
    %v1610 = vadd.s32 %v1609, 104
    %1611 = vset.pattern.permute.xlu0 %v1610
    %1612 = vperm.xlu0 %1611, %v1529
    %v1613 = vpop.permute.xlu0 %1612
    %v1614 = vlaneseq
    %v1615 = vshrl.u32 %v1614, 7
    %v1616 = vadd.s32 %v1615, 112
    %1617 = vset.pattern.permute.xlu0 %v1616
    %1618 = vperm.xlu0 %1617, %v1529
    %v1619 = vpop.permute.xlu0 %1618
    %v1620 = vlaneseq
    %v1621 = vshrl.u32 %v1620, 7
    %v1622 = vadd.s32 %v1621, 120
    %1623 = vset.pattern.permute.xlu0 %v1622
    %1624 = vperm.xlu0 %1623, %v1529
    %v1625 = vpop.permute.xlu0 %1624
    %v1626 = vperm.slane %v1430, 2
    %v1627 = vlaneseq
    %v1628 = vshrl.u32 %v1627, 7
    %1630 = vset.pattern.permute.xlu0 %v1628
    %1631 = vperm.xlu0 %1630, %v1626
    %v1632 = vpop.permute.xlu0 %1631
    %v1633 = vlaneseq
    %v1634 = vshrl.u32 %v1633, 7
    %v1635 = vadd.s32 %v1634, 8
    %1636 = vset.pattern.permute.xlu0 %v1635
    %1637 = vperm.xlu0 %1636, %v1626
    %v1638 = vpop.permute.xlu0 %1637
    %v1639 = vlaneseq
    %v1640 = vshrl.u32 %v1639, 7
    %v1641 = vadd.s32 %v1640, 16
    %1642 = vset.pattern.permute.xlu0 %v1641
    %1643 = vperm.xlu0 %1642, %v1626
    %v1644 = vpop.permute.xlu0 %1643
    %v1645 = vlaneseq
    %v1646 = vshrl.u32 %v1645, 7
    %v1647 = vadd.s32 %v1646, 24
    %1648 = vset.pattern.permute.xlu0 %v1647
    %1649 = vperm.xlu0 %1648, %v1626
    %v1650 = vpop.permute.xlu0 %1649
    %v1651 = vlaneseq
    %v1652 = vshrl.u32 %v1651, 7
    %v1653 = vadd.s32 %v1652, 32
    %1654 = vset.pattern.permute.xlu0 %v1653
    %1655 = vperm.xlu0 %1654, %v1626
    %v1656 = vpop.permute.xlu0 %1655
    %v1657 = vlaneseq
    %v1658 = vshrl.u32 %v1657, 7
    %v1659 = vadd.s32 %v1658, 40
    %1660 = vset.pattern.permute.xlu0 %v1659
    %1661 = vperm.xlu0 %1660, %v1626
    %v1662 = vpop.permute.xlu0 %1661
    %v1663 = vlaneseq
    %v1664 = vshrl.u32 %v1663, 7
    %v1665 = vadd.s32 %v1664, 48
    %1666 = vset.pattern.permute.xlu0 %v1665
    %1667 = vperm.xlu0 %1666, %v1626
    %v1668 = vpop.permute.xlu0 %1667
    %v1669 = vlaneseq
    %v1670 = vshrl.u32 %v1669, 7
    %v1671 = vadd.s32 %v1670, 56
    %1672 = vset.pattern.permute.xlu0 %v1671
    %1673 = vperm.xlu0 %1672, %v1626
    %v1674 = vpop.permute.xlu0 %1673
    %v1675 = vlaneseq
    %v1676 = vshrl.u32 %v1675, 7
    %v1677 = vadd.s32 %v1676, 64
    %1678 = vset.pattern.permute.xlu0 %v1677
    %1679 = vperm.xlu0 %1678, %v1626
    %v1680 = vpop.permute.xlu0 %1679
    %v1681 = vlaneseq
    %v1682 = vshrl.u32 %v1681, 7
    %v1683 = vadd.s32 %v1682, 72
    %1684 = vset.pattern.permute.xlu0 %v1683
    %1685 = vperm.xlu0 %1684, %v1626
    %v1686 = vpop.permute.xlu0 %1685
    %v1687 = vlaneseq
    %v1688 = vshrl.u32 %v1687, 7
    %v1689 = vadd.s32 %v1688, 80
    %1690 = vset.pattern.permute.xlu0 %v1689
    %1691 = vperm.xlu0 %1690, %v1626
    %v1692 = vpop.permute.xlu0 %1691
    %v1693 = vlaneseq
    %v1694 = vshrl.u32 %v1693, 7
    %v1695 = vadd.s32 %v1694, 88
    %1696 = vset.pattern.permute.xlu0 %v1695
    %1697 = vperm.xlu0 %1696, %v1626
    %v1698 = vpop.permute.xlu0 %1697
    %v1699 = vlaneseq
    %v1700 = vshrl.u32 %v1699, 7
    %v1701 = vadd.s32 %v1700, 96
    %1702 = vset.pattern.permute.xlu0 %v1701
    %1703 = vperm.xlu0 %1702, %v1626
    %v1704 = vpop.permute.xlu0 %1703
    %v1705 = vlaneseq
    %v1706 = vshrl.u32 %v1705, 7
    %v1707 = vadd.s32 %v1706, 104
    %1708 = vset.pattern.permute.xlu0 %v1707
    %1709 = vperm.xlu0 %1708, %v1626
    %v1710 = vpop.permute.xlu0 %1709
    %v1711 = vlaneseq
    %v1712 = vshrl.u32 %v1711, 7
    %v1713 = vadd.s32 %v1712, 112
    %1714 = vset.pattern.permute.xlu0 %v1713
    %1715 = vperm.xlu0 %1714, %v1626
    %v1716 = vpop.permute.xlu0 %1715
    %v1717 = vlaneseq
    %v1718 = vshrl.u32 %v1717, 7
    %v1719 = vadd.s32 %v1718, 120
    %1720 = vset.pattern.permute.xlu0 %v1719
    %1721 = vperm.xlu0 %1720, %v1626
    %v1722 = vpop.permute.xlu0 %1721
    %v1723 = vperm.slane %v1430, 3
    %v1724 = vlaneseq
    %v1725 = vshrl.u32 %v1724, 7
    %1727 = vset.pattern.permute.xlu0 %v1725
    %1728 = vperm.xlu0 %1727, %v1723
    %v1729 = vpop.permute.xlu0 %1728
    %v1730 = vlaneseq
    %v1731 = vshrl.u32 %v1730, 7
    %v1732 = vadd.s32 %v1731, 8
    %1733 = vset.pattern.permute.xlu0 %v1732
    %1734 = vperm.xlu0 %1733, %v1723
    %v1735 = vpop.permute.xlu0 %1734
    %v1736 = vlaneseq
    %v1737 = vshrl.u32 %v1736, 7
    %v1738 = vadd.s32 %v1737, 16
    %1739 = vset.pattern.permute.xlu0 %v1738
    %1740 = vperm.xlu0 %1739, %v1723
    %v1741 = vpop.permute.xlu0 %1740
    %v1742 = vlaneseq
    %v1743 = vshrl.u32 %v1742, 7
    %v1744 = vadd.s32 %v1743, 24
    %1745 = vset.pattern.permute.xlu0 %v1744
    %1746 = vperm.xlu0 %1745, %v1723
    %v1747 = vpop.permute.xlu0 %1746
    %v1748 = vlaneseq
    %v1749 = vshrl.u32 %v1748, 7
    %v1750 = vadd.s32 %v1749, 32
    %1751 = vset.pattern.permute.xlu0 %v1750
    %1752 = vperm.xlu0 %1751, %v1723
    %v1753 = vpop.permute.xlu0 %1752
    %v1754 = vlaneseq
    %v1755 = vshrl.u32 %v1754, 7
    %v1756 = vadd.s32 %v1755, 40
    %1757 = vset.pattern.permute.xlu0 %v1756
    %1758 = vperm.xlu0 %1757, %v1723
    %v1759 = vpop.permute.xlu0 %1758
    %v1760 = vlaneseq
    %v1761 = vshrl.u32 %v1760, 7
    %v1762 = vadd.s32 %v1761, 48
    %1763 = vset.pattern.permute.xlu0 %v1762
    %1764 = vperm.xlu0 %1763, %v1723
    %v1765 = vpop.permute.xlu0 %1764
    %v1766 = vlaneseq
    %v1767 = vshrl.u32 %v1766, 7
    %v1768 = vadd.s32 %v1767, 56
    %1769 = vset.pattern.permute.xlu0 %v1768
    %1770 = vperm.xlu0 %1769, %v1723
    %v1771 = vpop.permute.xlu0 %1770
    %v1772 = vlaneseq
    %v1773 = vshrl.u32 %v1772, 7
    %v1774 = vadd.s32 %v1773, 64
    %1775 = vset.pattern.permute.xlu0 %v1774
    %1776 = vperm.xlu0 %1775, %v1723
    %v1777 = vpop.permute.xlu0 %1776
    %v1778 = vlaneseq
    %v1779 = vshrl.u32 %v1778, 7
    %v1780 = vadd.s32 %v1779, 72
    %1781 = vset.pattern.permute.xlu0 %v1780
    %1782 = vperm.xlu0 %1781, %v1723
    %v1783 = vpop.permute.xlu0 %1782
    %v1784 = vlaneseq
    %v1785 = vshrl.u32 %v1784, 7
    %v1786 = vadd.s32 %v1785, 80
    %1787 = vset.pattern.permute.xlu0 %v1786
    %1788 = vperm.xlu0 %1787, %v1723
    %v1789 = vpop.permute.xlu0 %1788
    %v1790 = vlaneseq
    %v1791 = vshrl.u32 %v1790, 7
    %v1792 = vadd.s32 %v1791, 88
    %1793 = vset.pattern.permute.xlu0 %v1792
    %1794 = vperm.xlu0 %1793, %v1723
    %v1795 = vpop.permute.xlu0 %1794
    %v1796 = vlaneseq
    %v1797 = vshrl.u32 %v1796, 7
    %v1798 = vadd.s32 %v1797, 96
    %1799 = vset.pattern.permute.xlu0 %v1798
    %1800 = vperm.xlu0 %1799, %v1723
    %v1801 = vpop.permute.xlu0 %1800
    %v1802 = vlaneseq
    %v1803 = vshrl.u32 %v1802, 7
    %v1804 = vadd.s32 %v1803, 104
    %1805 = vset.pattern.permute.xlu0 %v1804
    %1806 = vperm.xlu0 %1805, %v1723
    %v1807 = vpop.permute.xlu0 %1806
    %v1808 = vlaneseq
    %v1809 = vshrl.u32 %v1808, 7
    %v1810 = vadd.s32 %v1809, 112
    %1811 = vset.pattern.permute.xlu0 %v1810
    %1812 = vperm.xlu0 %1811, %v1723
    %v1813 = vpop.permute.xlu0 %1812
    %v1814 = vlaneseq
    %v1815 = vshrl.u32 %v1814, 7
    %v1816 = vadd.s32 %v1815, 120
    %1817 = vset.pattern.permute.xlu0 %v1816
    %1818 = vperm.xlu0 %1817, %v1723
    %v1819 = vpop.permute.xlu0 %1818
    %v1820 = vperm.slane %v1430, 4
    %v1821 = vlaneseq
    %v1822 = vshrl.u32 %v1821, 7
    %1824 = vset.pattern.permute.xlu0 %v1822
    %1825 = vperm.xlu0 %1824, %v1820
    %v1826 = vpop.permute.xlu0 %1825
    %v1827 = vlaneseq
    %v1828 = vshrl.u32 %v1827, 7
    %v1829 = vadd.s32 %v1828, 8
    %1830 = vset.pattern.permute.xlu0 %v1829
    %1831 = vperm.xlu0 %1830, %v1820
    %v1832 = vpop.permute.xlu0 %1831
    %v1833 = vlaneseq
    %v1834 = vshrl.u32 %v1833, 7
    %v1835 = vadd.s32 %v1834, 16
    %1836 = vset.pattern.permute.xlu0 %v1835
    %1837 = vperm.xlu0 %1836, %v1820
    %v1838 = vpop.permute.xlu0 %1837
    %v1839 = vlaneseq
    %v1840 = vshrl.u32 %v1839, 7
    %v1841 = vadd.s32 %v1840, 24
    %1842 = vset.pattern.permute.xlu0 %v1841
    %1843 = vperm.xlu0 %1842, %v1820
    %v1844 = vpop.permute.xlu0 %1843
    %v1845 = vlaneseq
    %v1846 = vshrl.u32 %v1845, 7
    %v1847 = vadd.s32 %v1846, 32
    %1848 = vset.pattern.permute.xlu0 %v1847
    %1849 = vperm.xlu0 %1848, %v1820
    %v1850 = vpop.permute.xlu0 %1849
    %v1851 = vlaneseq
    %v1852 = vshrl.u32 %v1851, 7
    %v1853 = vadd.s32 %v1852, 40
    %1854 = vset.pattern.permute.xlu0 %v1853
    %1855 = vperm.xlu0 %1854, %v1820
    %v1856 = vpop.permute.xlu0 %1855
    %v1857 = vlaneseq
    %v1858 = vshrl.u32 %v1857, 7
    %v1859 = vadd.s32 %v1858, 48
    %1860 = vset.pattern.permute.xlu0 %v1859
    %1861 = vperm.xlu0 %1860, %v1820
    %v1862 = vpop.permute.xlu0 %1861
    %v1863 = vlaneseq
    %v1864 = vshrl.u32 %v1863, 7
    %v1865 = vadd.s32 %v1864, 56
    %1866 = vset.pattern.permute.xlu0 %v1865
    %1867 = vperm.xlu0 %1866, %v1820
    %v1868 = vpop.permute.xlu0 %1867
    %v1869 = vlaneseq
    %v1870 = vshrl.u32 %v1869, 7
    %v1871 = vadd.s32 %v1870, 64
    %1872 = vset.pattern.permute.xlu0 %v1871
    %1873 = vperm.xlu0 %1872, %v1820
    %v1874 = vpop.permute.xlu0 %1873
    %v1875 = vlaneseq
    %v1876 = vshrl.u32 %v1875, 7
    %v1877 = vadd.s32 %v1876, 72
    %1878 = vset.pattern.permute.xlu0 %v1877
    %1879 = vperm.xlu0 %1878, %v1820
    %v1880 = vpop.permute.xlu0 %1879
    %v1881 = vlaneseq
    %v1882 = vshrl.u32 %v1881, 7
    %v1883 = vadd.s32 %v1882, 80
    %1884 = vset.pattern.permute.xlu0 %v1883
    %1885 = vperm.xlu0 %1884, %v1820
    %v1886 = vpop.permute.xlu0 %1885
    %v1887 = vlaneseq
    %v1888 = vshrl.u32 %v1887, 7
    %v1889 = vadd.s32 %v1888, 88
    %1890 = vset.pattern.permute.xlu0 %v1889
    %1891 = vperm.xlu0 %1890, %v1820
    %v1892 = vpop.permute.xlu0 %1891
    %v1893 = vlaneseq
    %v1894 = vshrl.u32 %v1893, 7
    %v1895 = vadd.s32 %v1894, 96
    %1896 = vset.pattern.permute.xlu0 %v1895
    %1897 = vperm.xlu0 %1896, %v1820
    %v1898 = vpop.permute.xlu0 %1897
    %v1899 = vlaneseq
    %v1900 = vshrl.u32 %v1899, 7
    %v1901 = vadd.s32 %v1900, 104
    %1902 = vset.pattern.permute.xlu0 %v1901
    %1903 = vperm.xlu0 %1902, %v1820
    %v1904 = vpop.permute.xlu0 %1903
    %v1905 = vlaneseq
    %v1906 = vshrl.u32 %v1905, 7
    %v1907 = vadd.s32 %v1906, 112
    %1908 = vset.pattern.permute.xlu0 %v1907
    %1909 = vperm.xlu0 %1908, %v1820
    %v1910 = vpop.permute.xlu0 %1909
    %v1911 = vlaneseq
    %v1912 = vshrl.u32 %v1911, 7
    %v1913 = vadd.s32 %v1912, 120
    %1914 = vset.pattern.permute.xlu0 %v1913
    %1915 = vperm.xlu0 %1914, %v1820
    %v1916 = vpop.permute.xlu0 %1915
    %v1917 = vperm.slane %v1430, 5
    %v1918 = vlaneseq
    %v1919 = vshrl.u32 %v1918, 7
    %1921 = vset.pattern.permute.xlu0 %v1919
    %1922 = vperm.xlu0 %1921, %v1917
    %v1923 = vpop.permute.xlu0 %1922
    %v1924 = vlaneseq
    %v1925 = vshrl.u32 %v1924, 7
    %v1926 = vadd.s32 %v1925, 8
    %1927 = vset.pattern.permute.xlu0 %v1926
    %1928 = vperm.xlu0 %1927, %v1917
    %v1929 = vpop.permute.xlu0 %1928
    %v1930 = vlaneseq
    %v1931 = vshrl.u32 %v1930, 7
    %v1932 = vadd.s32 %v1931, 16
    %1933 = vset.pattern.permute.xlu0 %v1932
    %1934 = vperm.xlu0 %1933, %v1917
    %v1935 = vpop.permute.xlu0 %1934
    %v1936 = vlaneseq
    %v1937 = vshrl.u32 %v1936, 7
    %v1938 = vadd.s32 %v1937, 24
    %1939 = vset.pattern.permute.xlu0 %v1938
    %1940 = vperm.xlu0 %1939, %v1917
    %v1941 = vpop.permute.xlu0 %1940
    %v1942 = vlaneseq
    %v1943 = vshrl.u32 %v1942, 7
    %v1944 = vadd.s32 %v1943, 32
    %1945 = vset.pattern.permute.xlu0 %v1944
    %1946 = vperm.xlu0 %1945, %v1917
    %v1947 = vpop.permute.xlu0 %1946
    %v1948 = vlaneseq
    %v1949 = vshrl.u32 %v1948, 7
    %v1950 = vadd.s32 %v1949, 40
    %1951 = vset.pattern.permute.xlu0 %v1950
    %1952 = vperm.xlu0 %1951, %v1917
    %v1953 = vpop.permute.xlu0 %1952
    %v1954 = vlaneseq
    %v1955 = vshrl.u32 %v1954, 7
    %v1956 = vadd.s32 %v1955, 48
    %1957 = vset.pattern.permute.xlu0 %v1956
    %1958 = vperm.xlu0 %1957, %v1917
    %v1959 = vpop.permute.xlu0 %1958
    %v1960 = vlaneseq
    %v1961 = vshrl.u32 %v1960, 7
    %v1962 = vadd.s32 %v1961, 56
    %1963 = vset.pattern.permute.xlu0 %v1962
    %1964 = vperm.xlu0 %1963, %v1917
    %v1965 = vpop.permute.xlu0 %1964
    %v1966 = vlaneseq
    %v1967 = vshrl.u32 %v1966, 7
    %v1968 = vadd.s32 %v1967, 64
    %1969 = vset.pattern.permute.xlu0 %v1968
    %1970 = vperm.xlu0 %1969, %v1917
    %v1971 = vpop.permute.xlu0 %1970
    %v1972 = vlaneseq
    %v1973 = vshrl.u32 %v1972, 7
    %v1974 = vadd.s32 %v1973, 72
    %1975 = vset.pattern.permute.xlu0 %v1974
    %1976 = vperm.xlu0 %1975, %v1917
    %v1977 = vpop.permute.xlu0 %1976
    %v1978 = vlaneseq
    %v1979 = vshrl.u32 %v1978, 7
    %v1980 = vadd.s32 %v1979, 80
    %1981 = vset.pattern.permute.xlu0 %v1980
    %1982 = vperm.xlu0 %1981, %v1917
    %v1983 = vpop.permute.xlu0 %1982
    %v1984 = vlaneseq
    %v1985 = vshrl.u32 %v1984, 7
    %v1986 = vadd.s32 %v1985, 88
    %1987 = vset.pattern.permute.xlu0 %v1986
    %1988 = vperm.xlu0 %1987, %v1917
    %v1989 = vpop.permute.xlu0 %1988
    %v1990 = vlaneseq
    %v1991 = vshrl.u32 %v1990, 7
    %v1992 = vadd.s32 %v1991, 96
    %1993 = vset.pattern.permute.xlu0 %v1992
    %1994 = vperm.xlu0 %1993, %v1917
    %v1995 = vpop.permute.xlu0 %1994
    %v1996 = vlaneseq
    %v1997 = vshrl.u32 %v1996, 7
    %v1998 = vadd.s32 %v1997, 104
    %1999 = vset.pattern.permute.xlu0 %v1998
    %2000 = vperm.xlu0 %1999, %v1917
    %v2001 = vpop.permute.xlu0 %2000
    %v2002 = vlaneseq
    %v2003 = vshrl.u32 %v2002, 7
    %v2004 = vadd.s32 %v2003, 112
    %2005 = vset.pattern.permute.xlu0 %v2004
    %2006 = vperm.xlu0 %2005, %v1917
    %v2007 = vpop.permute.xlu0 %2006
    %v2008 = vlaneseq
    %v2009 = vshrl.u32 %v2008, 7
    %v2010 = vadd.s32 %v2009, 120
    %2011 = vset.pattern.permute.xlu0 %v2010
    %2012 = vperm.xlu0 %2011, %v1917
    %v2013 = vpop.permute.xlu0 %2012
    %v2014 = vperm.slane %v1430, 6
    %v2015 = vlaneseq
    %v2016 = vshrl.u32 %v2015, 7
    %2018 = vset.pattern.permute.xlu0 %v2016
    %2019 = vperm.xlu0 %2018, %v2014
    %v2020 = vpop.permute.xlu0 %2019
    %v2021 = vlaneseq
    %v2022 = vshrl.u32 %v2021, 7
    %v2023 = vadd.s32 %v2022, 8
    %2024 = vset.pattern.permute.xlu0 %v2023
    %2025 = vperm.xlu0 %2024, %v2014
    %v2026 = vpop.permute.xlu0 %2025
    %v2027 = vlaneseq
    %v2028 = vshrl.u32 %v2027, 7
    %v2029 = vadd.s32 %v2028, 16
    %2030 = vset.pattern.permute.xlu0 %v2029
    %2031 = vperm.xlu0 %2030, %v2014
    %v2032 = vpop.permute.xlu0 %2031
    %v2033 = vlaneseq
    %v2034 = vshrl.u32 %v2033, 7
    %v2035 = vadd.s32 %v2034, 24
    %2036 = vset.pattern.permute.xlu0 %v2035
    %2037 = vperm.xlu0 %2036, %v2014
    %v2038 = vpop.permute.xlu0 %2037
    %v2039 = vlaneseq
    %v2040 = vshrl.u32 %v2039, 7
    %v2041 = vadd.s32 %v2040, 32
    %2042 = vset.pattern.permute.xlu0 %v2041
    %2043 = vperm.xlu0 %2042, %v2014
    %v2044 = vpop.permute.xlu0 %2043
    %v2045 = vlaneseq
    %v2046 = vshrl.u32 %v2045, 7
    %v2047 = vadd.s32 %v2046, 40
    %2048 = vset.pattern.permute.xlu0 %v2047
    %2049 = vperm.xlu0 %2048, %v2014
    %v2050 = vpop.permute.xlu0 %2049
    %v2051 = vlaneseq
    %v2052 = vshrl.u32 %v2051, 7
    %v2053 = vadd.s32 %v2052, 48
    %2054 = vset.pattern.permute.xlu0 %v2053
    %2055 = vperm.xlu0 %2054, %v2014
    %v2056 = vpop.permute.xlu0 %2055
    %v2057 = vlaneseq
    %v2058 = vshrl.u32 %v2057, 7
    %v2059 = vadd.s32 %v2058, 56
    %2060 = vset.pattern.permute.xlu0 %v2059
    %2061 = vperm.xlu0 %2060, %v2014
    %v2062 = vpop.permute.xlu0 %2061
    %v2063 = vlaneseq
    %v2064 = vshrl.u32 %v2063, 7
    %v2065 = vadd.s32 %v2064, 64
    %2066 = vset.pattern.permute.xlu0 %v2065
    %2067 = vperm.xlu0 %2066, %v2014
    %v2068 = vpop.permute.xlu0 %2067
    %v2069 = vlaneseq
    %v2070 = vshrl.u32 %v2069, 7
    %v2071 = vadd.s32 %v2070, 72
    %2072 = vset.pattern.permute.xlu0 %v2071
    %2073 = vperm.xlu0 %2072, %v2014
    %v2074 = vpop.permute.xlu0 %2073
    %v2075 = vlaneseq
    %v2076 = vshrl.u32 %v2075, 7
    %v2077 = vadd.s32 %v2076, 80
    %2078 = vset.pattern.permute.xlu0 %v2077
    %2079 = vperm.xlu0 %2078, %v2014
    %v2080 = vpop.permute.xlu0 %2079
    %v2081 = vlaneseq
    %v2082 = vshrl.u32 %v2081, 7
    %v2083 = vadd.s32 %v2082, 88
    %2084 = vset.pattern.permute.xlu0 %v2083
    %2085 = vperm.xlu0 %2084, %v2014
    %v2086 = vpop.permute.xlu0 %2085
    %v2087 = vlaneseq
    %v2088 = vshrl.u32 %v2087, 7
    %v2089 = vadd.s32 %v2088, 96
    %2090 = vset.pattern.permute.xlu0 %v2089
    %2091 = vperm.xlu0 %2090, %v2014
    %v2092 = vpop.permute.xlu0 %2091
    %v2093 = vlaneseq
    %v2094 = vshrl.u32 %v2093, 7
    %v2095 = vadd.s32 %v2094, 104
    %2096 = vset.pattern.permute.xlu0 %v2095
    %2097 = vperm.xlu0 %2096, %v2014
    %v2098 = vpop.permute.xlu0 %2097
    %v2099 = vlaneseq
    %v2100 = vshrl.u32 %v2099, 7
    %v2101 = vadd.s32 %v2100, 112
    %2102 = vset.pattern.permute.xlu0 %v2101
    %2103 = vperm.xlu0 %2102, %v2014
    %v2104 = vpop.permute.xlu0 %2103
    %v2105 = vlaneseq
    %v2106 = vshrl.u32 %v2105, 7
    %v2107 = vadd.s32 %v2106, 120
    %2108 = vset.pattern.permute.xlu0 %v2107
    %2109 = vperm.xlu0 %2108, %v2014
    %v2110 = vpop.permute.xlu0 %2109
    %v2111 = vperm.slane %v1430, 7
    %v2112 = vlaneseq
    %v2113 = vshrl.u32 %v2112, 7
    %2115 = vset.pattern.permute.xlu0 %v2113
    %2116 = vperm.xlu0 %2115, %v2111
    %v2117 = vpop.permute.xlu0 %2116
    %v2118 = vlaneseq
    %v2119 = vshrl.u32 %v2118, 7
    %v2120 = vadd.s32 %v2119, 8
    %2121 = vset.pattern.permute.xlu0 %v2120
    %2122 = vperm.xlu0 %2121, %v2111
    %v2123 = vpop.permute.xlu0 %2122
    %v2124 = vlaneseq
    %v2125 = vshrl.u32 %v2124, 7
    %v2126 = vadd.s32 %v2125, 16
    %2127 = vset.pattern.permute.xlu0 %v2126
    %2128 = vperm.xlu0 %2127, %v2111
    %v2129 = vpop.permute.xlu0 %2128
    %v2130 = vlaneseq
    %v2131 = vshrl.u32 %v2130, 7
    %v2132 = vadd.s32 %v2131, 24
    %2133 = vset.pattern.permute.xlu0 %v2132
    %2134 = vperm.xlu0 %2133, %v2111
    %v2135 = vpop.permute.xlu0 %2134
    %v2136 = vlaneseq
    %v2137 = vshrl.u32 %v2136, 7
    %v2138 = vadd.s32 %v2137, 32
    %2139 = vset.pattern.permute.xlu0 %v2138
    %2140 = vperm.xlu0 %2139, %v2111
    %v2141 = vpop.permute.xlu0 %2140
    %v2142 = vlaneseq
    %v2143 = vshrl.u32 %v2142, 7
    %v2144 = vadd.s32 %v2143, 40
    %2145 = vset.pattern.permute.xlu0 %v2144
    %2146 = vperm.xlu0 %2145, %v2111
    %v2147 = vpop.permute.xlu0 %2146
    %v2148 = vlaneseq
    %v2149 = vshrl.u32 %v2148, 7
    %v2150 = vadd.s32 %v2149, 48
    %2151 = vset.pattern.permute.xlu0 %v2150
    %2152 = vperm.xlu0 %2151, %v2111
    %v2153 = vpop.permute.xlu0 %2152
    %v2154 = vlaneseq
    %v2155 = vshrl.u32 %v2154, 7
    %v2156 = vadd.s32 %v2155, 56
    %2157 = vset.pattern.permute.xlu0 %v2156
    %2158 = vperm.xlu0 %2157, %v2111
    %v2159 = vpop.permute.xlu0 %2158
    %v2160 = vlaneseq
    %v2161 = vshrl.u32 %v2160, 7
    %v2162 = vadd.s32 %v2161, 64
    %2163 = vset.pattern.permute.xlu0 %v2162
    %2164 = vperm.xlu0 %2163, %v2111
    %v2165 = vpop.permute.xlu0 %2164
    %v2166 = vlaneseq
    %v2167 = vshrl.u32 %v2166, 7
    %v2168 = vadd.s32 %v2167, 72
    %2169 = vset.pattern.permute.xlu0 %v2168
    %2170 = vperm.xlu0 %2169, %v2111
    %v2171 = vpop.permute.xlu0 %2170
    %v2172 = vlaneseq
    %v2173 = vshrl.u32 %v2172, 7
    %v2174 = vadd.s32 %v2173, 80
    %2175 = vset.pattern.permute.xlu0 %v2174
    %2176 = vperm.xlu0 %2175, %v2111
    %v2177 = vpop.permute.xlu0 %2176
    %v2178 = vlaneseq
    %v2179 = vshrl.u32 %v2178, 7
    %v2180 = vadd.s32 %v2179, 88
    %2181 = vset.pattern.permute.xlu0 %v2180
    %2182 = vperm.xlu0 %2181, %v2111
    %v2183 = vpop.permute.xlu0 %2182
    %v2184 = vlaneseq
    %v2185 = vshrl.u32 %v2184, 7
    %v2186 = vadd.s32 %v2185, 96
    %2187 = vset.pattern.permute.xlu0 %v2186
    %2188 = vperm.xlu0 %2187, %v2111
    %v2189 = vpop.permute.xlu0 %2188
    %v2190 = vlaneseq
    %v2191 = vshrl.u32 %v2190, 7
    %v2192 = vadd.s32 %v2191, 104
    %2193 = vset.pattern.permute.xlu0 %v2192
    %2194 = vperm.xlu0 %2193, %v2111
    %v2195 = vpop.permute.xlu0 %2194
    %v2196 = vlaneseq
    %v2197 = vshrl.u32 %v2196, 7
    %v2198 = vadd.s32 %v2197, 112
    %2199 = vset.pattern.permute.xlu0 %v2198
    %2200 = vperm.xlu0 %2199, %v2111
    %v2201 = vpop.permute.xlu0 %2200
    %v2202 = vlaneseq
    %v2203 = vshrl.u32 %v2202, 7
    %v2204 = vadd.s32 %v2203, 120
    %2205 = vset.pattern.permute.xlu0 %v2204
    %2206 = vperm.xlu0 %2205, %v2111
    %v2207 = vpop.permute.xlu0 %2206
    %v2336 = vadd.f32 %v1175, %v1438
    %v2337 = vadd.f32 %v1177, %v1444
    %v2338 = vadd.f32 %v1179, %v1450
    %v2339 = vadd.f32 %v1181, %v1456
    %v2340 = vadd.f32 %v1183, %v1462
    %v2341 = vadd.f32 %v1185, %v1468
    %v2342 = vadd.f32 %v1187, %v1474
    %v2343 = vadd.f32 %v1189, %v1480
    %v2344 = vadd.f32 %v1191, %v1486
    %v2345 = vadd.f32 %v1193, %v1492
    %v2346 = vadd.f32 %v1195, %v1498
    %v2347 = vadd.f32 %v1197, %v1504
    %v2348 = vadd.f32 %v1199, %v1510
    %v2349 = vadd.f32 %v1201, %v1516
    %v2350 = vadd.f32 %v1203, %v1522
    %v2351 = vadd.f32 %v1205, %v1528
    %v2352 = vadd.f32 %v1207, %v1535
    %v2353 = vadd.f32 %v1209, %v1541
    %v2354 = vadd.f32 %v1211, %v1547
    %v2355 = vadd.f32 %v1213, %v1553
    %v2356 = vadd.f32 %v1215, %v1559
    %v2357 = vadd.f32 %v1217, %v1565
    %v2358 = vadd.f32 %v1219, %v1571
    %v2359 = vadd.f32 %v1221, %v1577
    %v2360 = vadd.f32 %v1223, %v1583
    %v2361 = vadd.f32 %v1225, %v1589
    %v2362 = vadd.f32 %v1227, %v1595
    %v2363 = vadd.f32 %v1229, %v1601
    %v2364 = vadd.f32 %v1231, %v1607
    %v2365 = vadd.f32 %v1233, %v1613
    %v2366 = vadd.f32 %v1235, %v1619
    %v2367 = vadd.f32 %v1237, %v1625
    %v2368 = vadd.f32 %v1239, %v1632
    %v2369 = vadd.f32 %v1241, %v1638
    %v2370 = vadd.f32 %v1243, %v1644
    %v2371 = vadd.f32 %v1245, %v1650
    %v2372 = vadd.f32 %v1247, %v1656
    %v2373 = vadd.f32 %v1249, %v1662
    %v2374 = vadd.f32 %v1251, %v1668
    %v2375 = vadd.f32 %v1253, %v1674
    %v2376 = vadd.f32 %v1255, %v1680
    %v2377 = vadd.f32 %v1257, %v1686
    %v2378 = vadd.f32 %v1259, %v1692
    %v2379 = vadd.f32 %v1261, %v1698
    %v2380 = vadd.f32 %v1263, %v1704
    %v2381 = vadd.f32 %v1265, %v1710
    %v2382 = vadd.f32 %v1267, %v1716
    %v2383 = vadd.f32 %v1269, %v1722
    %v2384 = vadd.f32 %v1271, %v1729
    %v2385 = vadd.f32 %v1273, %v1735
    %v2386 = vadd.f32 %v1275, %v1741
    %v2387 = vadd.f32 %v1277, %v1747
    %v2388 = vadd.f32 %v1279, %v1753
    %v2389 = vadd.f32 %v1281, %v1759
    %v2390 = vadd.f32 %v1283, %v1765
    %v2391 = vadd.f32 %v1285, %v1771
    %v2392 = vadd.f32 %v1287, %v1777
    %v2393 = vadd.f32 %v1289, %v1783
    %v2394 = vadd.f32 %v1291, %v1789
    %v2395 = vadd.f32 %v1293, %v1795
    %v2396 = vadd.f32 %v1295, %v1801
    %v2397 = vadd.f32 %v1297, %v1807
    %v2398 = vadd.f32 %v1299, %v1813
    %v2399 = vadd.f32 %v1301, %v1819
    %v2400 = vadd.f32 %v1303, %v1826
    %v2401 = vadd.f32 %v1305, %v1832
    %v2402 = vadd.f32 %v1307, %v1838
    %v2403 = vadd.f32 %v1309, %v1844
    %v2404 = vadd.f32 %v1311, %v1850
    %v2405 = vadd.f32 %v1313, %v1856
    %v2406 = vadd.f32 %v1315, %v1862
    %v2407 = vadd.f32 %v1317, %v1868
    %v2408 = vadd.f32 %v1319, %v1874
    %v2409 = vadd.f32 %v1321, %v1880
    %v2410 = vadd.f32 %v1323, %v1886
    %v2411 = vadd.f32 %v1325, %v1892
    %v2412 = vadd.f32 %v1327, %v1898
    %v2413 = vadd.f32 %v1329, %v1904
    %v2414 = vadd.f32 %v1331, %v1910
    %v2415 = vadd.f32 %v1333, %v1916
    %v2416 = vadd.f32 %v1335, %v1923
    %v2417 = vadd.f32 %v1337, %v1929
    %v2418 = vadd.f32 %v1339, %v1935
    %v2419 = vadd.f32 %v1341, %v1941
    %v2420 = vadd.f32 %v1343, %v1947
    %v2421 = vadd.f32 %v1345, %v1953
    %v2422 = vadd.f32 %v1347, %v1959
    %v2423 = vadd.f32 %v1349, %v1965
    %v2424 = vadd.f32 %v1351, %v1971
    %v2425 = vadd.f32 %v1353, %v1977
    %v2426 = vadd.f32 %v1355, %v1983
    %v2427 = vadd.f32 %v1357, %v1989
    %v2428 = vadd.f32 %v1359, %v1995
    %v2429 = vadd.f32 %v1361, %v2001
    %v2430 = vadd.f32 %v1363, %v2007
    %v2431 = vadd.f32 %v1365, %v2013
    %v2432 = vadd.f32 %v1367, %v2020
    %v2433 = vadd.f32 %v1369, %v2026
    %v2434 = vadd.f32 %v1371, %v2032
    %v2435 = vadd.f32 %v1373, %v2038
    %v2436 = vadd.f32 %v1375, %v2044
    %v2437 = vadd.f32 %v1377, %v2050
    %v2438 = vadd.f32 %v1379, %v2056
    %v2439 = vadd.f32 %v1381, %v2062
    %v2440 = vadd.f32 %v1383, %v2068
    %v2441 = vadd.f32 %v1385, %v2074
    %v2442 = vadd.f32 %v1387, %v2080
    %v2443 = vadd.f32 %v1389, %v2086
    %v2444 = vadd.f32 %v1391, %v2092
    %v2445 = vadd.f32 %v1393, %v2098
    %v2446 = vadd.f32 %v1395, %v2104
    %v2447 = vadd.f32 %v1397, %v2110
    %v2448 = vadd.f32 %v1399, %v2117
    %v2449 = vadd.f32 %v1401, %v2123
    %v2450 = vadd.f32 %v1403, %v2129
    %v2451 = vadd.f32 %v1405, %v2135
    %v2452 = vadd.f32 %v1407, %v2141
    %v2453 = vadd.f32 %v1409, %v2147
    %v2454 = vadd.f32 %v1411, %v2153
    %v2455 = vadd.f32 %v1413, %v2159
    %v2456 = vadd.f32 %v1415, %v2165
    %v2457 = vadd.f32 %v1417, %v2171
    %v2458 = vadd.f32 %v1419, %v2177
    %v2459 = vadd.f32 %v1421, %v2183
    %v2460 = vadd.f32 %v1423, %v2189
    %v2461 = vadd.f32 %v1425, %v2195
    %v2462 = vadd.f32 %v1427, %v2201
    %v2463 = vadd.f32 %v1429, %v2207
    %2592 = vset.pattern.permute.xlu0 0
    %2593 = vperm.xlu0 %2592, %v2336
    %v2594 = vpop.permute.xlu0 %2593
    %2595 = vset.pattern.permute.xlu0 0
    %2596 = vperm.xlu0 %2595, %v2337
    %v2597 = vpop.permute.xlu0 %2596
    %2598 = vset.pattern.permute.xlu0 0
    %2599 = vperm.xlu0 %2598, %v2338
    %v2600 = vpop.permute.xlu0 %2599
    %2601 = vset.pattern.permute.xlu0 0
    %2602 = vperm.xlu0 %2601, %v2339
    %v2603 = vpop.permute.xlu0 %2602
    %2604 = vset.pattern.permute.xlu0 0
    %2605 = vperm.xlu0 %2604, %v2340
    %v2606 = vpop.permute.xlu0 %2605
    %2607 = vset.pattern.permute.xlu0 0
    %2608 = vperm.xlu0 %2607, %v2341
    %v2609 = vpop.permute.xlu0 %2608
    %2610 = vset.pattern.permute.xlu0 0
    %2611 = vperm.xlu0 %2610, %v2342
    %v2612 = vpop.permute.xlu0 %2611
    %2613 = vset.pattern.permute.xlu0 0
    %2614 = vperm.xlu0 %2613, %v2343
    %v2615 = vpop.permute.xlu0 %2614
    %2616 = vset.pattern.permute.xlu0 0
    %2617 = vperm.xlu0 %2616, %v2344
    %v2618 = vpop.permute.xlu0 %2617
    %2619 = vset.pattern.permute.xlu0 0
    %2620 = vperm.xlu0 %2619, %v2345
    %v2621 = vpop.permute.xlu0 %2620
    %2622 = vset.pattern.permute.xlu0 0
    %2623 = vperm.xlu0 %2622, %v2346
    %v2624 = vpop.permute.xlu0 %2623
    %2625 = vset.pattern.permute.xlu0 0
    %2626 = vperm.xlu0 %2625, %v2347
    %v2627 = vpop.permute.xlu0 %2626
    %2628 = vset.pattern.permute.xlu0 0
    %2629 = vperm.xlu0 %2628, %v2348
    %v2630 = vpop.permute.xlu0 %2629
    %2631 = vset.pattern.permute.xlu0 0
    %2632 = vperm.xlu0 %2631, %v2349
    %v2633 = vpop.permute.xlu0 %2632
    %2634 = vset.pattern.permute.xlu0 0
    %2635 = vperm.xlu0 %2634, %v2350
    %v2636 = vpop.permute.xlu0 %2635
    %2637 = vset.pattern.permute.xlu0 0
    %2638 = vperm.xlu0 %2637, %v2351
    %v2639 = vpop.permute.xlu0 %2638
    %2640 = vset.pattern.permute.xlu0 0
    %2641 = vperm.xlu0 %2640, %v2352
    %v2642 = vpop.permute.xlu0 %2641
    %2643 = vset.pattern.permute.xlu0 0
    %2644 = vperm.xlu0 %2643, %v2353
    %v2645 = vpop.permute.xlu0 %2644
    %2646 = vset.pattern.permute.xlu0 0
    %2647 = vperm.xlu0 %2646, %v2354
    %v2648 = vpop.permute.xlu0 %2647
    %2649 = vset.pattern.permute.xlu0 0
    %2650 = vperm.xlu0 %2649, %v2355
    %v2651 = vpop.permute.xlu0 %2650
    %2652 = vset.pattern.permute.xlu0 0
    %2653 = vperm.xlu0 %2652, %v2356
    %v2654 = vpop.permute.xlu0 %2653
    %2655 = vset.pattern.permute.xlu0 0
    %2656 = vperm.xlu0 %2655, %v2357
    %v2657 = vpop.permute.xlu0 %2656
    %2658 = vset.pattern.permute.xlu0 0
    %2659 = vperm.xlu0 %2658, %v2358
    %v2660 = vpop.permute.xlu0 %2659
    %2661 = vset.pattern.permute.xlu0 0
    %2662 = vperm.xlu0 %2661, %v2359
    %v2663 = vpop.permute.xlu0 %2662
    %2664 = vset.pattern.permute.xlu0 0
    %2665 = vperm.xlu0 %2664, %v2360
    %v2666 = vpop.permute.xlu0 %2665
    %2667 = vset.pattern.permute.xlu0 0
    %2668 = vperm.xlu0 %2667, %v2361
    %v2669 = vpop.permute.xlu0 %2668
    %2670 = vset.pattern.permute.xlu0 0
    %2671 = vperm.xlu0 %2670, %v2362
    %v2672 = vpop.permute.xlu0 %2671
    %2673 = vset.pattern.permute.xlu0 0
    %2674 = vperm.xlu0 %2673, %v2363
    %v2675 = vpop.permute.xlu0 %2674
    %2676 = vset.pattern.permute.xlu0 0
    %2677 = vperm.xlu0 %2676, %v2364
    %v2678 = vpop.permute.xlu0 %2677
    %2679 = vset.pattern.permute.xlu0 0
    %2680 = vperm.xlu0 %2679, %v2365
    %v2681 = vpop.permute.xlu0 %2680
    %2682 = vset.pattern.permute.xlu0 0
    %2683 = vperm.xlu0 %2682, %v2366
    %v2684 = vpop.permute.xlu0 %2683
    %2685 = vset.pattern.permute.xlu0 0
    %2686 = vperm.xlu0 %2685, %v2367
    %v2687 = vpop.permute.xlu0 %2686
    %2688 = vset.pattern.permute.xlu0 0
    %2689 = vperm.xlu0 %2688, %v2368
    %v2690 = vpop.permute.xlu0 %2689
    %2691 = vset.pattern.permute.xlu0 0
    %2692 = vperm.xlu0 %2691, %v2369
    %v2693 = vpop.permute.xlu0 %2692
    %2694 = vset.pattern.permute.xlu0 0
    %2695 = vperm.xlu0 %2694, %v2370
    %v2696 = vpop.permute.xlu0 %2695
    %2697 = vset.pattern.permute.xlu0 0
    %2698 = vperm.xlu0 %2697, %v2371
    %v2699 = vpop.permute.xlu0 %2698
    %2700 = vset.pattern.permute.xlu0 0
    %2701 = vperm.xlu0 %2700, %v2372
    %v2702 = vpop.permute.xlu0 %2701
    %2703 = vset.pattern.permute.xlu0 0
    %2704 = vperm.xlu0 %2703, %v2373
    %v2705 = vpop.permute.xlu0 %2704
    %2706 = vset.pattern.permute.xlu0 0
    %2707 = vperm.xlu0 %2706, %v2374
    %v2708 = vpop.permute.xlu0 %2707
    %2709 = vset.pattern.permute.xlu0 0
    %2710 = vperm.xlu0 %2709, %v2375
    %v2711 = vpop.permute.xlu0 %2710
    %2712 = vset.pattern.permute.xlu0 0
    %2713 = vperm.xlu0 %2712, %v2376
    %v2714 = vpop.permute.xlu0 %2713
    %2715 = vset.pattern.permute.xlu0 0
    %2716 = vperm.xlu0 %2715, %v2377
    %v2717 = vpop.permute.xlu0 %2716
    %2718 = vset.pattern.permute.xlu0 0
    %2719 = vperm.xlu0 %2718, %v2378
    %v2720 = vpop.permute.xlu0 %2719
    %2721 = vset.pattern.permute.xlu0 0
    %2722 = vperm.xlu0 %2721, %v2379
    %v2723 = vpop.permute.xlu0 %2722
    %2724 = vset.pattern.permute.xlu0 0
    %2725 = vperm.xlu0 %2724, %v2380
    %v2726 = vpop.permute.xlu0 %2725
    %2727 = vset.pattern.permute.xlu0 0
    %2728 = vperm.xlu0 %2727, %v2381
    %v2729 = vpop.permute.xlu0 %2728
    %2730 = vset.pattern.permute.xlu0 0
    %2731 = vperm.xlu0 %2730, %v2382
    %v2732 = vpop.permute.xlu0 %2731
    %2733 = vset.pattern.permute.xlu0 0
    %2734 = vperm.xlu0 %2733, %v2383
    %v2735 = vpop.permute.xlu0 %2734
    %2736 = vset.pattern.permute.xlu0 0
    %2737 = vperm.xlu0 %2736, %v2384
    %v2738 = vpop.permute.xlu0 %2737
    %2739 = vset.pattern.permute.xlu0 0
    %2740 = vperm.xlu0 %2739, %v2385
    %v2741 = vpop.permute.xlu0 %2740
    %2742 = vset.pattern.permute.xlu0 0
    %2743 = vperm.xlu0 %2742, %v2386
    %v2744 = vpop.permute.xlu0 %2743
    %2745 = vset.pattern.permute.xlu0 0
    %2746 = vperm.xlu0 %2745, %v2387
    %v2747 = vpop.permute.xlu0 %2746
    %2748 = vset.pattern.permute.xlu0 0
    %2749 = vperm.xlu0 %2748, %v2388
    %v2750 = vpop.permute.xlu0 %2749
    %2751 = vset.pattern.permute.xlu0 0
    %2752 = vperm.xlu0 %2751, %v2389
    %v2753 = vpop.permute.xlu0 %2752
    %2754 = vset.pattern.permute.xlu0 0
    %2755 = vperm.xlu0 %2754, %v2390
    %v2756 = vpop.permute.xlu0 %2755
    %2757 = vset.pattern.permute.xlu0 0
    %2758 = vperm.xlu0 %2757, %v2391
    %v2759 = vpop.permute.xlu0 %2758
    %2760 = vset.pattern.permute.xlu0 0
    %2761 = vperm.xlu0 %2760, %v2392
    %v2762 = vpop.permute.xlu0 %2761
    %2763 = vset.pattern.permute.xlu0 0
    %2764 = vperm.xlu0 %2763, %v2393
    %v2765 = vpop.permute.xlu0 %2764
    %2766 = vset.pattern.permute.xlu0 0
    %2767 = vperm.xlu0 %2766, %v2394
    %v2768 = vpop.permute.xlu0 %2767
    %2769 = vset.pattern.permute.xlu0 0
    %2770 = vperm.xlu0 %2769, %v2395
    %v2771 = vpop.permute.xlu0 %2770
    %2772 = vset.pattern.permute.xlu0 0
    %2773 = vperm.xlu0 %2772, %v2396
    %v2774 = vpop.permute.xlu0 %2773
    %2775 = vset.pattern.permute.xlu0 0
    %2776 = vperm.xlu0 %2775, %v2397
    %v2777 = vpop.permute.xlu0 %2776
    %2778 = vset.pattern.permute.xlu0 0
    %2779 = vperm.xlu0 %2778, %v2398
    %v2780 = vpop.permute.xlu0 %2779
    %2781 = vset.pattern.permute.xlu0 0
    %2782 = vperm.xlu0 %2781, %v2399
    %v2783 = vpop.permute.xlu0 %2782
    %2784 = vset.pattern.permute.xlu0 0
    %2785 = vperm.xlu0 %2784, %v2400
    %v2786 = vpop.permute.xlu0 %2785
    %2787 = vset.pattern.permute.xlu0 0
    %2788 = vperm.xlu0 %2787, %v2401
    %v2789 = vpop.permute.xlu0 %2788
    %2790 = vset.pattern.permute.xlu0 0
    %2791 = vperm.xlu0 %2790, %v2402
    %v2792 = vpop.permute.xlu0 %2791
    %2793 = vset.pattern.permute.xlu0 0
    %2794 = vperm.xlu0 %2793, %v2403
    %v2795 = vpop.permute.xlu0 %2794
    %2796 = vset.pattern.permute.xlu0 0
    %2797 = vperm.xlu0 %2796, %v2404
    %v2798 = vpop.permute.xlu0 %2797
    %2799 = vset.pattern.permute.xlu0 0
    %2800 = vperm.xlu0 %2799, %v2405
    %v2801 = vpop.permute.xlu0 %2800
    %2802 = vset.pattern.permute.xlu0 0
    %2803 = vperm.xlu0 %2802, %v2406
    %v2804 = vpop.permute.xlu0 %2803
    %2805 = vset.pattern.permute.xlu0 0
    %2806 = vperm.xlu0 %2805, %v2407
    %v2807 = vpop.permute.xlu0 %2806
    %2808 = vset.pattern.permute.xlu0 0
    %2809 = vperm.xlu0 %2808, %v2408
    %v2810 = vpop.permute.xlu0 %2809
    %2811 = vset.pattern.permute.xlu0 0
    %2812 = vperm.xlu0 %2811, %v2409
    %v2813 = vpop.permute.xlu0 %2812
    %2814 = vset.pattern.permute.xlu0 0
    %2815 = vperm.xlu0 %2814, %v2410
    %v2816 = vpop.permute.xlu0 %2815
    %2817 = vset.pattern.permute.xlu0 0
    %2818 = vperm.xlu0 %2817, %v2411
    %v2819 = vpop.permute.xlu0 %2818
    %2820 = vset.pattern.permute.xlu0 0
    %2821 = vperm.xlu0 %2820, %v2412
    %v2822 = vpop.permute.xlu0 %2821
    %2823 = vset.pattern.permute.xlu0 0
    %2824 = vperm.xlu0 %2823, %v2413
    %v2825 = vpop.permute.xlu0 %2824
    %2826 = vset.pattern.permute.xlu0 0
    %2827 = vperm.xlu0 %2826, %v2414
    %v2828 = vpop.permute.xlu0 %2827
    %2829 = vset.pattern.permute.xlu0 0
    %2830 = vperm.xlu0 %2829, %v2415
    %v2831 = vpop.permute.xlu0 %2830
    %2832 = vset.pattern.permute.xlu0 0
    %2833 = vperm.xlu0 %2832, %v2416
    %v2834 = vpop.permute.xlu0 %2833
    %2835 = vset.pattern.permute.xlu0 0
    %2836 = vperm.xlu0 %2835, %v2417
    %v2837 = vpop.permute.xlu0 %2836
    %2838 = vset.pattern.permute.xlu0 0
    %2839 = vperm.xlu0 %2838, %v2418
    %v2840 = vpop.permute.xlu0 %2839
    %2841 = vset.pattern.permute.xlu0 0
    %2842 = vperm.xlu0 %2841, %v2419
    %v2843 = vpop.permute.xlu0 %2842
    %2844 = vset.pattern.permute.xlu0 0
    %2845 = vperm.xlu0 %2844, %v2420
    %v2846 = vpop.permute.xlu0 %2845
    %2847 = vset.pattern.permute.xlu0 0
    %2848 = vperm.xlu0 %2847, %v2421
    %v2849 = vpop.permute.xlu0 %2848
    %2850 = vset.pattern.permute.xlu0 0
    %2851 = vperm.xlu0 %2850, %v2422
    %v2852 = vpop.permute.xlu0 %2851
    %2853 = vset.pattern.permute.xlu0 0
    %2854 = vperm.xlu0 %2853, %v2423
    %v2855 = vpop.permute.xlu0 %2854
    %2856 = vset.pattern.permute.xlu0 0
    %2857 = vperm.xlu0 %2856, %v2424
    %v2858 = vpop.permute.xlu0 %2857
    %2859 = vset.pattern.permute.xlu0 0
    %2860 = vperm.xlu0 %2859, %v2425
    %v2861 = vpop.permute.xlu0 %2860
    %2862 = vset.pattern.permute.xlu0 0
    %2863 = vperm.xlu0 %2862, %v2426
    %v2864 = vpop.permute.xlu0 %2863
    %2865 = vset.pattern.permute.xlu0 0
    %2866 = vperm.xlu0 %2865, %v2427
    %v2867 = vpop.permute.xlu0 %2866
    %2868 = vset.pattern.permute.xlu0 0
    %2869 = vperm.xlu0 %2868, %v2428
    %v2870 = vpop.permute.xlu0 %2869
    %2871 = vset.pattern.permute.xlu0 0
    %2872 = vperm.xlu0 %2871, %v2429
    %v2873 = vpop.permute.xlu0 %2872
    %2874 = vset.pattern.permute.xlu0 0
    %2875 = vperm.xlu0 %2874, %v2430
    %v2876 = vpop.permute.xlu0 %2875
    %2877 = vset.pattern.permute.xlu0 0
    %2878 = vperm.xlu0 %2877, %v2431
    %v2879 = vpop.permute.xlu0 %2878
    %2880 = vset.pattern.permute.xlu0 0
    %2881 = vperm.xlu0 %2880, %v2432
    %v2882 = vpop.permute.xlu0 %2881
    %2883 = vset.pattern.permute.xlu0 0
    %2884 = vperm.xlu0 %2883, %v2433
    %v2885 = vpop.permute.xlu0 %2884
    %2886 = vset.pattern.permute.xlu0 0
    %2887 = vperm.xlu0 %2886, %v2434
    %v2888 = vpop.permute.xlu0 %2887
    %2889 = vset.pattern.permute.xlu0 0
    %2890 = vperm.xlu0 %2889, %v2435
    %v2891 = vpop.permute.xlu0 %2890
    %2892 = vset.pattern.permute.xlu0 0
    %2893 = vperm.xlu0 %2892, %v2436
    %v2894 = vpop.permute.xlu0 %2893
    %2895 = vset.pattern.permute.xlu0 0
    %2896 = vperm.xlu0 %2895, %v2437
    %v2897 = vpop.permute.xlu0 %2896
    %2898 = vset.pattern.permute.xlu0 0
    %2899 = vperm.xlu0 %2898, %v2438
    %v2900 = vpop.permute.xlu0 %2899
    %2901 = vset.pattern.permute.xlu0 0
    %2902 = vperm.xlu0 %2901, %v2439
    %v2903 = vpop.permute.xlu0 %2902
    %2904 = vset.pattern.permute.xlu0 0
    %2905 = vperm.xlu0 %2904, %v2440
    %v2906 = vpop.permute.xlu0 %2905
    %2907 = vset.pattern.permute.xlu0 0
    %2908 = vperm.xlu0 %2907, %v2441
    %v2909 = vpop.permute.xlu0 %2908
    %2910 = vset.pattern.permute.xlu0 0
    %2911 = vperm.xlu0 %2910, %v2442
    %v2912 = vpop.permute.xlu0 %2911
    %2913 = vset.pattern.permute.xlu0 0
    %2914 = vperm.xlu0 %2913, %v2443
    %v2915 = vpop.permute.xlu0 %2914
    %2916 = vset.pattern.permute.xlu0 0
    %2917 = vperm.xlu0 %2916, %v2444
    %v2918 = vpop.permute.xlu0 %2917
    %2919 = vset.pattern.permute.xlu0 0
    %2920 = vperm.xlu0 %2919, %v2445
    %v2921 = vpop.permute.xlu0 %2920
    %2922 = vset.pattern.permute.xlu0 0
    %2923 = vperm.xlu0 %2922, %v2446
    %v2924 = vpop.permute.xlu0 %2923
    %2925 = vset.pattern.permute.xlu0 0
    %2926 = vperm.xlu0 %2925, %v2447
    %v2927 = vpop.permute.xlu0 %2926
    %2928 = vset.pattern.permute.xlu0 0
    %2929 = vperm.xlu0 %2928, %v2448
    %v2930 = vpop.permute.xlu0 %2929
    %2931 = vset.pattern.permute.xlu0 0
    %2932 = vperm.xlu0 %2931, %v2449
    %v2933 = vpop.permute.xlu0 %2932
    %2934 = vset.pattern.permute.xlu0 0
    %2935 = vperm.xlu0 %2934, %v2450
    %v2936 = vpop.permute.xlu0 %2935
    %2937 = vset.pattern.permute.xlu0 0
    %2938 = vperm.xlu0 %2937, %v2451
    %v2939 = vpop.permute.xlu0 %2938
    %2940 = vset.pattern.permute.xlu0 0
    %2941 = vperm.xlu0 %2940, %v2452
    %v2942 = vpop.permute.xlu0 %2941
    %2943 = vset.pattern.permute.xlu0 0
    %2944 = vperm.xlu0 %2943, %v2453
    %v2945 = vpop.permute.xlu0 %2944
    %2946 = vset.pattern.permute.xlu0 0
    %2947 = vperm.xlu0 %2946, %v2454
    %v2948 = vpop.permute.xlu0 %2947
    %2949 = vset.pattern.permute.xlu0 0
    %2950 = vperm.xlu0 %2949, %v2455
    %v2951 = vpop.permute.xlu0 %2950
    %2952 = vset.pattern.permute.xlu0 0
    %2953 = vperm.xlu0 %2952, %v2456
    %v2954 = vpop.permute.xlu0 %2953
    %2955 = vset.pattern.permute.xlu0 0
    %2956 = vperm.xlu0 %2955, %v2457
    %v2957 = vpop.permute.xlu0 %2956
    %2958 = vset.pattern.permute.xlu0 0
    %2959 = vperm.xlu0 %2958, %v2458
    %v2960 = vpop.permute.xlu0 %2959
    %2961 = vset.pattern.permute.xlu0 0
    %2962 = vperm.xlu0 %2961, %v2459
    %v2963 = vpop.permute.xlu0 %2962
    %2964 = vset.pattern.permute.xlu0 0
    %2965 = vperm.xlu0 %2964, %v2460
    %v2966 = vpop.permute.xlu0 %2965
    %2967 = vset.pattern.permute.xlu0 0
    %2968 = vperm.xlu0 %2967, %v2461
    %v2969 = vpop.permute.xlu0 %2968
    %2970 = vset.pattern.permute.xlu0 0
    %2971 = vperm.xlu0 %2970, %v2462
    %v2972 = vpop.permute.xlu0 %2971
    %2973 = vset.pattern.permute.xlu0 0
    %2974 = vperm.xlu0 %2973, %v2463
    %v2975 = vpop.permute.xlu0 %2974
    %v2976 = vlaneseq
    %v2977 = vand.u32 %v2976, 127
    %v2978 = vperm.slane %v2594, %v2977
    %v2979 = vadd.s32 %v2977, 4294967288
    %v2980 = vperm.slane %v2597, %v2979
    %vm2981 = vcmask 130112
    %v2982 = vsel %vm2981, %v2980, %v2978
    %v2983 = vadd.s32 %v2977, 4294967280
    %v2984 = vperm.slane %v2600, %v2983
    %vm2985 = vcmask 195712
    %v2986 = vsel %vm2985, %v2984, %v2982
    %v2987 = vadd.s32 %v2977, 4294967272
    %v2988 = vperm.slane %v2603, %v2987
    %vm2989 = vcmask 261312
    %v2990 = vsel %vm2989, %v2988, %v2986
    %v2991 = vadd.s32 %v2977, 4294967264
    %v2992 = vperm.slane %v2606, %v2991
    %vm2993 = vcmask 326912
    %v2994 = vsel %vm2993, %v2992, %v2990
    %v2995 = vadd.s32 %v2977, 4294967256
    %v2996 = vperm.slane %v2609, %v2995
    %vm2997 = vcmask 392512
    %v2998 = vsel %vm2997, %v2996, %v2994
    %v2999 = vadd.s32 %v2977, 4294967248
    %v3000 = vperm.slane %v2612, %v2999
    %vm3001 = vcmask 458112
    %v3002 = vsel %vm3001, %v3000, %v2998
    %v3003 = vadd.s32 %v2977, 4294967240
    %v3004 = vperm.slane %v2615, %v3003
    %vm3005 = vcmask 523712
    %v3006 = vsel %vm3005, %v3004, %v3002
    %v3007 = vadd.s32 %v2977, 4294967232
    %v3008 = vperm.slane %v2618, %v3007
    %vm3009 = vcmask 589312
    %v3010 = vsel %vm3009, %v3008, %v3006
    %v3011 = vadd.s32 %v2977, 4294967224
    %v3012 = vperm.slane %v2621, %v3011
    %vm3013 = vcmask 654912
    %v3014 = vsel %vm3013, %v3012, %v3010
    %v3015 = vadd.s32 %v2977, 4294967216
    %v3016 = vperm.slane %v2624, %v3015
    %vm3017 = vcmask 720512
    %v3018 = vsel %vm3017, %v3016, %v3014
    %v3019 = vadd.s32 %v2977, 4294967208
    %v3020 = vperm.slane %v2627, %v3019
    %vm3021 = vcmask 786112
    %v3022 = vsel %vm3021, %v3020, %v3018
    %v3023 = vadd.s32 %v2977, 4294967200
    %v3024 = vperm.slane %v2630, %v3023
    %vm3025 = vcmask 851712
    %v3026 = vsel %vm3025, %v3024, %v3022
    %v3027 = vadd.s32 %v2977, 4294967192
    %v3028 = vperm.slane %v2633, %v3027
    %vm3029 = vcmask 917312
    %v3030 = vsel %vm3029, %v3028, %v3026
    %v3031 = vadd.s32 %v2977, 4294967184
    %v3032 = vperm.slane %v2636, %v3031
    %vm3033 = vcmask 982912
    %v3034 = vsel %vm3033, %v3032, %v3030
    %v3035 = vadd.s32 %v2977, 4294967176
    %v3036 = vperm.slane %v2639, %v3035
    %vm3037 = vcmask 1048512
    %v3038 = vsel %vm3037, %v3036, %v3034
    %v3039 = vperm.slane %v2642, %v2977
    %v3040 = vperm.slane %v2645, %v2979
    %v3041 = vsel %vm2981, %v3040, %v3039
    %v3042 = vperm.slane %v2648, %v2983
    %v3043 = vsel %vm2985, %v3042, %v3041
    %v3044 = vperm.slane %v2651, %v2987
    %v3045 = vsel %vm2989, %v3044, %v3043
    %v3046 = vperm.slane %v2654, %v2991
    %v3047 = vsel %vm2993, %v3046, %v3045
    %v3048 = vperm.slane %v2657, %v2995
    %v3049 = vsel %vm2997, %v3048, %v3047
    %v3050 = vperm.slane %v2660, %v2999
    %v3051 = vsel %vm3001, %v3050, %v3049
    %v3052 = vperm.slane %v2663, %v3003
    %v3053 = vsel %vm3005, %v3052, %v3051
    %v3054 = vperm.slane %v2666, %v3007
    %v3055 = vsel %vm3009, %v3054, %v3053
    %v3056 = vperm.slane %v2669, %v3011
    %v3057 = vsel %vm3013, %v3056, %v3055
    %v3058 = vperm.slane %v2672, %v3015
    %v3059 = vsel %vm3017, %v3058, %v3057
    %v3060 = vperm.slane %v2675, %v3019
    %v3061 = vsel %vm3021, %v3060, %v3059
    %v3062 = vperm.slane %v2678, %v3023
    %v3063 = vsel %vm3025, %v3062, %v3061
    %v3064 = vperm.slane %v2681, %v3027
    %v3065 = vsel %vm3029, %v3064, %v3063
    %v3066 = vperm.slane %v2684, %v3031
    %v3067 = vsel %vm3033, %v3066, %v3065
    %v3068 = vperm.slane %v2687, %v3035
    %v3069 = vsel %vm3037, %v3068, %v3067
    %v3070 = vperm.slane %v2690, %v2977
    %v3071 = vperm.slane %v2693, %v2979
    %v3072 = vsel %vm2981, %v3071, %v3070
    %v3073 = vperm.slane %v2696, %v2983
    %v3074 = vsel %vm2985, %v3073, %v3072
    %v3075 = vperm.slane %v2699, %v2987
    %v3076 = vsel %vm2989, %v3075, %v3074
    %v3077 = vperm.slane %v2702, %v2991
    %v3078 = vsel %vm2993, %v3077, %v3076
    %v3079 = vperm.slane %v2705, %v2995
    %v3080 = vsel %vm2997, %v3079, %v3078
    %v3081 = vperm.slane %v2708, %v2999
    %v3082 = vsel %vm3001, %v3081, %v3080
    %v3083 = vperm.slane %v2711, %v3003
    %v3084 = vsel %vm3005, %v3083, %v3082
    %v3085 = vperm.slane %v2714, %v3007
    %v3086 = vsel %vm3009, %v3085, %v3084
    %v3087 = vperm.slane %v2717, %v3011
    %v3088 = vsel %vm3013, %v3087, %v3086
    %v3089 = vperm.slane %v2720, %v3015
    %v3090 = vsel %vm3017, %v3089, %v3088
    %v3091 = vperm.slane %v2723, %v3019
    %v3092 = vsel %vm3021, %v3091, %v3090
    %v3093 = vperm.slane %v2726, %v3023
    %v3094 = vsel %vm3025, %v3093, %v3092
    %v3095 = vperm.slane %v2729, %v3027
    %v3096 = vsel %vm3029, %v3095, %v3094
    %v3097 = vperm.slane %v2732, %v3031
    %v3098 = vsel %vm3033, %v3097, %v3096
    %v3099 = vperm.slane %v2735, %v3035
    %v3100 = vsel %vm3037, %v3099, %v3098
    %v3101 = vperm.slane %v2738, %v2977
    %v3102 = vperm.slane %v2741, %v2979
    %v3103 = vsel %vm2981, %v3102, %v3101
    %v3104 = vperm.slane %v2744, %v2983
    %v3105 = vsel %vm2985, %v3104, %v3103
    %v3106 = vperm.slane %v2747, %v2987
    %v3107 = vsel %vm2989, %v3106, %v3105
    %v3108 = vperm.slane %v2750, %v2991
    %v3109 = vsel %vm2993, %v3108, %v3107
    %v3110 = vperm.slane %v2753, %v2995
    %v3111 = vsel %vm2997, %v3110, %v3109
    %v3112 = vperm.slane %v2756, %v2999
    %v3113 = vsel %vm3001, %v3112, %v3111
    %v3114 = vperm.slane %v2759, %v3003
    %v3115 = vsel %vm3005, %v3114, %v3113
    %v3116 = vperm.slane %v2762, %v3007
    %v3117 = vsel %vm3009, %v3116, %v3115
    %v3118 = vperm.slane %v2765, %v3011
    %v3119 = vsel %vm3013, %v3118, %v3117
    %v3120 = vperm.slane %v2768, %v3015
    %v3121 = vsel %vm3017, %v3120, %v3119
    %v3122 = vperm.slane %v2771, %v3019
    %v3123 = vsel %vm3021, %v3122, %v3121
    %v3124 = vperm.slane %v2774, %v3023
    %v3125 = vsel %vm3025, %v3124, %v3123
    %v3126 = vperm.slane %v2777, %v3027
    %v3127 = vsel %vm3029, %v3126, %v3125
    %v3128 = vperm.slane %v2780, %v3031
    %v3129 = vsel %vm3033, %v3128, %v3127
    %v3130 = vperm.slane %v2783, %v3035
    %v3131 = vsel %vm3037, %v3130, %v3129
    %v3132 = vperm.slane %v2786, %v2977
    %v3133 = vperm.slane %v2789, %v2979
    %v3134 = vsel %vm2981, %v3133, %v3132
    %v3135 = vperm.slane %v2792, %v2983
    %v3136 = vsel %vm2985, %v3135, %v3134
    %v3137 = vperm.slane %v2795, %v2987
    %v3138 = vsel %vm2989, %v3137, %v3136
    %v3139 = vperm.slane %v2798, %v2991
    %v3140 = vsel %vm2993, %v3139, %v3138
    %v3141 = vperm.slane %v2801, %v2995
    %v3142 = vsel %vm2997, %v3141, %v3140
    %v3143 = vperm.slane %v2804, %v2999
    %v3144 = vsel %vm3001, %v3143, %v3142
    %v3145 = vperm.slane %v2807, %v3003
    %v3146 = vsel %vm3005, %v3145, %v3144
    %v3147 = vperm.slane %v2810, %v3007
    %v3148 = vsel %vm3009, %v3147, %v3146
    %v3149 = vperm.slane %v2813, %v3011
    %v3150 = vsel %vm3013, %v3149, %v3148
    %v3151 = vperm.slane %v2816, %v3015
    %v3152 = vsel %vm3017, %v3151, %v3150
    %v3153 = vperm.slane %v2819, %v3019
    %v3154 = vsel %vm3021, %v3153, %v3152
    %v3155 = vperm.slane %v2822, %v3023
    %v3156 = vsel %vm3025, %v3155, %v3154
    %v3157 = vperm.slane %v2825, %v3027
    %v3158 = vsel %vm3029, %v3157, %v3156
    %v3159 = vperm.slane %v2828, %v3031
    %v3160 = vsel %vm3033, %v3159, %v3158
    %v3161 = vperm.slane %v2831, %v3035
    %v3162 = vsel %vm3037, %v3161, %v3160
    %v3163 = vperm.slane %v2834, %v2977
    %v3164 = vperm.slane %v2837, %v2979
    %v3165 = vsel %vm2981, %v3164, %v3163
    %v3166 = vperm.slane %v2840, %v2983
    %v3167 = vsel %vm2985, %v3166, %v3165
    %v3168 = vperm.slane %v2843, %v2987
    %v3169 = vsel %vm2989, %v3168, %v3167
    %v3170 = vperm.slane %v2846, %v2991
    %v3171 = vsel %vm2993, %v3170, %v3169
    %v3172 = vperm.slane %v2849, %v2995
    %v3173 = vsel %vm2997, %v3172, %v3171
    %v3174 = vperm.slane %v2852, %v2999
    %v3175 = vsel %vm3001, %v3174, %v3173
    %v3176 = vperm.slane %v2855, %v3003
    %v3177 = vsel %vm3005, %v3176, %v3175
    %v3178 = vperm.slane %v2858, %v3007
    %v3179 = vsel %vm3009, %v3178, %v3177
    %v3180 = vperm.slane %v2861, %v3011
    %v3181 = vsel %vm3013, %v3180, %v3179
    %v3182 = vperm.slane %v2864, %v3015
    %v3183 = vsel %vm3017, %v3182, %v3181
    %v3184 = vperm.slane %v2867, %v3019
    %v3185 = vsel %vm3021, %v3184, %v3183
    %v3186 = vperm.slane %v2870, %v3023
    %v3187 = vsel %vm3025, %v3186, %v3185
    %v3188 = vperm.slane %v2873, %v3027
    %v3189 = vsel %vm3029, %v3188, %v3187
    %v3190 = vperm.slane %v2876, %v3031
    %v3191 = vsel %vm3033, %v3190, %v3189
    %v3192 = vperm.slane %v2879, %v3035
    %v3193 = vsel %vm3037, %v3192, %v3191
    %v3194 = vperm.slane %v2882, %v2977
    %v3195 = vperm.slane %v2885, %v2979
    %v3196 = vsel %vm2981, %v3195, %v3194
    %v3197 = vperm.slane %v2888, %v2983
    %v3198 = vsel %vm2985, %v3197, %v3196
    %v3199 = vperm.slane %v2891, %v2987
    %v3200 = vsel %vm2989, %v3199, %v3198
    %v3201 = vperm.slane %v2894, %v2991
    %v3202 = vsel %vm2993, %v3201, %v3200
    %v3203 = vperm.slane %v2897, %v2995
    %v3204 = vsel %vm2997, %v3203, %v3202
    %v3205 = vperm.slane %v2900, %v2999
    %v3206 = vsel %vm3001, %v3205, %v3204
    %v3207 = vperm.slane %v2903, %v3003
    %v3208 = vsel %vm3005, %v3207, %v3206
    %v3209 = vperm.slane %v2906, %v3007
    %v3210 = vsel %vm3009, %v3209, %v3208
    %v3211 = vperm.slane %v2909, %v3011
    %v3212 = vsel %vm3013, %v3211, %v3210
    %v3213 = vperm.slane %v2912, %v3015
    %v3214 = vsel %vm3017, %v3213, %v3212
    %v3215 = vperm.slane %v2915, %v3019
    %v3216 = vsel %vm3021, %v3215, %v3214
    %v3217 = vperm.slane %v2918, %v3023
    %v3218 = vsel %vm3025, %v3217, %v3216
    %v3219 = vperm.slane %v2921, %v3027
    %v3220 = vsel %vm3029, %v3219, %v3218
    %v3221 = vperm.slane %v2924, %v3031
    %v3222 = vsel %vm3033, %v3221, %v3220
    %v3223 = vperm.slane %v2927, %v3035
    %v3224 = vsel %vm3037, %v3223, %v3222
    %v3225 = vperm.slane %v2930, %v2977
    %v3226 = vperm.slane %v2933, %v2979
    %v3227 = vsel %vm2981, %v3226, %v3225
    %v3228 = vperm.slane %v2936, %v2983
    %v3229 = vsel %vm2985, %v3228, %v3227
    %v3230 = vperm.slane %v2939, %v2987
    %v3231 = vsel %vm2989, %v3230, %v3229
    %v3232 = vperm.slane %v2942, %v2991
    %v3233 = vsel %vm2993, %v3232, %v3231
    %v3234 = vperm.slane %v2945, %v2995
    %v3235 = vsel %vm2997, %v3234, %v3233
    %v3236 = vperm.slane %v2948, %v2999
    %v3237 = vsel %vm3001, %v3236, %v3235
    %v3238 = vperm.slane %v2951, %v3003
    %v3239 = vsel %vm3005, %v3238, %v3237
    %v3240 = vperm.slane %v2954, %v3007
    %v3241 = vsel %vm3009, %v3240, %v3239
    %v3242 = vperm.slane %v2957, %v3011
    %v3243 = vsel %vm3013, %v3242, %v3241
    %v3244 = vperm.slane %v2960, %v3015
    %v3245 = vsel %vm3017, %v3244, %v3243
    %v3246 = vperm.slane %v2963, %v3019
    %v3247 = vsel %vm3021, %v3246, %v3245
    %v3248 = vperm.slane %v2966, %v3023
    %v3249 = vsel %vm3025, %v3248, %v3247
    %v3250 = vperm.slane %v2969, %v3027
    %v3251 = vsel %vm3029, %v3250, %v3249
    %v3252 = vperm.slane %v2972, %v3031
    %v3253 = vsel %vm3033, %v3252, %v3251
    %v3254 = vperm.slane %v2975, %v3035
    %v3255 = vsel %vm3037, %v3254, %v3253
    %vm3256 = vcmask 1041409
    %v3257 = vsel %vm3256, %v3069, %v3038
    %vm3258 = vcmask 1042434
    %v3259 = vsel %vm3258, %v3100, %v3257
    %vm3260 = vcmask 1043459
    %v3261 = vsel %vm3260, %v3131, %v3259
    %vm3262 = vcmask 1044484
    %v3263 = vsel %vm3262, %v3162, %v3261
    %vm3264 = vcmask 1045509
    %v3265 = vsel %vm3264, %v3193, %v3263
    %vm3266 = vcmask 1046534
    %v3267 = vsel %vm3266, %v3224, %v3265
    %vm3268 = vcmask 1047559
    %v3269 = vsel %vm3268, %v3255, %v3267
    %3271 = vst [vmem:[#allocation15] sm:$0xff] %v3269
    %s3272 = smul.u32 8, 128
    %s3273 = scalar_lea.vmem [#allocation2], %s3272
    %v3274 = vld [vmem:[%s3273] sm:$0xff]
    %v3275 = vld [vmem:[%s3273 + $0x8] sm:$0xff]
    %v3276 = vld [vmem:[%s3273 + $0x10] sm:$0xff]
    %v3277 = vld [vmem:[%s3273 + $0x18] sm:$0xff]
    %v3278 = vld [vmem:[%s3273 + $0x20] sm:$0xff]
    %v3279 = vld [vmem:[%s3273 + $0x28] sm:$0xff]
    %v3280 = vld [vmem:[%s3273 + $0x30] sm:$0xff]
    %v3281 = vld [vmem:[%s3273 + $0x38] sm:$0xff]
    %v3282 = vld [vmem:[%s3273 + $0x40] sm:$0xff]
    %v3283 = vld [vmem:[%s3273 + $0x48] sm:$0xff]
    %v3284 = vld [vmem:[%s3273 + $0x50] sm:$0xff]
    %v3285 = vld [vmem:[%s3273 + $0x58] sm:$0xff]
    %v3286 = vld [vmem:[%s3273 + $0x60] sm:$0xff]
    %v3287 = vld [vmem:[%s3273 + $0x68] sm:$0xff]
    %v3288 = vld [vmem:[%s3273 + $0x70] sm:$0xff]
    %v3289 = vld [vmem:[%s3273 + $0x78] sm:$0xff]
    %v3290 = vld [vmem:[%s3273 + $0x80] sm:$0xff]
    %v3291 = vld [vmem:[%s3273 + $0x88] sm:$0xff]
    %v3292 = vld [vmem:[%s3273 + $0x90] sm:$0xff]
    %v3293 = vld [vmem:[%s3273 + $0x98] sm:$0xff]
    %v3294 = vld [vmem:[%s3273 + $0xa0] sm:$0xff]
    %v3295 = vld [vmem:[%s3273 + $0xa8] sm:$0xff]
    %v3296 = vld [vmem:[%s3273 + $0xb0] sm:$0xff]
    %v3297 = vld [vmem:[%s3273 + $0xb8] sm:$0xff]
    %v3298 = vld [vmem:[%s3273 + $0xc0] sm:$0xff]
    %v3299 = vld [vmem:[%s3273 + $0xc8] sm:$0xff]
    %v3300 = vld [vmem:[%s3273 + $0xd0] sm:$0xff]
    %v3301 = vld [vmem:[%s3273 + $0xd8] sm:$0xff]
    %v3302 = vld [vmem:[%s3273 + $0xe0] sm:$0xff]
    %v3303 = vld [vmem:[%s3273 + $0xe8] sm:$0xff]
    %v3304 = vld [vmem:[%s3273 + $0xf0] sm:$0xff]
    %v3305 = vld [vmem:[%s3273 + $0xf8] sm:$0xff]
    %v3306 = vld [vmem:[%s3273 + $0x100] sm:$0xff]
    %v3307 = vld [vmem:[%s3273 + $0x108] sm:$0xff]
    %v3308 = vld [vmem:[%s3273 + $0x110] sm:$0xff]
    %v3309 = vld [vmem:[%s3273 + $0x118] sm:$0xff]
    %v3310 = vld [vmem:[%s3273 + $0x120] sm:$0xff]
    %v3311 = vld [vmem:[%s3273 + $0x128] sm:$0xff]
    %v3312 = vld [vmem:[%s3273 + $0x130] sm:$0xff]
    %v3313 = vld [vmem:[%s3273 + $0x138] sm:$0xff]
    %v3314 = vld [vmem:[%s3273 + $0x140] sm:$0xff]
    %v3315 = vld [vmem:[%s3273 + $0x148] sm:$0xff]
    %v3316 = vld [vmem:[%s3273 + $0x150] sm:$0xff]
    %v3317 = vld [vmem:[%s3273 + $0x158] sm:$0xff]
    %v3318 = vld [vmem:[%s3273 + $0x160] sm:$0xff]
    %v3319 = vld [vmem:[%s3273 + $0x168] sm:$0xff]
    %v3320 = vld [vmem:[%s3273 + $0x170] sm:$0xff]
    %v3321 = vld [vmem:[%s3273 + $0x178] sm:$0xff]
    %v3322 = vld [vmem:[%s3273 + $0x180] sm:$0xff]
    %v3323 = vld [vmem:[%s3273 + $0x188] sm:$0xff]
    %v3324 = vld [vmem:[%s3273 + $0x190] sm:$0xff]
    %v3325 = vld [vmem:[%s3273 + $0x198] sm:$0xff]
    %v3326 = vld [vmem:[%s3273 + $0x1a0] sm:$0xff]
    %v3327 = vld [vmem:[%s3273 + $0x1a8] sm:$0xff]
    %v3328 = vld [vmem:[%s3273 + $0x1b0] sm:$0xff]
    %v3329 = vld [vmem:[%s3273 + $0x1b8] sm:$0xff]
    %v3330 = vld [vmem:[%s3273 + $0x1c0] sm:$0xff]
    %v3331 = vld [vmem:[%s3273 + $0x1c8] sm:$0xff]
    %v3332 = vld [vmem:[%s3273 + $0x1d0] sm:$0xff]
    %v3333 = vld [vmem:[%s3273 + $0x1d8] sm:$0xff]
    %v3334 = vld [vmem:[%s3273 + $0x1e0] sm:$0xff]
    %v3335 = vld [vmem:[%s3273 + $0x1e8] sm:$0xff]
    %v3336 = vld [vmem:[%s3273 + $0x1f0] sm:$0xff]
    %v3337 = vld [vmem:[%s3273 + $0x1f8] sm:$0xff]
    %v3338 = vld [vmem:[%s3273 + $0x200] sm:$0xff]
    %v3339 = vld [vmem:[%s3273 + $0x208] sm:$0xff]
    %v3340 = vld [vmem:[%s3273 + $0x210] sm:$0xff]
    %v3341 = vld [vmem:[%s3273 + $0x218] sm:$0xff]
    %v3342 = vld [vmem:[%s3273 + $0x220] sm:$0xff]
    %v3343 = vld [vmem:[%s3273 + $0x228] sm:$0xff]
    %v3344 = vld [vmem:[%s3273 + $0x230] sm:$0xff]
    %v3345 = vld [vmem:[%s3273 + $0x238] sm:$0xff]
    %v3346 = vld [vmem:[%s3273 + $0x240] sm:$0xff]
    %v3347 = vld [vmem:[%s3273 + $0x248] sm:$0xff]
    %v3348 = vld [vmem:[%s3273 + $0x250] sm:$0xff]
    %v3349 = vld [vmem:[%s3273 + $0x258] sm:$0xff]
    %v3350 = vld [vmem:[%s3273 + $0x260] sm:$0xff]
    %v3351 = vld [vmem:[%s3273 + $0x268] sm:$0xff]
    %v3352 = vld [vmem:[%s3273 + $0x270] sm:$0xff]
    %v3353 = vld [vmem:[%s3273 + $0x278] sm:$0xff]
    %v3354 = vld [vmem:[%s3273 + $0x280] sm:$0xff]
    %v3355 = vld [vmem:[%s3273 + $0x288] sm:$0xff]
    %v3356 = vld [vmem:[%s3273 + $0x290] sm:$0xff]
    %v3357 = vld [vmem:[%s3273 + $0x298] sm:$0xff]
    %v3358 = vld [vmem:[%s3273 + $0x2a0] sm:$0xff]
    %v3359 = vld [vmem:[%s3273 + $0x2a8] sm:$0xff]
    %v3360 = vld [vmem:[%s3273 + $0x2b0] sm:$0xff]
    %v3361 = vld [vmem:[%s3273 + $0x2b8] sm:$0xff]
    %v3362 = vld [vmem:[%s3273 + $0x2c0] sm:$0xff]
    %v3363 = vld [vmem:[%s3273 + $0x2c8] sm:$0xff]
    %v3364 = vld [vmem:[%s3273 + $0x2d0] sm:$0xff]
    %v3365 = vld [vmem:[%s3273 + $0x2d8] sm:$0xff]
    %v3366 = vld [vmem:[%s3273 + $0x2e0] sm:$0xff]
    %v3367 = vld [vmem:[%s3273 + $0x2e8] sm:$0xff]
    %v3368 = vld [vmem:[%s3273 + $0x2f0] sm:$0xff]
    %v3369 = vld [vmem:[%s3273 + $0x2f8] sm:$0xff]
    %v3370 = vld [vmem:[%s3273 + $0x300] sm:$0xff]
    %v3371 = vld [vmem:[%s3273 + $0x308] sm:$0xff]
    %v3372 = vld [vmem:[%s3273 + $0x310] sm:$0xff]
    %v3373 = vld [vmem:[%s3273 + $0x318] sm:$0xff]
    %v3374 = vld [vmem:[%s3273 + $0x320] sm:$0xff]
    %v3375 = vld [vmem:[%s3273 + $0x328] sm:$0xff]
    %v3376 = vld [vmem:[%s3273 + $0x330] sm:$0xff]
    %v3377 = vld [vmem:[%s3273 + $0x338] sm:$0xff]
    %v3378 = vld [vmem:[%s3273 + $0x340] sm:$0xff]
    %v3379 = vld [vmem:[%s3273 + $0x348] sm:$0xff]
    %v3380 = vld [vmem:[%s3273 + $0x350] sm:$0xff]
    %v3381 = vld [vmem:[%s3273 + $0x358] sm:$0xff]
    %v3382 = vld [vmem:[%s3273 + $0x360] sm:$0xff]
    %v3383 = vld [vmem:[%s3273 + $0x368] sm:$0xff]
    %v3384 = vld [vmem:[%s3273 + $0x370] sm:$0xff]
    %v3385 = vld [vmem:[%s3273 + $0x378] sm:$0xff]
    %v3386 = vld [vmem:[%s3273 + $0x380] sm:$0xff]
    %v3387 = vld [vmem:[%s3273 + $0x388] sm:$0xff]
    %v3388 = vld [vmem:[%s3273 + $0x390] sm:$0xff]
    %v3389 = vld [vmem:[%s3273 + $0x398] sm:$0xff]
    %v3390 = vld [vmem:[%s3273 + $0x3a0] sm:$0xff]
    %v3391 = vld [vmem:[%s3273 + $0x3a8] sm:$0xff]
    %v3392 = vld [vmem:[%s3273 + $0x3b0] sm:$0xff]
    %v3393 = vld [vmem:[%s3273 + $0x3b8] sm:$0xff]
    %v3394 = vld [vmem:[%s3273 + $0x3c0] sm:$0xff]
    %v3395 = vld [vmem:[%s3273 + $0x3c8] sm:$0xff]
    %v3396 = vld [vmem:[%s3273 + $0x3d0] sm:$0xff]
    %v3397 = vld [vmem:[%s3273 + $0x3d8] sm:$0xff]
    %v3398 = vld [vmem:[%s3273 + $0x3e0] sm:$0xff]
    %v3399 = vld [vmem:[%s3273 + $0x3e8] sm:$0xff]
    %v3400 = vld [vmem:[%s3273 + $0x3f0] sm:$0xff]
    %v3401 = vld [vmem:[%s3273 + $0x3f8] sm:$0xff]
    %v3402 = vld [vmem:[#allocation8] sm:$0xff]
    %v3403 = vld [vmem:[#allocation8 + $0x8] sm:$0xff]
    %v3404 = vld [vmem:[#allocation8 + $0x10] sm:$0xff]
    %v3405 = vld [vmem:[#allocation8 + $0x18] sm:$0xff]
    %v3406 = vld [vmem:[#allocation8 + $0x20] sm:$0xff]
    %v3407 = vld [vmem:[#allocation8 + $0x28] sm:$0xff]
    %v3408 = vld [vmem:[#allocation8 + $0x30] sm:$0xff]
    %v3409 = vld [vmem:[#allocation8 + $0x38] sm:$0xff]
    %v3410 = vld [vmem:[#allocation8 + $0x40] sm:$0xff]
    %v3411 = vld [vmem:[#allocation8 + $0x48] sm:$0xff]
    %v3412 = vld [vmem:[#allocation8 + $0x50] sm:$0xff]
    %v3413 = vld [vmem:[#allocation8 + $0x58] sm:$0xff]
    %v3414 = vld [vmem:[#allocation8 + $0x60] sm:$0xff]
    %v3415 = vld [vmem:[#allocation8 + $0x68] sm:$0xff]
    %v3416 = vld [vmem:[#allocation8 + $0x70] sm:$0xff]
    %v3417 = vld [vmem:[#allocation8 + $0x78] sm:$0xff]
    %3418 = vmatpush.msra.mxu0 %v3417
    %3419 = vmatpush.msra.mxu0 %v3416
    %3420 = vmatpush.msra.mxu0 %v3415
    %3421 = vmatpush.msra.mxu0 %v3414
    %3422 = vmatpush.msra.mxu0 %v3413
    %3423 = vmatpush.msra.mxu0 %v3412
    %3424 = vmatpush.msra.mxu0 %v3411
    %3425 = vmatpush.msra.mxu0 %v3410
    %3426 = vmatpush.msra.mxu0 %v3409
    %3427 = vmatpush.msra.mxu0 %v3408
    %3428 = vmatpush.msra.mxu0 %v3407
    %3429 = vmatpush.msra.mxu0 %v3406
    %3430 = vmatpush.msra.mxu0 %v3405
    %3431 = vmatpush.msra.mxu0 %v3404
    %3432 = vmatpush.msra.mxu0 %v3403
    %3433 = vmatpush.msra.mxu0 %v3402
    %3434 = vmatmul.f32.gmra.mxu0 %v3274
    %v3435 = vpop.f32.mrf.mxu0
    %v3436 = vadd.f32 0.0, %v3435
    %3437 = vmatmul.f32.gmra.mxu0 %v3275
    %v3438 = vpop.f32.mrf.mxu0
    %v3439 = vadd.f32 0.0, %v3438
    %3440 = vmatmul.f32.gmra.mxu0 %v3276
    %v3441 = vpop.f32.mrf.mxu0
    %v3442 = vadd.f32 0.0, %v3441
    %3443 = vmatmul.f32.gmra.mxu0 %v3277
    %v3444 = vpop.f32.mrf.mxu0
    %v3445 = vadd.f32 0.0, %v3444
    %3446 = vmatmul.f32.gmra.mxu0 %v3278
    %v3447 = vpop.f32.mrf.mxu0
    %v3448 = vadd.f32 0.0, %v3447
    %3449 = vmatmul.f32.gmra.mxu0 %v3279
    %v3450 = vpop.f32.mrf.mxu0
    %v3451 = vadd.f32 0.0, %v3450
    %3452 = vmatmul.f32.gmra.mxu0 %v3280
    %v3453 = vpop.f32.mrf.mxu0
    %v3454 = vadd.f32 0.0, %v3453
    %3455 = vmatmul.f32.gmra.mxu0 %v3281
    %v3456 = vpop.f32.mrf.mxu0
    %v3457 = vadd.f32 0.0, %v3456
    %3458 = vmatmul.f32.gmra.mxu0 %v3282
    %v3459 = vpop.f32.mrf.mxu0
    %v3460 = vadd.f32 0.0, %v3459
    %3461 = vmatmul.f32.gmra.mxu0 %v3283
    %v3462 = vpop.f32.mrf.mxu0
    %v3463 = vadd.f32 0.0, %v3462
    %3464 = vmatmul.f32.gmra.mxu0 %v3284
    %v3465 = vpop.f32.mrf.mxu0
    %v3466 = vadd.f32 0.0, %v3465
    %3467 = vmatmul.f32.gmra.mxu0 %v3285
    %v3468 = vpop.f32.mrf.mxu0
    %v3469 = vadd.f32 0.0, %v3468
    %3470 = vmatmul.f32.gmra.mxu0 %v3286
    %v3471 = vpop.f32.mrf.mxu0
    %v3472 = vadd.f32 0.0, %v3471
    %3473 = vmatmul.f32.gmra.mxu0 %v3287
    %v3474 = vpop.f32.mrf.mxu0
    %v3475 = vadd.f32 0.0, %v3474
    %3476 = vmatmul.f32.gmra.mxu0 %v3288
    %v3477 = vpop.f32.mrf.mxu0
    %v3478 = vadd.f32 0.0, %v3477
    %3479 = vmatmul.f32.gmra.mxu0 %v3289
    %v3480 = vpop.f32.mrf.mxu0
    %v3481 = vadd.f32 0.0, %v3480
    %3482 = vmatmul.f32.gmra.mxu0 %v3290
    %v3483 = vpop.f32.mrf.mxu0
    %v3484 = vadd.f32 0.0, %v3483
    %3485 = vmatmul.f32.gmra.mxu0 %v3291
    %v3486 = vpop.f32.mrf.mxu0
    %v3487 = vadd.f32 0.0, %v3486
    %3488 = vmatmul.f32.gmra.mxu0 %v3292
    %v3489 = vpop.f32.mrf.mxu0
    %v3490 = vadd.f32 0.0, %v3489
    %3491 = vmatmul.f32.gmra.mxu0 %v3293
    %v3492 = vpop.f32.mrf.mxu0
    %v3493 = vadd.f32 0.0, %v3492
    %3494 = vmatmul.f32.gmra.mxu0 %v3294
    %v3495 = vpop.f32.mrf.mxu0
    %v3496 = vadd.f32 0.0, %v3495
    %3497 = vmatmul.f32.gmra.mxu0 %v3295
    %v3498 = vpop.f32.mrf.mxu0
    %v3499 = vadd.f32 0.0, %v3498
    %3500 = vmatmul.f32.gmra.mxu0 %v3296
    %v3501 = vpop.f32.mrf.mxu0
    %v3502 = vadd.f32 0.0, %v3501
    %3503 = vmatmul.f32.gmra.mxu0 %v3297
    %v3504 = vpop.f32.mrf.mxu0
    %v3505 = vadd.f32 0.0, %v3504
    %3506 = vmatmul.f32.gmra.mxu0 %v3298
    %v3507 = vpop.f32.mrf.mxu0
    %v3508 = vadd.f32 0.0, %v3507
    %3509 = vmatmul.f32.gmra.mxu0 %v3299
    %v3510 = vpop.f32.mrf.mxu0
    %v3511 = vadd.f32 0.0, %v3510
    %3512 = vmatmul.f32.gmra.mxu0 %v3300
    %v3513 = vpop.f32.mrf.mxu0
    %v3514 = vadd.f32 0.0, %v3513
    %3515 = vmatmul.f32.gmra.mxu0 %v3301
    %v3516 = vpop.f32.mrf.mxu0
    %v3517 = vadd.f32 0.0, %v3516
    %3518 = vmatmul.f32.gmra.mxu0 %v3302
    %v3519 = vpop.f32.mrf.mxu0
    %v3520 = vadd.f32 0.0, %v3519
    %3521 = vmatmul.f32.gmra.mxu0 %v3303
    %v3522 = vpop.f32.mrf.mxu0
    %v3523 = vadd.f32 0.0, %v3522
    %3524 = vmatmul.f32.gmra.mxu0 %v3304
    %v3525 = vpop.f32.mrf.mxu0
    %v3526 = vadd.f32 0.0, %v3525
    %3527 = vmatmul.f32.gmra.mxu0 %v3305
    %v3528 = vpop.f32.mrf.mxu0
    %v3529 = vadd.f32 0.0, %v3528
    %3530 = vmatmul.f32.gmra.mxu0 %v3306
    %v3531 = vpop.f32.mrf.mxu0
    %v3532 = vadd.f32 0.0, %v3531
    %3533 = vmatmul.f32.gmra.mxu0 %v3307
    %v3534 = vpop.f32.mrf.mxu0
    %v3535 = vadd.f32 0.0, %v3534
    %3536 = vmatmul.f32.gmra.mxu0 %v3308
    %v3537 = vpop.f32.mrf.mxu0
    %v3538 = vadd.f32 0.0, %v3537
    %3539 = vmatmul.f32.gmra.mxu0 %v3309
    %v3540 = vpop.f32.mrf.mxu0
    %v3541 = vadd.f32 0.0, %v3540
    %3542 = vmatmul.f32.gmra.mxu0 %v3310
    %v3543 = vpop.f32.mrf.mxu0
    %v3544 = vadd.f32 0.0, %v3543
    %3545 = vmatmul.f32.gmra.mxu0 %v3311
    %v3546 = vpop.f32.mrf.mxu0
    %v3547 = vadd.f32 0.0, %v3546
    %3548 = vmatmul.f32.gmra.mxu0 %v3312
    %v3549 = vpop.f32.mrf.mxu0
    %v3550 = vadd.f32 0.0, %v3549
    %3551 = vmatmul.f32.gmra.mxu0 %v3313
    %v3552 = vpop.f32.mrf.mxu0
    %v3553 = vadd.f32 0.0, %v3552
    %3554 = vmatmul.f32.gmra.mxu0 %v3314
    %v3555 = vpop.f32.mrf.mxu0
    %v3556 = vadd.f32 0.0, %v3555
    %3557 = vmatmul.f32.gmra.mxu0 %v3315
    %v3558 = vpop.f32.mrf.mxu0
    %v3559 = vadd.f32 0.0, %v3558
    %3560 = vmatmul.f32.gmra.mxu0 %v3316
    %v3561 = vpop.f32.mrf.mxu0
    %v3562 = vadd.f32 0.0, %v3561
    %3563 = vmatmul.f32.gmra.mxu0 %v3317
    %v3564 = vpop.f32.mrf.mxu0
    %v3565 = vadd.f32 0.0, %v3564
    %3566 = vmatmul.f32.gmra.mxu0 %v3318
    %v3567 = vpop.f32.mrf.mxu0
    %v3568 = vadd.f32 0.0, %v3567
    %3569 = vmatmul.f32.gmra.mxu0 %v3319
    %v3570 = vpop.f32.mrf.mxu0
    %v3571 = vadd.f32 0.0, %v3570
    %3572 = vmatmul.f32.gmra.mxu0 %v3320
    %v3573 = vpop.f32.mrf.mxu0
    %v3574 = vadd.f32 0.0, %v3573
    %3575 = vmatmul.f32.gmra.mxu0 %v3321
    %v3576 = vpop.f32.mrf.mxu0
    %v3577 = vadd.f32 0.0, %v3576
    %3578 = vmatmul.f32.gmra.mxu0 %v3322
    %v3579 = vpop.f32.mrf.mxu0
    %v3580 = vadd.f32 0.0, %v3579
    %3581 = vmatmul.f32.gmra.mxu0 %v3323
    %v3582 = vpop.f32.mrf.mxu0
    %v3583 = vadd.f32 0.0, %v3582
    %3584 = vmatmul.f32.gmra.mxu0 %v3324
    %v3585 = vpop.f32.mrf.mxu0
    %v3586 = vadd.f32 0.0, %v3585
    %3587 = vmatmul.f32.gmra.mxu0 %v3325
    %v3588 = vpop.f32.mrf.mxu0
    %v3589 = vadd.f32 0.0, %v3588
    %3590 = vmatmul.f32.gmra.mxu0 %v3326
    %v3591 = vpop.f32.mrf.mxu0
    %v3592 = vadd.f32 0.0, %v3591
    %3593 = vmatmul.f32.gmra.mxu0 %v3327
    %v3594 = vpop.f32.mrf.mxu0
    %v3595 = vadd.f32 0.0, %v3594
    %3596 = vmatmul.f32.gmra.mxu0 %v3328
    %v3597 = vpop.f32.mrf.mxu0
    %v3598 = vadd.f32 0.0, %v3597
    %3599 = vmatmul.f32.gmra.mxu0 %v3329
    %v3600 = vpop.f32.mrf.mxu0
    %v3601 = vadd.f32 0.0, %v3600
    %3602 = vmatmul.f32.gmra.mxu0 %v3330
    %v3603 = vpop.f32.mrf.mxu0
    %v3604 = vadd.f32 0.0, %v3603
    %3605 = vmatmul.f32.gmra.mxu0 %v3331
    %v3606 = vpop.f32.mrf.mxu0
    %v3607 = vadd.f32 0.0, %v3606
    %3608 = vmatmul.f32.gmra.mxu0 %v3332
    %v3609 = vpop.f32.mrf.mxu0
    %v3610 = vadd.f32 0.0, %v3609
    %3611 = vmatmul.f32.gmra.mxu0 %v3333
    %v3612 = vpop.f32.mrf.mxu0
    %v3613 = vadd.f32 0.0, %v3612
    %3614 = vmatmul.f32.gmra.mxu0 %v3334
    %v3615 = vpop.f32.mrf.mxu0
    %v3616 = vadd.f32 0.0, %v3615
    %3617 = vmatmul.f32.gmra.mxu0 %v3335
    %v3618 = vpop.f32.mrf.mxu0
    %v3619 = vadd.f32 0.0, %v3618
    %3620 = vmatmul.f32.gmra.mxu0 %v3336
    %v3621 = vpop.f32.mrf.mxu0
    %v3622 = vadd.f32 0.0, %v3621
    %3623 = vmatmul.f32.gmra.mxu0 %v3337
    %v3624 = vpop.f32.mrf.mxu0
    %v3625 = vadd.f32 0.0, %v3624
    %3626 = vmatmul.f32.gmra.mxu0 %v3338
    %v3627 = vpop.f32.mrf.mxu0
    %v3628 = vadd.f32 0.0, %v3627
    %3629 = vmatmul.f32.gmra.mxu0 %v3339
    %v3630 = vpop.f32.mrf.mxu0
    %v3631 = vadd.f32 0.0, %v3630
    %3632 = vmatmul.f32.gmra.mxu0 %v3340
    %v3633 = vpop.f32.mrf.mxu0
    %v3634 = vadd.f32 0.0, %v3633
    %3635 = vmatmul.f32.gmra.mxu0 %v3341
    %v3636 = vpop.f32.mrf.mxu0
    %v3637 = vadd.f32 0.0, %v3636
    %3638 = vmatmul.f32.gmra.mxu0 %v3342
    %v3639 = vpop.f32.mrf.mxu0
    %v3640 = vadd.f32 0.0, %v3639
    %3641 = vmatmul.f32.gmra.mxu0 %v3343
    %v3642 = vpop.f32.mrf.mxu0
    %v3643 = vadd.f32 0.0, %v3642
    %3644 = vmatmul.f32.gmra.mxu0 %v3344
    %v3645 = vpop.f32.mrf.mxu0
    %v3646 = vadd.f32 0.0, %v3645
    %3647 = vmatmul.f32.gmra.mxu0 %v3345
    %v3648 = vpop.f32.mrf.mxu0
    %v3649 = vadd.f32 0.0, %v3648
    %3650 = vmatmul.f32.gmra.mxu0 %v3346
    %v3651 = vpop.f32.mrf.mxu0
    %v3652 = vadd.f32 0.0, %v3651
    %3653 = vmatmul.f32.gmra.mxu0 %v3347
    %v3654 = vpop.f32.mrf.mxu0
    %v3655 = vadd.f32 0.0, %v3654
    %3656 = vmatmul.f32.gmra.mxu0 %v3348
    %v3657 = vpop.f32.mrf.mxu0
    %v3658 = vadd.f32 0.0, %v3657
    %3659 = vmatmul.f32.gmra.mxu0 %v3349
    %v3660 = vpop.f32.mrf.mxu0
    %v3661 = vadd.f32 0.0, %v3660
    %3662 = vmatmul.f32.gmra.mxu0 %v3350
    %v3663 = vpop.f32.mrf.mxu0
    %v3664 = vadd.f32 0.0, %v3663
    %3665 = vmatmul.f32.gmra.mxu0 %v3351
    %v3666 = vpop.f32.mrf.mxu0
    %v3667 = vadd.f32 0.0, %v3666
    %3668 = vmatmul.f32.gmra.mxu0 %v3352
    %v3669 = vpop.f32.mrf.mxu0
    %v3670 = vadd.f32 0.0, %v3669
    %3671 = vmatmul.f32.gmra.mxu0 %v3353
    %v3672 = vpop.f32.mrf.mxu0
    %v3673 = vadd.f32 0.0, %v3672
    %3674 = vmatmul.f32.gmra.mxu0 %v3354
    %v3675 = vpop.f32.mrf.mxu0
    %v3676 = vadd.f32 0.0, %v3675
    %3677 = vmatmul.f32.gmra.mxu0 %v3355
    %v3678 = vpop.f32.mrf.mxu0
    %v3679 = vadd.f32 0.0, %v3678
    %3680 = vmatmul.f32.gmra.mxu0 %v3356
    %v3681 = vpop.f32.mrf.mxu0
    %v3682 = vadd.f32 0.0, %v3681
    %3683 = vmatmul.f32.gmra.mxu0 %v3357
    %v3684 = vpop.f32.mrf.mxu0
    %v3685 = vadd.f32 0.0, %v3684
    %3686 = vmatmul.f32.gmra.mxu0 %v3358
    %v3687 = vpop.f32.mrf.mxu0
    %v3688 = vadd.f32 0.0, %v3687
    %3689 = vmatmul.f32.gmra.mxu0 %v3359
    %v3690 = vpop.f32.mrf.mxu0
    %v3691 = vadd.f32 0.0, %v3690
    %3692 = vmatmul.f32.gmra.mxu0 %v3360
    %v3693 = vpop.f32.mrf.mxu0
    %v3694 = vadd.f32 0.0, %v3693
    %3695 = vmatmul.f32.gmra.mxu0 %v3361
    %v3696 = vpop.f32.mrf.mxu0
    %v3697 = vadd.f32 0.0, %v3696
    %3698 = vmatmul.f32.gmra.mxu0 %v3362
    %v3699 = vpop.f32.mrf.mxu0
    %v3700 = vadd.f32 0.0, %v3699
    %3701 = vmatmul.f32.gmra.mxu0 %v3363
    %v3702 = vpop.f32.mrf.mxu0
    %v3703 = vadd.f32 0.0, %v3702
    %3704 = vmatmul.f32.gmra.mxu0 %v3364
    %v3705 = vpop.f32.mrf.mxu0
    %v3706 = vadd.f32 0.0, %v3705
    %3707 = vmatmul.f32.gmra.mxu0 %v3365
    %v3708 = vpop.f32.mrf.mxu0
    %v3709 = vadd.f32 0.0, %v3708
    %3710 = vmatmul.f32.gmra.mxu0 %v3366
    %v3711 = vpop.f32.mrf.mxu0
    %v3712 = vadd.f32 0.0, %v3711
    %3713 = vmatmul.f32.gmra.mxu0 %v3367
    %v3714 = vpop.f32.mrf.mxu0
    %v3715 = vadd.f32 0.0, %v3714
    %3716 = vmatmul.f32.gmra.mxu0 %v3368
    %v3717 = vpop.f32.mrf.mxu0
    %v3718 = vadd.f32 0.0, %v3717
    %3719 = vmatmul.f32.gmra.mxu0 %v3369
    %v3720 = vpop.f32.mrf.mxu0
    %v3721 = vadd.f32 0.0, %v3720
    %3722 = vmatmul.f32.gmra.mxu0 %v3370
    %v3723 = vpop.f32.mrf.mxu0
    %v3724 = vadd.f32 0.0, %v3723
    %3725 = vmatmul.f32.gmra.mxu0 %v3371
    %v3726 = vpop.f32.mrf.mxu0
    %v3727 = vadd.f32 0.0, %v3726
    %3728 = vmatmul.f32.gmra.mxu0 %v3372
    %v3729 = vpop.f32.mrf.mxu0
    %v3730 = vadd.f32 0.0, %v3729
    %3731 = vmatmul.f32.gmra.mxu0 %v3373
    %v3732 = vpop.f32.mrf.mxu0
    %v3733 = vadd.f32 0.0, %v3732
    %3734 = vmatmul.f32.gmra.mxu0 %v3374
    %v3735 = vpop.f32.mrf.mxu0
    %v3736 = vadd.f32 0.0, %v3735
    %3737 = vmatmul.f32.gmra.mxu0 %v3375
    %v3738 = vpop.f32.mrf.mxu0
    %v3739 = vadd.f32 0.0, %v3738
    %3740 = vmatmul.f32.gmra.mxu0 %v3376
    %v3741 = vpop.f32.mrf.mxu0
    %v3742 = vadd.f32 0.0, %v3741
    %3743 = vmatmul.f32.gmra.mxu0 %v3377
    %v3744 = vpop.f32.mrf.mxu0
    %v3745 = vadd.f32 0.0, %v3744
    %3746 = vmatmul.f32.gmra.mxu0 %v3378
    %v3747 = vpop.f32.mrf.mxu0
    %v3748 = vadd.f32 0.0, %v3747
    %3749 = vmatmul.f32.gmra.mxu0 %v3379
    %v3750 = vpop.f32.mrf.mxu0
    %v3751 = vadd.f32 0.0, %v3750
    %3752 = vmatmul.f32.gmra.mxu0 %v3380
    %v3753 = vpop.f32.mrf.mxu0
    %v3754 = vadd.f32 0.0, %v3753
    %3755 = vmatmul.f32.gmra.mxu0 %v3381
    %v3756 = vpop.f32.mrf.mxu0
    %v3757 = vadd.f32 0.0, %v3756
    %3758 = vmatmul.f32.gmra.mxu0 %v3382
    %v3759 = vpop.f32.mrf.mxu0
    %v3760 = vadd.f32 0.0, %v3759
    %3761 = vmatmul.f32.gmra.mxu0 %v3383
    %v3762 = vpop.f32.mrf.mxu0
    %v3763 = vadd.f32 0.0, %v3762
    %3764 = vmatmul.f32.gmra.mxu0 %v3384
    %v3765 = vpop.f32.mrf.mxu0
    %v3766 = vadd.f32 0.0, %v3765
    %3767 = vmatmul.f32.gmra.mxu0 %v3385
    %v3768 = vpop.f32.mrf.mxu0
    %v3769 = vadd.f32 0.0, %v3768
    %3770 = vmatmul.f32.gmra.mxu0 %v3386
    %v3771 = vpop.f32.mrf.mxu0
    %v3772 = vadd.f32 0.0, %v3771
    %3773 = vmatmul.f32.gmra.mxu0 %v3387
    %v3774 = vpop.f32.mrf.mxu0
    %v3775 = vadd.f32 0.0, %v3774
    %3776 = vmatmul.f32.gmra.mxu0 %v3388
    %v3777 = vpop.f32.mrf.mxu0
    %v3778 = vadd.f32 0.0, %v3777
    %3779 = vmatmul.f32.gmra.mxu0 %v3389
    %v3780 = vpop.f32.mrf.mxu0
    %v3781 = vadd.f32 0.0, %v3780
    %3782 = vmatmul.f32.gmra.mxu0 %v3390
    %v3783 = vpop.f32.mrf.mxu0
    %v3784 = vadd.f32 0.0, %v3783
    %3785 = vmatmul.f32.gmra.mxu0 %v3391
    %v3786 = vpop.f32.mrf.mxu0
    %v3787 = vadd.f32 0.0, %v3786
    %3788 = vmatmul.f32.gmra.mxu0 %v3392
    %v3789 = vpop.f32.mrf.mxu0
    %v3790 = vadd.f32 0.0, %v3789
    %3791 = vmatmul.f32.gmra.mxu0 %v3393
    %v3792 = vpop.f32.mrf.mxu0
    %v3793 = vadd.f32 0.0, %v3792
    %3794 = vmatmul.f32.gmra.mxu0 %v3394
    %v3795 = vpop.f32.mrf.mxu0
    %v3796 = vadd.f32 0.0, %v3795
    %3797 = vmatmul.f32.gmra.mxu0 %v3395
    %v3798 = vpop.f32.mrf.mxu0
    %v3799 = vadd.f32 0.0, %v3798
    %3800 = vmatmul.f32.gmra.mxu0 %v3396
    %v3801 = vpop.f32.mrf.mxu0
    %v3802 = vadd.f32 0.0, %v3801
    %3803 = vmatmul.f32.gmra.mxu0 %v3397
    %v3804 = vpop.f32.mrf.mxu0
    %v3805 = vadd.f32 0.0, %v3804
    %3806 = vmatmul.f32.gmra.mxu0 %v3398
    %v3807 = vpop.f32.mrf.mxu0
    %v3808 = vadd.f32 0.0, %v3807
    %3809 = vmatmul.f32.gmra.mxu0 %v3399
    %v3810 = vpop.f32.mrf.mxu0
    %v3811 = vadd.f32 0.0, %v3810
    %3812 = vmatmul.f32.gmra.mxu0 %v3400
    %v3813 = vpop.f32.mrf.mxu0
    %v3814 = vadd.f32 0.0, %v3813
    %3815 = vmatmul.f32.gmra.mxu0 %v3401
    %v3816 = vpop.f32.mrf.mxu0
    %v3817 = vadd.f32 0.0, %v3816
    %3818 = vdwg.mxu0
    %v3819 = vadd.f32 %v3436, %v193
    %v3820 = vadd.f32 %v3439, %v196
    %v3821 = vadd.f32 %v3442, %v199
    %v3822 = vadd.f32 %v3445, %v202
    %v3823 = vadd.f32 %v3448, %v205
    %v3824 = vadd.f32 %v3451, %v208
    %v3825 = vadd.f32 %v3454, %v211
    %v3826 = vadd.f32 %v3457, %v214
    %v3827 = vadd.f32 %v3460, %v217
    %v3828 = vadd.f32 %v3463, %v220
    %v3829 = vadd.f32 %v3466, %v223
    %v3830 = vadd.f32 %v3469, %v226
    %v3831 = vadd.f32 %v3472, %v229
    %v3832 = vadd.f32 %v3475, %v232
    %v3833 = vadd.f32 %v3478, %v235
    %v3834 = vadd.f32 %v3481, %v238
    %v3835 = vadd.f32 %v3484, %v193
    %v3836 = vadd.f32 %v3487, %v196
    %v3837 = vadd.f32 %v3490, %v199
    %v3838 = vadd.f32 %v3493, %v202
    %v3839 = vadd.f32 %v3496, %v205
    %v3840 = vadd.f32 %v3499, %v208
    %v3841 = vadd.f32 %v3502, %v211
    %v3842 = vadd.f32 %v3505, %v214
    %v3843 = vadd.f32 %v3508, %v217
    %v3844 = vadd.f32 %v3511, %v220
    %v3845 = vadd.f32 %v3514, %v223
    %v3846 = vadd.f32 %v3517, %v226
    %v3847 = vadd.f32 %v3520, %v229
    %v3848 = vadd.f32 %v3523, %v232
    %v3849 = vadd.f32 %v3526, %v235
    %v3850 = vadd.f32 %v3529, %v238
    %v3851 = vadd.f32 %v3532, %v193
    %v3852 = vadd.f32 %v3535, %v196
    %v3853 = vadd.f32 %v3538, %v199
    %v3854 = vadd.f32 %v3541, %v202
    %v3855 = vadd.f32 %v3544, %v205
    %v3856 = vadd.f32 %v3547, %v208
    %v3857 = vadd.f32 %v3550, %v211
    %v3858 = vadd.f32 %v3553, %v214
    %v3859 = vadd.f32 %v3556, %v217
    %v3860 = vadd.f32 %v3559, %v220
    %v3861 = vadd.f32 %v3562, %v223
    %v3862 = vadd.f32 %v3565, %v226
    %v3863 = vadd.f32 %v3568, %v229
    %v3864 = vadd.f32 %v3571, %v232
    %v3865 = vadd.f32 %v3574, %v235
    %v3866 = vadd.f32 %v3577, %v238
    %v3867 = vadd.f32 %v3580, %v193
    %v3868 = vadd.f32 %v3583, %v196
    %v3869 = vadd.f32 %v3586, %v199
    %v3870 = vadd.f32 %v3589, %v202
    %v3871 = vadd.f32 %v3592, %v205
    %v3872 = vadd.f32 %v3595, %v208
    %v3873 = vadd.f32 %v3598, %v211
    %v3874 = vadd.f32 %v3601, %v214
    %v3875 = vadd.f32 %v3604, %v217
    %v3876 = vadd.f32 %v3607, %v220
    %v3877 = vadd.f32 %v3610, %v223
    %v3878 = vadd.f32 %v3613, %v226
    %v3879 = vadd.f32 %v3616, %v229
    %v3880 = vadd.f32 %v3619, %v232
    %v3881 = vadd.f32 %v3622, %v235
    %v3882 = vadd.f32 %v3625, %v238
    %v3883 = vadd.f32 %v3628, %v193
    %v3884 = vadd.f32 %v3631, %v196
    %v3885 = vadd.f32 %v3634, %v199
    %v3886 = vadd.f32 %v3637, %v202
    %v3887 = vadd.f32 %v3640, %v205
    %v3888 = vadd.f32 %v3643, %v208
    %v3889 = vadd.f32 %v3646, %v211
    %v3890 = vadd.f32 %v3649, %v214
    %v3891 = vadd.f32 %v3652, %v217
    %v3892 = vadd.f32 %v3655, %v220
    %v3893 = vadd.f32 %v3658, %v223
    %v3894 = vadd.f32 %v3661, %v226
    %v3895 = vadd.f32 %v3664, %v229
    %v3896 = vadd.f32 %v3667, %v232
    %v3897 = vadd.f32 %v3670, %v235
    %v3898 = vadd.f32 %v3673, %v238
    %v3899 = vadd.f32 %v3676, %v193
    %v3900 = vadd.f32 %v3679, %v196
    %v3901 = vadd.f32 %v3682, %v199
    %v3902 = vadd.f32 %v3685, %v202
    %v3903 = vadd.f32 %v3688, %v205
    %v3904 = vadd.f32 %v3691, %v208
    %v3905 = vadd.f32 %v3694, %v211
    %v3906 = vadd.f32 %v3697, %v214
    %v3907 = vadd.f32 %v3700, %v217
    %v3908 = vadd.f32 %v3703, %v220
    %v3909 = vadd.f32 %v3706, %v223
    %v3910 = vadd.f32 %v3709, %v226
    %v3911 = vadd.f32 %v3712, %v229
    %v3912 = vadd.f32 %v3715, %v232
    %v3913 = vadd.f32 %v3718, %v235
    %v3914 = vadd.f32 %v3721, %v238
    %v3915 = vadd.f32 %v3724, %v193
    %v3916 = vadd.f32 %v3727, %v196
    %v3917 = vadd.f32 %v3730, %v199
    %v3918 = vadd.f32 %v3733, %v202
    %v3919 = vadd.f32 %v3736, %v205
    %v3920 = vadd.f32 %v3739, %v208
    %v3921 = vadd.f32 %v3742, %v211
    %v3922 = vadd.f32 %v3745, %v214
    %v3923 = vadd.f32 %v3748, %v217
    %v3924 = vadd.f32 %v3751, %v220
    %v3925 = vadd.f32 %v3754, %v223
    %v3926 = vadd.f32 %v3757, %v226
    %v3927 = vadd.f32 %v3760, %v229
    %v3928 = vadd.f32 %v3763, %v232
    %v3929 = vadd.f32 %v3766, %v235
    %v3930 = vadd.f32 %v3769, %v238
    %v3931 = vadd.f32 %v3772, %v193
    %v3932 = vadd.f32 %v3775, %v196
    %v3933 = vadd.f32 %v3778, %v199
    %v3934 = vadd.f32 %v3781, %v202
    %v3935 = vadd.f32 %v3784, %v205
    %v3936 = vadd.f32 %v3787, %v208
    %v3937 = vadd.f32 %v3790, %v211
    %v3938 = vadd.f32 %v3793, %v214
    %v3939 = vadd.f32 %v3796, %v217
    %v3940 = vadd.f32 %v3799, %v220
    %v3941 = vadd.f32 %v3802, %v223
    %v3942 = vadd.f32 %v3805, %v226
    %v3943 = vadd.f32 %v3808, %v229
    %v3944 = vadd.f32 %v3811, %v232
    %v3945 = vadd.f32 %v3814, %v235
    %v3946 = vadd.f32 %v3817, %v238
    %v3947 = vtanh.pop %v3819
    %v3948 = vtanh.pop %v3820
    %v3949 = vtanh.pop %v3821
    %v3950 = vtanh.pop %v3822
    %v3951 = vtanh.pop %v3823
    %v3952 = vtanh.pop %v3824
    %v3953 = vtanh.pop %v3825
    %v3954 = vtanh.pop %v3826
    %v3955 = vtanh.pop %v3827
    %v3956 = vtanh.pop %v3828
    %v3957 = vtanh.pop %v3829
    %v3958 = vtanh.pop %v3830
    %v3959 = vtanh.pop %v3831
    %v3960 = vtanh.pop %v3832
    %v3961 = vtanh.pop %v3833
    %v3962 = vtanh.pop %v3834
    %v3963 = vtanh.pop %v3835
    %v3964 = vtanh.pop %v3836
    %v3965 = vtanh.pop %v3837
    %v3966 = vtanh.pop %v3838
    %v3967 = vtanh.pop %v3839
    %v3968 = vtanh.pop %v3840
    %v3969 = vtanh.pop %v3841
    %v3970 = vtanh.pop %v3842
    %v3971 = vtanh.pop %v3843
    %v3972 = vtanh.pop %v3844
    %v3973 = vtanh.pop %v3845
    %v3974 = vtanh.pop %v3846
    %v3975 = vtanh.pop %v3847
    %v3976 = vtanh.pop %v3848
    %v3977 = vtanh.pop %v3849
    %v3978 = vtanh.pop %v3850
    %v3979 = vtanh.pop %v3851
    %v3980 = vtanh.pop %v3852
    %v3981 = vtanh.pop %v3853
    %v3982 = vtanh.pop %v3854
    %v3983 = vtanh.pop %v3855
    %v3984 = vtanh.pop %v3856
    %v3985 = vtanh.pop %v3857
    %v3986 = vtanh.pop %v3858
    %v3987 = vtanh.pop %v3859
    %v3988 = vtanh.pop %v3860
    %v3989 = vtanh.pop %v3861
    %v3990 = vtanh.pop %v3862
    %v3991 = vtanh.pop %v3863
    %v3992 = vtanh.pop %v3864
    %v3993 = vtanh.pop %v3865
    %v3994 = vtanh.pop %v3866
    %v3995 = vtanh.pop %v3867
    %v3996 = vtanh.pop %v3868
    %v3997 = vtanh.pop %v3869
    %v3998 = vtanh.pop %v3870
    %v3999 = vtanh.pop %v3871
    %v4000 = vtanh.pop %v3872
    %v4001 = vtanh.pop %v3873
    %v4002 = vtanh.pop %v3874
    %v4003 = vtanh.pop %v3875
    %v4004 = vtanh.pop %v3876
    %v4005 = vtanh.pop %v3877
    %v4006 = vtanh.pop %v3878
    %v4007 = vtanh.pop %v3879
    %v4008 = vtanh.pop %v3880
    %v4009 = vtanh.pop %v3881
    %v4010 = vtanh.pop %v3882
    %v4011 = vtanh.pop %v3883
    %v4012 = vtanh.pop %v3884
    %v4013 = vtanh.pop %v3885
    %v4014 = vtanh.pop %v3886
    %v4015 = vtanh.pop %v3887
    %v4016 = vtanh.pop %v3888
    %v4017 = vtanh.pop %v3889
    %v4018 = vtanh.pop %v3890
    %v4019 = vtanh.pop %v3891
    %v4020 = vtanh.pop %v3892
    %v4021 = vtanh.pop %v3893
    %v4022 = vtanh.pop %v3894
    %v4023 = vtanh.pop %v3895
    %v4024 = vtanh.pop %v3896
    %v4025 = vtanh.pop %v3897
    %v4026 = vtanh.pop %v3898
    %v4027 = vtanh.pop %v3899
    %v4028 = vtanh.pop %v3900
    %v4029 = vtanh.pop %v3901
    %v4030 = vtanh.pop %v3902
    %v4031 = vtanh.pop %v3903
    %v4032 = vtanh.pop %v3904
    %v4033 = vtanh.pop %v3905
    %v4034 = vtanh.pop %v3906
    %v4035 = vtanh.pop %v3907
    %v4036 = vtanh.pop %v3908
    %v4037 = vtanh.pop %v3909
    %v4038 = vtanh.pop %v3910
    %v4039 = vtanh.pop %v3911
    %v4040 = vtanh.pop %v3912
    %v4041 = vtanh.pop %v3913
    %v4042 = vtanh.pop %v3914
    %v4043 = vtanh.pop %v3915
    %v4044 = vtanh.pop %v3916
    %v4045 = vtanh.pop %v3917
    %v4046 = vtanh.pop %v3918
    %v4047 = vtanh.pop %v3919
    %v4048 = vtanh.pop %v3920
    %v4049 = vtanh.pop %v3921
    %v4050 = vtanh.pop %v3922
    %v4051 = vtanh.pop %v3923
    %v4052 = vtanh.pop %v3924
    %v4053 = vtanh.pop %v3925
    %v4054 = vtanh.pop %v3926
    %v4055 = vtanh.pop %v3927
    %v4056 = vtanh.pop %v3928
    %v4057 = vtanh.pop %v3929
    %v4058 = vtanh.pop %v3930
    %v4059 = vtanh.pop %v3931
    %v4060 = vtanh.pop %v3932
    %v4061 = vtanh.pop %v3933
    %v4062 = vtanh.pop %v3934
    %v4063 = vtanh.pop %v3935
    %v4064 = vtanh.pop %v3936
    %v4065 = vtanh.pop %v3937
    %v4066 = vtanh.pop %v3938
    %v4067 = vtanh.pop %v3939
    %v4068 = vtanh.pop %v3940
    %v4069 = vtanh.pop %v3941
    %v4070 = vtanh.pop %v3942
    %v4071 = vtanh.pop %v3943
    %v4072 = vtanh.pop %v3944
    %v4073 = vtanh.pop %v3945
    %v4074 = vtanh.pop %v3946
    %v4075 = vmul.f32 %v3947, %v1044
    %v4076 = vmul.f32 %v3948, %v1044
    %v4077 = vmul.f32 %v3949, %v1044
    %v4078 = vmul.f32 %v3950, %v1044
    %v4079 = vmul.f32 %v3951, %v1044
    %v4080 = vmul.f32 %v3952, %v1044
    %v4081 = vmul.f32 %v3953, %v1044
    %v4082 = vmul.f32 %v3954, %v1044
    %v4083 = vmul.f32 %v3955, %v1044
    %v4084 = vmul.f32 %v3956, %v1044
    %v4085 = vmul.f32 %v3957, %v1044
    %v4086 = vmul.f32 %v3958, %v1044
    %v4087 = vmul.f32 %v3959, %v1044
    %v4088 = vmul.f32 %v3960, %v1044
    %v4089 = vmul.f32 %v3961, %v1044
    %v4090 = vmul.f32 %v3962, %v1044
    %v4091 = vmul.f32 %v3963, %v1044
    %v4092 = vmul.f32 %v3964, %v1044
    %v4093 = vmul.f32 %v3965, %v1044
    %v4094 = vmul.f32 %v3966, %v1044
    %v4095 = vmul.f32 %v3967, %v1044
    %v4096 = vmul.f32 %v3968, %v1044
    %v4097 = vmul.f32 %v3969, %v1044
    %v4098 = vmul.f32 %v3970, %v1044
    %v4099 = vmul.f32 %v3971, %v1044
    %v4100 = vmul.f32 %v3972, %v1044
    %v4101 = vmul.f32 %v3973, %v1044
    %v4102 = vmul.f32 %v3974, %v1044
    %v4103 = vmul.f32 %v3975, %v1044
    %v4104 = vmul.f32 %v3976, %v1044
    %v4105 = vmul.f32 %v3977, %v1044
    %v4106 = vmul.f32 %v3978, %v1044
    %v4107 = vmul.f32 %v3979, %v1044
    %v4108 = vmul.f32 %v3980, %v1044
    %v4109 = vmul.f32 %v3981, %v1044
    %v4110 = vmul.f32 %v3982, %v1044
    %v4111 = vmul.f32 %v3983, %v1044
    %v4112 = vmul.f32 %v3984, %v1044
    %v4113 = vmul.f32 %v3985, %v1044
    %v4114 = vmul.f32 %v3986, %v1044
    %v4115 = vmul.f32 %v3987, %v1044
    %v4116 = vmul.f32 %v3988, %v1044
    %v4117 = vmul.f32 %v3989, %v1044
    %v4118 = vmul.f32 %v3990, %v1044
    %v4119 = vmul.f32 %v3991, %v1044
    %v4120 = vmul.f32 %v3992, %v1044
    %v4121 = vmul.f32 %v3993, %v1044
    %v4122 = vmul.f32 %v3994, %v1044
    %v4123 = vmul.f32 %v3995, %v1044
    %v4124 = vmul.f32 %v3996, %v1044
    %v4125 = vmul.f32 %v3997, %v1044
    %v4126 = vmul.f32 %v3998, %v1044
    %v4127 = vmul.f32 %v3999, %v1044
    %v4128 = vmul.f32 %v4000, %v1044
    %v4129 = vmul.f32 %v4001, %v1044
    %v4130 = vmul.f32 %v4002, %v1044
    %v4131 = vmul.f32 %v4003, %v1044
    %v4132 = vmul.f32 %v4004, %v1044
    %v4133 = vmul.f32 %v4005, %v1044
    %v4134 = vmul.f32 %v4006, %v1044
    %v4135 = vmul.f32 %v4007, %v1044
    %v4136 = vmul.f32 %v4008, %v1044
    %v4137 = vmul.f32 %v4009, %v1044
    %v4138 = vmul.f32 %v4010, %v1044
    %v4139 = vmul.f32 %v4011, %v1044
    %v4140 = vmul.f32 %v4012, %v1044
    %v4141 = vmul.f32 %v4013, %v1044
    %v4142 = vmul.f32 %v4014, %v1044
    %v4143 = vmul.f32 %v4015, %v1044
    %v4144 = vmul.f32 %v4016, %v1044
    %v4145 = vmul.f32 %v4017, %v1044
    %v4146 = vmul.f32 %v4018, %v1044
    %v4147 = vmul.f32 %v4019, %v1044
    %v4148 = vmul.f32 %v4020, %v1044
    %v4149 = vmul.f32 %v4021, %v1044
    %v4150 = vmul.f32 %v4022, %v1044
    %v4151 = vmul.f32 %v4023, %v1044
    %v4152 = vmul.f32 %v4024, %v1044
    %v4153 = vmul.f32 %v4025, %v1044
    %v4154 = vmul.f32 %v4026, %v1044
    %v4155 = vmul.f32 %v4027, %v1044
    %v4156 = vmul.f32 %v4028, %v1044
    %v4157 = vmul.f32 %v4029, %v1044
    %v4158 = vmul.f32 %v4030, %v1044
    %v4159 = vmul.f32 %v4031, %v1044
    %v4160 = vmul.f32 %v4032, %v1044
    %v4161 = vmul.f32 %v4033, %v1044
    %v4162 = vmul.f32 %v4034, %v1044
    %v4163 = vmul.f32 %v4035, %v1044
    %v4164 = vmul.f32 %v4036, %v1044
    %v4165 = vmul.f32 %v4037, %v1044
    %v4166 = vmul.f32 %v4038, %v1044
    %v4167 = vmul.f32 %v4039, %v1044
    %v4168 = vmul.f32 %v4040, %v1044
    %v4169 = vmul.f32 %v4041, %v1044
    %v4170 = vmul.f32 %v4042, %v1044
    %v4171 = vmul.f32 %v4043, %v1044
    %v4172 = vmul.f32 %v4044, %v1044
    %v4173 = vmul.f32 %v4045, %v1044
    %v4174 = vmul.f32 %v4046, %v1044
    %v4175 = vmul.f32 %v4047, %v1044
    %v4176 = vmul.f32 %v4048, %v1044
    %v4177 = vmul.f32 %v4049, %v1044
    %v4178 = vmul.f32 %v4050, %v1044
    %v4179 = vmul.f32 %v4051, %v1044
    %v4180 = vmul.f32 %v4052, %v1044
    %v4181 = vmul.f32 %v4053, %v1044
    %v4182 = vmul.f32 %v4054, %v1044
    %v4183 = vmul.f32 %v4055, %v1044
    %v4184 = vmul.f32 %v4056, %v1044
    %v4185 = vmul.f32 %v4057, %v1044
    %v4186 = vmul.f32 %v4058, %v1044
    %v4187 = vmul.f32 %v4059, %v1044
    %v4188 = vmul.f32 %v4060, %v1044
    %v4189 = vmul.f32 %v4061, %v1044
    %v4190 = vmul.f32 %v4062, %v1044
    %v4191 = vmul.f32 %v4063, %v1044
    %v4192 = vmul.f32 %v4064, %v1044
    %v4193 = vmul.f32 %v4065, %v1044
    %v4194 = vmul.f32 %v4066, %v1044
    %v4195 = vmul.f32 %v4067, %v1044
    %v4196 = vmul.f32 %v4068, %v1044
    %v4197 = vmul.f32 %v4069, %v1044
    %v4198 = vmul.f32 %v4070, %v1044
    %v4199 = vmul.f32 %v4071, %v1044
    %v4200 = vmul.f32 %v4072, %v1044
    %v4201 = vmul.f32 %v4073, %v1044
    %v4202 = vmul.f32 %v4074, %v1044
    %4203 = vadd.xlane.f32.xlu0 %v4075
    %v4204 = vpop.xlane.xlu0 %4203
    %4205 = vadd.xlane.f32.xlu0 %v4076
    %v4206 = vpop.xlane.xlu0 %4205
    %4207 = vadd.xlane.f32.xlu0 %v4077
    %v4208 = vpop.xlane.xlu0 %4207
    %4209 = vadd.xlane.f32.xlu0 %v4078
    %v4210 = vpop.xlane.xlu0 %4209
    %4211 = vadd.xlane.f32.xlu0 %v4079
    %v4212 = vpop.xlane.xlu0 %4211
    %4213 = vadd.xlane.f32.xlu0 %v4080
    %v4214 = vpop.xlane.xlu0 %4213
    %4215 = vadd.xlane.f32.xlu0 %v4081
    %v4216 = vpop.xlane.xlu0 %4215
    %4217 = vadd.xlane.f32.xlu0 %v4082
    %v4218 = vpop.xlane.xlu0 %4217
    %4219 = vadd.xlane.f32.xlu0 %v4083
    %v4220 = vpop.xlane.xlu0 %4219
    %4221 = vadd.xlane.f32.xlu0 %v4084
    %v4222 = vpop.xlane.xlu0 %4221
    %4223 = vadd.xlane.f32.xlu0 %v4085
    %v4224 = vpop.xlane.xlu0 %4223
    %4225 = vadd.xlane.f32.xlu0 %v4086
    %v4226 = vpop.xlane.xlu0 %4225
    %4227 = vadd.xlane.f32.xlu0 %v4087
    %v4228 = vpop.xlane.xlu0 %4227
    %4229 = vadd.xlane.f32.xlu0 %v4088
    %v4230 = vpop.xlane.xlu0 %4229
    %4231 = vadd.xlane.f32.xlu0 %v4089
    %v4232 = vpop.xlane.xlu0 %4231
    %4233 = vadd.xlane.f32.xlu0 %v4090
    %v4234 = vpop.xlane.xlu0 %4233
    %4235 = vadd.xlane.f32.xlu0 %v4091
    %v4236 = vpop.xlane.xlu0 %4235
    %4237 = vadd.xlane.f32.xlu0 %v4092
    %v4238 = vpop.xlane.xlu0 %4237
    %4239 = vadd.xlane.f32.xlu0 %v4093
    %v4240 = vpop.xlane.xlu0 %4239
    %4241 = vadd.xlane.f32.xlu0 %v4094
    %v4242 = vpop.xlane.xlu0 %4241
    %4243 = vadd.xlane.f32.xlu0 %v4095
    %v4244 = vpop.xlane.xlu0 %4243
    %4245 = vadd.xlane.f32.xlu0 %v4096
    %v4246 = vpop.xlane.xlu0 %4245
    %4247 = vadd.xlane.f32.xlu0 %v4097
    %v4248 = vpop.xlane.xlu0 %4247
    %4249 = vadd.xlane.f32.xlu0 %v4098
    %v4250 = vpop.xlane.xlu0 %4249
    %4251 = vadd.xlane.f32.xlu0 %v4099
    %v4252 = vpop.xlane.xlu0 %4251
    %4253 = vadd.xlane.f32.xlu0 %v4100
    %v4254 = vpop.xlane.xlu0 %4253
    %4255 = vadd.xlane.f32.xlu0 %v4101
    %v4256 = vpop.xlane.xlu0 %4255
    %4257 = vadd.xlane.f32.xlu0 %v4102
    %v4258 = vpop.xlane.xlu0 %4257
    %4259 = vadd.xlane.f32.xlu0 %v4103
    %v4260 = vpop.xlane.xlu0 %4259
    %4261 = vadd.xlane.f32.xlu0 %v4104
    %v4262 = vpop.xlane.xlu0 %4261
    %4263 = vadd.xlane.f32.xlu0 %v4105
    %v4264 = vpop.xlane.xlu0 %4263
    %4265 = vadd.xlane.f32.xlu0 %v4106
    %v4266 = vpop.xlane.xlu0 %4265
    %4267 = vadd.xlane.f32.xlu0 %v4107
    %v4268 = vpop.xlane.xlu0 %4267
    %4269 = vadd.xlane.f32.xlu0 %v4108
    %v4270 = vpop.xlane.xlu0 %4269
    %4271 = vadd.xlane.f32.xlu0 %v4109
    %v4272 = vpop.xlane.xlu0 %4271
    %4273 = vadd.xlane.f32.xlu0 %v4110
    %v4274 = vpop.xlane.xlu0 %4273
    %4275 = vadd.xlane.f32.xlu0 %v4111
    %v4276 = vpop.xlane.xlu0 %4275
    %4277 = vadd.xlane.f32.xlu0 %v4112
    %v4278 = vpop.xlane.xlu0 %4277
    %4279 = vadd.xlane.f32.xlu0 %v4113
    %v4280 = vpop.xlane.xlu0 %4279
    %4281 = vadd.xlane.f32.xlu0 %v4114
    %v4282 = vpop.xlane.xlu0 %4281
    %4283 = vadd.xlane.f32.xlu0 %v4115
    %v4284 = vpop.xlane.xlu0 %4283
    %4285 = vadd.xlane.f32.xlu0 %v4116
    %v4286 = vpop.xlane.xlu0 %4285
    %4287 = vadd.xlane.f32.xlu0 %v4117
    %v4288 = vpop.xlane.xlu0 %4287
    %4289 = vadd.xlane.f32.xlu0 %v4118
    %v4290 = vpop.xlane.xlu0 %4289
    %4291 = vadd.xlane.f32.xlu0 %v4119
    %v4292 = vpop.xlane.xlu0 %4291
    %4293 = vadd.xlane.f32.xlu0 %v4120
    %v4294 = vpop.xlane.xlu0 %4293
    %4295 = vadd.xlane.f32.xlu0 %v4121
    %v4296 = vpop.xlane.xlu0 %4295
    %4297 = vadd.xlane.f32.xlu0 %v4122
    %v4298 = vpop.xlane.xlu0 %4297
    %4299 = vadd.xlane.f32.xlu0 %v4123
    %v4300 = vpop.xlane.xlu0 %4299
    %4301 = vadd.xlane.f32.xlu0 %v4124
    %v4302 = vpop.xlane.xlu0 %4301
    %4303 = vadd.xlane.f32.xlu0 %v4125
    %v4304 = vpop.xlane.xlu0 %4303
    %4305 = vadd.xlane.f32.xlu0 %v4126
    %v4306 = vpop.xlane.xlu0 %4305
    %4307 = vadd.xlane.f32.xlu0 %v4127
    %v4308 = vpop.xlane.xlu0 %4307
    %4309 = vadd.xlane.f32.xlu0 %v4128
    %v4310 = vpop.xlane.xlu0 %4309
    %4311 = vadd.xlane.f32.xlu0 %v4129
    %v4312 = vpop.xlane.xlu0 %4311
    %4313 = vadd.xlane.f32.xlu0 %v4130
    %v4314 = vpop.xlane.xlu0 %4313
    %4315 = vadd.xlane.f32.xlu0 %v4131
    %v4316 = vpop.xlane.xlu0 %4315
    %4317 = vadd.xlane.f32.xlu0 %v4132
    %v4318 = vpop.xlane.xlu0 %4317
    %4319 = vadd.xlane.f32.xlu0 %v4133
    %v4320 = vpop.xlane.xlu0 %4319
    %4321 = vadd.xlane.f32.xlu0 %v4134
    %v4322 = vpop.xlane.xlu0 %4321
    %4323 = vadd.xlane.f32.xlu0 %v4135
    %v4324 = vpop.xlane.xlu0 %4323
    %4325 = vadd.xlane.f32.xlu0 %v4136
    %v4326 = vpop.xlane.xlu0 %4325
    %4327 = vadd.xlane.f32.xlu0 %v4137
    %v4328 = vpop.xlane.xlu0 %4327
    %4329 = vadd.xlane.f32.xlu0 %v4138
    %v4330 = vpop.xlane.xlu0 %4329
    %4331 = vadd.xlane.f32.xlu0 %v4139
    %v4332 = vpop.xlane.xlu0 %4331
    %4333 = vadd.xlane.f32.xlu0 %v4140
    %v4334 = vpop.xlane.xlu0 %4333
    %4335 = vadd.xlane.f32.xlu0 %v4141
    %v4336 = vpop.xlane.xlu0 %4335
    %4337 = vadd.xlane.f32.xlu0 %v4142
    %v4338 = vpop.xlane.xlu0 %4337
    %4339 = vadd.xlane.f32.xlu0 %v4143
    %v4340 = vpop.xlane.xlu0 %4339
    %4341 = vadd.xlane.f32.xlu0 %v4144
    %v4342 = vpop.xlane.xlu0 %4341
    %4343 = vadd.xlane.f32.xlu0 %v4145
    %v4344 = vpop.xlane.xlu0 %4343
    %4345 = vadd.xlane.f32.xlu0 %v4146
    %v4346 = vpop.xlane.xlu0 %4345
    %4347 = vadd.xlane.f32.xlu0 %v4147
    %v4348 = vpop.xlane.xlu0 %4347
    %4349 = vadd.xlane.f32.xlu0 %v4148
    %v4350 = vpop.xlane.xlu0 %4349
    %4351 = vadd.xlane.f32.xlu0 %v4149
    %v4352 = vpop.xlane.xlu0 %4351
    %4353 = vadd.xlane.f32.xlu0 %v4150
    %v4354 = vpop.xlane.xlu0 %4353
    %4355 = vadd.xlane.f32.xlu0 %v4151
    %v4356 = vpop.xlane.xlu0 %4355
    %4357 = vadd.xlane.f32.xlu0 %v4152
    %v4358 = vpop.xlane.xlu0 %4357
    %4359 = vadd.xlane.f32.xlu0 %v4153
    %v4360 = vpop.xlane.xlu0 %4359
    %4361 = vadd.xlane.f32.xlu0 %v4154
    %v4362 = vpop.xlane.xlu0 %4361
    %4363 = vadd.xlane.f32.xlu0 %v4155
    %v4364 = vpop.xlane.xlu0 %4363
    %4365 = vadd.xlane.f32.xlu0 %v4156
    %v4366 = vpop.xlane.xlu0 %4365
    %4367 = vadd.xlane.f32.xlu0 %v4157
    %v4368 = vpop.xlane.xlu0 %4367
    %4369 = vadd.xlane.f32.xlu0 %v4158
    %v4370 = vpop.xlane.xlu0 %4369
    %4371 = vadd.xlane.f32.xlu0 %v4159
    %v4372 = vpop.xlane.xlu0 %4371
    %4373 = vadd.xlane.f32.xlu0 %v4160
    %v4374 = vpop.xlane.xlu0 %4373
    %4375 = vadd.xlane.f32.xlu0 %v4161
    %v4376 = vpop.xlane.xlu0 %4375
    %4377 = vadd.xlane.f32.xlu0 %v4162
    %v4378 = vpop.xlane.xlu0 %4377
    %4379 = vadd.xlane.f32.xlu0 %v4163
    %v4380 = vpop.xlane.xlu0 %4379
    %4381 = vadd.xlane.f32.xlu0 %v4164
    %v4382 = vpop.xlane.xlu0 %4381
    %4383 = vadd.xlane.f32.xlu0 %v4165
    %v4384 = vpop.xlane.xlu0 %4383
    %4385 = vadd.xlane.f32.xlu0 %v4166
    %v4386 = vpop.xlane.xlu0 %4385
    %4387 = vadd.xlane.f32.xlu0 %v4167
    %v4388 = vpop.xlane.xlu0 %4387
    %4389 = vadd.xlane.f32.xlu0 %v4168
    %v4390 = vpop.xlane.xlu0 %4389
    %4391 = vadd.xlane.f32.xlu0 %v4169
    %v4392 = vpop.xlane.xlu0 %4391
    %4393 = vadd.xlane.f32.xlu0 %v4170
    %v4394 = vpop.xlane.xlu0 %4393
    %4395 = vadd.xlane.f32.xlu0 %v4171
    %v4396 = vpop.xlane.xlu0 %4395
    %4397 = vadd.xlane.f32.xlu0 %v4172
    %v4398 = vpop.xlane.xlu0 %4397
    %4399 = vadd.xlane.f32.xlu0 %v4173
    %v4400 = vpop.xlane.xlu0 %4399
    %4401 = vadd.xlane.f32.xlu0 %v4174
    %v4402 = vpop.xlane.xlu0 %4401
    %4403 = vadd.xlane.f32.xlu0 %v4175
    %v4404 = vpop.xlane.xlu0 %4403
    %4405 = vadd.xlane.f32.xlu0 %v4176
    %v4406 = vpop.xlane.xlu0 %4405
    %4407 = vadd.xlane.f32.xlu0 %v4177
    %v4408 = vpop.xlane.xlu0 %4407
    %4409 = vadd.xlane.f32.xlu0 %v4178
    %v4410 = vpop.xlane.xlu0 %4409
    %4411 = vadd.xlane.f32.xlu0 %v4179
    %v4412 = vpop.xlane.xlu0 %4411
    %4413 = vadd.xlane.f32.xlu0 %v4180
    %v4414 = vpop.xlane.xlu0 %4413
    %4415 = vadd.xlane.f32.xlu0 %v4181
    %v4416 = vpop.xlane.xlu0 %4415
    %4417 = vadd.xlane.f32.xlu0 %v4182
    %v4418 = vpop.xlane.xlu0 %4417
    %4419 = vadd.xlane.f32.xlu0 %v4183
    %v4420 = vpop.xlane.xlu0 %4419
    %4421 = vadd.xlane.f32.xlu0 %v4184
    %v4422 = vpop.xlane.xlu0 %4421
    %4423 = vadd.xlane.f32.xlu0 %v4185
    %v4424 = vpop.xlane.xlu0 %4423
    %4425 = vadd.xlane.f32.xlu0 %v4186
    %v4426 = vpop.xlane.xlu0 %4425
    %4427 = vadd.xlane.f32.xlu0 %v4187
    %v4428 = vpop.xlane.xlu0 %4427
    %4429 = vadd.xlane.f32.xlu0 %v4188
    %v4430 = vpop.xlane.xlu0 %4429
    %4431 = vadd.xlane.f32.xlu0 %v4189
    %v4432 = vpop.xlane.xlu0 %4431
    %4433 = vadd.xlane.f32.xlu0 %v4190
    %v4434 = vpop.xlane.xlu0 %4433
    %4435 = vadd.xlane.f32.xlu0 %v4191
    %v4436 = vpop.xlane.xlu0 %4435
    %4437 = vadd.xlane.f32.xlu0 %v4192
    %v4438 = vpop.xlane.xlu0 %4437
    %4439 = vadd.xlane.f32.xlu0 %v4193
    %v4440 = vpop.xlane.xlu0 %4439
    %4441 = vadd.xlane.f32.xlu0 %v4194
    %v4442 = vpop.xlane.xlu0 %4441
    %4443 = vadd.xlane.f32.xlu0 %v4195
    %v4444 = vpop.xlane.xlu0 %4443
    %4445 = vadd.xlane.f32.xlu0 %v4196
    %v4446 = vpop.xlane.xlu0 %4445
    %4447 = vadd.xlane.f32.xlu0 %v4197
    %v4448 = vpop.xlane.xlu0 %4447
    %4449 = vadd.xlane.f32.xlu0 %v4198
    %v4450 = vpop.xlane.xlu0 %4449
    %4451 = vadd.xlane.f32.xlu0 %v4199
    %v4452 = vpop.xlane.xlu0 %4451
    %4453 = vadd.xlane.f32.xlu0 %v4200
    %v4454 = vpop.xlane.xlu0 %4453
    %4455 = vadd.xlane.f32.xlu0 %v4201
    %v4456 = vpop.xlane.xlu0 %4455
    %4457 = vadd.xlane.f32.xlu0 %v4202
    %v4458 = vpop.xlane.xlu0 %4457
    %s4459 = scalar_lea.vmem [#allocation5], 8
    %v4460 = vld [vmem:[%s4459] sm:$0xff]
    %v4462 = vperm.slane %v4460, 0
    %v4463 = vlaneseq
    %v4464 = vshrl.u32 %v4463, 7
    %4466 = vset.pattern.permute.xlu0 %v4464
    %4467 = vperm.xlu0 %4466, %v4462
    %v4468 = vpop.permute.xlu0 %4467
    %v4469 = vlaneseq
    %v4470 = vshrl.u32 %v4469, 7
    %v4471 = vadd.s32 %v4470, 8
    %4472 = vset.pattern.permute.xlu0 %v4471
    %4473 = vperm.xlu0 %4472, %v4462
    %v4474 = vpop.permute.xlu0 %4473
    %v4475 = vlaneseq
    %v4476 = vshrl.u32 %v4475, 7
    %v4477 = vadd.s32 %v4476, 16
    %4478 = vset.pattern.permute.xlu0 %v4477
    %4479 = vperm.xlu0 %4478, %v4462
    %v4480 = vpop.permute.xlu0 %4479
    %v4481 = vlaneseq
    %v4482 = vshrl.u32 %v4481, 7
    %v4483 = vadd.s32 %v4482, 24
    %4484 = vset.pattern.permute.xlu0 %v4483
    %4485 = vperm.xlu0 %4484, %v4462
    %v4486 = vpop.permute.xlu0 %4485
    %v4487 = vlaneseq
    %v4488 = vshrl.u32 %v4487, 7
    %v4489 = vadd.s32 %v4488, 32
    %4490 = vset.pattern.permute.xlu0 %v4489
    %4491 = vperm.xlu0 %4490, %v4462
    %v4492 = vpop.permute.xlu0 %4491
    %v4493 = vlaneseq
    %v4494 = vshrl.u32 %v4493, 7
    %v4495 = vadd.s32 %v4494, 40
    %4496 = vset.pattern.permute.xlu0 %v4495
    %4497 = vperm.xlu0 %4496, %v4462
    %v4498 = vpop.permute.xlu0 %4497
    %v4499 = vlaneseq
    %v4500 = vshrl.u32 %v4499, 7
    %v4501 = vadd.s32 %v4500, 48
    %4502 = vset.pattern.permute.xlu0 %v4501
    %4503 = vperm.xlu0 %4502, %v4462
    %v4504 = vpop.permute.xlu0 %4503
    %v4505 = vlaneseq
    %v4506 = vshrl.u32 %v4505, 7
    %v4507 = vadd.s32 %v4506, 56
    %4508 = vset.pattern.permute.xlu0 %v4507
    %4509 = vperm.xlu0 %4508, %v4462
    %v4510 = vpop.permute.xlu0 %4509
    %v4511 = vlaneseq
    %v4512 = vshrl.u32 %v4511, 7
    %v4513 = vadd.s32 %v4512, 64
    %4514 = vset.pattern.permute.xlu0 %v4513
    %4515 = vperm.xlu0 %4514, %v4462
    %v4516 = vpop.permute.xlu0 %4515
    %v4517 = vlaneseq
    %v4518 = vshrl.u32 %v4517, 7
    %v4519 = vadd.s32 %v4518, 72
    %4520 = vset.pattern.permute.xlu0 %v4519
    %4521 = vperm.xlu0 %4520, %v4462
    %v4522 = vpop.permute.xlu0 %4521
    %v4523 = vlaneseq
    %v4524 = vshrl.u32 %v4523, 7
    %v4525 = vadd.s32 %v4524, 80
    %4526 = vset.pattern.permute.xlu0 %v4525
    %4527 = vperm.xlu0 %4526, %v4462
    %v4528 = vpop.permute.xlu0 %4527
    %v4529 = vlaneseq
    %v4530 = vshrl.u32 %v4529, 7
    %v4531 = vadd.s32 %v4530, 88
    %4532 = vset.pattern.permute.xlu0 %v4531
    %4533 = vperm.xlu0 %4532, %v4462
    %v4534 = vpop.permute.xlu0 %4533
    %v4535 = vlaneseq
    %v4536 = vshrl.u32 %v4535, 7
    %v4537 = vadd.s32 %v4536, 96
    %4538 = vset.pattern.permute.xlu0 %v4537
    %4539 = vperm.xlu0 %4538, %v4462
    %v4540 = vpop.permute.xlu0 %4539
    %v4541 = vlaneseq
    %v4542 = vshrl.u32 %v4541, 7
    %v4543 = vadd.s32 %v4542, 104
    %4544 = vset.pattern.permute.xlu0 %v4543
    %4545 = vperm.xlu0 %4544, %v4462
    %v4546 = vpop.permute.xlu0 %4545
    %v4547 = vlaneseq
    %v4548 = vshrl.u32 %v4547, 7
    %v4549 = vadd.s32 %v4548, 112
    %4550 = vset.pattern.permute.xlu0 %v4549
    %4551 = vperm.xlu0 %4550, %v4462
    %v4552 = vpop.permute.xlu0 %4551
    %v4553 = vlaneseq
    %v4554 = vshrl.u32 %v4553, 7
    %v4555 = vadd.s32 %v4554, 120
    %4556 = vset.pattern.permute.xlu0 %v4555
    %4557 = vperm.xlu0 %4556, %v4462
    %v4558 = vpop.permute.xlu0 %4557
    %v4559 = vperm.slane %v4460, 1
    %v4560 = vlaneseq
    %v4561 = vshrl.u32 %v4560, 7
    %4563 = vset.pattern.permute.xlu0 %v4561
    %4564 = vperm.xlu0 %4563, %v4559
    %v4565 = vpop.permute.xlu0 %4564
    %v4566 = vlaneseq
    %v4567 = vshrl.u32 %v4566, 7
    %v4568 = vadd.s32 %v4567, 8
    %4569 = vset.pattern.permute.xlu0 %v4568
    %4570 = vperm.xlu0 %4569, %v4559
    %v4571 = vpop.permute.xlu0 %4570
    %v4572 = vlaneseq
    %v4573 = vshrl.u32 %v4572, 7
    %v4574 = vadd.s32 %v4573, 16
    %4575 = vset.pattern.permute.xlu0 %v4574
    %4576 = vperm.xlu0 %4575, %v4559
    %v4577 = vpop.permute.xlu0 %4576
    %v4578 = vlaneseq
    %v4579 = vshrl.u32 %v4578, 7
    %v4580 = vadd.s32 %v4579, 24
    %4581 = vset.pattern.permute.xlu0 %v4580
    %4582 = vperm.xlu0 %4581, %v4559
    %v4583 = vpop.permute.xlu0 %4582
    %v4584 = vlaneseq
    %v4585 = vshrl.u32 %v4584, 7
    %v4586 = vadd.s32 %v4585, 32
    %4587 = vset.pattern.permute.xlu0 %v4586
    %4588 = vperm.xlu0 %4587, %v4559
    %v4589 = vpop.permute.xlu0 %4588
    %v4590 = vlaneseq
    %v4591 = vshrl.u32 %v4590, 7
    %v4592 = vadd.s32 %v4591, 40
    %4593 = vset.pattern.permute.xlu0 %v4592
    %4594 = vperm.xlu0 %4593, %v4559
    %v4595 = vpop.permute.xlu0 %4594
    %v4596 = vlaneseq
    %v4597 = vshrl.u32 %v4596, 7
    %v4598 = vadd.s32 %v4597, 48
    %4599 = vset.pattern.permute.xlu0 %v4598
    %4600 = vperm.xlu0 %4599, %v4559
    %v4601 = vpop.permute.xlu0 %4600
    %v4602 = vlaneseq
    %v4603 = vshrl.u32 %v4602, 7
    %v4604 = vadd.s32 %v4603, 56
    %4605 = vset.pattern.permute.xlu0 %v4604
    %4606 = vperm.xlu0 %4605, %v4559
    %v4607 = vpop.permute.xlu0 %4606
    %v4608 = vlaneseq
    %v4609 = vshrl.u32 %v4608, 7
    %v4610 = vadd.s32 %v4609, 64
    %4611 = vset.pattern.permute.xlu0 %v4610
    %4612 = vperm.xlu0 %4611, %v4559
    %v4613 = vpop.permute.xlu0 %4612
    %v4614 = vlaneseq
    %v4615 = vshrl.u32 %v4614, 7
    %v4616 = vadd.s32 %v4615, 72
    %4617 = vset.pattern.permute.xlu0 %v4616
    %4618 = vperm.xlu0 %4617, %v4559
    %v4619 = vpop.permute.xlu0 %4618
    %v4620 = vlaneseq
    %v4621 = vshrl.u32 %v4620, 7
    %v4622 = vadd.s32 %v4621, 80
    %4623 = vset.pattern.permute.xlu0 %v4622
    %4624 = vperm.xlu0 %4623, %v4559
    %v4625 = vpop.permute.xlu0 %4624
    %v4626 = vlaneseq
    %v4627 = vshrl.u32 %v4626, 7
    %v4628 = vadd.s32 %v4627, 88
    %4629 = vset.pattern.permute.xlu0 %v4628
    %4630 = vperm.xlu0 %4629, %v4559
    %v4631 = vpop.permute.xlu0 %4630
    %v4632 = vlaneseq
    %v4633 = vshrl.u32 %v4632, 7
    %v4634 = vadd.s32 %v4633, 96
    %4635 = vset.pattern.permute.xlu0 %v4634
    %4636 = vperm.xlu0 %4635, %v4559
    %v4637 = vpop.permute.xlu0 %4636
    %v4638 = vlaneseq
    %v4639 = vshrl.u32 %v4638, 7
    %v4640 = vadd.s32 %v4639, 104
    %4641 = vset.pattern.permute.xlu0 %v4640
    %4642 = vperm.xlu0 %4641, %v4559
    %v4643 = vpop.permute.xlu0 %4642
    %v4644 = vlaneseq
    %v4645 = vshrl.u32 %v4644, 7
    %v4646 = vadd.s32 %v4645, 112
    %4647 = vset.pattern.permute.xlu0 %v4646
    %4648 = vperm.xlu0 %4647, %v4559
    %v4649 = vpop.permute.xlu0 %4648
    %v4650 = vlaneseq
    %v4651 = vshrl.u32 %v4650, 7
    %v4652 = vadd.s32 %v4651, 120
    %4653 = vset.pattern.permute.xlu0 %v4652
    %4654 = vperm.xlu0 %4653, %v4559
    %v4655 = vpop.permute.xlu0 %4654
    %v4656 = vperm.slane %v4460, 2
    %v4657 = vlaneseq
    %v4658 = vshrl.u32 %v4657, 7
    %4660 = vset.pattern.permute.xlu0 %v4658
    %4661 = vperm.xlu0 %4660, %v4656
    %v4662 = vpop.permute.xlu0 %4661
    %v4663 = vlaneseq
    %v4664 = vshrl.u32 %v4663, 7
    %v4665 = vadd.s32 %v4664, 8
    %4666 = vset.pattern.permute.xlu0 %v4665
    %4667 = vperm.xlu0 %4666, %v4656
    %v4668 = vpop.permute.xlu0 %4667
    %v4669 = vlaneseq
    %v4670 = vshrl.u32 %v4669, 7
    %v4671 = vadd.s32 %v4670, 16
    %4672 = vset.pattern.permute.xlu0 %v4671
    %4673 = vperm.xlu0 %4672, %v4656
    %v4674 = vpop.permute.xlu0 %4673
    %v4675 = vlaneseq
    %v4676 = vshrl.u32 %v4675, 7
    %v4677 = vadd.s32 %v4676, 24
    %4678 = vset.pattern.permute.xlu0 %v4677
    %4679 = vperm.xlu0 %4678, %v4656
    %v4680 = vpop.permute.xlu0 %4679
    %v4681 = vlaneseq
    %v4682 = vshrl.u32 %v4681, 7
    %v4683 = vadd.s32 %v4682, 32
    %4684 = vset.pattern.permute.xlu0 %v4683
    %4685 = vperm.xlu0 %4684, %v4656
    %v4686 = vpop.permute.xlu0 %4685
    %v4687 = vlaneseq
    %v4688 = vshrl.u32 %v4687, 7
    %v4689 = vadd.s32 %v4688, 40
    %4690 = vset.pattern.permute.xlu0 %v4689
    %4691 = vperm.xlu0 %4690, %v4656
    %v4692 = vpop.permute.xlu0 %4691
    %v4693 = vlaneseq
    %v4694 = vshrl.u32 %v4693, 7
    %v4695 = vadd.s32 %v4694, 48
    %4696 = vset.pattern.permute.xlu0 %v4695
    %4697 = vperm.xlu0 %4696, %v4656
    %v4698 = vpop.permute.xlu0 %4697
    %v4699 = vlaneseq
    %v4700 = vshrl.u32 %v4699, 7
    %v4701 = vadd.s32 %v4700, 56
    %4702 = vset.pattern.permute.xlu0 %v4701
    %4703 = vperm.xlu0 %4702, %v4656
    %v4704 = vpop.permute.xlu0 %4703
    %v4705 = vlaneseq
    %v4706 = vshrl.u32 %v4705, 7
    %v4707 = vadd.s32 %v4706, 64
    %4708 = vset.pattern.permute.xlu0 %v4707
    %4709 = vperm.xlu0 %4708, %v4656
    %v4710 = vpop.permute.xlu0 %4709
    %v4711 = vlaneseq
    %v4712 = vshrl.u32 %v4711, 7
    %v4713 = vadd.s32 %v4712, 72
    %4714 = vset.pattern.permute.xlu0 %v4713
    %4715 = vperm.xlu0 %4714, %v4656
    %v4716 = vpop.permute.xlu0 %4715
    %v4717 = vlaneseq
    %v4718 = vshrl.u32 %v4717, 7
    %v4719 = vadd.s32 %v4718, 80
    %4720 = vset.pattern.permute.xlu0 %v4719
    %4721 = vperm.xlu0 %4720, %v4656
    %v4722 = vpop.permute.xlu0 %4721
    %v4723 = vlaneseq
    %v4724 = vshrl.u32 %v4723, 7
    %v4725 = vadd.s32 %v4724, 88
    %4726 = vset.pattern.permute.xlu0 %v4725
    %4727 = vperm.xlu0 %4726, %v4656
    %v4728 = vpop.permute.xlu0 %4727
    %v4729 = vlaneseq
    %v4730 = vshrl.u32 %v4729, 7
    %v4731 = vadd.s32 %v4730, 96
    %4732 = vset.pattern.permute.xlu0 %v4731
    %4733 = vperm.xlu0 %4732, %v4656
    %v4734 = vpop.permute.xlu0 %4733
    %v4735 = vlaneseq
    %v4736 = vshrl.u32 %v4735, 7
    %v4737 = vadd.s32 %v4736, 104
    %4738 = vset.pattern.permute.xlu0 %v4737
    %4739 = vperm.xlu0 %4738, %v4656
    %v4740 = vpop.permute.xlu0 %4739
    %v4741 = vlaneseq
    %v4742 = vshrl.u32 %v4741, 7
    %v4743 = vadd.s32 %v4742, 112
    %4744 = vset.pattern.permute.xlu0 %v4743
    %4745 = vperm.xlu0 %4744, %v4656
    %v4746 = vpop.permute.xlu0 %4745
    %v4747 = vlaneseq
    %v4748 = vshrl.u32 %v4747, 7
    %v4749 = vadd.s32 %v4748, 120
    %4750 = vset.pattern.permute.xlu0 %v4749
    %4751 = vperm.xlu0 %4750, %v4656
    %v4752 = vpop.permute.xlu0 %4751
    %v4753 = vperm.slane %v4460, 3
    %v4754 = vlaneseq
    %v4755 = vshrl.u32 %v4754, 7
    %4757 = vset.pattern.permute.xlu0 %v4755
    %4758 = vperm.xlu0 %4757, %v4753
    %v4759 = vpop.permute.xlu0 %4758
    %v4760 = vlaneseq
    %v4761 = vshrl.u32 %v4760, 7
    %v4762 = vadd.s32 %v4761, 8
    %4763 = vset.pattern.permute.xlu0 %v4762
    %4764 = vperm.xlu0 %4763, %v4753
    %v4765 = vpop.permute.xlu0 %4764
    %v4766 = vlaneseq
    %v4767 = vshrl.u32 %v4766, 7
    %v4768 = vadd.s32 %v4767, 16
    %4769 = vset.pattern.permute.xlu0 %v4768
    %4770 = vperm.xlu0 %4769, %v4753
    %v4771 = vpop.permute.xlu0 %4770
    %v4772 = vlaneseq
    %v4773 = vshrl.u32 %v4772, 7
    %v4774 = vadd.s32 %v4773, 24
    %4775 = vset.pattern.permute.xlu0 %v4774
    %4776 = vperm.xlu0 %4775, %v4753
    %v4777 = vpop.permute.xlu0 %4776
    %v4778 = vlaneseq
    %v4779 = vshrl.u32 %v4778, 7
    %v4780 = vadd.s32 %v4779, 32
    %4781 = vset.pattern.permute.xlu0 %v4780
    %4782 = vperm.xlu0 %4781, %v4753
    %v4783 = vpop.permute.xlu0 %4782
    %v4784 = vlaneseq
    %v4785 = vshrl.u32 %v4784, 7
    %v4786 = vadd.s32 %v4785, 40
    %4787 = vset.pattern.permute.xlu0 %v4786
    %4788 = vperm.xlu0 %4787, %v4753
    %v4789 = vpop.permute.xlu0 %4788
    %v4790 = vlaneseq
    %v4791 = vshrl.u32 %v4790, 7
    %v4792 = vadd.s32 %v4791, 48
    %4793 = vset.pattern.permute.xlu0 %v4792
    %4794 = vperm.xlu0 %4793, %v4753
    %v4795 = vpop.permute.xlu0 %4794
    %v4796 = vlaneseq
    %v4797 = vshrl.u32 %v4796, 7
    %v4798 = vadd.s32 %v4797, 56
    %4799 = vset.pattern.permute.xlu0 %v4798
    %4800 = vperm.xlu0 %4799, %v4753
    %v4801 = vpop.permute.xlu0 %4800
    %v4802 = vlaneseq
    %v4803 = vshrl.u32 %v4802, 7
    %v4804 = vadd.s32 %v4803, 64
    %4805 = vset.pattern.permute.xlu0 %v4804
    %4806 = vperm.xlu0 %4805, %v4753
    %v4807 = vpop.permute.xlu0 %4806
    %v4808 = vlaneseq
    %v4809 = vshrl.u32 %v4808, 7
    %v4810 = vadd.s32 %v4809, 72
    %4811 = vset.pattern.permute.xlu0 %v4810
    %4812 = vperm.xlu0 %4811, %v4753
    %v4813 = vpop.permute.xlu0 %4812
    %v4814 = vlaneseq
    %v4815 = vshrl.u32 %v4814, 7
    %v4816 = vadd.s32 %v4815, 80
    %4817 = vset.pattern.permute.xlu0 %v4816
    %4818 = vperm.xlu0 %4817, %v4753
    %v4819 = vpop.permute.xlu0 %4818
    %v4820 = vlaneseq
    %v4821 = vshrl.u32 %v4820, 7
    %v4822 = vadd.s32 %v4821, 88
    %4823 = vset.pattern.permute.xlu0 %v4822
    %4824 = vperm.xlu0 %4823, %v4753
    %v4825 = vpop.permute.xlu0 %4824
    %v4826 = vlaneseq
    %v4827 = vshrl.u32 %v4826, 7
    %v4828 = vadd.s32 %v4827, 96
    %4829 = vset.pattern.permute.xlu0 %v4828
    %4830 = vperm.xlu0 %4829, %v4753
    %v4831 = vpop.permute.xlu0 %4830
    %v4832 = vlaneseq
    %v4833 = vshrl.u32 %v4832, 7
    %v4834 = vadd.s32 %v4833, 104
    %4835 = vset.pattern.permute.xlu0 %v4834
    %4836 = vperm.xlu0 %4835, %v4753
    %v4837 = vpop.permute.xlu0 %4836
    %v4838 = vlaneseq
    %v4839 = vshrl.u32 %v4838, 7
    %v4840 = vadd.s32 %v4839, 112
    %4841 = vset.pattern.permute.xlu0 %v4840
    %4842 = vperm.xlu0 %4841, %v4753
    %v4843 = vpop.permute.xlu0 %4842
    %v4844 = vlaneseq
    %v4845 = vshrl.u32 %v4844, 7
    %v4846 = vadd.s32 %v4845, 120
    %4847 = vset.pattern.permute.xlu0 %v4846
    %4848 = vperm.xlu0 %4847, %v4753
    %v4849 = vpop.permute.xlu0 %4848
    %v4850 = vperm.slane %v4460, 4
    %v4851 = vlaneseq
    %v4852 = vshrl.u32 %v4851, 7
    %4854 = vset.pattern.permute.xlu0 %v4852
    %4855 = vperm.xlu0 %4854, %v4850
    %v4856 = vpop.permute.xlu0 %4855
    %v4857 = vlaneseq
    %v4858 = vshrl.u32 %v4857, 7
    %v4859 = vadd.s32 %v4858, 8
    %4860 = vset.pattern.permute.xlu0 %v4859
    %4861 = vperm.xlu0 %4860, %v4850
    %v4862 = vpop.permute.xlu0 %4861
    %v4863 = vlaneseq
    %v4864 = vshrl.u32 %v4863, 7
    %v4865 = vadd.s32 %v4864, 16
    %4866 = vset.pattern.permute.xlu0 %v4865
    %4867 = vperm.xlu0 %4866, %v4850
    %v4868 = vpop.permute.xlu0 %4867
    %v4869 = vlaneseq
    %v4870 = vshrl.u32 %v4869, 7
    %v4871 = vadd.s32 %v4870, 24
    %4872 = vset.pattern.permute.xlu0 %v4871
    %4873 = vperm.xlu0 %4872, %v4850
    %v4874 = vpop.permute.xlu0 %4873
    %v4875 = vlaneseq
    %v4876 = vshrl.u32 %v4875, 7
    %v4877 = vadd.s32 %v4876, 32
    %4878 = vset.pattern.permute.xlu0 %v4877
    %4879 = vperm.xlu0 %4878, %v4850
    %v4880 = vpop.permute.xlu0 %4879
    %v4881 = vlaneseq
    %v4882 = vshrl.u32 %v4881, 7
    %v4883 = vadd.s32 %v4882, 40
    %4884 = vset.pattern.permute.xlu0 %v4883
    %4885 = vperm.xlu0 %4884, %v4850
    %v4886 = vpop.permute.xlu0 %4885
    %v4887 = vlaneseq
    %v4888 = vshrl.u32 %v4887, 7
    %v4889 = vadd.s32 %v4888, 48
    %4890 = vset.pattern.permute.xlu0 %v4889
    %4891 = vperm.xlu0 %4890, %v4850
    %v4892 = vpop.permute.xlu0 %4891
    %v4893 = vlaneseq
    %v4894 = vshrl.u32 %v4893, 7
    %v4895 = vadd.s32 %v4894, 56
    %4896 = vset.pattern.permute.xlu0 %v4895
    %4897 = vperm.xlu0 %4896, %v4850
    %v4898 = vpop.permute.xlu0 %4897
    %v4899 = vlaneseq
    %v4900 = vshrl.u32 %v4899, 7
    %v4901 = vadd.s32 %v4900, 64
    %4902 = vset.pattern.permute.xlu0 %v4901
    %4903 = vperm.xlu0 %4902, %v4850
    %v4904 = vpop.permute.xlu0 %4903
    %v4905 = vlaneseq
    %v4906 = vshrl.u32 %v4905, 7
    %v4907 = vadd.s32 %v4906, 72
    %4908 = vset.pattern.permute.xlu0 %v4907
    %4909 = vperm.xlu0 %4908, %v4850
    %v4910 = vpop.permute.xlu0 %4909
    %v4911 = vlaneseq
    %v4912 = vshrl.u32 %v4911, 7
    %v4913 = vadd.s32 %v4912, 80
    %4914 = vset.pattern.permute.xlu0 %v4913
    %4915 = vperm.xlu0 %4914, %v4850
    %v4916 = vpop.permute.xlu0 %4915
    %v4917 = vlaneseq
    %v4918 = vshrl.u32 %v4917, 7
    %v4919 = vadd.s32 %v4918, 88
    %4920 = vset.pattern.permute.xlu0 %v4919
    %4921 = vperm.xlu0 %4920, %v4850
    %v4922 = vpop.permute.xlu0 %4921
    %v4923 = vlaneseq
    %v4924 = vshrl.u32 %v4923, 7
    %v4925 = vadd.s32 %v4924, 96
    %4926 = vset.pattern.permute.xlu0 %v4925
    %4927 = vperm.xlu0 %4926, %v4850
    %v4928 = vpop.permute.xlu0 %4927
    %v4929 = vlaneseq
    %v4930 = vshrl.u32 %v4929, 7
    %v4931 = vadd.s32 %v4930, 104
    %4932 = vset.pattern.permute.xlu0 %v4931
    %4933 = vperm.xlu0 %4932, %v4850
    %v4934 = vpop.permute.xlu0 %4933
    %v4935 = vlaneseq
    %v4936 = vshrl.u32 %v4935, 7
    %v4937 = vadd.s32 %v4936, 112
    %4938 = vset.pattern.permute.xlu0 %v4937
    %4939 = vperm.xlu0 %4938, %v4850
    %v4940 = vpop.permute.xlu0 %4939
    %v4941 = vlaneseq
    %v4942 = vshrl.u32 %v4941, 7
    %v4943 = vadd.s32 %v4942, 120
    %4944 = vset.pattern.permute.xlu0 %v4943
    %4945 = vperm.xlu0 %4944, %v4850
    %v4946 = vpop.permute.xlu0 %4945
    %v4947 = vperm.slane %v4460, 5
    %v4948 = vlaneseq
    %v4949 = vshrl.u32 %v4948, 7
    %4951 = vset.pattern.permute.xlu0 %v4949
    %4952 = vperm.xlu0 %4951, %v4947
    %v4953 = vpop.permute.xlu0 %4952
    %v4954 = vlaneseq
    %v4955 = vshrl.u32 %v4954, 7
    %v4956 = vadd.s32 %v4955, 8
    %4957 = vset.pattern.permute.xlu0 %v4956
    %4958 = vperm.xlu0 %4957, %v4947
    %v4959 = vpop.permute.xlu0 %4958
    %v4960 = vlaneseq
    %v4961 = vshrl.u32 %v4960, 7
    %v4962 = vadd.s32 %v4961, 16
    %4963 = vset.pattern.permute.xlu0 %v4962
    %4964 = vperm.xlu0 %4963, %v4947
    %v4965 = vpop.permute.xlu0 %4964
    %v4966 = vlaneseq
    %v4967 = vshrl.u32 %v4966, 7
    %v4968 = vadd.s32 %v4967, 24
    %4969 = vset.pattern.permute.xlu0 %v4968
    %4970 = vperm.xlu0 %4969, %v4947
    %v4971 = vpop.permute.xlu0 %4970
    %v4972 = vlaneseq
    %v4973 = vshrl.u32 %v4972, 7
    %v4974 = vadd.s32 %v4973, 32
    %4975 = vset.pattern.permute.xlu0 %v4974
    %4976 = vperm.xlu0 %4975, %v4947
    %v4977 = vpop.permute.xlu0 %4976
    %v4978 = vlaneseq
    %v4979 = vshrl.u32 %v4978, 7
    %v4980 = vadd.s32 %v4979, 40
    %4981 = vset.pattern.permute.xlu0 %v4980
    %4982 = vperm.xlu0 %4981, %v4947
    %v4983 = vpop.permute.xlu0 %4982
    %v4984 = vlaneseq
    %v4985 = vshrl.u32 %v4984, 7
    %v4986 = vadd.s32 %v4985, 48
    %4987 = vset.pattern.permute.xlu0 %v4986
    %4988 = vperm.xlu0 %4987, %v4947
    %v4989 = vpop.permute.xlu0 %4988
    %v4990 = vlaneseq
    %v4991 = vshrl.u32 %v4990, 7
    %v4992 = vadd.s32 %v4991, 56
    %4993 = vset.pattern.permute.xlu0 %v4992
    %4994 = vperm.xlu0 %4993, %v4947
    %v4995 = vpop.permute.xlu0 %4994
    %v4996 = vlaneseq
    %v4997 = vshrl.u32 %v4996, 7
    %v4998 = vadd.s32 %v4997, 64
    %4999 = vset.pattern.permute.xlu0 %v4998
    %5000 = vperm.xlu0 %4999, %v4947
    %v5001 = vpop.permute.xlu0 %5000
    %v5002 = vlaneseq
    %v5003 = vshrl.u32 %v5002, 7
    %v5004 = vadd.s32 %v5003, 72
    %5005 = vset.pattern.permute.xlu0 %v5004
    %5006 = vperm.xlu0 %5005, %v4947
    %v5007 = vpop.permute.xlu0 %5006
    %v5008 = vlaneseq
    %v5009 = vshrl.u32 %v5008, 7
    %v5010 = vadd.s32 %v5009, 80
    %5011 = vset.pattern.permute.xlu0 %v5010
    %5012 = vperm.xlu0 %5011, %v4947
    %v5013 = vpop.permute.xlu0 %5012
    %v5014 = vlaneseq
    %v5015 = vshrl.u32 %v5014, 7
    %v5016 = vadd.s32 %v5015, 88
    %5017 = vset.pattern.permute.xlu0 %v5016
    %5018 = vperm.xlu0 %5017, %v4947
    %v5019 = vpop.permute.xlu0 %5018
    %v5020 = vlaneseq
    %v5021 = vshrl.u32 %v5020, 7
    %v5022 = vadd.s32 %v5021, 96
    %5023 = vset.pattern.permute.xlu0 %v5022
    %5024 = vperm.xlu0 %5023, %v4947
    %v5025 = vpop.permute.xlu0 %5024
    %v5026 = vlaneseq
    %v5027 = vshrl.u32 %v5026, 7
    %v5028 = vadd.s32 %v5027, 104
    %5029 = vset.pattern.permute.xlu0 %v5028
    %5030 = vperm.xlu0 %5029, %v4947
    %v5031 = vpop.permute.xlu0 %5030
    %v5032 = vlaneseq
    %v5033 = vshrl.u32 %v5032, 7
    %v5034 = vadd.s32 %v5033, 112
    %5035 = vset.pattern.permute.xlu0 %v5034
    %5036 = vperm.xlu0 %5035, %v4947
    %v5037 = vpop.permute.xlu0 %5036
    %v5038 = vlaneseq
    %v5039 = vshrl.u32 %v5038, 7
    %v5040 = vadd.s32 %v5039, 120
    %5041 = vset.pattern.permute.xlu0 %v5040
    %5042 = vperm.xlu0 %5041, %v4947
    %v5043 = vpop.permute.xlu0 %5042
    %v5044 = vperm.slane %v4460, 6
    %v5045 = vlaneseq
    %v5046 = vshrl.u32 %v5045, 7
    %5048 = vset.pattern.permute.xlu0 %v5046
    %5049 = vperm.xlu0 %5048, %v5044
    %v5050 = vpop.permute.xlu0 %5049
    %v5051 = vlaneseq
    %v5052 = vshrl.u32 %v5051, 7
    %v5053 = vadd.s32 %v5052, 8
    %5054 = vset.pattern.permute.xlu0 %v5053
    %5055 = vperm.xlu0 %5054, %v5044
    %v5056 = vpop.permute.xlu0 %5055
    %v5057 = vlaneseq
    %v5058 = vshrl.u32 %v5057, 7
    %v5059 = vadd.s32 %v5058, 16
    %5060 = vset.pattern.permute.xlu0 %v5059
    %5061 = vperm.xlu0 %5060, %v5044
    %v5062 = vpop.permute.xlu0 %5061
    %v5063 = vlaneseq
    %v5064 = vshrl.u32 %v5063, 7
    %v5065 = vadd.s32 %v5064, 24
    %5066 = vset.pattern.permute.xlu0 %v5065
    %5067 = vperm.xlu0 %5066, %v5044
    %v5068 = vpop.permute.xlu0 %5067
    %v5069 = vlaneseq
    %v5070 = vshrl.u32 %v5069, 7
    %v5071 = vadd.s32 %v5070, 32
    %5072 = vset.pattern.permute.xlu0 %v5071
    %5073 = vperm.xlu0 %5072, %v5044
    %v5074 = vpop.permute.xlu0 %5073
    %v5075 = vlaneseq
    %v5076 = vshrl.u32 %v5075, 7
    %v5077 = vadd.s32 %v5076, 40
    %5078 = vset.pattern.permute.xlu0 %v5077
    %5079 = vperm.xlu0 %5078, %v5044
    %v5080 = vpop.permute.xlu0 %5079
    %v5081 = vlaneseq
    %v5082 = vshrl.u32 %v5081, 7
    %v5083 = vadd.s32 %v5082, 48
    %5084 = vset.pattern.permute.xlu0 %v5083
    %5085 = vperm.xlu0 %5084, %v5044
    %v5086 = vpop.permute.xlu0 %5085
    %v5087 = vlaneseq
    %v5088 = vshrl.u32 %v5087, 7
    %v5089 = vadd.s32 %v5088, 56
    %5090 = vset.pattern.permute.xlu0 %v5089
    %5091 = vperm.xlu0 %5090, %v5044
    %v5092 = vpop.permute.xlu0 %5091
    %v5093 = vlaneseq
    %v5094 = vshrl.u32 %v5093, 7
    %v5095 = vadd.s32 %v5094, 64
    %5096 = vset.pattern.permute.xlu0 %v5095
    %5097 = vperm.xlu0 %5096, %v5044
    %v5098 = vpop.permute.xlu0 %5097
    %v5099 = vlaneseq
    %v5100 = vshrl.u32 %v5099, 7
    %v5101 = vadd.s32 %v5100, 72
    %5102 = vset.pattern.permute.xlu0 %v5101
    %5103 = vperm.xlu0 %5102, %v5044
    %v5104 = vpop.permute.xlu0 %5103
    %v5105 = vlaneseq
    %v5106 = vshrl.u32 %v5105, 7
    %v5107 = vadd.s32 %v5106, 80
    %5108 = vset.pattern.permute.xlu0 %v5107
    %5109 = vperm.xlu0 %5108, %v5044
    %v5110 = vpop.permute.xlu0 %5109
    %v5111 = vlaneseq
    %v5112 = vshrl.u32 %v5111, 7
    %v5113 = vadd.s32 %v5112, 88
    %5114 = vset.pattern.permute.xlu0 %v5113
    %5115 = vperm.xlu0 %5114, %v5044
    %v5116 = vpop.permute.xlu0 %5115
    %v5117 = vlaneseq
    %v5118 = vshrl.u32 %v5117, 7
    %v5119 = vadd.s32 %v5118, 96
    %5120 = vset.pattern.permute.xlu0 %v5119
    %5121 = vperm.xlu0 %5120, %v5044
    %v5122 = vpop.permute.xlu0 %5121
    %v5123 = vlaneseq
    %v5124 = vshrl.u32 %v5123, 7
    %v5125 = vadd.s32 %v5124, 104
    %5126 = vset.pattern.permute.xlu0 %v5125
    %5127 = vperm.xlu0 %5126, %v5044
    %v5128 = vpop.permute.xlu0 %5127
    %v5129 = vlaneseq
    %v5130 = vshrl.u32 %v5129, 7
    %v5131 = vadd.s32 %v5130, 112
    %5132 = vset.pattern.permute.xlu0 %v5131
    %5133 = vperm.xlu0 %5132, %v5044
    %v5134 = vpop.permute.xlu0 %5133
    %v5135 = vlaneseq
    %v5136 = vshrl.u32 %v5135, 7
    %v5137 = vadd.s32 %v5136, 120
    %5138 = vset.pattern.permute.xlu0 %v5137
    %5139 = vperm.xlu0 %5138, %v5044
    %v5140 = vpop.permute.xlu0 %5139
    %v5141 = vperm.slane %v4460, 7
    %v5142 = vlaneseq
    %v5143 = vshrl.u32 %v5142, 7
    %5145 = vset.pattern.permute.xlu0 %v5143
    %5146 = vperm.xlu0 %5145, %v5141
    %v5147 = vpop.permute.xlu0 %5146
    %v5148 = vlaneseq
    %v5149 = vshrl.u32 %v5148, 7
    %v5150 = vadd.s32 %v5149, 8
    %5151 = vset.pattern.permute.xlu0 %v5150
    %5152 = vperm.xlu0 %5151, %v5141
    %v5153 = vpop.permute.xlu0 %5152
    %v5154 = vlaneseq
    %v5155 = vshrl.u32 %v5154, 7
    %v5156 = vadd.s32 %v5155, 16
    %5157 = vset.pattern.permute.xlu0 %v5156
    %5158 = vperm.xlu0 %5157, %v5141
    %v5159 = vpop.permute.xlu0 %5158
    %v5160 = vlaneseq
    %v5161 = vshrl.u32 %v5160, 7
    %v5162 = vadd.s32 %v5161, 24
    %5163 = vset.pattern.permute.xlu0 %v5162
    %5164 = vperm.xlu0 %5163, %v5141
    %v5165 = vpop.permute.xlu0 %5164
    %v5166 = vlaneseq
    %v5167 = vshrl.u32 %v5166, 7
    %v5168 = vadd.s32 %v5167, 32
    %5169 = vset.pattern.permute.xlu0 %v5168
    %5170 = vperm.xlu0 %5169, %v5141
    %v5171 = vpop.permute.xlu0 %5170
    %v5172 = vlaneseq
    %v5173 = vshrl.u32 %v5172, 7
    %v5174 = vadd.s32 %v5173, 40
    %5175 = vset.pattern.permute.xlu0 %v5174
    %5176 = vperm.xlu0 %5175, %v5141
    %v5177 = vpop.permute.xlu0 %5176
    %v5178 = vlaneseq
    %v5179 = vshrl.u32 %v5178, 7
    %v5180 = vadd.s32 %v5179, 48
    %5181 = vset.pattern.permute.xlu0 %v5180
    %5182 = vperm.xlu0 %5181, %v5141
    %v5183 = vpop.permute.xlu0 %5182
    %v5184 = vlaneseq
    %v5185 = vshrl.u32 %v5184, 7
    %v5186 = vadd.s32 %v5185, 56
    %5187 = vset.pattern.permute.xlu0 %v5186
    %5188 = vperm.xlu0 %5187, %v5141
    %v5189 = vpop.permute.xlu0 %5188
    %v5190 = vlaneseq
    %v5191 = vshrl.u32 %v5190, 7
    %v5192 = vadd.s32 %v5191, 64
    %5193 = vset.pattern.permute.xlu0 %v5192
    %5194 = vperm.xlu0 %5193, %v5141
    %v5195 = vpop.permute.xlu0 %5194
    %v5196 = vlaneseq
    %v5197 = vshrl.u32 %v5196, 7
    %v5198 = vadd.s32 %v5197, 72
    %5199 = vset.pattern.permute.xlu0 %v5198
    %5200 = vperm.xlu0 %5199, %v5141
    %v5201 = vpop.permute.xlu0 %5200
    %v5202 = vlaneseq
    %v5203 = vshrl.u32 %v5202, 7
    %v5204 = vadd.s32 %v5203, 80
    %5205 = vset.pattern.permute.xlu0 %v5204
    %5206 = vperm.xlu0 %5205, %v5141
    %v5207 = vpop.permute.xlu0 %5206
    %v5208 = vlaneseq
    %v5209 = vshrl.u32 %v5208, 7
    %v5210 = vadd.s32 %v5209, 88
    %5211 = vset.pattern.permute.xlu0 %v5210
    %5212 = vperm.xlu0 %5211, %v5141
    %v5213 = vpop.permute.xlu0 %5212
    %v5214 = vlaneseq
    %v5215 = vshrl.u32 %v5214, 7
    %v5216 = vadd.s32 %v5215, 96
    %5217 = vset.pattern.permute.xlu0 %v5216
    %5218 = vperm.xlu0 %5217, %v5141
    %v5219 = vpop.permute.xlu0 %5218
    %v5220 = vlaneseq
    %v5221 = vshrl.u32 %v5220, 7
    %v5222 = vadd.s32 %v5221, 104
    %5223 = vset.pattern.permute.xlu0 %v5222
    %5224 = vperm.xlu0 %5223, %v5141
    %v5225 = vpop.permute.xlu0 %5224
    %v5226 = vlaneseq
    %v5227 = vshrl.u32 %v5226, 7
    %v5228 = vadd.s32 %v5227, 112
    %5229 = vset.pattern.permute.xlu0 %v5228
    %5230 = vperm.xlu0 %5229, %v5141
    %v5231 = vpop.permute.xlu0 %5230
    %v5232 = vlaneseq
    %v5233 = vshrl.u32 %v5232, 7
    %v5234 = vadd.s32 %v5233, 120
    %5235 = vset.pattern.permute.xlu0 %v5234
    %5236 = vperm.xlu0 %5235, %v5141
    %v5237 = vpop.permute.xlu0 %5236
    %v5366 = vadd.f32 %v4204, %v4468
    %v5367 = vadd.f32 %v4206, %v4474
    %v5368 = vadd.f32 %v4208, %v4480
    %v5369 = vadd.f32 %v4210, %v4486
    %v5370 = vadd.f32 %v4212, %v4492
    %v5371 = vadd.f32 %v4214, %v4498
    %v5372 = vadd.f32 %v4216, %v4504
    %v5373 = vadd.f32 %v4218, %v4510
    %v5374 = vadd.f32 %v4220, %v4516
    %v5375 = vadd.f32 %v4222, %v4522
    %v5376 = vadd.f32 %v4224, %v4528
    %v5377 = vadd.f32 %v4226, %v4534
    %v5378 = vadd.f32 %v4228, %v4540
    %v5379 = vadd.f32 %v4230, %v4546
    %v5380 = vadd.f32 %v4232, %v4552
    %v5381 = vadd.f32 %v4234, %v4558
    %v5382 = vadd.f32 %v4236, %v4565
    %v5383 = vadd.f32 %v4238, %v4571
    %v5384 = vadd.f32 %v4240, %v4577
    %v5385 = vadd.f32 %v4242, %v4583
    %v5386 = vadd.f32 %v4244, %v4589
    %v5387 = vadd.f32 %v4246, %v4595
    %v5388 = vadd.f32 %v4248, %v4601
    %v5389 = vadd.f32 %v4250, %v4607
    %v5390 = vadd.f32 %v4252, %v4613
    %v5391 = vadd.f32 %v4254, %v4619
    %v5392 = vadd.f32 %v4256, %v4625
    %v5393 = vadd.f32 %v4258, %v4631
    %v5394 = vadd.f32 %v4260, %v4637
    %v5395 = vadd.f32 %v4262, %v4643
    %v5396 = vadd.f32 %v4264, %v4649
    %v5397 = vadd.f32 %v4266, %v4655
    %v5398 = vadd.f32 %v4268, %v4662
    %v5399 = vadd.f32 %v4270, %v4668
    %v5400 = vadd.f32 %v4272, %v4674
    %v5401 = vadd.f32 %v4274, %v4680
    %v5402 = vadd.f32 %v4276, %v4686
    %v5403 = vadd.f32 %v4278, %v4692
    %v5404 = vadd.f32 %v4280, %v4698
    %v5405 = vadd.f32 %v4282, %v4704
    %v5406 = vadd.f32 %v4284, %v4710
    %v5407 = vadd.f32 %v4286, %v4716
    %v5408 = vadd.f32 %v4288, %v4722
    %v5409 = vadd.f32 %v4290, %v4728
    %v5410 = vadd.f32 %v4292, %v4734
    %v5411 = vadd.f32 %v4294, %v4740
    %v5412 = vadd.f32 %v4296, %v4746
    %v5413 = vadd.f32 %v4298, %v4752
    %v5414 = vadd.f32 %v4300, %v4759
    %v5415 = vadd.f32 %v4302, %v4765
    %v5416 = vadd.f32 %v4304, %v4771
    %v5417 = vadd.f32 %v4306, %v4777
    %v5418 = vadd.f32 %v4308, %v4783
    %v5419 = vadd.f32 %v4310, %v4789
    %v5420 = vadd.f32 %v4312, %v4795
    %v5421 = vadd.f32 %v4314, %v4801
    %v5422 = vadd.f32 %v4316, %v4807
    %v5423 = vadd.f32 %v4318, %v4813
    %v5424 = vadd.f32 %v4320, %v4819
    %v5425 = vadd.f32 %v4322, %v4825
    %v5426 = vadd.f32 %v4324, %v4831
    %v5427 = vadd.f32 %v4326, %v4837
    %v5428 = vadd.f32 %v4328, %v4843
    %v5429 = vadd.f32 %v4330, %v4849
    %v5430 = vadd.f32 %v4332, %v4856
    %v5431 = vadd.f32 %v4334, %v4862
    %v5432 = vadd.f32 %v4336, %v4868
    %v5433 = vadd.f32 %v4338, %v4874
    %v5434 = vadd.f32 %v4340, %v4880
    %v5435 = vadd.f32 %v4342, %v4886
    %v5436 = vadd.f32 %v4344, %v4892
    %v5437 = vadd.f32 %v4346, %v4898
    %v5438 = vadd.f32 %v4348, %v4904
    %v5439 = vadd.f32 %v4350, %v4910
    %v5440 = vadd.f32 %v4352, %v4916
    %v5441 = vadd.f32 %v4354, %v4922
    %v5442 = vadd.f32 %v4356, %v4928
    %v5443 = vadd.f32 %v4358, %v4934
    %v5444 = vadd.f32 %v4360, %v4940
    %v5445 = vadd.f32 %v4362, %v4946
    %v5446 = vadd.f32 %v4364, %v4953
    %v5447 = vadd.f32 %v4366, %v4959
    %v5448 = vadd.f32 %v4368, %v4965
    %v5449 = vadd.f32 %v4370, %v4971
    %v5450 = vadd.f32 %v4372, %v4977
    %v5451 = vadd.f32 %v4374, %v4983
    %v5452 = vadd.f32 %v4376, %v4989
    %v5453 = vadd.f32 %v4378, %v4995
    %v5454 = vadd.f32 %v4380, %v5001
    %v5455 = vadd.f32 %v4382, %v5007
    %v5456 = vadd.f32 %v4384, %v5013
    %v5457 = vadd.f32 %v4386, %v5019
    %v5458 = vadd.f32 %v4388, %v5025
    %v5459 = vadd.f32 %v4390, %v5031
    %v5460 = vadd.f32 %v4392, %v5037
    %v5461 = vadd.f32 %v4394, %v5043
    %v5462 = vadd.f32 %v4396, %v5050
    %v5463 = vadd.f32 %v4398, %v5056
    %v5464 = vadd.f32 %v4400, %v5062
    %v5465 = vadd.f32 %v4402, %v5068
    %v5466 = vadd.f32 %v4404, %v5074
    %v5467 = vadd.f32 %v4406, %v5080
    %v5468 = vadd.f32 %v4408, %v5086
    %v5469 = vadd.f32 %v4410, %v5092
    %v5470 = vadd.f32 %v4412, %v5098
    %v5471 = vadd.f32 %v4414, %v5104
    %v5472 = vadd.f32 %v4416, %v5110
    %v5473 = vadd.f32 %v4418, %v5116
    %v5474 = vadd.f32 %v4420, %v5122
    %v5475 = vadd.f32 %v4422, %v5128
    %v5476 = vadd.f32 %v4424, %v5134
    %v5477 = vadd.f32 %v4426, %v5140
    %v5478 = vadd.f32 %v4428, %v5147
    %v5479 = vadd.f32 %v4430, %v5153
    %v5480 = vadd.f32 %v4432, %v5159
    %v5481 = vadd.f32 %v4434, %v5165
    %v5482 = vadd.f32 %v4436, %v5171
    %v5483 = vadd.f32 %v4438, %v5177
    %v5484 = vadd.f32 %v4440, %v5183
    %v5485 = vadd.f32 %v4442, %v5189
    %v5486 = vadd.f32 %v4444, %v5195
    %v5487 = vadd.f32 %v4446, %v5201
    %v5488 = vadd.f32 %v4448, %v5207
    %v5489 = vadd.f32 %v4450, %v5213
    %v5490 = vadd.f32 %v4452, %v5219
    %v5491 = vadd.f32 %v4454, %v5225
    %v5492 = vadd.f32 %v4456, %v5231
    %v5493 = vadd.f32 %v4458, %v5237
    %5622 = vset.pattern.permute.xlu0 0
    %5623 = vperm.xlu0 %5622, %v5366
    %v5624 = vpop.permute.xlu0 %5623
    %5625 = vset.pattern.permute.xlu0 0
    %5626 = vperm.xlu0 %5625, %v5367
    %v5627 = vpop.permute.xlu0 %5626
    %5628 = vset.pattern.permute.xlu0 0
    %5629 = vperm.xlu0 %5628, %v5368
    %v5630 = vpop.permute.xlu0 %5629
    %5631 = vset.pattern.permute.xlu0 0
    %5632 = vperm.xlu0 %5631, %v5369
    %v5633 = vpop.permute.xlu0 %5632
    %5634 = vset.pattern.permute.xlu0 0
    %5635 = vperm.xlu0 %5634, %v5370
    %v5636 = vpop.permute.xlu0 %5635
    %5637 = vset.pattern.permute.xlu0 0
    %5638 = vperm.xlu0 %5637, %v5371
    %v5639 = vpop.permute.xlu0 %5638
    %5640 = vset.pattern.permute.xlu0 0
    %5641 = vperm.xlu0 %5640, %v5372
    %v5642 = vpop.permute.xlu0 %5641
    %5643 = vset.pattern.permute.xlu0 0
    %5644 = vperm.xlu0 %5643, %v5373
    %v5645 = vpop.permute.xlu0 %5644
    %5646 = vset.pattern.permute.xlu0 0
    %5647 = vperm.xlu0 %5646, %v5374
    %v5648 = vpop.permute.xlu0 %5647
    %5649 = vset.pattern.permute.xlu0 0
    %5650 = vperm.xlu0 %5649, %v5375
    %v5651 = vpop.permute.xlu0 %5650
    %5652 = vset.pattern.permute.xlu0 0
    %5653 = vperm.xlu0 %5652, %v5376
    %v5654 = vpop.permute.xlu0 %5653
    %5655 = vset.pattern.permute.xlu0 0
    %5656 = vperm.xlu0 %5655, %v5377
    %v5657 = vpop.permute.xlu0 %5656
    %5658 = vset.pattern.permute.xlu0 0
    %5659 = vperm.xlu0 %5658, %v5378
    %v5660 = vpop.permute.xlu0 %5659
    %5661 = vset.pattern.permute.xlu0 0
    %5662 = vperm.xlu0 %5661, %v5379
    %v5663 = vpop.permute.xlu0 %5662
    %5664 = vset.pattern.permute.xlu0 0
    %5665 = vperm.xlu0 %5664, %v5380
    %v5666 = vpop.permute.xlu0 %5665
    %5667 = vset.pattern.permute.xlu0 0
    %5668 = vperm.xlu0 %5667, %v5381
    %v5669 = vpop.permute.xlu0 %5668
    %5670 = vset.pattern.permute.xlu0 0
    %5671 = vperm.xlu0 %5670, %v5382
    %v5672 = vpop.permute.xlu0 %5671
    %5673 = vset.pattern.permute.xlu0 0
    %5674 = vperm.xlu0 %5673, %v5383
    %v5675 = vpop.permute.xlu0 %5674
    %5676 = vset.pattern.permute.xlu0 0
    %5677 = vperm.xlu0 %5676, %v5384
    %v5678 = vpop.permute.xlu0 %5677
    %5679 = vset.pattern.permute.xlu0 0
    %5680 = vperm.xlu0 %5679, %v5385
    %v5681 = vpop.permute.xlu0 %5680
    %5682 = vset.pattern.permute.xlu0 0
    %5683 = vperm.xlu0 %5682, %v5386
    %v5684 = vpop.permute.xlu0 %5683
    %5685 = vset.pattern.permute.xlu0 0
    %5686 = vperm.xlu0 %5685, %v5387
    %v5687 = vpop.permute.xlu0 %5686
    %5688 = vset.pattern.permute.xlu0 0
    %5689 = vperm.xlu0 %5688, %v5388
    %v5690 = vpop.permute.xlu0 %5689
    %5691 = vset.pattern.permute.xlu0 0
    %5692 = vperm.xlu0 %5691, %v5389
    %v5693 = vpop.permute.xlu0 %5692
    %5694 = vset.pattern.permute.xlu0 0
    %5695 = vperm.xlu0 %5694, %v5390
    %v5696 = vpop.permute.xlu0 %5695
    %5697 = vset.pattern.permute.xlu0 0
    %5698 = vperm.xlu0 %5697, %v5391
    %v5699 = vpop.permute.xlu0 %5698
    %5700 = vset.pattern.permute.xlu0 0
    %5701 = vperm.xlu0 %5700, %v5392
    %v5702 = vpop.permute.xlu0 %5701
    %5703 = vset.pattern.permute.xlu0 0
    %5704 = vperm.xlu0 %5703, %v5393
    %v5705 = vpop.permute.xlu0 %5704
    %5706 = vset.pattern.permute.xlu0 0
    %5707 = vperm.xlu0 %5706, %v5394
    %v5708 = vpop.permute.xlu0 %5707
    %5709 = vset.pattern.permute.xlu0 0
    %5710 = vperm.xlu0 %5709, %v5395
    %v5711 = vpop.permute.xlu0 %5710
    %5712 = vset.pattern.permute.xlu0 0
    %5713 = vperm.xlu0 %5712, %v5396
    %v5714 = vpop.permute.xlu0 %5713
    %5715 = vset.pattern.permute.xlu0 0
    %5716 = vperm.xlu0 %5715, %v5397
    %v5717 = vpop.permute.xlu0 %5716
    %5718 = vset.pattern.permute.xlu0 0
    %5719 = vperm.xlu0 %5718, %v5398
    %v5720 = vpop.permute.xlu0 %5719
    %5721 = vset.pattern.permute.xlu0 0
    %5722 = vperm.xlu0 %5721, %v5399
    %v5723 = vpop.permute.xlu0 %5722
    %5724 = vset.pattern.permute.xlu0 0
    %5725 = vperm.xlu0 %5724, %v5400
    %v5726 = vpop.permute.xlu0 %5725
    %5727 = vset.pattern.permute.xlu0 0
    %5728 = vperm.xlu0 %5727, %v5401
    %v5729 = vpop.permute.xlu0 %5728
    %5730 = vset.pattern.permute.xlu0 0
    %5731 = vperm.xlu0 %5730, %v5402
    %v5732 = vpop.permute.xlu0 %5731
    %5733 = vset.pattern.permute.xlu0 0
    %5734 = vperm.xlu0 %5733, %v5403
    %v5735 = vpop.permute.xlu0 %5734
    %5736 = vset.pattern.permute.xlu0 0
    %5737 = vperm.xlu0 %5736, %v5404
    %v5738 = vpop.permute.xlu0 %5737
    %5739 = vset.pattern.permute.xlu0 0
    %5740 = vperm.xlu0 %5739, %v5405
    %v5741 = vpop.permute.xlu0 %5740
    %5742 = vset.pattern.permute.xlu0 0
    %5743 = vperm.xlu0 %5742, %v5406
    %v5744 = vpop.permute.xlu0 %5743
    %5745 = vset.pattern.permute.xlu0 0
    %5746 = vperm.xlu0 %5745, %v5407
    %v5747 = vpop.permute.xlu0 %5746
    %5748 = vset.pattern.permute.xlu0 0
    %5749 = vperm.xlu0 %5748, %v5408
    %v5750 = vpop.permute.xlu0 %5749
    %5751 = vset.pattern.permute.xlu0 0
    %5752 = vperm.xlu0 %5751, %v5409
    %v5753 = vpop.permute.xlu0 %5752
    %5754 = vset.pattern.permute.xlu0 0
    %5755 = vperm.xlu0 %5754, %v5410
    %v5756 = vpop.permute.xlu0 %5755
    %5757 = vset.pattern.permute.xlu0 0
    %5758 = vperm.xlu0 %5757, %v5411
    %v5759 = vpop.permute.xlu0 %5758
    %5760 = vset.pattern.permute.xlu0 0
    %5761 = vperm.xlu0 %5760, %v5412
    %v5762 = vpop.permute.xlu0 %5761
    %5763 = vset.pattern.permute.xlu0 0
    %5764 = vperm.xlu0 %5763, %v5413
    %v5765 = vpop.permute.xlu0 %5764
    %5766 = vset.pattern.permute.xlu0 0
    %5767 = vperm.xlu0 %5766, %v5414
    %v5768 = vpop.permute.xlu0 %5767
    %5769 = vset.pattern.permute.xlu0 0
    %5770 = vperm.xlu0 %5769, %v5415
    %v5771 = vpop.permute.xlu0 %5770
    %5772 = vset.pattern.permute.xlu0 0
    %5773 = vperm.xlu0 %5772, %v5416
    %v5774 = vpop.permute.xlu0 %5773
    %5775 = vset.pattern.permute.xlu0 0
    %5776 = vperm.xlu0 %5775, %v5417
    %v5777 = vpop.permute.xlu0 %5776
    %5778 = vset.pattern.permute.xlu0 0
    %5779 = vperm.xlu0 %5778, %v5418
    %v5780 = vpop.permute.xlu0 %5779
    %5781 = vset.pattern.permute.xlu0 0
    %5782 = vperm.xlu0 %5781, %v5419
    %v5783 = vpop.permute.xlu0 %5782
    %5784 = vset.pattern.permute.xlu0 0
    %5785 = vperm.xlu0 %5784, %v5420
    %v5786 = vpop.permute.xlu0 %5785
    %5787 = vset.pattern.permute.xlu0 0
    %5788 = vperm.xlu0 %5787, %v5421
    %v5789 = vpop.permute.xlu0 %5788
    %5790 = vset.pattern.permute.xlu0 0
    %5791 = vperm.xlu0 %5790, %v5422
    %v5792 = vpop.permute.xlu0 %5791
    %5793 = vset.pattern.permute.xlu0 0
    %5794 = vperm.xlu0 %5793, %v5423
    %v5795 = vpop.permute.xlu0 %5794
    %5796 = vset.pattern.permute.xlu0 0
    %5797 = vperm.xlu0 %5796, %v5424
    %v5798 = vpop.permute.xlu0 %5797
    %5799 = vset.pattern.permute.xlu0 0
    %5800 = vperm.xlu0 %5799, %v5425
    %v5801 = vpop.permute.xlu0 %5800
    %5802 = vset.pattern.permute.xlu0 0
    %5803 = vperm.xlu0 %5802, %v5426
    %v5804 = vpop.permute.xlu0 %5803
    %5805 = vset.pattern.permute.xlu0 0
    %5806 = vperm.xlu0 %5805, %v5427
    %v5807 = vpop.permute.xlu0 %5806
    %5808 = vset.pattern.permute.xlu0 0
    %5809 = vperm.xlu0 %5808, %v5428
    %v5810 = vpop.permute.xlu0 %5809
    %5811 = vset.pattern.permute.xlu0 0
    %5812 = vperm.xlu0 %5811, %v5429
    %v5813 = vpop.permute.xlu0 %5812
    %5814 = vset.pattern.permute.xlu0 0
    %5815 = vperm.xlu0 %5814, %v5430
    %v5816 = vpop.permute.xlu0 %5815
    %5817 = vset.pattern.permute.xlu0 0
    %5818 = vperm.xlu0 %5817, %v5431
    %v5819 = vpop.permute.xlu0 %5818
    %5820 = vset.pattern.permute.xlu0 0
    %5821 = vperm.xlu0 %5820, %v5432
    %v5822 = vpop.permute.xlu0 %5821
    %5823 = vset.pattern.permute.xlu0 0
    %5824 = vperm.xlu0 %5823, %v5433
    %v5825 = vpop.permute.xlu0 %5824
    %5826 = vset.pattern.permute.xlu0 0
    %5827 = vperm.xlu0 %5826, %v5434
    %v5828 = vpop.permute.xlu0 %5827
    %5829 = vset.pattern.permute.xlu0 0
    %5830 = vperm.xlu0 %5829, %v5435
    %v5831 = vpop.permute.xlu0 %5830
    %5832 = vset.pattern.permute.xlu0 0
    %5833 = vperm.xlu0 %5832, %v5436
    %v5834 = vpop.permute.xlu0 %5833
    %5835 = vset.pattern.permute.xlu0 0
    %5836 = vperm.xlu0 %5835, %v5437
    %v5837 = vpop.permute.xlu0 %5836
    %5838 = vset.pattern.permute.xlu0 0
    %5839 = vperm.xlu0 %5838, %v5438
    %v5840 = vpop.permute.xlu0 %5839
    %5841 = vset.pattern.permute.xlu0 0
    %5842 = vperm.xlu0 %5841, %v5439
    %v5843 = vpop.permute.xlu0 %5842
    %5844 = vset.pattern.permute.xlu0 0
    %5845 = vperm.xlu0 %5844, %v5440
    %v5846 = vpop.permute.xlu0 %5845
    %5847 = vset.pattern.permute.xlu0 0
    %5848 = vperm.xlu0 %5847, %v5441
    %v5849 = vpop.permute.xlu0 %5848
    %5850 = vset.pattern.permute.xlu0 0
    %5851 = vperm.xlu0 %5850, %v5442
    %v5852 = vpop.permute.xlu0 %5851
    %5853 = vset.pattern.permute.xlu0 0
    %5854 = vperm.xlu0 %5853, %v5443
    %v5855 = vpop.permute.xlu0 %5854
    %5856 = vset.pattern.permute.xlu0 0
    %5857 = vperm.xlu0 %5856, %v5444
    %v5858 = vpop.permute.xlu0 %5857
    %5859 = vset.pattern.permute.xlu0 0
    %5860 = vperm.xlu0 %5859, %v5445
    %v5861 = vpop.permute.xlu0 %5860
    %5862 = vset.pattern.permute.xlu0 0
    %5863 = vperm.xlu0 %5862, %v5446
    %v5864 = vpop.permute.xlu0 %5863
    %5865 = vset.pattern.permute.xlu0 0
    %5866 = vperm.xlu0 %5865, %v5447
    %v5867 = vpop.permute.xlu0 %5866
    %5868 = vset.pattern.permute.xlu0 0
    %5869 = vperm.xlu0 %5868, %v5448
    %v5870 = vpop.permute.xlu0 %5869
    %5871 = vset.pattern.permute.xlu0 0
    %5872 = vperm.xlu0 %5871, %v5449
    %v5873 = vpop.permute.xlu0 %5872
    %5874 = vset.pattern.permute.xlu0 0
    %5875 = vperm.xlu0 %5874, %v5450
    %v5876 = vpop.permute.xlu0 %5875
    %5877 = vset.pattern.permute.xlu0 0
    %5878 = vperm.xlu0 %5877, %v5451
    %v5879 = vpop.permute.xlu0 %5878
    %5880 = vset.pattern.permute.xlu0 0
    %5881 = vperm.xlu0 %5880, %v5452
    %v5882 = vpop.permute.xlu0 %5881
    %5883 = vset.pattern.permute.xlu0 0
    %5884 = vperm.xlu0 %5883, %v5453
    %v5885 = vpop.permute.xlu0 %5884
    %5886 = vset.pattern.permute.xlu0 0
    %5887 = vperm.xlu0 %5886, %v5454
    %v5888 = vpop.permute.xlu0 %5887
    %5889 = vset.pattern.permute.xlu0 0
    %5890 = vperm.xlu0 %5889, %v5455
    %v5891 = vpop.permute.xlu0 %5890
    %5892 = vset.pattern.permute.xlu0 0
    %5893 = vperm.xlu0 %5892, %v5456
    %v5894 = vpop.permute.xlu0 %5893
    %5895 = vset.pattern.permute.xlu0 0
    %5896 = vperm.xlu0 %5895, %v5457
    %v5897 = vpop.permute.xlu0 %5896
    %5898 = vset.pattern.permute.xlu0 0
    %5899 = vperm.xlu0 %5898, %v5458
    %v5900 = vpop.permute.xlu0 %5899
    %5901 = vset.pattern.permute.xlu0 0
    %5902 = vperm.xlu0 %5901, %v5459
    %v5903 = vpop.permute.xlu0 %5902
    %5904 = vset.pattern.permute.xlu0 0
    %5905 = vperm.xlu0 %5904, %v5460
    %v5906 = vpop.permute.xlu0 %5905
    %5907 = vset.pattern.permute.xlu0 0
    %5908 = vperm.xlu0 %5907, %v5461
    %v5909 = vpop.permute.xlu0 %5908
    %5910 = vset.pattern.permute.xlu0 0
    %5911 = vperm.xlu0 %5910, %v5462
    %v5912 = vpop.permute.xlu0 %5911
    %5913 = vset.pattern.permute.xlu0 0
    %5914 = vperm.xlu0 %5913, %v5463
    %v5915 = vpop.permute.xlu0 %5914
    %5916 = vset.pattern.permute.xlu0 0
    %5917 = vperm.xlu0 %5916, %v5464
    %v5918 = vpop.permute.xlu0 %5917
    %5919 = vset.pattern.permute.xlu0 0
    %5920 = vperm.xlu0 %5919, %v5465
    %v5921 = vpop.permute.xlu0 %5920
    %5922 = vset.pattern.permute.xlu0 0
    %5923 = vperm.xlu0 %5922, %v5466
    %v5924 = vpop.permute.xlu0 %5923
    %5925 = vset.pattern.permute.xlu0 0
    %5926 = vperm.xlu0 %5925, %v5467
    %v5927 = vpop.permute.xlu0 %5926
    %5928 = vset.pattern.permute.xlu0 0
    %5929 = vperm.xlu0 %5928, %v5468
    %v5930 = vpop.permute.xlu0 %5929
    %5931 = vset.pattern.permute.xlu0 0
    %5932 = vperm.xlu0 %5931, %v5469
    %v5933 = vpop.permute.xlu0 %5932
    %5934 = vset.pattern.permute.xlu0 0
    %5935 = vperm.xlu0 %5934, %v5470
    %v5936 = vpop.permute.xlu0 %5935
    %5937 = vset.pattern.permute.xlu0 0
    %5938 = vperm.xlu0 %5937, %v5471
    %v5939 = vpop.permute.xlu0 %5938
    %5940 = vset.pattern.permute.xlu0 0
    %5941 = vperm.xlu0 %5940, %v5472
    %v5942 = vpop.permute.xlu0 %5941
    %5943 = vset.pattern.permute.xlu0 0
    %5944 = vperm.xlu0 %5943, %v5473
    %v5945 = vpop.permute.xlu0 %5944
    %5946 = vset.pattern.permute.xlu0 0
    %5947 = vperm.xlu0 %5946, %v5474
    %v5948 = vpop.permute.xlu0 %5947
    %5949 = vset.pattern.permute.xlu0 0
    %5950 = vperm.xlu0 %5949, %v5475
    %v5951 = vpop.permute.xlu0 %5950
    %5952 = vset.pattern.permute.xlu0 0
    %5953 = vperm.xlu0 %5952, %v5476
    %v5954 = vpop.permute.xlu0 %5953
    %5955 = vset.pattern.permute.xlu0 0
    %5956 = vperm.xlu0 %5955, %v5477
    %v5957 = vpop.permute.xlu0 %5956
    %5958 = vset.pattern.permute.xlu0 0
    %5959 = vperm.xlu0 %5958, %v5478
    %v5960 = vpop.permute.xlu0 %5959
    %5961 = vset.pattern.permute.xlu0 0
    %5962 = vperm.xlu0 %5961, %v5479
    %v5963 = vpop.permute.xlu0 %5962
    %5964 = vset.pattern.permute.xlu0 0
    %5965 = vperm.xlu0 %5964, %v5480
    %v5966 = vpop.permute.xlu0 %5965
    %5967 = vset.pattern.permute.xlu0 0
    %5968 = vperm.xlu0 %5967, %v5481
    %v5969 = vpop.permute.xlu0 %5968
    %5970 = vset.pattern.permute.xlu0 0
    %5971 = vperm.xlu0 %5970, %v5482
    %v5972 = vpop.permute.xlu0 %5971
    %5973 = vset.pattern.permute.xlu0 0
    %5974 = vperm.xlu0 %5973, %v5483
    %v5975 = vpop.permute.xlu0 %5974
    %5976 = vset.pattern.permute.xlu0 0
    %5977 = vperm.xlu0 %5976, %v5484
    %v5978 = vpop.permute.xlu0 %5977
    %5979 = vset.pattern.permute.xlu0 0
    %5980 = vperm.xlu0 %5979, %v5485
    %v5981 = vpop.permute.xlu0 %5980
    %5982 = vset.pattern.permute.xlu0 0
    %5983 = vperm.xlu0 %5982, %v5486
    %v5984 = vpop.permute.xlu0 %5983
    %5985 = vset.pattern.permute.xlu0 0
    %5986 = vperm.xlu0 %5985, %v5487
    %v5987 = vpop.permute.xlu0 %5986
    %5988 = vset.pattern.permute.xlu0 0
    %5989 = vperm.xlu0 %5988, %v5488
    %v5990 = vpop.permute.xlu0 %5989
    %5991 = vset.pattern.permute.xlu0 0
    %5992 = vperm.xlu0 %5991, %v5489
    %v5993 = vpop.permute.xlu0 %5992
    %5994 = vset.pattern.permute.xlu0 0
    %5995 = vperm.xlu0 %5994, %v5490
    %v5996 = vpop.permute.xlu0 %5995
    %5997 = vset.pattern.permute.xlu0 0
    %5998 = vperm.xlu0 %5997, %v5491
    %v5999 = vpop.permute.xlu0 %5998
    %6000 = vset.pattern.permute.xlu0 0
    %6001 = vperm.xlu0 %6000, %v5492
    %v6002 = vpop.permute.xlu0 %6001
    %6003 = vset.pattern.permute.xlu0 0
    %6004 = vperm.xlu0 %6003, %v5493
    %v6005 = vpop.permute.xlu0 %6004
    %v6006 = vperm.slane %v5624, %v2977
    %v6007 = vperm.slane %v5627, %v2979
    %v6008 = vsel %vm2981, %v6007, %v6006
    %v6009 = vperm.slane %v5630, %v2983
    %v6010 = vsel %vm2985, %v6009, %v6008
    %v6011 = vperm.slane %v5633, %v2987
    %v6012 = vsel %vm2989, %v6011, %v6010
    %v6013 = vperm.slane %v5636, %v2991
    %v6014 = vsel %vm2993, %v6013, %v6012
    %v6015 = vperm.slane %v5639, %v2995
    %v6016 = vsel %vm2997, %v6015, %v6014
    %v6017 = vperm.slane %v5642, %v2999
    %v6018 = vsel %vm3001, %v6017, %v6016
    %v6019 = vperm.slane %v5645, %v3003
    %v6020 = vsel %vm3005, %v6019, %v6018
    %v6021 = vperm.slane %v5648, %v3007
    %v6022 = vsel %vm3009, %v6021, %v6020
    %v6023 = vperm.slane %v5651, %v3011
    %v6024 = vsel %vm3013, %v6023, %v6022
    %v6025 = vperm.slane %v5654, %v3015
    %v6026 = vsel %vm3017, %v6025, %v6024
    %v6027 = vperm.slane %v5657, %v3019
    %v6028 = vsel %vm3021, %v6027, %v6026
    %v6029 = vperm.slane %v5660, %v3023
    %v6030 = vsel %vm3025, %v6029, %v6028
    %v6031 = vperm.slane %v5663, %v3027
    %v6032 = vsel %vm3029, %v6031, %v6030
    %v6033 = vperm.slane %v5666, %v3031
    %v6034 = vsel %vm3033, %v6033, %v6032
    %v6035 = vperm.slane %v5669, %v3035
    %v6036 = vsel %vm3037, %v6035, %v6034
    %v6037 = vperm.slane %v5672, %v2977
    %v6038 = vperm.slane %v5675, %v2979
    %v6039 = vsel %vm2981, %v6038, %v6037
    %v6040 = vperm.slane %v5678, %v2983
    %v6041 = vsel %vm2985, %v6040, %v6039
    %v6042 = vperm.slane %v5681, %v2987
    %v6043 = vsel %vm2989, %v6042, %v6041
    %v6044 = vperm.slane %v5684, %v2991
    %v6045 = vsel %vm2993, %v6044, %v6043
    %v6046 = vperm.slane %v5687, %v2995
    %v6047 = vsel %vm2997, %v6046, %v6045
    %v6048 = vperm.slane %v5690, %v2999
    %v6049 = vsel %vm3001, %v6048, %v6047
    %v6050 = vperm.slane %v5693, %v3003
    %v6051 = vsel %vm3005, %v6050, %v6049
    %v6052 = vperm.slane %v5696, %v3007
    %v6053 = vsel %vm3009, %v6052, %v6051
    %v6054 = vperm.slane %v5699, %v3011
    %v6055 = vsel %vm3013, %v6054, %v6053
    %v6056 = vperm.slane %v5702, %v3015
    %v6057 = vsel %vm3017, %v6056, %v6055
    %v6058 = vperm.slane %v5705, %v3019
    %v6059 = vsel %vm3021, %v6058, %v6057
    %v6060 = vperm.slane %v5708, %v3023
    %v6061 = vsel %vm3025, %v6060, %v6059
    %v6062 = vperm.slane %v5711, %v3027
    %v6063 = vsel %vm3029, %v6062, %v6061
    %v6064 = vperm.slane %v5714, %v3031
    %v6065 = vsel %vm3033, %v6064, %v6063
    %v6066 = vperm.slane %v5717, %v3035
    %v6067 = vsel %vm3037, %v6066, %v6065
    %v6068 = vperm.slane %v5720, %v2977
    %v6069 = vperm.slane %v5723, %v2979
    %v6070 = vsel %vm2981, %v6069, %v6068
    %v6071 = vperm.slane %v5726, %v2983
    %v6072 = vsel %vm2985, %v6071, %v6070
    %v6073 = vperm.slane %v5729, %v2987
    %v6074 = vsel %vm2989, %v6073, %v6072
    %v6075 = vperm.slane %v5732, %v2991
    %v6076 = vsel %vm2993, %v6075, %v6074
    %v6077 = vperm.slane %v5735, %v2995
    %v6078 = vsel %vm2997, %v6077, %v6076
    %v6079 = vperm.slane %v5738, %v2999
    %v6080 = vsel %vm3001, %v6079, %v6078
    %v6081 = vperm.slane %v5741, %v3003
    %v6082 = vsel %vm3005, %v6081, %v6080
    %v6083 = vperm.slane %v5744, %v3007
    %v6084 = vsel %vm3009, %v6083, %v6082
    %v6085 = vperm.slane %v5747, %v3011
    %v6086 = vsel %vm3013, %v6085, %v6084
    %v6087 = vperm.slane %v5750, %v3015
    %v6088 = vsel %vm3017, %v6087, %v6086
    %v6089 = vperm.slane %v5753, %v3019
    %v6090 = vsel %vm3021, %v6089, %v6088
    %v6091 = vperm.slane %v5756, %v3023
    %v6092 = vsel %vm3025, %v6091, %v6090
    %v6093 = vperm.slane %v5759, %v3027
    %v6094 = vsel %vm3029, %v6093, %v6092
    %v6095 = vperm.slane %v5762, %v3031
    %v6096 = vsel %vm3033, %v6095, %v6094
    %v6097 = vperm.slane %v5765, %v3035
    %v6098 = vsel %vm3037, %v6097, %v6096
    %v6099 = vperm.slane %v5768, %v2977
    %v6100 = vperm.slane %v5771, %v2979
    %v6101 = vsel %vm2981, %v6100, %v6099
    %v6102 = vperm.slane %v5774, %v2983
    %v6103 = vsel %vm2985, %v6102, %v6101
    %v6104 = vperm.slane %v5777, %v2987
    %v6105 = vsel %vm2989, %v6104, %v6103
    %v6106 = vperm.slane %v5780, %v2991
    %v6107 = vsel %vm2993, %v6106, %v6105
    %v6108 = vperm.slane %v5783, %v2995
    %v6109 = vsel %vm2997, %v6108, %v6107
    %v6110 = vperm.slane %v5786, %v2999
    %v6111 = vsel %vm3001, %v6110, %v6109
    %v6112 = vperm.slane %v5789, %v3003
    %v6113 = vsel %vm3005, %v6112, %v6111
    %v6114 = vperm.slane %v5792, %v3007
    %v6115 = vsel %vm3009, %v6114, %v6113
    %v6116 = vperm.slane %v5795, %v3011
    %v6117 = vsel %vm3013, %v6116, %v6115
    %v6118 = vperm.slane %v5798, %v3015
    %v6119 = vsel %vm3017, %v6118, %v6117
    %v6120 = vperm.slane %v5801, %v3019
    %v6121 = vsel %vm3021, %v6120, %v6119
    %v6122 = vperm.slane %v5804, %v3023
    %v6123 = vsel %vm3025, %v6122, %v6121
    %v6124 = vperm.slane %v5807, %v3027
    %v6125 = vsel %vm3029, %v6124, %v6123
    %v6126 = vperm.slane %v5810, %v3031
    %v6127 = vsel %vm3033, %v6126, %v6125
    %v6128 = vperm.slane %v5813, %v3035
    %v6129 = vsel %vm3037, %v6128, %v6127
    %v6130 = vperm.slane %v5816, %v2977
    %v6131 = vperm.slane %v5819, %v2979
    %v6132 = vsel %vm2981, %v6131, %v6130
    %v6133 = vperm.slane %v5822, %v2983
    %v6134 = vsel %vm2985, %v6133, %v6132
    %v6135 = vperm.slane %v5825, %v2987
    %v6136 = vsel %vm2989, %v6135, %v6134
    %v6137 = vperm.slane %v5828, %v2991
    %v6138 = vsel %vm2993, %v6137, %v6136
    %v6139 = vperm.slane %v5831, %v2995
    %v6140 = vsel %vm2997, %v6139, %v6138
    %v6141 = vperm.slane %v5834, %v2999
    %v6142 = vsel %vm3001, %v6141, %v6140
    %v6143 = vperm.slane %v5837, %v3003
    %v6144 = vsel %vm3005, %v6143, %v6142
    %v6145 = vperm.slane %v5840, %v3007
    %v6146 = vsel %vm3009, %v6145, %v6144
    %v6147 = vperm.slane %v5843, %v3011
    %v6148 = vsel %vm3013, %v6147, %v6146
    %v6149 = vperm.slane %v5846, %v3015
    %v6150 = vsel %vm3017, %v6149, %v6148
    %v6151 = vperm.slane %v5849, %v3019
    %v6152 = vsel %vm3021, %v6151, %v6150
    %v6153 = vperm.slane %v5852, %v3023
    %v6154 = vsel %vm3025, %v6153, %v6152
    %v6155 = vperm.slane %v5855, %v3027
    %v6156 = vsel %vm3029, %v6155, %v6154
    %v6157 = vperm.slane %v5858, %v3031
    %v6158 = vsel %vm3033, %v6157, %v6156
    %v6159 = vperm.slane %v5861, %v3035
    %v6160 = vsel %vm3037, %v6159, %v6158
    %v6161 = vperm.slane %v5864, %v2977
    %v6162 = vperm.slane %v5867, %v2979
    %v6163 = vsel %vm2981, %v6162, %v6161
    %v6164 = vperm.slane %v5870, %v2983
    %v6165 = vsel %vm2985, %v6164, %v6163
    %v6166 = vperm.slane %v5873, %v2987
    %v6167 = vsel %vm2989, %v6166, %v6165
    %v6168 = vperm.slane %v5876, %v2991
    %v6169 = vsel %vm2993, %v6168, %v6167
    %v6170 = vperm.slane %v5879, %v2995
    %v6171 = vsel %vm2997, %v6170, %v6169
    %v6172 = vperm.slane %v5882, %v2999
    %v6173 = vsel %vm3001, %v6172, %v6171
    %v6174 = vperm.slane %v5885, %v3003
    %v6175 = vsel %vm3005, %v6174, %v6173
    %v6176 = vperm.slane %v5888, %v3007
    %v6177 = vsel %vm3009, %v6176, %v6175
    %v6178 = vperm.slane %v5891, %v3011
    %v6179 = vsel %vm3013, %v6178, %v6177
    %v6180 = vperm.slane %v5894, %v3015
    %v6181 = vsel %vm3017, %v6180, %v6179
    %v6182 = vperm.slane %v5897, %v3019
    %v6183 = vsel %vm3021, %v6182, %v6181
    %v6184 = vperm.slane %v5900, %v3023
    %v6185 = vsel %vm3025, %v6184, %v6183
    %v6186 = vperm.slane %v5903, %v3027
    %v6187 = vsel %vm3029, %v6186, %v6185
    %v6188 = vperm.slane %v5906, %v3031
    %v6189 = vsel %vm3033, %v6188, %v6187
    %v6190 = vperm.slane %v5909, %v3035
    %v6191 = vsel %vm3037, %v6190, %v6189
    %v6192 = vperm.slane %v5912, %v2977
    %v6193 = vperm.slane %v5915, %v2979
    %v6194 = vsel %vm2981, %v6193, %v6192
    %v6195 = vperm.slane %v5918, %v2983
    %v6196 = vsel %vm2985, %v6195, %v6194
    %v6197 = vperm.slane %v5921, %v2987
    %v6198 = vsel %vm2989, %v6197, %v6196
    %v6199 = vperm.slane %v5924, %v2991
    %v6200 = vsel %vm2993, %v6199, %v6198
    %v6201 = vperm.slane %v5927, %v2995
    %v6202 = vsel %vm2997, %v6201, %v6200
    %v6203 = vperm.slane %v5930, %v2999
    %v6204 = vsel %vm3001, %v6203, %v6202
    %v6205 = vperm.slane %v5933, %v3003
    %v6206 = vsel %vm3005, %v6205, %v6204
    %v6207 = vperm.slane %v5936, %v3007
    %v6208 = vsel %vm3009, %v6207, %v6206
    %v6209 = vperm.slane %v5939, %v3011
    %v6210 = vsel %vm3013, %v6209, %v6208
    %v6211 = vperm.slane %v5942, %v3015
    %v6212 = vsel %vm3017, %v6211, %v6210
    %v6213 = vperm.slane %v5945, %v3019
    %v6214 = vsel %vm3021, %v6213, %v6212
    %v6215 = vperm.slane %v5948, %v3023
    %v6216 = vsel %vm3025, %v6215, %v6214
    %v6217 = vperm.slane %v5951, %v3027
    %v6218 = vsel %vm3029, %v6217, %v6216
    %v6219 = vperm.slane %v5954, %v3031
    %v6220 = vsel %vm3033, %v6219, %v6218
    %v6221 = vperm.slane %v5957, %v3035
    %v6222 = vsel %vm3037, %v6221, %v6220
    %v6223 = vperm.slane %v5960, %v2977
    %v6224 = vperm.slane %v5963, %v2979
    %v6225 = vsel %vm2981, %v6224, %v6223
    %v6226 = vperm.slane %v5966, %v2983
    %v6227 = vsel %vm2985, %v6226, %v6225
    %v6228 = vperm.slane %v5969, %v2987
    %v6229 = vsel %vm2989, %v6228, %v6227
    %v6230 = vperm.slane %v5972, %v2991
    %v6231 = vsel %vm2993, %v6230, %v6229
    %v6232 = vperm.slane %v5975, %v2995
    %v6233 = vsel %vm2997, %v6232, %v6231
    %v6234 = vperm.slane %v5978, %v2999
    %v6235 = vsel %vm3001, %v6234, %v6233
    %v6236 = vperm.slane %v5981, %v3003
    %v6237 = vsel %vm3005, %v6236, %v6235
    %v6238 = vperm.slane %v5984, %v3007
    %v6239 = vsel %vm3009, %v6238, %v6237
    %v6240 = vperm.slane %v5987, %v3011
    %v6241 = vsel %vm3013, %v6240, %v6239
    %v6242 = vperm.slane %v5990, %v3015
    %v6243 = vsel %vm3017, %v6242, %v6241
    %v6244 = vperm.slane %v5993, %v3019
    %v6245 = vsel %vm3021, %v6244, %v6243
    %v6246 = vperm.slane %v5996, %v3023
    %v6247 = vsel %vm3025, %v6246, %v6245
    %v6248 = vperm.slane %v5999, %v3027
    %v6249 = vsel %vm3029, %v6248, %v6247
    %v6250 = vperm.slane %v6002, %v3031
    %v6251 = vsel %vm3033, %v6250, %v6249
    %v6252 = vperm.slane %v6005, %v3035
    %v6253 = vsel %vm3037, %v6252, %v6251
    %v6254 = vsel %vm3256, %v6067, %v6036
    %v6255 = vsel %vm3258, %v6098, %v6254
    %v6256 = vsel %vm3260, %v6129, %v6255
    %v6257 = vsel %vm3262, %v6160, %v6256
    %v6258 = vsel %vm3264, %v6191, %v6257
    %v6259 = vsel %vm3266, %v6222, %v6258
    %v6260 = vsel %vm3268, %v6253, %v6259
    %s6262 = scalar_lea.vmem [#allocation15], 8
    %6263 = vst [vmem:[%s6262] sm:$0xff] %v6260
    %v6264 = vld [vmem:[#allocation15] sm:$0xff]
    %v6265 = vld [vmem:[#allocation15 + $0x8] sm:$0xff]
    %v6266 = vmax.f32 %v6264, %v6265
    %v6267 = vrot.slane %v6266, 4
    %v6268 = vmax.f32 %v6266, %v6267
    %v6269 = vrot.slane %v6268, 2
    %v6270 = vmax.f32 %v6268, %v6269
    %v6271 = vrot.slane %v6270, 1
    %v6272 = vmax.f32 %v6270, %v6271
    %v6273 = vsub.f32 %v6264, %v6272
    %v6274 = vsub.f32 %v6265, %v6272
    %v6275 = vmul.f32 %v6273, 1.442695
    %v6276 = vpow.pop %v6275
    %v6277 = vmul.f32 %v6274, 1.442695
    %v6278 = vpow.pop %v6277
    %v6279 = vadd.f32 %v6276, %v6278
    %v6280 = vrot.slane %v6279, 4
    %v6281 = vadd.f32 %v6279, %v6280
    %v6282 = vrot.slane %v6281, 2
    %v6283 = vadd.f32 %v6281, %v6282
    %v6284 = vrot.slane %v6283, 1
    %v6285 = vadd.f32 %v6283, %v6284
    %v6286 = vrcp.pop %v6285
    %v6287 = vmul.f32 %v6276, %v6286
    %v6288 = vmul.f32 %v6278, %v6286
    %6289 = vst [vmem:[#allocation15] sm:$0xff] %v6287
    %6290 = vst [vmem:[#allocation15 + $0x8] sm:$0xff] %v6288
    %v6291 = vld [vmem:[%s241] sm:$0xff]
    %v6292 = vld [vmem:[%s241 + $0x8] sm:$0xff]
    %v6293 = vld [vmem:[%s241 + $0x10] sm:$0xff]
    %v6294 = vld [vmem:[%s241 + $0x18] sm:$0xff]
    %v6295 = vld [vmem:[%s241 + $0x20] sm:$0xff]
    %v6296 = vld [vmem:[%s241 + $0x28] sm:$0xff]
    %v6297 = vld [vmem:[%s241 + $0x30] sm:$0xff]
    %v6298 = vld [vmem:[%s241 + $0x38] sm:$0xff]
    %v6299 = vld [vmem:[%s241 + $0x40] sm:$0xff]
    %v6300 = vld [vmem:[%s241 + $0x48] sm:$0xff]
    %v6301 = vld [vmem:[%s241 + $0x50] sm:$0xff]
    %v6302 = vld [vmem:[%s241 + $0x58] sm:$0xff]
    %v6303 = vld [vmem:[%s241 + $0x60] sm:$0xff]
    %v6304 = vld [vmem:[%s241 + $0x68] sm:$0xff]
    %v6305 = vld [vmem:[%s241 + $0x70] sm:$0xff]
    %v6306 = vld [vmem:[%s241 + $0x78] sm:$0xff]
    %v6307 = vld [vmem:[%s241 + $0x80] sm:$0xff]
    %v6308 = vld [vmem:[%s241 + $0x88] sm:$0xff]
    %v6309 = vld [vmem:[%s241 + $0x90] sm:$0xff]
    %v6310 = vld [vmem:[%s241 + $0x98] sm:$0xff]
    %v6311 = vld [vmem:[%s241 + $0xa0] sm:$0xff]
    %v6312 = vld [vmem:[%s241 + $0xa8] sm:$0xff]
    %v6313 = vld [vmem:[%s241 + $0xb0] sm:$0xff]
    %v6314 = vld [vmem:[%s241 + $0xb8] sm:$0xff]
    %v6315 = vld [vmem:[%s241 + $0xc0] sm:$0xff]
    %v6316 = vld [vmem:[%s241 + $0xc8] sm:$0xff]
    %v6317 = vld [vmem:[%s241 + $0xd0] sm:$0xff]
    %v6318 = vld [vmem:[%s241 + $0xd8] sm:$0xff]
    %v6319 = vld [vmem:[%s241 + $0xe0] sm:$0xff]
    %v6320 = vld [vmem:[%s241 + $0xe8] sm:$0xff]
    %v6321 = vld [vmem:[%s241 + $0xf0] sm:$0xff]
    %v6322 = vld [vmem:[%s241 + $0xf8] sm:$0xff]
    %v6323 = vld [vmem:[%s241 + $0x100] sm:$0xff]
    %v6324 = vld [vmem:[%s241 + $0x108] sm:$0xff]
    %v6325 = vld [vmem:[%s241 + $0x110] sm:$0xff]
    %v6326 = vld [vmem:[%s241 + $0x118] sm:$0xff]
    %v6327 = vld [vmem:[%s241 + $0x120] sm:$0xff]
    %v6328 = vld [vmem:[%s241 + $0x128] sm:$0xff]
    %v6329 = vld [vmem:[%s241 + $0x130] sm:$0xff]
    %v6330 = vld [vmem:[%s241 + $0x138] sm:$0xff]
    %v6331 = vld [vmem:[%s241 + $0x140] sm:$0xff]
    %v6332 = vld [vmem:[%s241 + $0x148] sm:$0xff]
    %v6333 = vld [vmem:[%s241 + $0x150] sm:$0xff]
    %v6334 = vld [vmem:[%s241 + $0x158] sm:$0xff]
    %v6335 = vld [vmem:[%s241 + $0x160] sm:$0xff]
    %v6336 = vld [vmem:[%s241 + $0x168] sm:$0xff]
    %v6337 = vld [vmem:[%s241 + $0x170] sm:$0xff]
    %v6338 = vld [vmem:[%s241 + $0x178] sm:$0xff]
    %v6339 = vld [vmem:[%s241 + $0x180] sm:$0xff]
    %v6340 = vld [vmem:[%s241 + $0x188] sm:$0xff]
    %v6341 = vld [vmem:[%s241 + $0x190] sm:$0xff]
    %v6342 = vld [vmem:[%s241 + $0x198] sm:$0xff]
    %v6343 = vld [vmem:[%s241 + $0x1a0] sm:$0xff]
    %v6344 = vld [vmem:[%s241 + $0x1a8] sm:$0xff]
    %v6345 = vld [vmem:[%s241 + $0x1b0] sm:$0xff]
    %v6346 = vld [vmem:[%s241 + $0x1b8] sm:$0xff]
    %v6347 = vld [vmem:[%s241 + $0x1c0] sm:$0xff]
    %v6348 = vld [vmem:[%s241 + $0x1c8] sm:$0xff]
    %v6349 = vld [vmem:[%s241 + $0x1d0] sm:$0xff]
    %v6350 = vld [vmem:[%s241 + $0x1d8] sm:$0xff]
    %v6351 = vld [vmem:[%s241 + $0x1e0] sm:$0xff]
    %v6352 = vld [vmem:[%s241 + $0x1e8] sm:$0xff]
    %v6353 = vld [vmem:[%s241 + $0x1f0] sm:$0xff]
    %v6354 = vld [vmem:[%s241 + $0x1f8] sm:$0xff]
    %v6355 = vld [vmem:[%s241 + $0x200] sm:$0xff]
    %v6356 = vld [vmem:[%s241 + $0x208] sm:$0xff]
    %v6357 = vld [vmem:[%s241 + $0x210] sm:$0xff]
    %v6358 = vld [vmem:[%s241 + $0x218] sm:$0xff]
    %v6359 = vld [vmem:[%s241 + $0x220] sm:$0xff]
    %v6360 = vld [vmem:[%s241 + $0x228] sm:$0xff]
    %v6361 = vld [vmem:[%s241 + $0x230] sm:$0xff]
    %v6362 = vld [vmem:[%s241 + $0x238] sm:$0xff]
    %v6363 = vld [vmem:[%s241 + $0x240] sm:$0xff]
    %v6364 = vld [vmem:[%s241 + $0x248] sm:$0xff]
    %v6365 = vld [vmem:[%s241 + $0x250] sm:$0xff]
    %v6366 = vld [vmem:[%s241 + $0x258] sm:$0xff]
    %v6367 = vld [vmem:[%s241 + $0x260] sm:$0xff]
    %v6368 = vld [vmem:[%s241 + $0x268] sm:$0xff]
    %v6369 = vld [vmem:[%s241 + $0x270] sm:$0xff]
    %v6370 = vld [vmem:[%s241 + $0x278] sm:$0xff]
    %v6371 = vld [vmem:[%s241 + $0x280] sm:$0xff]
    %v6372 = vld [vmem:[%s241 + $0x288] sm:$0xff]
    %v6373 = vld [vmem:[%s241 + $0x290] sm:$0xff]
    %v6374 = vld [vmem:[%s241 + $0x298] sm:$0xff]
    %v6375 = vld [vmem:[%s241 + $0x2a0] sm:$0xff]
    %v6376 = vld [vmem:[%s241 + $0x2a8] sm:$0xff]
    %v6377 = vld [vmem:[%s241 + $0x2b0] sm:$0xff]
    %v6378 = vld [vmem:[%s241 + $0x2b8] sm:$0xff]
    %v6379 = vld [vmem:[%s241 + $0x2c0] sm:$0xff]
    %v6380 = vld [vmem:[%s241 + $0x2c8] sm:$0xff]
    %v6381 = vld [vmem:[%s241 + $0x2d0] sm:$0xff]
    %v6382 = vld [vmem:[%s241 + $0x2d8] sm:$0xff]
    %v6383 = vld [vmem:[%s241 + $0x2e0] sm:$0xff]
    %v6384 = vld [vmem:[%s241 + $0x2e8] sm:$0xff]
    %v6385 = vld [vmem:[%s241 + $0x2f0] sm:$0xff]
    %v6386 = vld [vmem:[%s241 + $0x2f8] sm:$0xff]
    %v6387 = vld [vmem:[%s241 + $0x300] sm:$0xff]
    %v6388 = vld [vmem:[%s241 + $0x308] sm:$0xff]
    %v6389 = vld [vmem:[%s241 + $0x310] sm:$0xff]
    %v6390 = vld [vmem:[%s241 + $0x318] sm:$0xff]
    %v6391 = vld [vmem:[%s241 + $0x320] sm:$0xff]
    %v6392 = vld [vmem:[%s241 + $0x328] sm:$0xff]
    %v6393 = vld [vmem:[%s241 + $0x330] sm:$0xff]
    %v6394 = vld [vmem:[%s241 + $0x338] sm:$0xff]
    %v6395 = vld [vmem:[%s241 + $0x340] sm:$0xff]
    %v6396 = vld [vmem:[%s241 + $0x348] sm:$0xff]
    %v6397 = vld [vmem:[%s241 + $0x350] sm:$0xff]
    %v6398 = vld [vmem:[%s241 + $0x358] sm:$0xff]
    %v6399 = vld [vmem:[%s241 + $0x360] sm:$0xff]
    %v6400 = vld [vmem:[%s241 + $0x368] sm:$0xff]
    %v6401 = vld [vmem:[%s241 + $0x370] sm:$0xff]
    %v6402 = vld [vmem:[%s241 + $0x378] sm:$0xff]
    %v6403 = vld [vmem:[%s241 + $0x380] sm:$0xff]
    %v6404 = vld [vmem:[%s241 + $0x388] sm:$0xff]
    %v6405 = vld [vmem:[%s241 + $0x390] sm:$0xff]
    %v6406 = vld [vmem:[%s241 + $0x398] sm:$0xff]
    %v6407 = vld [vmem:[%s241 + $0x3a0] sm:$0xff]
    %v6408 = vld [vmem:[%s241 + $0x3a8] sm:$0xff]
    %v6409 = vld [vmem:[%s241 + $0x3b0] sm:$0xff]
    %v6410 = vld [vmem:[%s241 + $0x3b8] sm:$0xff]
    %v6411 = vld [vmem:[%s241 + $0x3c0] sm:$0xff]
    %v6412 = vld [vmem:[%s241 + $0x3c8] sm:$0xff]
    %v6413 = vld [vmem:[%s241 + $0x3d0] sm:$0xff]
    %v6414 = vld [vmem:[%s241 + $0x3d8] sm:$0xff]
    %v6415 = vld [vmem:[%s241 + $0x3e0] sm:$0xff]
    %v6416 = vld [vmem:[%s241 + $0x3e8] sm:$0xff]
    %v6417 = vld [vmem:[%s241 + $0x3f0] sm:$0xff]
    %v6418 = vld [vmem:[%s241 + $0x3f8] sm:$0xff]
    %v6419 = vld [vmem:[#allocation15] sm:$0xff]
    %v6420 = vperm.slane %v6419, 0
    %v6421 = vlaneseq
    %v6422 = vshrl.u32 %v6421, 7
    %6424 = vset.pattern.permute.xlu0 %v6422
    %6425 = vperm.xlu0 %6424, %v6420
    %v6426 = vpop.permute.xlu0 %6425
    %v6427 = vlaneseq
    %v6428 = vshrl.u32 %v6427, 7
    %v6429 = vadd.s32 %v6428, 8
    %6430 = vset.pattern.permute.xlu0 %v6429
    %6431 = vperm.xlu0 %6430, %v6420
    %v6432 = vpop.permute.xlu0 %6431
    %v6433 = vlaneseq
    %v6434 = vshrl.u32 %v6433, 7
    %v6435 = vadd.s32 %v6434, 16
    %6436 = vset.pattern.permute.xlu0 %v6435
    %6437 = vperm.xlu0 %6436, %v6420
    %v6438 = vpop.permute.xlu0 %6437
    %v6439 = vlaneseq
    %v6440 = vshrl.u32 %v6439, 7
    %v6441 = vadd.s32 %v6440, 24
    %6442 = vset.pattern.permute.xlu0 %v6441
    %6443 = vperm.xlu0 %6442, %v6420
    %v6444 = vpop.permute.xlu0 %6443
    %v6445 = vlaneseq
    %v6446 = vshrl.u32 %v6445, 7
    %v6447 = vadd.s32 %v6446, 32
    %6448 = vset.pattern.permute.xlu0 %v6447
    %6449 = vperm.xlu0 %6448, %v6420
    %v6450 = vpop.permute.xlu0 %6449
    %v6451 = vlaneseq
    %v6452 = vshrl.u32 %v6451, 7
    %v6453 = vadd.s32 %v6452, 40
    %6454 = vset.pattern.permute.xlu0 %v6453
    %6455 = vperm.xlu0 %6454, %v6420
    %v6456 = vpop.permute.xlu0 %6455
    %v6457 = vlaneseq
    %v6458 = vshrl.u32 %v6457, 7
    %v6459 = vadd.s32 %v6458, 48
    %6460 = vset.pattern.permute.xlu0 %v6459
    %6461 = vperm.xlu0 %6460, %v6420
    %v6462 = vpop.permute.xlu0 %6461
    %v6463 = vlaneseq
    %v6464 = vshrl.u32 %v6463, 7
    %v6465 = vadd.s32 %v6464, 56
    %6466 = vset.pattern.permute.xlu0 %v6465
    %6467 = vperm.xlu0 %6466, %v6420
    %v6468 = vpop.permute.xlu0 %6467
    %v6469 = vlaneseq
    %v6470 = vshrl.u32 %v6469, 7
    %v6471 = vadd.s32 %v6470, 64
    %6472 = vset.pattern.permute.xlu0 %v6471
    %6473 = vperm.xlu0 %6472, %v6420
    %v6474 = vpop.permute.xlu0 %6473
    %v6475 = vlaneseq
    %v6476 = vshrl.u32 %v6475, 7
    %v6477 = vadd.s32 %v6476, 72
    %6478 = vset.pattern.permute.xlu0 %v6477
    %6479 = vperm.xlu0 %6478, %v6420
    %v6480 = vpop.permute.xlu0 %6479
    %v6481 = vlaneseq
    %v6482 = vshrl.u32 %v6481, 7
    %v6483 = vadd.s32 %v6482, 80
    %6484 = vset.pattern.permute.xlu0 %v6483
    %6485 = vperm.xlu0 %6484, %v6420
    %v6486 = vpop.permute.xlu0 %6485
    %v6487 = vlaneseq
    %v6488 = vshrl.u32 %v6487, 7
    %v6489 = vadd.s32 %v6488, 88
    %6490 = vset.pattern.permute.xlu0 %v6489
    %6491 = vperm.xlu0 %6490, %v6420
    %v6492 = vpop.permute.xlu0 %6491
    %v6493 = vlaneseq
    %v6494 = vshrl.u32 %v6493, 7
    %v6495 = vadd.s32 %v6494, 96
    %6496 = vset.pattern.permute.xlu0 %v6495
    %6497 = vperm.xlu0 %6496, %v6420
    %v6498 = vpop.permute.xlu0 %6497
    %v6499 = vlaneseq
    %v6500 = vshrl.u32 %v6499, 7
    %v6501 = vadd.s32 %v6500, 104
    %6502 = vset.pattern.permute.xlu0 %v6501
    %6503 = vperm.xlu0 %6502, %v6420
    %v6504 = vpop.permute.xlu0 %6503
    %v6505 = vlaneseq
    %v6506 = vshrl.u32 %v6505, 7
    %v6507 = vadd.s32 %v6506, 112
    %6508 = vset.pattern.permute.xlu0 %v6507
    %6509 = vperm.xlu0 %6508, %v6420
    %v6510 = vpop.permute.xlu0 %6509
    %v6511 = vlaneseq
    %v6512 = vshrl.u32 %v6511, 7
    %v6513 = vadd.s32 %v6512, 120
    %6514 = vset.pattern.permute.xlu0 %v6513
    %6515 = vperm.xlu0 %6514, %v6420
    %v6516 = vpop.permute.xlu0 %6515
    %v6517 = vperm.slane %v6419, 1
    %v6518 = vlaneseq
    %v6519 = vshrl.u32 %v6518, 7
    %6521 = vset.pattern.permute.xlu0 %v6519
    %6522 = vperm.xlu0 %6521, %v6517
    %v6523 = vpop.permute.xlu0 %6522
    %v6524 = vlaneseq
    %v6525 = vshrl.u32 %v6524, 7
    %v6526 = vadd.s32 %v6525, 8
    %6527 = vset.pattern.permute.xlu0 %v6526
    %6528 = vperm.xlu0 %6527, %v6517
    %v6529 = vpop.permute.xlu0 %6528
    %v6530 = vlaneseq
    %v6531 = vshrl.u32 %v6530, 7
    %v6532 = vadd.s32 %v6531, 16
    %6533 = vset.pattern.permute.xlu0 %v6532
    %6534 = vperm.xlu0 %6533, %v6517
    %v6535 = vpop.permute.xlu0 %6534
    %v6536 = vlaneseq
    %v6537 = vshrl.u32 %v6536, 7
    %v6538 = vadd.s32 %v6537, 24
    %6539 = vset.pattern.permute.xlu0 %v6538
    %6540 = vperm.xlu0 %6539, %v6517
    %v6541 = vpop.permute.xlu0 %6540
    %v6542 = vlaneseq
    %v6543 = vshrl.u32 %v6542, 7
    %v6544 = vadd.s32 %v6543, 32
    %6545 = vset.pattern.permute.xlu0 %v6544
    %6546 = vperm.xlu0 %6545, %v6517
    %v6547 = vpop.permute.xlu0 %6546
    %v6548 = vlaneseq
    %v6549 = vshrl.u32 %v6548, 7
    %v6550 = vadd.s32 %v6549, 40
    %6551 = vset.pattern.permute.xlu0 %v6550
    %6552 = vperm.xlu0 %6551, %v6517
    %v6553 = vpop.permute.xlu0 %6552
    %v6554 = vlaneseq
    %v6555 = vshrl.u32 %v6554, 7
    %v6556 = vadd.s32 %v6555, 48
    %6557 = vset.pattern.permute.xlu0 %v6556
    %6558 = vperm.xlu0 %6557, %v6517
    %v6559 = vpop.permute.xlu0 %6558
    %v6560 = vlaneseq
    %v6561 = vshrl.u32 %v6560, 7
    %v6562 = vadd.s32 %v6561, 56
    %6563 = vset.pattern.permute.xlu0 %v6562
    %6564 = vperm.xlu0 %6563, %v6517
    %v6565 = vpop.permute.xlu0 %6564
    %v6566 = vlaneseq
    %v6567 = vshrl.u32 %v6566, 7
    %v6568 = vadd.s32 %v6567, 64
    %6569 = vset.pattern.permute.xlu0 %v6568
    %6570 = vperm.xlu0 %6569, %v6517
    %v6571 = vpop.permute.xlu0 %6570
    %v6572 = vlaneseq
    %v6573 = vshrl.u32 %v6572, 7
    %v6574 = vadd.s32 %v6573, 72
    %6575 = vset.pattern.permute.xlu0 %v6574
    %6576 = vperm.xlu0 %6575, %v6517
    %v6577 = vpop.permute.xlu0 %6576
    %v6578 = vlaneseq
    %v6579 = vshrl.u32 %v6578, 7
    %v6580 = vadd.s32 %v6579, 80
    %6581 = vset.pattern.permute.xlu0 %v6580
    %6582 = vperm.xlu0 %6581, %v6517
    %v6583 = vpop.permute.xlu0 %6582
    %v6584 = vlaneseq
    %v6585 = vshrl.u32 %v6584, 7
    %v6586 = vadd.s32 %v6585, 88
    %6587 = vset.pattern.permute.xlu0 %v6586
    %6588 = vperm.xlu0 %6587, %v6517
    %v6589 = vpop.permute.xlu0 %6588
    %v6590 = vlaneseq
    %v6591 = vshrl.u32 %v6590, 7
    %v6592 = vadd.s32 %v6591, 96
    %6593 = vset.pattern.permute.xlu0 %v6592
    %6594 = vperm.xlu0 %6593, %v6517
    %v6595 = vpop.permute.xlu0 %6594
    %v6596 = vlaneseq
    %v6597 = vshrl.u32 %v6596, 7
    %v6598 = vadd.s32 %v6597, 104
    %6599 = vset.pattern.permute.xlu0 %v6598
    %6600 = vperm.xlu0 %6599, %v6517
    %v6601 = vpop.permute.xlu0 %6600
    %v6602 = vlaneseq
    %v6603 = vshrl.u32 %v6602, 7
    %v6604 = vadd.s32 %v6603, 112
    %6605 = vset.pattern.permute.xlu0 %v6604
    %6606 = vperm.xlu0 %6605, %v6517
    %v6607 = vpop.permute.xlu0 %6606
    %v6608 = vlaneseq
    %v6609 = vshrl.u32 %v6608, 7
    %v6610 = vadd.s32 %v6609, 120
    %6611 = vset.pattern.permute.xlu0 %v6610
    %6612 = vperm.xlu0 %6611, %v6517
    %v6613 = vpop.permute.xlu0 %6612
    %v6614 = vperm.slane %v6419, 2
    %v6615 = vlaneseq
    %v6616 = vshrl.u32 %v6615, 7
    %6618 = vset.pattern.permute.xlu0 %v6616
    %6619 = vperm.xlu0 %6618, %v6614
    %v6620 = vpop.permute.xlu0 %6619
    %v6621 = vlaneseq
    %v6622 = vshrl.u32 %v6621, 7
    %v6623 = vadd.s32 %v6622, 8
    %6624 = vset.pattern.permute.xlu0 %v6623
    %6625 = vperm.xlu0 %6624, %v6614
    %v6626 = vpop.permute.xlu0 %6625
    %v6627 = vlaneseq
    %v6628 = vshrl.u32 %v6627, 7
    %v6629 = vadd.s32 %v6628, 16
    %6630 = vset.pattern.permute.xlu0 %v6629
    %6631 = vperm.xlu0 %6630, %v6614
    %v6632 = vpop.permute.xlu0 %6631
    %v6633 = vlaneseq
    %v6634 = vshrl.u32 %v6633, 7
    %v6635 = vadd.s32 %v6634, 24
    %6636 = vset.pattern.permute.xlu0 %v6635
    %6637 = vperm.xlu0 %6636, %v6614
    %v6638 = vpop.permute.xlu0 %6637
    %v6639 = vlaneseq
    %v6640 = vshrl.u32 %v6639, 7
    %v6641 = vadd.s32 %v6640, 32
    %6642 = vset.pattern.permute.xlu0 %v6641
    %6643 = vperm.xlu0 %6642, %v6614
    %v6644 = vpop.permute.xlu0 %6643
    %v6645 = vlaneseq
    %v6646 = vshrl.u32 %v6645, 7
    %v6647 = vadd.s32 %v6646, 40
    %6648 = vset.pattern.permute.xlu0 %v6647
    %6649 = vperm.xlu0 %6648, %v6614
    %v6650 = vpop.permute.xlu0 %6649
    %v6651 = vlaneseq
    %v6652 = vshrl.u32 %v6651, 7
    %v6653 = vadd.s32 %v6652, 48
    %6654 = vset.pattern.permute.xlu0 %v6653
    %6655 = vperm.xlu0 %6654, %v6614
    %v6656 = vpop.permute.xlu0 %6655
    %v6657 = vlaneseq
    %v6658 = vshrl.u32 %v6657, 7
    %v6659 = vadd.s32 %v6658, 56
    %6660 = vset.pattern.permute.xlu0 %v6659
    %6661 = vperm.xlu0 %6660, %v6614
    %v6662 = vpop.permute.xlu0 %6661
    %v6663 = vlaneseq
    %v6664 = vshrl.u32 %v6663, 7
    %v6665 = vadd.s32 %v6664, 64
    %6666 = vset.pattern.permute.xlu0 %v6665
    %6667 = vperm.xlu0 %6666, %v6614
    %v6668 = vpop.permute.xlu0 %6667
    %v6669 = vlaneseq
    %v6670 = vshrl.u32 %v6669, 7
    %v6671 = vadd.s32 %v6670, 72
    %6672 = vset.pattern.permute.xlu0 %v6671
    %6673 = vperm.xlu0 %6672, %v6614
    %v6674 = vpop.permute.xlu0 %6673
    %v6675 = vlaneseq
    %v6676 = vshrl.u32 %v6675, 7
    %v6677 = vadd.s32 %v6676, 80
    %6678 = vset.pattern.permute.xlu0 %v6677
    %6679 = vperm.xlu0 %6678, %v6614
    %v6680 = vpop.permute.xlu0 %6679
    %v6681 = vlaneseq
    %v6682 = vshrl.u32 %v6681, 7
    %v6683 = vadd.s32 %v6682, 88
    %6684 = vset.pattern.permute.xlu0 %v6683
    %6685 = vperm.xlu0 %6684, %v6614
    %v6686 = vpop.permute.xlu0 %6685
    %v6687 = vlaneseq
    %v6688 = vshrl.u32 %v6687, 7
    %v6689 = vadd.s32 %v6688, 96
    %6690 = vset.pattern.permute.xlu0 %v6689
    %6691 = vperm.xlu0 %6690, %v6614
    %v6692 = vpop.permute.xlu0 %6691
    %v6693 = vlaneseq
    %v6694 = vshrl.u32 %v6693, 7
    %v6695 = vadd.s32 %v6694, 104
    %6696 = vset.pattern.permute.xlu0 %v6695
    %6697 = vperm.xlu0 %6696, %v6614
    %v6698 = vpop.permute.xlu0 %6697
    %v6699 = vlaneseq
    %v6700 = vshrl.u32 %v6699, 7
    %v6701 = vadd.s32 %v6700, 112
    %6702 = vset.pattern.permute.xlu0 %v6701
    %6703 = vperm.xlu0 %6702, %v6614
    %v6704 = vpop.permute.xlu0 %6703
    %v6705 = vlaneseq
    %v6706 = vshrl.u32 %v6705, 7
    %v6707 = vadd.s32 %v6706, 120
    %6708 = vset.pattern.permute.xlu0 %v6707
    %6709 = vperm.xlu0 %6708, %v6614
    %v6710 = vpop.permute.xlu0 %6709
    %v6711 = vperm.slane %v6419, 3
    %v6712 = vlaneseq
    %v6713 = vshrl.u32 %v6712, 7
    %6715 = vset.pattern.permute.xlu0 %v6713
    %6716 = vperm.xlu0 %6715, %v6711
    %v6717 = vpop.permute.xlu0 %6716
    %v6718 = vlaneseq
    %v6719 = vshrl.u32 %v6718, 7
    %v6720 = vadd.s32 %v6719, 8
    %6721 = vset.pattern.permute.xlu0 %v6720
    %6722 = vperm.xlu0 %6721, %v6711
    %v6723 = vpop.permute.xlu0 %6722
    %v6724 = vlaneseq
    %v6725 = vshrl.u32 %v6724, 7
    %v6726 = vadd.s32 %v6725, 16
    %6727 = vset.pattern.permute.xlu0 %v6726
    %6728 = vperm.xlu0 %6727, %v6711
    %v6729 = vpop.permute.xlu0 %6728
    %v6730 = vlaneseq
    %v6731 = vshrl.u32 %v6730, 7
    %v6732 = vadd.s32 %v6731, 24
    %6733 = vset.pattern.permute.xlu0 %v6732
    %6734 = vperm.xlu0 %6733, %v6711
    %v6735 = vpop.permute.xlu0 %6734
    %v6736 = vlaneseq
    %v6737 = vshrl.u32 %v6736, 7
    %v6738 = vadd.s32 %v6737, 32
    %6739 = vset.pattern.permute.xlu0 %v6738
    %6740 = vperm.xlu0 %6739, %v6711
    %v6741 = vpop.permute.xlu0 %6740
    %v6742 = vlaneseq
    %v6743 = vshrl.u32 %v6742, 7
    %v6744 = vadd.s32 %v6743, 40
    %6745 = vset.pattern.permute.xlu0 %v6744
    %6746 = vperm.xlu0 %6745, %v6711
    %v6747 = vpop.permute.xlu0 %6746
    %v6748 = vlaneseq
    %v6749 = vshrl.u32 %v6748, 7
    %v6750 = vadd.s32 %v6749, 48
    %6751 = vset.pattern.permute.xlu0 %v6750
    %6752 = vperm.xlu0 %6751, %v6711
    %v6753 = vpop.permute.xlu0 %6752
    %v6754 = vlaneseq
    %v6755 = vshrl.u32 %v6754, 7
    %v6756 = vadd.s32 %v6755, 56
    %6757 = vset.pattern.permute.xlu0 %v6756
    %6758 = vperm.xlu0 %6757, %v6711
    %v6759 = vpop.permute.xlu0 %6758
    %v6760 = vlaneseq
    %v6761 = vshrl.u32 %v6760, 7
    %v6762 = vadd.s32 %v6761, 64
    %6763 = vset.pattern.permute.xlu0 %v6762
    %6764 = vperm.xlu0 %6763, %v6711
    %v6765 = vpop.permute.xlu0 %6764
    %v6766 = vlaneseq
    %v6767 = vshrl.u32 %v6766, 7
    %v6768 = vadd.s32 %v6767, 72
    %6769 = vset.pattern.permute.xlu0 %v6768
    %6770 = vperm.xlu0 %6769, %v6711
    %v6771 = vpop.permute.xlu0 %6770
    %v6772 = vlaneseq
    %v6773 = vshrl.u32 %v6772, 7
    %v6774 = vadd.s32 %v6773, 80
    %6775 = vset.pattern.permute.xlu0 %v6774
    %6776 = vperm.xlu0 %6775, %v6711
    %v6777 = vpop.permute.xlu0 %6776
    %v6778 = vlaneseq
    %v6779 = vshrl.u32 %v6778, 7
    %v6780 = vadd.s32 %v6779, 88
    %6781 = vset.pattern.permute.xlu0 %v6780
    %6782 = vperm.xlu0 %6781, %v6711
    %v6783 = vpop.permute.xlu0 %6782
    %v6784 = vlaneseq
    %v6785 = vshrl.u32 %v6784, 7
    %v6786 = vadd.s32 %v6785, 96
    %6787 = vset.pattern.permute.xlu0 %v6786
    %6788 = vperm.xlu0 %6787, %v6711
    %v6789 = vpop.permute.xlu0 %6788
    %v6790 = vlaneseq
    %v6791 = vshrl.u32 %v6790, 7
    %v6792 = vadd.s32 %v6791, 104
    %6793 = vset.pattern.permute.xlu0 %v6792
    %6794 = vperm.xlu0 %6793, %v6711
    %v6795 = vpop.permute.xlu0 %6794
    %v6796 = vlaneseq
    %v6797 = vshrl.u32 %v6796, 7
    %v6798 = vadd.s32 %v6797, 112
    %6799 = vset.pattern.permute.xlu0 %v6798
    %6800 = vperm.xlu0 %6799, %v6711
    %v6801 = vpop.permute.xlu0 %6800
    %v6802 = vlaneseq
    %v6803 = vshrl.u32 %v6802, 7
    %v6804 = vadd.s32 %v6803, 120
    %6805 = vset.pattern.permute.xlu0 %v6804
    %6806 = vperm.xlu0 %6805, %v6711
    %v6807 = vpop.permute.xlu0 %6806
    %v6808 = vperm.slane %v6419, 4
    %v6809 = vlaneseq
    %v6810 = vshrl.u32 %v6809, 7
    %6812 = vset.pattern.permute.xlu0 %v6810
    %6813 = vperm.xlu0 %6812, %v6808
    %v6814 = vpop.permute.xlu0 %6813
    %v6815 = vlaneseq
    %v6816 = vshrl.u32 %v6815, 7
    %v6817 = vadd.s32 %v6816, 8
    %6818 = vset.pattern.permute.xlu0 %v6817
    %6819 = vperm.xlu0 %6818, %v6808
    %v6820 = vpop.permute.xlu0 %6819
    %v6821 = vlaneseq
    %v6822 = vshrl.u32 %v6821, 7
    %v6823 = vadd.s32 %v6822, 16
    %6824 = vset.pattern.permute.xlu0 %v6823
    %6825 = vperm.xlu0 %6824, %v6808
    %v6826 = vpop.permute.xlu0 %6825
    %v6827 = vlaneseq
    %v6828 = vshrl.u32 %v6827, 7
    %v6829 = vadd.s32 %v6828, 24
    %6830 = vset.pattern.permute.xlu0 %v6829
    %6831 = vperm.xlu0 %6830, %v6808
    %v6832 = vpop.permute.xlu0 %6831
    %v6833 = vlaneseq
    %v6834 = vshrl.u32 %v6833, 7
    %v6835 = vadd.s32 %v6834, 32
    %6836 = vset.pattern.permute.xlu0 %v6835
    %6837 = vperm.xlu0 %6836, %v6808
    %v6838 = vpop.permute.xlu0 %6837
    %v6839 = vlaneseq
    %v6840 = vshrl.u32 %v6839, 7
    %v6841 = vadd.s32 %v6840, 40
    %6842 = vset.pattern.permute.xlu0 %v6841
    %6843 = vperm.xlu0 %6842, %v6808
    %v6844 = vpop.permute.xlu0 %6843
    %v6845 = vlaneseq
    %v6846 = vshrl.u32 %v6845, 7
    %v6847 = vadd.s32 %v6846, 48
    %6848 = vset.pattern.permute.xlu0 %v6847
    %6849 = vperm.xlu0 %6848, %v6808
    %v6850 = vpop.permute.xlu0 %6849
    %v6851 = vlaneseq
    %v6852 = vshrl.u32 %v6851, 7
    %v6853 = vadd.s32 %v6852, 56
    %6854 = vset.pattern.permute.xlu0 %v6853
    %6855 = vperm.xlu0 %6854, %v6808
    %v6856 = vpop.permute.xlu0 %6855
    %v6857 = vlaneseq
    %v6858 = vshrl.u32 %v6857, 7
    %v6859 = vadd.s32 %v6858, 64
    %6860 = vset.pattern.permute.xlu0 %v6859
    %6861 = vperm.xlu0 %6860, %v6808
    %v6862 = vpop.permute.xlu0 %6861
    %v6863 = vlaneseq
    %v6864 = vshrl.u32 %v6863, 7
    %v6865 = vadd.s32 %v6864, 72
    %6866 = vset.pattern.permute.xlu0 %v6865
    %6867 = vperm.xlu0 %6866, %v6808
    %v6868 = vpop.permute.xlu0 %6867
    %v6869 = vlaneseq
    %v6870 = vshrl.u32 %v6869, 7
    %v6871 = vadd.s32 %v6870, 80
    %6872 = vset.pattern.permute.xlu0 %v6871
    %6873 = vperm.xlu0 %6872, %v6808
    %v6874 = vpop.permute.xlu0 %6873
    %v6875 = vlaneseq
    %v6876 = vshrl.u32 %v6875, 7
    %v6877 = vadd.s32 %v6876, 88
    %6878 = vset.pattern.permute.xlu0 %v6877
    %6879 = vperm.xlu0 %6878, %v6808
    %v6880 = vpop.permute.xlu0 %6879
    %v6881 = vlaneseq
    %v6882 = vshrl.u32 %v6881, 7
    %v6883 = vadd.s32 %v6882, 96
    %6884 = vset.pattern.permute.xlu0 %v6883
    %6885 = vperm.xlu0 %6884, %v6808
    %v6886 = vpop.permute.xlu0 %6885
    %v6887 = vlaneseq
    %v6888 = vshrl.u32 %v6887, 7
    %v6889 = vadd.s32 %v6888, 104
    %6890 = vset.pattern.permute.xlu0 %v6889
    %6891 = vperm.xlu0 %6890, %v6808
    %v6892 = vpop.permute.xlu0 %6891
    %v6893 = vlaneseq
    %v6894 = vshrl.u32 %v6893, 7
    %v6895 = vadd.s32 %v6894, 112
    %6896 = vset.pattern.permute.xlu0 %v6895
    %6897 = vperm.xlu0 %6896, %v6808
    %v6898 = vpop.permute.xlu0 %6897
    %v6899 = vlaneseq
    %v6900 = vshrl.u32 %v6899, 7
    %v6901 = vadd.s32 %v6900, 120
    %6902 = vset.pattern.permute.xlu0 %v6901
    %6903 = vperm.xlu0 %6902, %v6808
    %v6904 = vpop.permute.xlu0 %6903
    %v6905 = vperm.slane %v6419, 5
    %v6906 = vlaneseq
    %v6907 = vshrl.u32 %v6906, 7
    %6909 = vset.pattern.permute.xlu0 %v6907
    %6910 = vperm.xlu0 %6909, %v6905
    %v6911 = vpop.permute.xlu0 %6910
    %v6912 = vlaneseq
    %v6913 = vshrl.u32 %v6912, 7
    %v6914 = vadd.s32 %v6913, 8
    %6915 = vset.pattern.permute.xlu0 %v6914
    %6916 = vperm.xlu0 %6915, %v6905
    %v6917 = vpop.permute.xlu0 %6916
    %v6918 = vlaneseq
    %v6919 = vshrl.u32 %v6918, 7
    %v6920 = vadd.s32 %v6919, 16
    %6921 = vset.pattern.permute.xlu0 %v6920
    %6922 = vperm.xlu0 %6921, %v6905
    %v6923 = vpop.permute.xlu0 %6922
    %v6924 = vlaneseq
    %v6925 = vshrl.u32 %v6924, 7
    %v6926 = vadd.s32 %v6925, 24
    %6927 = vset.pattern.permute.xlu0 %v6926
    %6928 = vperm.xlu0 %6927, %v6905
    %v6929 = vpop.permute.xlu0 %6928
    %v6930 = vlaneseq
    %v6931 = vshrl.u32 %v6930, 7
    %v6932 = vadd.s32 %v6931, 32
    %6933 = vset.pattern.permute.xlu0 %v6932
    %6934 = vperm.xlu0 %6933, %v6905
    %v6935 = vpop.permute.xlu0 %6934
    %v6936 = vlaneseq
    %v6937 = vshrl.u32 %v6936, 7
    %v6938 = vadd.s32 %v6937, 40
    %6939 = vset.pattern.permute.xlu0 %v6938
    %6940 = vperm.xlu0 %6939, %v6905
    %v6941 = vpop.permute.xlu0 %6940
    %v6942 = vlaneseq
    %v6943 = vshrl.u32 %v6942, 7
    %v6944 = vadd.s32 %v6943, 48
    %6945 = vset.pattern.permute.xlu0 %v6944
    %6946 = vperm.xlu0 %6945, %v6905
    %v6947 = vpop.permute.xlu0 %6946
    %v6948 = vlaneseq
    %v6949 = vshrl.u32 %v6948, 7
    %v6950 = vadd.s32 %v6949, 56
    %6951 = vset.pattern.permute.xlu0 %v6950
    %6952 = vperm.xlu0 %6951, %v6905
    %v6953 = vpop.permute.xlu0 %6952
    %v6954 = vlaneseq
    %v6955 = vshrl.u32 %v6954, 7
    %v6956 = vadd.s32 %v6955, 64
    %6957 = vset.pattern.permute.xlu0 %v6956
    %6958 = vperm.xlu0 %6957, %v6905
    %v6959 = vpop.permute.xlu0 %6958
    %v6960 = vlaneseq
    %v6961 = vshrl.u32 %v6960, 7
    %v6962 = vadd.s32 %v6961, 72
    %6963 = vset.pattern.permute.xlu0 %v6962
    %6964 = vperm.xlu0 %6963, %v6905
    %v6965 = vpop.permute.xlu0 %6964
    %v6966 = vlaneseq
    %v6967 = vshrl.u32 %v6966, 7
    %v6968 = vadd.s32 %v6967, 80
    %6969 = vset.pattern.permute.xlu0 %v6968
    %6970 = vperm.xlu0 %6969, %v6905
    %v6971 = vpop.permute.xlu0 %6970
    %v6972 = vlaneseq
    %v6973 = vshrl.u32 %v6972, 7
    %v6974 = vadd.s32 %v6973, 88
    %6975 = vset.pattern.permute.xlu0 %v6974
    %6976 = vperm.xlu0 %6975, %v6905
    %v6977 = vpop.permute.xlu0 %6976
    %v6978 = vlaneseq
    %v6979 = vshrl.u32 %v6978, 7
    %v6980 = vadd.s32 %v6979, 96
    %6981 = vset.pattern.permute.xlu0 %v6980
    %6982 = vperm.xlu0 %6981, %v6905
    %v6983 = vpop.permute.xlu0 %6982
    %v6984 = vlaneseq
    %v6985 = vshrl.u32 %v6984, 7
    %v6986 = vadd.s32 %v6985, 104
    %6987 = vset.pattern.permute.xlu0 %v6986
    %6988 = vperm.xlu0 %6987, %v6905
    %v6989 = vpop.permute.xlu0 %6988
    %v6990 = vlaneseq
    %v6991 = vshrl.u32 %v6990, 7
    %v6992 = vadd.s32 %v6991, 112
    %6993 = vset.pattern.permute.xlu0 %v6992
    %6994 = vperm.xlu0 %6993, %v6905
    %v6995 = vpop.permute.xlu0 %6994
    %v6996 = vlaneseq
    %v6997 = vshrl.u32 %v6996, 7
    %v6998 = vadd.s32 %v6997, 120
    %6999 = vset.pattern.permute.xlu0 %v6998
    %7000 = vperm.xlu0 %6999, %v6905
    %v7001 = vpop.permute.xlu0 %7000
    %v7002 = vperm.slane %v6419, 6
    %v7003 = vlaneseq
    %v7004 = vshrl.u32 %v7003, 7
    %7006 = vset.pattern.permute.xlu0 %v7004
    %7007 = vperm.xlu0 %7006, %v7002
    %v7008 = vpop.permute.xlu0 %7007
    %v7009 = vlaneseq
    %v7010 = vshrl.u32 %v7009, 7
    %v7011 = vadd.s32 %v7010, 8
    %7012 = vset.pattern.permute.xlu0 %v7011
    %7013 = vperm.xlu0 %7012, %v7002
    %v7014 = vpop.permute.xlu0 %7013
    %v7015 = vlaneseq
    %v7016 = vshrl.u32 %v7015, 7
    %v7017 = vadd.s32 %v7016, 16
    %7018 = vset.pattern.permute.xlu0 %v7017
    %7019 = vperm.xlu0 %7018, %v7002
    %v7020 = vpop.permute.xlu0 %7019
    %v7021 = vlaneseq
    %v7022 = vshrl.u32 %v7021, 7
    %v7023 = vadd.s32 %v7022, 24
    %7024 = vset.pattern.permute.xlu0 %v7023
    %7025 = vperm.xlu0 %7024, %v7002
    %v7026 = vpop.permute.xlu0 %7025
    %v7027 = vlaneseq
    %v7028 = vshrl.u32 %v7027, 7
    %v7029 = vadd.s32 %v7028, 32
    %7030 = vset.pattern.permute.xlu0 %v7029
    %7031 = vperm.xlu0 %7030, %v7002
    %v7032 = vpop.permute.xlu0 %7031
    %v7033 = vlaneseq
    %v7034 = vshrl.u32 %v7033, 7
    %v7035 = vadd.s32 %v7034, 40
    %7036 = vset.pattern.permute.xlu0 %v7035
    %7037 = vperm.xlu0 %7036, %v7002
    %v7038 = vpop.permute.xlu0 %7037
    %v7039 = vlaneseq
    %v7040 = vshrl.u32 %v7039, 7
    %v7041 = vadd.s32 %v7040, 48
    %7042 = vset.pattern.permute.xlu0 %v7041
    %7043 = vperm.xlu0 %7042, %v7002
    %v7044 = vpop.permute.xlu0 %7043
    %v7045 = vlaneseq
    %v7046 = vshrl.u32 %v7045, 7
    %v7047 = vadd.s32 %v7046, 56
    %7048 = vset.pattern.permute.xlu0 %v7047
    %7049 = vperm.xlu0 %7048, %v7002
    %v7050 = vpop.permute.xlu0 %7049
    %v7051 = vlaneseq
    %v7052 = vshrl.u32 %v7051, 7
    %v7053 = vadd.s32 %v7052, 64
    %7054 = vset.pattern.permute.xlu0 %v7053
    %7055 = vperm.xlu0 %7054, %v7002
    %v7056 = vpop.permute.xlu0 %7055
    %v7057 = vlaneseq
    %v7058 = vshrl.u32 %v7057, 7
    %v7059 = vadd.s32 %v7058, 72
    %7060 = vset.pattern.permute.xlu0 %v7059
    %7061 = vperm.xlu0 %7060, %v7002
    %v7062 = vpop.permute.xlu0 %7061
    %v7063 = vlaneseq
    %v7064 = vshrl.u32 %v7063, 7
    %v7065 = vadd.s32 %v7064, 80
    %7066 = vset.pattern.permute.xlu0 %v7065
    %7067 = vperm.xlu0 %7066, %v7002
    %v7068 = vpop.permute.xlu0 %7067
    %v7069 = vlaneseq
    %v7070 = vshrl.u32 %v7069, 7
    %v7071 = vadd.s32 %v7070, 88
    %7072 = vset.pattern.permute.xlu0 %v7071
    %7073 = vperm.xlu0 %7072, %v7002
    %v7074 = vpop.permute.xlu0 %7073
    %v7075 = vlaneseq
    %v7076 = vshrl.u32 %v7075, 7
    %v7077 = vadd.s32 %v7076, 96
    %7078 = vset.pattern.permute.xlu0 %v7077
    %7079 = vperm.xlu0 %7078, %v7002
    %v7080 = vpop.permute.xlu0 %7079
    %v7081 = vlaneseq
    %v7082 = vshrl.u32 %v7081, 7
    %v7083 = vadd.s32 %v7082, 104
    %7084 = vset.pattern.permute.xlu0 %v7083
    %7085 = vperm.xlu0 %7084, %v7002
    %v7086 = vpop.permute.xlu0 %7085
    %v7087 = vlaneseq
    %v7088 = vshrl.u32 %v7087, 7
    %v7089 = vadd.s32 %v7088, 112
    %7090 = vset.pattern.permute.xlu0 %v7089
    %7091 = vperm.xlu0 %7090, %v7002
    %v7092 = vpop.permute.xlu0 %7091
    %v7093 = vlaneseq
    %v7094 = vshrl.u32 %v7093, 7
    %v7095 = vadd.s32 %v7094, 120
    %7096 = vset.pattern.permute.xlu0 %v7095
    %7097 = vperm.xlu0 %7096, %v7002
    %v7098 = vpop.permute.xlu0 %7097
    %v7099 = vperm.slane %v6419, 7
    %v7100 = vlaneseq
    %v7101 = vshrl.u32 %v7100, 7
    %7103 = vset.pattern.permute.xlu0 %v7101
    %7104 = vperm.xlu0 %7103, %v7099
    %v7105 = vpop.permute.xlu0 %7104
    %v7106 = vlaneseq
    %v7107 = vshrl.u32 %v7106, 7
    %v7108 = vadd.s32 %v7107, 8
    %7109 = vset.pattern.permute.xlu0 %v7108
    %7110 = vperm.xlu0 %7109, %v7099
    %v7111 = vpop.permute.xlu0 %7110
    %v7112 = vlaneseq
    %v7113 = vshrl.u32 %v7112, 7
    %v7114 = vadd.s32 %v7113, 16
    %7115 = vset.pattern.permute.xlu0 %v7114
    %7116 = vperm.xlu0 %7115, %v7099
    %v7117 = vpop.permute.xlu0 %7116
    %v7118 = vlaneseq
    %v7119 = vshrl.u32 %v7118, 7
    %v7120 = vadd.s32 %v7119, 24
    %7121 = vset.pattern.permute.xlu0 %v7120
    %7122 = vperm.xlu0 %7121, %v7099
    %v7123 = vpop.permute.xlu0 %7122
    %v7124 = vlaneseq
    %v7125 = vshrl.u32 %v7124, 7
    %v7126 = vadd.s32 %v7125, 32
    %7127 = vset.pattern.permute.xlu0 %v7126
    %7128 = vperm.xlu0 %7127, %v7099
    %v7129 = vpop.permute.xlu0 %7128
    %v7130 = vlaneseq
    %v7131 = vshrl.u32 %v7130, 7
    %v7132 = vadd.s32 %v7131, 40
    %7133 = vset.pattern.permute.xlu0 %v7132
    %7134 = vperm.xlu0 %7133, %v7099
    %v7135 = vpop.permute.xlu0 %7134
    %v7136 = vlaneseq
    %v7137 = vshrl.u32 %v7136, 7
    %v7138 = vadd.s32 %v7137, 48
    %7139 = vset.pattern.permute.xlu0 %v7138
    %7140 = vperm.xlu0 %7139, %v7099
    %v7141 = vpop.permute.xlu0 %7140
    %v7142 = vlaneseq
    %v7143 = vshrl.u32 %v7142, 7
    %v7144 = vadd.s32 %v7143, 56
    %7145 = vset.pattern.permute.xlu0 %v7144
    %7146 = vperm.xlu0 %7145, %v7099
    %v7147 = vpop.permute.xlu0 %7146
    %v7148 = vlaneseq
    %v7149 = vshrl.u32 %v7148, 7
    %v7150 = vadd.s32 %v7149, 64
    %7151 = vset.pattern.permute.xlu0 %v7150
    %7152 = vperm.xlu0 %7151, %v7099
    %v7153 = vpop.permute.xlu0 %7152
    %v7154 = vlaneseq
    %v7155 = vshrl.u32 %v7154, 7
    %v7156 = vadd.s32 %v7155, 72
    %7157 = vset.pattern.permute.xlu0 %v7156
    %7158 = vperm.xlu0 %7157, %v7099
    %v7159 = vpop.permute.xlu0 %7158
    %v7160 = vlaneseq
    %v7161 = vshrl.u32 %v7160, 7
    %v7162 = vadd.s32 %v7161, 80
    %7163 = vset.pattern.permute.xlu0 %v7162
    %7164 = vperm.xlu0 %7163, %v7099
    %v7165 = vpop.permute.xlu0 %7164
    %v7166 = vlaneseq
    %v7167 = vshrl.u32 %v7166, 7
    %v7168 = vadd.s32 %v7167, 88
    %7169 = vset.pattern.permute.xlu0 %v7168
    %7170 = vperm.xlu0 %7169, %v7099
    %v7171 = vpop.permute.xlu0 %7170
    %v7172 = vlaneseq
    %v7173 = vshrl.u32 %v7172, 7
    %v7174 = vadd.s32 %v7173, 96
    %7175 = vset.pattern.permute.xlu0 %v7174
    %7176 = vperm.xlu0 %7175, %v7099
    %v7177 = vpop.permute.xlu0 %7176
    %v7178 = vlaneseq
    %v7179 = vshrl.u32 %v7178, 7
    %v7180 = vadd.s32 %v7179, 104
    %7181 = vset.pattern.permute.xlu0 %v7180
    %7182 = vperm.xlu0 %7181, %v7099
    %v7183 = vpop.permute.xlu0 %7182
    %v7184 = vlaneseq
    %v7185 = vshrl.u32 %v7184, 7
    %v7186 = vadd.s32 %v7185, 112
    %7187 = vset.pattern.permute.xlu0 %v7186
    %7188 = vperm.xlu0 %7187, %v7099
    %v7189 = vpop.permute.xlu0 %7188
    %v7190 = vlaneseq
    %v7191 = vshrl.u32 %v7190, 7
    %v7192 = vadd.s32 %v7191, 120
    %7193 = vset.pattern.permute.xlu0 %v7192
    %7194 = vperm.xlu0 %7193, %v7099
    %v7195 = vpop.permute.xlu0 %7194
    %v7196 = vmul.f32 %v6426, %v6291
    %v7197 = vmul.f32 %v6432, %v6292
    %v7198 = vmul.f32 %v6438, %v6293
    %v7199 = vmul.f32 %v6444, %v6294
    %v7200 = vmul.f32 %v6450, %v6295
    %v7201 = vmul.f32 %v6456, %v6296
    %v7202 = vmul.f32 %v6462, %v6297
    %v7203 = vmul.f32 %v6468, %v6298
    %v7204 = vmul.f32 %v6474, %v6299
    %v7205 = vmul.f32 %v6480, %v6300
    %v7206 = vmul.f32 %v6486, %v6301
    %v7207 = vmul.f32 %v6492, %v6302
    %v7208 = vmul.f32 %v6498, %v6303
    %v7209 = vmul.f32 %v6504, %v6304
    %v7210 = vmul.f32 %v6510, %v6305
    %v7211 = vmul.f32 %v6516, %v6306
    %v7212 = vmul.f32 %v6523, %v6307
    %v7213 = vmul.f32 %v6529, %v6308
    %v7214 = vmul.f32 %v6535, %v6309
    %v7215 = vmul.f32 %v6541, %v6310
    %v7216 = vmul.f32 %v6547, %v6311
    %v7217 = vmul.f32 %v6553, %v6312
    %v7218 = vmul.f32 %v6559, %v6313
    %v7219 = vmul.f32 %v6565, %v6314
    %v7220 = vmul.f32 %v6571, %v6315
    %v7221 = vmul.f32 %v6577, %v6316
    %v7222 = vmul.f32 %v6583, %v6317
    %v7223 = vmul.f32 %v6589, %v6318
    %v7224 = vmul.f32 %v6595, %v6319
    %v7225 = vmul.f32 %v6601, %v6320
    %v7226 = vmul.f32 %v6607, %v6321
    %v7227 = vmul.f32 %v6613, %v6322
    %v7228 = vmul.f32 %v6620, %v6323
    %v7229 = vmul.f32 %v6626, %v6324
    %v7230 = vmul.f32 %v6632, %v6325
    %v7231 = vmul.f32 %v6638, %v6326
    %v7232 = vmul.f32 %v6644, %v6327
    %v7233 = vmul.f32 %v6650, %v6328
    %v7234 = vmul.f32 %v6656, %v6329
    %v7235 = vmul.f32 %v6662, %v6330
    %v7236 = vmul.f32 %v6668, %v6331
    %v7237 = vmul.f32 %v6674, %v6332
    %v7238 = vmul.f32 %v6680, %v6333
    %v7239 = vmul.f32 %v6686, %v6334
    %v7240 = vmul.f32 %v6692, %v6335
    %v7241 = vmul.f32 %v6698, %v6336
    %v7242 = vmul.f32 %v6704, %v6337
    %v7243 = vmul.f32 %v6710, %v6338
    %v7244 = vmul.f32 %v6717, %v6339
    %v7245 = vmul.f32 %v6723, %v6340
    %v7246 = vmul.f32 %v6729, %v6341
    %v7247 = vmul.f32 %v6735, %v6342
    %v7248 = vmul.f32 %v6741, %v6343
    %v7249 = vmul.f32 %v6747, %v6344
    %v7250 = vmul.f32 %v6753, %v6345
    %v7251 = vmul.f32 %v6759, %v6346
    %v7252 = vmul.f32 %v6765, %v6347
    %v7253 = vmul.f32 %v6771, %v6348
    %v7254 = vmul.f32 %v6777, %v6349
    %v7255 = vmul.f32 %v6783, %v6350
    %v7256 = vmul.f32 %v6789, %v6351
    %v7257 = vmul.f32 %v6795, %v6352
    %v7258 = vmul.f32 %v6801, %v6353
    %v7259 = vmul.f32 %v6807, %v6354
    %v7260 = vmul.f32 %v6814, %v6355
    %v7261 = vmul.f32 %v6820, %v6356
    %v7262 = vmul.f32 %v6826, %v6357
    %v7263 = vmul.f32 %v6832, %v6358
    %v7264 = vmul.f32 %v6838, %v6359
    %v7265 = vmul.f32 %v6844, %v6360
    %v7266 = vmul.f32 %v6850, %v6361
    %v7267 = vmul.f32 %v6856, %v6362
    %v7268 = vmul.f32 %v6862, %v6363
    %v7269 = vmul.f32 %v6868, %v6364
    %v7270 = vmul.f32 %v6874, %v6365
    %v7271 = vmul.f32 %v6880, %v6366
    %v7272 = vmul.f32 %v6886, %v6367
    %v7273 = vmul.f32 %v6892, %v6368
    %v7274 = vmul.f32 %v6898, %v6369
    %v7275 = vmul.f32 %v6904, %v6370
    %v7276 = vmul.f32 %v6911, %v6371
    %v7277 = vmul.f32 %v6917, %v6372
    %v7278 = vmul.f32 %v6923, %v6373
    %v7279 = vmul.f32 %v6929, %v6374
    %v7280 = vmul.f32 %v6935, %v6375
    %v7281 = vmul.f32 %v6941, %v6376
    %v7282 = vmul.f32 %v6947, %v6377
    %v7283 = vmul.f32 %v6953, %v6378
    %v7284 = vmul.f32 %v6959, %v6379
    %v7285 = vmul.f32 %v6965, %v6380
    %v7286 = vmul.f32 %v6971, %v6381
    %v7287 = vmul.f32 %v6977, %v6382
    %v7288 = vmul.f32 %v6983, %v6383
    %v7289 = vmul.f32 %v6989, %v6384
    %v7290 = vmul.f32 %v6995, %v6385
    %v7291 = vmul.f32 %v7001, %v6386
    %v7292 = vmul.f32 %v7008, %v6387
    %v7293 = vmul.f32 %v7014, %v6388
    %v7294 = vmul.f32 %v7020, %v6389
    %v7295 = vmul.f32 %v7026, %v6390
    %v7296 = vmul.f32 %v7032, %v6391
    %v7297 = vmul.f32 %v7038, %v6392
    %v7298 = vmul.f32 %v7044, %v6393
    %v7299 = vmul.f32 %v7050, %v6394
    %v7300 = vmul.f32 %v7056, %v6395
    %v7301 = vmul.f32 %v7062, %v6396
    %v7302 = vmul.f32 %v7068, %v6397
    %v7303 = vmul.f32 %v7074, %v6398
    %v7304 = vmul.f32 %v7080, %v6399
    %v7305 = vmul.f32 %v7086, %v6400
    %v7306 = vmul.f32 %v7092, %v6401
    %v7307 = vmul.f32 %v7098, %v6402
    %v7308 = vmul.f32 %v7105, %v6403
    %v7309 = vmul.f32 %v7111, %v6404
    %v7310 = vmul.f32 %v7117, %v6405
    %v7311 = vmul.f32 %v7123, %v6406
    %v7312 = vmul.f32 %v7129, %v6407
    %v7313 = vmul.f32 %v7135, %v6408
    %v7314 = vmul.f32 %v7141, %v6409
    %v7315 = vmul.f32 %v7147, %v6410
    %v7316 = vmul.f32 %v7153, %v6411
    %v7317 = vmul.f32 %v7159, %v6412
    %v7318 = vmul.f32 %v7165, %v6413
    %v7319 = vmul.f32 %v7171, %v6414
    %v7320 = vmul.f32 %v7177, %v6415
    %v7321 = vmul.f32 %v7183, %v6416
    %v7322 = vmul.f32 %v7189, %v6417
    %v7323 = vmul.f32 %v7195, %v6418
    %v7324 = vadd.f32 %v7196, %v7212
    %v7325 = vadd.f32 %v7324, %v7228
    %v7326 = vadd.f32 %v7325, %v7244
    %v7327 = vadd.f32 %v7326, %v7260
    %v7328 = vadd.f32 %v7327, %v7276
    %v7329 = vadd.f32 %v7328, %v7292
    %v7330 = vadd.f32 %v7329, %v7308
    %v7331 = vadd.f32 %v7197, %v7213
    %v7332 = vadd.f32 %v7331, %v7229
    %v7333 = vadd.f32 %v7332, %v7245
    %v7334 = vadd.f32 %v7333, %v7261
    %v7335 = vadd.f32 %v7334, %v7277
    %v7336 = vadd.f32 %v7335, %v7293
    %v7337 = vadd.f32 %v7336, %v7309
    %v7338 = vadd.f32 %v7198, %v7214
    %v7339 = vadd.f32 %v7338, %v7230
    %v7340 = vadd.f32 %v7339, %v7246
    %v7341 = vadd.f32 %v7340, %v7262
    %v7342 = vadd.f32 %v7341, %v7278
    %v7343 = vadd.f32 %v7342, %v7294
    %v7344 = vadd.f32 %v7343, %v7310
    %v7345 = vadd.f32 %v7199, %v7215
    %v7346 = vadd.f32 %v7345, %v7231
    %v7347 = vadd.f32 %v7346, %v7247
    %v7348 = vadd.f32 %v7347, %v7263
    %v7349 = vadd.f32 %v7348, %v7279
    %v7350 = vadd.f32 %v7349, %v7295
    %v7351 = vadd.f32 %v7350, %v7311
    %v7352 = vadd.f32 %v7200, %v7216
    %v7353 = vadd.f32 %v7352, %v7232
    %v7354 = vadd.f32 %v7353, %v7248
    %v7355 = vadd.f32 %v7354, %v7264
    %v7356 = vadd.f32 %v7355, %v7280
    %v7357 = vadd.f32 %v7356, %v7296
    %v7358 = vadd.f32 %v7357, %v7312
    %v7359 = vadd.f32 %v7201, %v7217
    %v7360 = vadd.f32 %v7359, %v7233
    %v7361 = vadd.f32 %v7360, %v7249
    %v7362 = vadd.f32 %v7361, %v7265
    %v7363 = vadd.f32 %v7362, %v7281
    %v7364 = vadd.f32 %v7363, %v7297
    %v7365 = vadd.f32 %v7364, %v7313
    %v7366 = vadd.f32 %v7202, %v7218
    %v7367 = vadd.f32 %v7366, %v7234
    %v7368 = vadd.f32 %v7367, %v7250
    %v7369 = vadd.f32 %v7368, %v7266
    %v7370 = vadd.f32 %v7369, %v7282
    %v7371 = vadd.f32 %v7370, %v7298
    %v7372 = vadd.f32 %v7371, %v7314
    %v7373 = vadd.f32 %v7203, %v7219
    %v7374 = vadd.f32 %v7373, %v7235
    %v7375 = vadd.f32 %v7374, %v7251
    %v7376 = vadd.f32 %v7375, %v7267
    %v7377 = vadd.f32 %v7376, %v7283
    %v7378 = vadd.f32 %v7377, %v7299
    %v7379 = vadd.f32 %v7378, %v7315
    %v7380 = vadd.f32 %v7204, %v7220
    %v7381 = vadd.f32 %v7380, %v7236
    %v7382 = vadd.f32 %v7381, %v7252
    %v7383 = vadd.f32 %v7382, %v7268
    %v7384 = vadd.f32 %v7383, %v7284
    %v7385 = vadd.f32 %v7384, %v7300
    %v7386 = vadd.f32 %v7385, %v7316
    %v7387 = vadd.f32 %v7205, %v7221
    %v7388 = vadd.f32 %v7387, %v7237
    %v7389 = vadd.f32 %v7388, %v7253
    %v7390 = vadd.f32 %v7389, %v7269
    %v7391 = vadd.f32 %v7390, %v7285
    %v7392 = vadd.f32 %v7391, %v7301
    %v7393 = vadd.f32 %v7392, %v7317
    %v7394 = vadd.f32 %v7206, %v7222
    %v7395 = vadd.f32 %v7394, %v7238
    %v7396 = vadd.f32 %v7395, %v7254
    %v7397 = vadd.f32 %v7396, %v7270
    %v7398 = vadd.f32 %v7397, %v7286
    %v7399 = vadd.f32 %v7398, %v7302
    %v7400 = vadd.f32 %v7399, %v7318
    %v7401 = vadd.f32 %v7207, %v7223
    %v7402 = vadd.f32 %v7401, %v7239
    %v7403 = vadd.f32 %v7402, %v7255
    %v7404 = vadd.f32 %v7403, %v7271
    %v7405 = vadd.f32 %v7404, %v7287
    %v7406 = vadd.f32 %v7405, %v7303
    %v7407 = vadd.f32 %v7406, %v7319
    %v7408 = vadd.f32 %v7208, %v7224
    %v7409 = vadd.f32 %v7408, %v7240
    %v7410 = vadd.f32 %v7409, %v7256
    %v7411 = vadd.f32 %v7410, %v7272
    %v7412 = vadd.f32 %v7411, %v7288
    %v7413 = vadd.f32 %v7412, %v7304
    %v7414 = vadd.f32 %v7413, %v7320
    %v7415 = vadd.f32 %v7209, %v7225
    %v7416 = vadd.f32 %v7415, %v7241
    %v7417 = vadd.f32 %v7416, %v7257
    %v7418 = vadd.f32 %v7417, %v7273
    %v7419 = vadd.f32 %v7418, %v7289
    %v7420 = vadd.f32 %v7419, %v7305
    %v7421 = vadd.f32 %v7420, %v7321
    %v7422 = vadd.f32 %v7210, %v7226
    %v7423 = vadd.f32 %v7422, %v7242
    %v7424 = vadd.f32 %v7423, %v7258
    %v7425 = vadd.f32 %v7424, %v7274
    %v7426 = vadd.f32 %v7425, %v7290
    %v7427 = vadd.f32 %v7426, %v7306
    %v7428 = vadd.f32 %v7427, %v7322
    %v7429 = vadd.f32 %v7211, %v7227
    %v7430 = vadd.f32 %v7429, %v7243
    %v7431 = vadd.f32 %v7430, %v7259
    %v7432 = vadd.f32 %v7431, %v7275
    %v7433 = vadd.f32 %v7432, %v7291
    %v7434 = vadd.f32 %v7433, %v7307
    %v7435 = vadd.f32 %v7434, %v7323
    %v7436 = vadd.f32 %v7330, 0.0
    %v7437 = vadd.f32 %v7337, 0.0
    %v7438 = vadd.f32 %v7344, 0.0
    %v7439 = vadd.f32 %v7351, 0.0
    %v7440 = vadd.f32 %v7358, 0.0
    %v7441 = vadd.f32 %v7365, 0.0
    %v7442 = vadd.f32 %v7372, 0.0
    %v7443 = vadd.f32 %v7379, 0.0
    %v7444 = vadd.f32 %v7386, 0.0
    %v7445 = vadd.f32 %v7393, 0.0
    %v7446 = vadd.f32 %v7400, 0.0
    %v7447 = vadd.f32 %v7407, 0.0
    %v7448 = vadd.f32 %v7414, 0.0
    %v7449 = vadd.f32 %v7421, 0.0
    %v7450 = vadd.f32 %v7428, 0.0
    %v7451 = vadd.f32 %v7435, 0.0
    %v7452 = vld [vmem:[%s3273] sm:$0xff]
    %v7453 = vld [vmem:[%s3273 + $0x8] sm:$0xff]
    %v7454 = vld [vmem:[%s3273 + $0x10] sm:$0xff]
    %v7455 = vld [vmem:[%s3273 + $0x18] sm:$0xff]
    %v7456 = vld [vmem:[%s3273 + $0x20] sm:$0xff]
    %v7457 = vld [vmem:[%s3273 + $0x28] sm:$0xff]
    %v7458 = vld [vmem:[%s3273 + $0x30] sm:$0xff]
    %v7459 = vld [vmem:[%s3273 + $0x38] sm:$0xff]
    %v7460 = vld [vmem:[%s3273 + $0x40] sm:$0xff]
    %v7461 = vld [vmem:[%s3273 + $0x48] sm:$0xff]
    %v7462 = vld [vmem:[%s3273 + $0x50] sm:$0xff]
    %v7463 = vld [vmem:[%s3273 + $0x58] sm:$0xff]
    %v7464 = vld [vmem:[%s3273 + $0x60] sm:$0xff]
    %v7465 = vld [vmem:[%s3273 + $0x68] sm:$0xff]
    %v7466 = vld [vmem:[%s3273 + $0x70] sm:$0xff]
    %v7467 = vld [vmem:[%s3273 + $0x78] sm:$0xff]
    %v7468 = vld [vmem:[%s3273 + $0x80] sm:$0xff]
    %v7469 = vld [vmem:[%s3273 + $0x88] sm:$0xff]
    %v7470 = vld [vmem:[%s3273 + $0x90] sm:$0xff]
    %v7471 = vld [vmem:[%s3273 + $0x98] sm:$0xff]
    %v7472 = vld [vmem:[%s3273 + $0xa0] sm:$0xff]
    %v7473 = vld [vmem:[%s3273 + $0xa8] sm:$0xff]
    %v7474 = vld [vmem:[%s3273 + $0xb0] sm:$0xff]
    %v7475 = vld [vmem:[%s3273 + $0xb8] sm:$0xff]
    %v7476 = vld [vmem:[%s3273 + $0xc0] sm:$0xff]
    %v7477 = vld [vmem:[%s3273 + $0xc8] sm:$0xff]
    %v7478 = vld [vmem:[%s3273 + $0xd0] sm:$0xff]
    %v7479 = vld [vmem:[%s3273 + $0xd8] sm:$0xff]
    %v7480 = vld [vmem:[%s3273 + $0xe0] sm:$0xff]
    %v7481 = vld [vmem:[%s3273 + $0xe8] sm:$0xff]
    %v7482 = vld [vmem:[%s3273 + $0xf0] sm:$0xff]
    %v7483 = vld [vmem:[%s3273 + $0xf8] sm:$0xff]
    %v7484 = vld [vmem:[%s3273 + $0x100] sm:$0xff]
    %v7485 = vld [vmem:[%s3273 + $0x108] sm:$0xff]
    %v7486 = vld [vmem:[%s3273 + $0x110] sm:$0xff]
    %v7487 = vld [vmem:[%s3273 + $0x118] sm:$0xff]
    %v7488 = vld [vmem:[%s3273 + $0x120] sm:$0xff]
    %v7489 = vld [vmem:[%s3273 + $0x128] sm:$0xff]
    %v7490 = vld [vmem:[%s3273 + $0x130] sm:$0xff]
    %v7491 = vld [vmem:[%s3273 + $0x138] sm:$0xff]
    %v7492 = vld [vmem:[%s3273 + $0x140] sm:$0xff]
    %v7493 = vld [vmem:[%s3273 + $0x148] sm:$0xff]
    %v7494 = vld [vmem:[%s3273 + $0x150] sm:$0xff]
    %v7495 = vld [vmem:[%s3273 + $0x158] sm:$0xff]
    %v7496 = vld [vmem:[%s3273 + $0x160] sm:$0xff]
    %v7497 = vld [vmem:[%s3273 + $0x168] sm:$0xff]
    %v7498 = vld [vmem:[%s3273 + $0x170] sm:$0xff]
    %v7499 = vld [vmem:[%s3273 + $0x178] sm:$0xff]
    %v7500 = vld [vmem:[%s3273 + $0x180] sm:$0xff]
    %v7501 = vld [vmem:[%s3273 + $0x188] sm:$0xff]
    %v7502 = vld [vmem:[%s3273 + $0x190] sm:$0xff]
    %v7503 = vld [vmem:[%s3273 + $0x198] sm:$0xff]
    %v7504 = vld [vmem:[%s3273 + $0x1a0] sm:$0xff]
    %v7505 = vld [vmem:[%s3273 + $0x1a8] sm:$0xff]
    %v7506 = vld [vmem:[%s3273 + $0x1b0] sm:$0xff]
    %v7507 = vld [vmem:[%s3273 + $0x1b8] sm:$0xff]
    %v7508 = vld [vmem:[%s3273 + $0x1c0] sm:$0xff]
    %v7509 = vld [vmem:[%s3273 + $0x1c8] sm:$0xff]
    %v7510 = vld [vmem:[%s3273 + $0x1d0] sm:$0xff]
    %v7511 = vld [vmem:[%s3273 + $0x1d8] sm:$0xff]
    %v7512 = vld [vmem:[%s3273 + $0x1e0] sm:$0xff]
    %v7513 = vld [vmem:[%s3273 + $0x1e8] sm:$0xff]
    %v7514 = vld [vmem:[%s3273 + $0x1f0] sm:$0xff]
    %v7515 = vld [vmem:[%s3273 + $0x1f8] sm:$0xff]
    %v7516 = vld [vmem:[%s3273 + $0x200] sm:$0xff]
    %v7517 = vld [vmem:[%s3273 + $0x208] sm:$0xff]
    %v7518 = vld [vmem:[%s3273 + $0x210] sm:$0xff]
    %v7519 = vld [vmem:[%s3273 + $0x218] sm:$0xff]
    %v7520 = vld [vmem:[%s3273 + $0x220] sm:$0xff]
    %v7521 = vld [vmem:[%s3273 + $0x228] sm:$0xff]
    %v7522 = vld [vmem:[%s3273 + $0x230] sm:$0xff]
    %v7523 = vld [vmem:[%s3273 + $0x238] sm:$0xff]
    %v7524 = vld [vmem:[%s3273 + $0x240] sm:$0xff]
    %v7525 = vld [vmem:[%s3273 + $0x248] sm:$0xff]
    %v7526 = vld [vmem:[%s3273 + $0x250] sm:$0xff]
    %v7527 = vld [vmem:[%s3273 + $0x258] sm:$0xff]
    %v7528 = vld [vmem:[%s3273 + $0x260] sm:$0xff]
    %v7529 = vld [vmem:[%s3273 + $0x268] sm:$0xff]
    %v7530 = vld [vmem:[%s3273 + $0x270] sm:$0xff]
    %v7531 = vld [vmem:[%s3273 + $0x278] sm:$0xff]
    %v7532 = vld [vmem:[%s3273 + $0x280] sm:$0xff]
    %v7533 = vld [vmem:[%s3273 + $0x288] sm:$0xff]
    %v7534 = vld [vmem:[%s3273 + $0x290] sm:$0xff]
    %v7535 = vld [vmem:[%s3273 + $0x298] sm:$0xff]
    %v7536 = vld [vmem:[%s3273 + $0x2a0] sm:$0xff]
    %v7537 = vld [vmem:[%s3273 + $0x2a8] sm:$0xff]
    %v7538 = vld [vmem:[%s3273 + $0x2b0] sm:$0xff]
    %v7539 = vld [vmem:[%s3273 + $0x2b8] sm:$0xff]
    %v7540 = vld [vmem:[%s3273 + $0x2c0] sm:$0xff]
    %v7541 = vld [vmem:[%s3273 + $0x2c8] sm:$0xff]
    %v7542 = vld [vmem:[%s3273 + $0x2d0] sm:$0xff]
    %v7543 = vld [vmem:[%s3273 + $0x2d8] sm:$0xff]
    %v7544 = vld [vmem:[%s3273 + $0x2e0] sm:$0xff]
    %v7545 = vld [vmem:[%s3273 + $0x2e8] sm:$0xff]
    %v7546 = vld [vmem:[%s3273 + $0x2f0] sm:$0xff]
    %v7547 = vld [vmem:[%s3273 + $0x2f8] sm:$0xff]
    %v7548 = vld [vmem:[%s3273 + $0x300] sm:$0xff]
    %v7549 = vld [vmem:[%s3273 + $0x308] sm:$0xff]
    %v7550 = vld [vmem:[%s3273 + $0x310] sm:$0xff]
    %v7551 = vld [vmem:[%s3273 + $0x318] sm:$0xff]
    %v7552 = vld [vmem:[%s3273 + $0x320] sm:$0xff]
    %v7553 = vld [vmem:[%s3273 + $0x328] sm:$0xff]
    %v7554 = vld [vmem:[%s3273 + $0x330] sm:$0xff]
    %v7555 = vld [vmem:[%s3273 + $0x338] sm:$0xff]
    %v7556 = vld [vmem:[%s3273 + $0x340] sm:$0xff]
    %v7557 = vld [vmem:[%s3273 + $0x348] sm:$0xff]
    %v7558 = vld [vmem:[%s3273 + $0x350] sm:$0xff]
    %v7559 = vld [vmem:[%s3273 + $0x358] sm:$0xff]
    %v7560 = vld [vmem:[%s3273 + $0x360] sm:$0xff]
    %v7561 = vld [vmem:[%s3273 + $0x368] sm:$0xff]
    %v7562 = vld [vmem:[%s3273 + $0x370] sm:$0xff]
    %v7563 = vld [vmem:[%s3273 + $0x378] sm:$0xff]
    %v7564 = vld [vmem:[%s3273 + $0x380] sm:$0xff]
    %v7565 = vld [vmem:[%s3273 + $0x388] sm:$0xff]
    %v7566 = vld [vmem:[%s3273 + $0x390] sm:$0xff]
    %v7567 = vld [vmem:[%s3273 + $0x398] sm:$0xff]
    %v7568 = vld [vmem:[%s3273 + $0x3a0] sm:$0xff]
    %v7569 = vld [vmem:[%s3273 + $0x3a8] sm:$0xff]
    %v7570 = vld [vmem:[%s3273 + $0x3b0] sm:$0xff]
    %v7571 = vld [vmem:[%s3273 + $0x3b8] sm:$0xff]
    %v7572 = vld [vmem:[%s3273 + $0x3c0] sm:$0xff]
    %v7573 = vld [vmem:[%s3273 + $0x3c8] sm:$0xff]
    %v7574 = vld [vmem:[%s3273 + $0x3d0] sm:$0xff]
    %v7575 = vld [vmem:[%s3273 + $0x3d8] sm:$0xff]
    %v7576 = vld [vmem:[%s3273 + $0x3e0] sm:$0xff]
    %v7577 = vld [vmem:[%s3273 + $0x3e8] sm:$0xff]
    %v7578 = vld [vmem:[%s3273 + $0x3f0] sm:$0xff]
    %v7579 = vld [vmem:[%s3273 + $0x3f8] sm:$0xff]
    %v7580 = vld [vmem:[%s6262] sm:$0xff]
    %v7581 = vperm.slane %v7580, 0
    %v7582 = vlaneseq
    %v7583 = vshrl.u32 %v7582, 7
    %7585 = vset.pattern.permute.xlu0 %v7583
    %7586 = vperm.xlu0 %7585, %v7581
    %v7587 = vpop.permute.xlu0 %7586
    %v7588 = vlaneseq
    %v7589 = vshrl.u32 %v7588, 7
    %v7590 = vadd.s32 %v7589, 8
    %7591 = vset.pattern.permute.xlu0 %v7590
    %7592 = vperm.xlu0 %7591, %v7581
    %v7593 = vpop.permute.xlu0 %7592
    %v7594 = vlaneseq
    %v7595 = vshrl.u32 %v7594, 7
    %v7596 = vadd.s32 %v7595, 16
    %7597 = vset.pattern.permute.xlu0 %v7596
    %7598 = vperm.xlu0 %7597, %v7581
    %v7599 = vpop.permute.xlu0 %7598
    %v7600 = vlaneseq
    %v7601 = vshrl.u32 %v7600, 7
    %v7602 = vadd.s32 %v7601, 24
    %7603 = vset.pattern.permute.xlu0 %v7602
    %7604 = vperm.xlu0 %7603, %v7581
    %v7605 = vpop.permute.xlu0 %7604
    %v7606 = vlaneseq
    %v7607 = vshrl.u32 %v7606, 7
    %v7608 = vadd.s32 %v7607, 32
    %7609 = vset.pattern.permute.xlu0 %v7608
    %7610 = vperm.xlu0 %7609, %v7581
    %v7611 = vpop.permute.xlu0 %7610
    %v7612 = vlaneseq
    %v7613 = vshrl.u32 %v7612, 7
    %v7614 = vadd.s32 %v7613, 40
    %7615 = vset.pattern.permute.xlu0 %v7614
    %7616 = vperm.xlu0 %7615, %v7581
    %v7617 = vpop.permute.xlu0 %7616
    %v7618 = vlaneseq
    %v7619 = vshrl.u32 %v7618, 7
    %v7620 = vadd.s32 %v7619, 48
    %7621 = vset.pattern.permute.xlu0 %v7620
    %7622 = vperm.xlu0 %7621, %v7581
    %v7623 = vpop.permute.xlu0 %7622
    %v7624 = vlaneseq
    %v7625 = vshrl.u32 %v7624, 7
    %v7626 = vadd.s32 %v7625, 56
    %7627 = vset.pattern.permute.xlu0 %v7626
    %7628 = vperm.xlu0 %7627, %v7581
    %v7629 = vpop.permute.xlu0 %7628
    %v7630 = vlaneseq
    %v7631 = vshrl.u32 %v7630, 7
    %v7632 = vadd.s32 %v7631, 64
    %7633 = vset.pattern.permute.xlu0 %v7632
    %7634 = vperm.xlu0 %7633, %v7581
    %v7635 = vpop.permute.xlu0 %7634
    %v7636 = vlaneseq
    %v7637 = vshrl.u32 %v7636, 7
    %v7638 = vadd.s32 %v7637, 72
    %7639 = vset.pattern.permute.xlu0 %v7638
    %7640 = vperm.xlu0 %7639, %v7581
    %v7641 = vpop.permute.xlu0 %7640
    %v7642 = vlaneseq
    %v7643 = vshrl.u32 %v7642, 7
    %v7644 = vadd.s32 %v7643, 80
    %7645 = vset.pattern.permute.xlu0 %v7644
    %7646 = vperm.xlu0 %7645, %v7581
    %v7647 = vpop.permute.xlu0 %7646
    %v7648 = vlaneseq
    %v7649 = vshrl.u32 %v7648, 7
    %v7650 = vadd.s32 %v7649, 88
    %7651 = vset.pattern.permute.xlu0 %v7650
    %7652 = vperm.xlu0 %7651, %v7581
    %v7653 = vpop.permute.xlu0 %7652
    %v7654 = vlaneseq
    %v7655 = vshrl.u32 %v7654, 7
    %v7656 = vadd.s32 %v7655, 96
    %7657 = vset.pattern.permute.xlu0 %v7656
    %7658 = vperm.xlu0 %7657, %v7581
    %v7659 = vpop.permute.xlu0 %7658
    %v7660 = vlaneseq
    %v7661 = vshrl.u32 %v7660, 7
    %v7662 = vadd.s32 %v7661, 104
    %7663 = vset.pattern.permute.xlu0 %v7662
    %7664 = vperm.xlu0 %7663, %v7581
    %v7665 = vpop.permute.xlu0 %7664
    %v7666 = vlaneseq
    %v7667 = vshrl.u32 %v7666, 7
    %v7668 = vadd.s32 %v7667, 112
    %7669 = vset.pattern.permute.xlu0 %v7668
    %7670 = vperm.xlu0 %7669, %v7581
    %v7671 = vpop.permute.xlu0 %7670
    %v7672 = vlaneseq
    %v7673 = vshrl.u32 %v7672, 7
    %v7674 = vadd.s32 %v7673, 120
    %7675 = vset.pattern.permute.xlu0 %v7674
    %7676 = vperm.xlu0 %7675, %v7581
    %v7677 = vpop.permute.xlu0 %7676
    %v7678 = vperm.slane %v7580, 1
    %v7679 = vlaneseq
    %v7680 = vshrl.u32 %v7679, 7
    %7682 = vset.pattern.permute.xlu0 %v7680
    %7683 = vperm.xlu0 %7682, %v7678
    %v7684 = vpop.permute.xlu0 %7683
    %v7685 = vlaneseq
    %v7686 = vshrl.u32 %v7685, 7
    %v7687 = vadd.s32 %v7686, 8
    %7688 = vset.pattern.permute.xlu0 %v7687
    %7689 = vperm.xlu0 %7688, %v7678
    %v7690 = vpop.permute.xlu0 %7689
    %v7691 = vlaneseq
    %v7692 = vshrl.u32 %v7691, 7
    %v7693 = vadd.s32 %v7692, 16
    %7694 = vset.pattern.permute.xlu0 %v7693
    %7695 = vperm.xlu0 %7694, %v7678
    %v7696 = vpop.permute.xlu0 %7695
    %v7697 = vlaneseq
    %v7698 = vshrl.u32 %v7697, 7
    %v7699 = vadd.s32 %v7698, 24
    %7700 = vset.pattern.permute.xlu0 %v7699
    %7701 = vperm.xlu0 %7700, %v7678
    %v7702 = vpop.permute.xlu0 %7701
    %v7703 = vlaneseq
    %v7704 = vshrl.u32 %v7703, 7
    %v7705 = vadd.s32 %v7704, 32
    %7706 = vset.pattern.permute.xlu0 %v7705
    %7707 = vperm.xlu0 %7706, %v7678
    %v7708 = vpop.permute.xlu0 %7707
    %v7709 = vlaneseq
    %v7710 = vshrl.u32 %v7709, 7
    %v7711 = vadd.s32 %v7710, 40
    %7712 = vset.pattern.permute.xlu0 %v7711
    %7713 = vperm.xlu0 %7712, %v7678
    %v7714 = vpop.permute.xlu0 %7713
    %v7715 = vlaneseq
    %v7716 = vshrl.u32 %v7715, 7
    %v7717 = vadd.s32 %v7716, 48
    %7718 = vset.pattern.permute.xlu0 %v7717
    %7719 = vperm.xlu0 %7718, %v7678
    %v7720 = vpop.permute.xlu0 %7719
    %v7721 = vlaneseq
    %v7722 = vshrl.u32 %v7721, 7
    %v7723 = vadd.s32 %v7722, 56
    %7724 = vset.pattern.permute.xlu0 %v7723
    %7725 = vperm.xlu0 %7724, %v7678
    %v7726 = vpop.permute.xlu0 %7725
    %v7727 = vlaneseq
    %v7728 = vshrl.u32 %v7727, 7
    %v7729 = vadd.s32 %v7728, 64
    %7730 = vset.pattern.permute.xlu0 %v7729
    %7731 = vperm.xlu0 %7730, %v7678
    %v7732 = vpop.permute.xlu0 %7731
    %v7733 = vlaneseq
    %v7734 = vshrl.u32 %v7733, 7
    %v7735 = vadd.s32 %v7734, 72
    %7736 = vset.pattern.permute.xlu0 %v7735
    %7737 = vperm.xlu0 %7736, %v7678
    %v7738 = vpop.permute.xlu0 %7737
    %v7739 = vlaneseq
    %v7740 = vshrl.u32 %v7739, 7
    %v7741 = vadd.s32 %v7740, 80
    %7742 = vset.pattern.permute.xlu0 %v7741
    %7743 = vperm.xlu0 %7742, %v7678
    %v7744 = vpop.permute.xlu0 %7743
    %v7745 = vlaneseq
    %v7746 = vshrl.u32 %v7745, 7
    %v7747 = vadd.s32 %v7746, 88
    %7748 = vset.pattern.permute.xlu0 %v7747
    %7749 = vperm.xlu0 %7748, %v7678
    %v7750 = vpop.permute.xlu0 %7749
    %v7751 = vlaneseq
    %v7752 = vshrl.u32 %v7751, 7
    %v7753 = vadd.s32 %v7752, 96
    %7754 = vset.pattern.permute.xlu0 %v7753
    %7755 = vperm.xlu0 %7754, %v7678
    %v7756 = vpop.permute.xlu0 %7755
    %v7757 = vlaneseq
    %v7758 = vshrl.u32 %v7757, 7
    %v7759 = vadd.s32 %v7758, 104
    %7760 = vset.pattern.permute.xlu0 %v7759
    %7761 = vperm.xlu0 %7760, %v7678
    %v7762 = vpop.permute.xlu0 %7761
    %v7763 = vlaneseq
    %v7764 = vshrl.u32 %v7763, 7
    %v7765 = vadd.s32 %v7764, 112
    %7766 = vset.pattern.permute.xlu0 %v7765
    %7767 = vperm.xlu0 %7766, %v7678
    %v7768 = vpop.permute.xlu0 %7767
    %v7769 = vlaneseq
    %v7770 = vshrl.u32 %v7769, 7
    %v7771 = vadd.s32 %v7770, 120
    %7772 = vset.pattern.permute.xlu0 %v7771
    %7773 = vperm.xlu0 %7772, %v7678
    %v7774 = vpop.permute.xlu0 %7773
    %v7775 = vperm.slane %v7580, 2
    %v7776 = vlaneseq
    %v7777 = vshrl.u32 %v7776, 7
    %7779 = vset.pattern.permute.xlu0 %v7777
    %7780 = vperm.xlu0 %7779, %v7775
    %v7781 = vpop.permute.xlu0 %7780
    %v7782 = vlaneseq
    %v7783 = vshrl.u32 %v7782, 7
    %v7784 = vadd.s32 %v7783, 8
    %7785 = vset.pattern.permute.xlu0 %v7784
    %7786 = vperm.xlu0 %7785, %v7775
    %v7787 = vpop.permute.xlu0 %7786
    %v7788 = vlaneseq
    %v7789 = vshrl.u32 %v7788, 7
    %v7790 = vadd.s32 %v7789, 16
    %7791 = vset.pattern.permute.xlu0 %v7790
    %7792 = vperm.xlu0 %7791, %v7775
    %v7793 = vpop.permute.xlu0 %7792
    %v7794 = vlaneseq
    %v7795 = vshrl.u32 %v7794, 7
    %v7796 = vadd.s32 %v7795, 24
    %7797 = vset.pattern.permute.xlu0 %v7796
    %7798 = vperm.xlu0 %7797, %v7775
    %v7799 = vpop.permute.xlu0 %7798
    %v7800 = vlaneseq
    %v7801 = vshrl.u32 %v7800, 7
    %v7802 = vadd.s32 %v7801, 32
    %7803 = vset.pattern.permute.xlu0 %v7802
    %7804 = vperm.xlu0 %7803, %v7775
    %v7805 = vpop.permute.xlu0 %7804
    %v7806 = vlaneseq
    %v7807 = vshrl.u32 %v7806, 7
    %v7808 = vadd.s32 %v7807, 40
    %7809 = vset.pattern.permute.xlu0 %v7808
    %7810 = vperm.xlu0 %7809, %v7775
    %v7811 = vpop.permute.xlu0 %7810
    %v7812 = vlaneseq
    %v7813 = vshrl.u32 %v7812, 7
    %v7814 = vadd.s32 %v7813, 48
    %7815 = vset.pattern.permute.xlu0 %v7814
    %7816 = vperm.xlu0 %7815, %v7775
    %v7817 = vpop.permute.xlu0 %7816
    %v7818 = vlaneseq
    %v7819 = vshrl.u32 %v7818, 7
    %v7820 = vadd.s32 %v7819, 56
    %7821 = vset.pattern.permute.xlu0 %v7820
    %7822 = vperm.xlu0 %7821, %v7775
    %v7823 = vpop.permute.xlu0 %7822
    %v7824 = vlaneseq
    %v7825 = vshrl.u32 %v7824, 7
    %v7826 = vadd.s32 %v7825, 64
    %7827 = vset.pattern.permute.xlu0 %v7826
    %7828 = vperm.xlu0 %7827, %v7775
    %v7829 = vpop.permute.xlu0 %7828
    %v7830 = vlaneseq
    %v7831 = vshrl.u32 %v7830, 7
    %v7832 = vadd.s32 %v7831, 72
    %7833 = vset.pattern.permute.xlu0 %v7832
    %7834 = vperm.xlu0 %7833, %v7775
    %v7835 = vpop.permute.xlu0 %7834
    %v7836 = vlaneseq
    %v7837 = vshrl.u32 %v7836, 7
    %v7838 = vadd.s32 %v7837, 80
    %7839 = vset.pattern.permute.xlu0 %v7838
    %7840 = vperm.xlu0 %7839, %v7775
    %v7841 = vpop.permute.xlu0 %7840
    %v7842 = vlaneseq
    %v7843 = vshrl.u32 %v7842, 7
    %v7844 = vadd.s32 %v7843, 88
    %7845 = vset.pattern.permute.xlu0 %v7844
    %7846 = vperm.xlu0 %7845, %v7775
    %v7847 = vpop.permute.xlu0 %7846
    %v7848 = vlaneseq
    %v7849 = vshrl.u32 %v7848, 7
    %v7850 = vadd.s32 %v7849, 96
    %7851 = vset.pattern.permute.xlu0 %v7850
    %7852 = vperm.xlu0 %7851, %v7775
    %v7853 = vpop.permute.xlu0 %7852
    %v7854 = vlaneseq
    %v7855 = vshrl.u32 %v7854, 7
    %v7856 = vadd.s32 %v7855, 104
    %7857 = vset.pattern.permute.xlu0 %v7856
    %7858 = vperm.xlu0 %7857, %v7775
    %v7859 = vpop.permute.xlu0 %7858
    %v7860 = vlaneseq
    %v7861 = vshrl.u32 %v7860, 7
    %v7862 = vadd.s32 %v7861, 112
    %7863 = vset.pattern.permute.xlu0 %v7862
    %7864 = vperm.xlu0 %7863, %v7775
    %v7865 = vpop.permute.xlu0 %7864
    %v7866 = vlaneseq
    %v7867 = vshrl.u32 %v7866, 7
    %v7868 = vadd.s32 %v7867, 120
    %7869 = vset.pattern.permute.xlu0 %v7868
    %7870 = vperm.xlu0 %7869, %v7775
    %v7871 = vpop.permute.xlu0 %7870
    %v7872 = vperm.slane %v7580, 3
    %v7873 = vlaneseq
    %v7874 = vshrl.u32 %v7873, 7
    %7876 = vset.pattern.permute.xlu0 %v7874
    %7877 = vperm.xlu0 %7876, %v7872
    %v7878 = vpop.permute.xlu0 %7877
    %v7879 = vlaneseq
    %v7880 = vshrl.u32 %v7879, 7
    %v7881 = vadd.s32 %v7880, 8
    %7882 = vset.pattern.permute.xlu0 %v7881
    %7883 = vperm.xlu0 %7882, %v7872
    %v7884 = vpop.permute.xlu0 %7883
    %v7885 = vlaneseq
    %v7886 = vshrl.u32 %v7885, 7
    %v7887 = vadd.s32 %v7886, 16
    %7888 = vset.pattern.permute.xlu0 %v7887
    %7889 = vperm.xlu0 %7888, %v7872
    %v7890 = vpop.permute.xlu0 %7889
    %v7891 = vlaneseq
    %v7892 = vshrl.u32 %v7891, 7
    %v7893 = vadd.s32 %v7892, 24
    %7894 = vset.pattern.permute.xlu0 %v7893
    %7895 = vperm.xlu0 %7894, %v7872
    %v7896 = vpop.permute.xlu0 %7895
    %v7897 = vlaneseq
    %v7898 = vshrl.u32 %v7897, 7
    %v7899 = vadd.s32 %v7898, 32
    %7900 = vset.pattern.permute.xlu0 %v7899
    %7901 = vperm.xlu0 %7900, %v7872
    %v7902 = vpop.permute.xlu0 %7901
    %v7903 = vlaneseq
    %v7904 = vshrl.u32 %v7903, 7
    %v7905 = vadd.s32 %v7904, 40
    %7906 = vset.pattern.permute.xlu0 %v7905
    %7907 = vperm.xlu0 %7906, %v7872
    %v7908 = vpop.permute.xlu0 %7907
    %v7909 = vlaneseq
    %v7910 = vshrl.u32 %v7909, 7
    %v7911 = vadd.s32 %v7910, 48
    %7912 = vset.pattern.permute.xlu0 %v7911
    %7913 = vperm.xlu0 %7912, %v7872
    %v7914 = vpop.permute.xlu0 %7913
    %v7915 = vlaneseq
    %v7916 = vshrl.u32 %v7915, 7
    %v7917 = vadd.s32 %v7916, 56
    %7918 = vset.pattern.permute.xlu0 %v7917
    %7919 = vperm.xlu0 %7918, %v7872
    %v7920 = vpop.permute.xlu0 %7919
    %v7921 = vlaneseq
    %v7922 = vshrl.u32 %v7921, 7
    %v7923 = vadd.s32 %v7922, 64
    %7924 = vset.pattern.permute.xlu0 %v7923
    %7925 = vperm.xlu0 %7924, %v7872
    %v7926 = vpop.permute.xlu0 %7925
    %v7927 = vlaneseq
    %v7928 = vshrl.u32 %v7927, 7
    %v7929 = vadd.s32 %v7928, 72
    %7930 = vset.pattern.permute.xlu0 %v7929
    %7931 = vperm.xlu0 %7930, %v7872
    %v7932 = vpop.permute.xlu0 %7931
    %v7933 = vlaneseq
    %v7934 = vshrl.u32 %v7933, 7
    %v7935 = vadd.s32 %v7934, 80
    %7936 = vset.pattern.permute.xlu0 %v7935
    %7937 = vperm.xlu0 %7936, %v7872
    %v7938 = vpop.permute.xlu0 %7937
    %v7939 = vlaneseq
    %v7940 = vshrl.u32 %v7939, 7
    %v7941 = vadd.s32 %v7940, 88
    %7942 = vset.pattern.permute.xlu0 %v7941
    %7943 = vperm.xlu0 %7942, %v7872
    %v7944 = vpop.permute.xlu0 %7943
    %v7945 = vlaneseq
    %v7946 = vshrl.u32 %v7945, 7
    %v7947 = vadd.s32 %v7946, 96
    %7948 = vset.pattern.permute.xlu0 %v7947
    %7949 = vperm.xlu0 %7948, %v7872
    %v7950 = vpop.permute.xlu0 %7949
    %v7951 = vlaneseq
    %v7952 = vshrl.u32 %v7951, 7
    %v7953 = vadd.s32 %v7952, 104
    %7954 = vset.pattern.permute.xlu0 %v7953
    %7955 = vperm.xlu0 %7954, %v7872
    %v7956 = vpop.permute.xlu0 %7955
    %v7957 = vlaneseq
    %v7958 = vshrl.u32 %v7957, 7
    %v7959 = vadd.s32 %v7958, 112
    %7960 = vset.pattern.permute.xlu0 %v7959
    %7961 = vperm.xlu0 %7960, %v7872
    %v7962 = vpop.permute.xlu0 %7961
    %v7963 = vlaneseq
    %v7964 = vshrl.u32 %v7963, 7
    %v7965 = vadd.s32 %v7964, 120
    %7966 = vset.pattern.permute.xlu0 %v7965
    %7967 = vperm.xlu0 %7966, %v7872
    %v7968 = vpop.permute.xlu0 %7967
    %v7969 = vperm.slane %v7580, 4
    %v7970 = vlaneseq
    %v7971 = vshrl.u32 %v7970, 7
    %7973 = vset.pattern.permute.xlu0 %v7971
    %7974 = vperm.xlu0 %7973, %v7969
    %v7975 = vpop.permute.xlu0 %7974
    %v7976 = vlaneseq
    %v7977 = vshrl.u32 %v7976, 7
    %v7978 = vadd.s32 %v7977, 8
    %7979 = vset.pattern.permute.xlu0 %v7978
    %7980 = vperm.xlu0 %7979, %v7969
    %v7981 = vpop.permute.xlu0 %7980
    %v7982 = vlaneseq
    %v7983 = vshrl.u32 %v7982, 7
    %v7984 = vadd.s32 %v7983, 16
    %7985 = vset.pattern.permute.xlu0 %v7984
    %7986 = vperm.xlu0 %7985, %v7969
    %v7987 = vpop.permute.xlu0 %7986
    %v7988 = vlaneseq
    %v7989 = vshrl.u32 %v7988, 7
    %v7990 = vadd.s32 %v7989, 24
    %7991 = vset.pattern.permute.xlu0 %v7990
    %7992 = vperm.xlu0 %7991, %v7969
    %v7993 = vpop.permute.xlu0 %7992
    %v7994 = vlaneseq
    %v7995 = vshrl.u32 %v7994, 7
    %v7996 = vadd.s32 %v7995, 32
    %7997 = vset.pattern.permute.xlu0 %v7996
    %7998 = vperm.xlu0 %7997, %v7969
    %v7999 = vpop.permute.xlu0 %7998
    %v8000 = vlaneseq
    %v8001 = vshrl.u32 %v8000, 7
    %v8002 = vadd.s32 %v8001, 40
    %8003 = vset.pattern.permute.xlu0 %v8002
    %8004 = vperm.xlu0 %8003, %v7969
    %v8005 = vpop.permute.xlu0 %8004
    %v8006 = vlaneseq
    %v8007 = vshrl.u32 %v8006, 7
    %v8008 = vadd.s32 %v8007, 48
    %8009 = vset.pattern.permute.xlu0 %v8008
    %8010 = vperm.xlu0 %8009, %v7969
    %v8011 = vpop.permute.xlu0 %8010
    %v8012 = vlaneseq
    %v8013 = vshrl.u32 %v8012, 7
    %v8014 = vadd.s32 %v8013, 56
    %8015 = vset.pattern.permute.xlu0 %v8014
    %8016 = vperm.xlu0 %8015, %v7969
    %v8017 = vpop.permute.xlu0 %8016
    %v8018 = vlaneseq
    %v8019 = vshrl.u32 %v8018, 7
    %v8020 = vadd.s32 %v8019, 64
    %8021 = vset.pattern.permute.xlu0 %v8020
    %8022 = vperm.xlu0 %8021, %v7969
    %v8023 = vpop.permute.xlu0 %8022
    %v8024 = vlaneseq
    %v8025 = vshrl.u32 %v8024, 7
    %v8026 = vadd.s32 %v8025, 72
    %8027 = vset.pattern.permute.xlu0 %v8026
    %8028 = vperm.xlu0 %8027, %v7969
    %v8029 = vpop.permute.xlu0 %8028
    %v8030 = vlaneseq
    %v8031 = vshrl.u32 %v8030, 7
    %v8032 = vadd.s32 %v8031, 80
    %8033 = vset.pattern.permute.xlu0 %v8032
    %8034 = vperm.xlu0 %8033, %v7969
    %v8035 = vpop.permute.xlu0 %8034
    %v8036 = vlaneseq
    %v8037 = vshrl.u32 %v8036, 7
    %v8038 = vadd.s32 %v8037, 88
    %8039 = vset.pattern.permute.xlu0 %v8038
    %8040 = vperm.xlu0 %8039, %v7969
    %v8041 = vpop.permute.xlu0 %8040
    %v8042 = vlaneseq
    %v8043 = vshrl.u32 %v8042, 7
    %v8044 = vadd.s32 %v8043, 96
    %8045 = vset.pattern.permute.xlu0 %v8044
    %8046 = vperm.xlu0 %8045, %v7969
    %v8047 = vpop.permute.xlu0 %8046
    %v8048 = vlaneseq
    %v8049 = vshrl.u32 %v8048, 7
    %v8050 = vadd.s32 %v8049, 104
    %8051 = vset.pattern.permute.xlu0 %v8050
    %8052 = vperm.xlu0 %8051, %v7969
    %v8053 = vpop.permute.xlu0 %8052
    %v8054 = vlaneseq
    %v8055 = vshrl.u32 %v8054, 7
    %v8056 = vadd.s32 %v8055, 112
    %8057 = vset.pattern.permute.xlu0 %v8056
    %8058 = vperm.xlu0 %8057, %v7969
    %v8059 = vpop.permute.xlu0 %8058
    %v8060 = vlaneseq
    %v8061 = vshrl.u32 %v8060, 7
    %v8062 = vadd.s32 %v8061, 120
    %8063 = vset.pattern.permute.xlu0 %v8062
    %8064 = vperm.xlu0 %8063, %v7969
    %v8065 = vpop.permute.xlu0 %8064
    %v8066 = vperm.slane %v7580, 5
    %v8067 = vlaneseq
    %v8068 = vshrl.u32 %v8067, 7
    %8070 = vset.pattern.permute.xlu0 %v8068
    %8071 = vperm.xlu0 %8070, %v8066
    %v8072 = vpop.permute.xlu0 %8071
    %v8073 = vlaneseq
    %v8074 = vshrl.u32 %v8073, 7
    %v8075 = vadd.s32 %v8074, 8
    %8076 = vset.pattern.permute.xlu0 %v8075
    %8077 = vperm.xlu0 %8076, %v8066
    %v8078 = vpop.permute.xlu0 %8077
    %v8079 = vlaneseq
    %v8080 = vshrl.u32 %v8079, 7
    %v8081 = vadd.s32 %v8080, 16
    %8082 = vset.pattern.permute.xlu0 %v8081
    %8083 = vperm.xlu0 %8082, %v8066
    %v8084 = vpop.permute.xlu0 %8083
    %v8085 = vlaneseq
    %v8086 = vshrl.u32 %v8085, 7
    %v8087 = vadd.s32 %v8086, 24
    %8088 = vset.pattern.permute.xlu0 %v8087
    %8089 = vperm.xlu0 %8088, %v8066
    %v8090 = vpop.permute.xlu0 %8089
    %v8091 = vlaneseq
    %v8092 = vshrl.u32 %v8091, 7
    %v8093 = vadd.s32 %v8092, 32
    %8094 = vset.pattern.permute.xlu0 %v8093
    %8095 = vperm.xlu0 %8094, %v8066
    %v8096 = vpop.permute.xlu0 %8095
    %v8097 = vlaneseq
    %v8098 = vshrl.u32 %v8097, 7
    %v8099 = vadd.s32 %v8098, 40
    %8100 = vset.pattern.permute.xlu0 %v8099
    %8101 = vperm.xlu0 %8100, %v8066
    %v8102 = vpop.permute.xlu0 %8101
    %v8103 = vlaneseq
    %v8104 = vshrl.u32 %v8103, 7
    %v8105 = vadd.s32 %v8104, 48
    %8106 = vset.pattern.permute.xlu0 %v8105
    %8107 = vperm.xlu0 %8106, %v8066
    %v8108 = vpop.permute.xlu0 %8107
    %v8109 = vlaneseq
    %v8110 = vshrl.u32 %v8109, 7
    %v8111 = vadd.s32 %v8110, 56
    %8112 = vset.pattern.permute.xlu0 %v8111
    %8113 = vperm.xlu0 %8112, %v8066
    %v8114 = vpop.permute.xlu0 %8113
    %v8115 = vlaneseq
    %v8116 = vshrl.u32 %v8115, 7
    %v8117 = vadd.s32 %v8116, 64
    %8118 = vset.pattern.permute.xlu0 %v8117
    %8119 = vperm.xlu0 %8118, %v8066
    %v8120 = vpop.permute.xlu0 %8119
    %v8121 = vlaneseq
    %v8122 = vshrl.u32 %v8121, 7
    %v8123 = vadd.s32 %v8122, 72
    %8124 = vset.pattern.permute.xlu0 %v8123
    %8125 = vperm.xlu0 %8124, %v8066
    %v8126 = vpop.permute.xlu0 %8125
    %v8127 = vlaneseq
    %v8128 = vshrl.u32 %v8127, 7
    %v8129 = vadd.s32 %v8128, 80
    %8130 = vset.pattern.permute.xlu0 %v8129
    %8131 = vperm.xlu0 %8130, %v8066
    %v8132 = vpop.permute.xlu0 %8131
    %v8133 = vlaneseq
    %v8134 = vshrl.u32 %v8133, 7
    %v8135 = vadd.s32 %v8134, 88
    %8136 = vset.pattern.permute.xlu0 %v8135
    %8137 = vperm.xlu0 %8136, %v8066
    %v8138 = vpop.permute.xlu0 %8137
    %v8139 = vlaneseq
    %v8140 = vshrl.u32 %v8139, 7
    %v8141 = vadd.s32 %v8140, 96
    %8142 = vset.pattern.permute.xlu0 %v8141
    %8143 = vperm.xlu0 %8142, %v8066
    %v8144 = vpop.permute.xlu0 %8143
    %v8145 = vlaneseq
    %v8146 = vshrl.u32 %v8145, 7
    %v8147 = vadd.s32 %v8146, 104
    %8148 = vset.pattern.permute.xlu0 %v8147
    %8149 = vperm.xlu0 %8148, %v8066
    %v8150 = vpop.permute.xlu0 %8149
    %v8151 = vlaneseq
    %v8152 = vshrl.u32 %v8151, 7
    %v8153 = vadd.s32 %v8152, 112
    %8154 = vset.pattern.permute.xlu0 %v8153
    %8155 = vperm.xlu0 %8154, %v8066
    %v8156 = vpop.permute.xlu0 %8155
    %v8157 = vlaneseq
    %v8158 = vshrl.u32 %v8157, 7
    %v8159 = vadd.s32 %v8158, 120
    %8160 = vset.pattern.permute.xlu0 %v8159
    %8161 = vperm.xlu0 %8160, %v8066
    %v8162 = vpop.permute.xlu0 %8161
    %v8163 = vperm.slane %v7580, 6
    %v8164 = vlaneseq
    %v8165 = vshrl.u32 %v8164, 7
    %8167 = vset.pattern.permute.xlu0 %v8165
    %8168 = vperm.xlu0 %8167, %v8163
    %v8169 = vpop.permute.xlu0 %8168
    %v8170 = vlaneseq
    %v8171 = vshrl.u32 %v8170, 7
    %v8172 = vadd.s32 %v8171, 8
    %8173 = vset.pattern.permute.xlu0 %v8172
    %8174 = vperm.xlu0 %8173, %v8163
    %v8175 = vpop.permute.xlu0 %8174
    %v8176 = vlaneseq
    %v8177 = vshrl.u32 %v8176, 7
    %v8178 = vadd.s32 %v8177, 16
    %8179 = vset.pattern.permute.xlu0 %v8178
    %8180 = vperm.xlu0 %8179, %v8163
    %v8181 = vpop.permute.xlu0 %8180
    %v8182 = vlaneseq
    %v8183 = vshrl.u32 %v8182, 7
    %v8184 = vadd.s32 %v8183, 24
    %8185 = vset.pattern.permute.xlu0 %v8184
    %8186 = vperm.xlu0 %8185, %v8163
    %v8187 = vpop.permute.xlu0 %8186
    %v8188 = vlaneseq
    %v8189 = vshrl.u32 %v8188, 7
    %v8190 = vadd.s32 %v8189, 32
    %8191 = vset.pattern.permute.xlu0 %v8190
    %8192 = vperm.xlu0 %8191, %v8163
    %v8193 = vpop.permute.xlu0 %8192
    %v8194 = vlaneseq
    %v8195 = vshrl.u32 %v8194, 7
    %v8196 = vadd.s32 %v8195, 40
    %8197 = vset.pattern.permute.xlu0 %v8196
    %8198 = vperm.xlu0 %8197, %v8163
    %v8199 = vpop.permute.xlu0 %8198
    %v8200 = vlaneseq
    %v8201 = vshrl.u32 %v8200, 7
    %v8202 = vadd.s32 %v8201, 48
    %8203 = vset.pattern.permute.xlu0 %v8202
    %8204 = vperm.xlu0 %8203, %v8163
    %v8205 = vpop.permute.xlu0 %8204
    %v8206 = vlaneseq
    %v8207 = vshrl.u32 %v8206, 7
    %v8208 = vadd.s32 %v8207, 56
    %8209 = vset.pattern.permute.xlu0 %v8208
    %8210 = vperm.xlu0 %8209, %v8163
    %v8211 = vpop.permute.xlu0 %8210
    %v8212 = vlaneseq
    %v8213 = vshrl.u32 %v8212, 7
    %v8214 = vadd.s32 %v8213, 64
    %8215 = vset.pattern.permute.xlu0 %v8214
    %8216 = vperm.xlu0 %8215, %v8163
    %v8217 = vpop.permute.xlu0 %8216
    %v8218 = vlaneseq
    %v8219 = vshrl.u32 %v8218, 7
    %v8220 = vadd.s32 %v8219, 72
    %8221 = vset.pattern.permute.xlu0 %v8220
    %8222 = vperm.xlu0 %8221, %v8163
    %v8223 = vpop.permute.xlu0 %8222
    %v8224 = vlaneseq
    %v8225 = vshrl.u32 %v8224, 7
    %v8226 = vadd.s32 %v8225, 80
    %8227 = vset.pattern.permute.xlu0 %v8226
    %8228 = vperm.xlu0 %8227, %v8163
    %v8229 = vpop.permute.xlu0 %8228
    %v8230 = vlaneseq
    %v8231 = vshrl.u32 %v8230, 7
    %v8232 = vadd.s32 %v8231, 88
    %8233 = vset.pattern.permute.xlu0 %v8232
    %8234 = vperm.xlu0 %8233, %v8163
    %v8235 = vpop.permute.xlu0 %8234
    %v8236 = vlaneseq
    %v8237 = vshrl.u32 %v8236, 7
    %v8238 = vadd.s32 %v8237, 96
    %8239 = vset.pattern.permute.xlu0 %v8238
    %8240 = vperm.xlu0 %8239, %v8163
    %v8241 = vpop.permute.xlu0 %8240
    %v8242 = vlaneseq
    %v8243 = vshrl.u32 %v8242, 7
    %v8244 = vadd.s32 %v8243, 104
    %8245 = vset.pattern.permute.xlu0 %v8244
    %8246 = vperm.xlu0 %8245, %v8163
    %v8247 = vpop.permute.xlu0 %8246
    %v8248 = vlaneseq
    %v8249 = vshrl.u32 %v8248, 7
    %v8250 = vadd.s32 %v8249, 112
    %8251 = vset.pattern.permute.xlu0 %v8250
    %8252 = vperm.xlu0 %8251, %v8163
    %v8253 = vpop.permute.xlu0 %8252
    %v8254 = vlaneseq
    %v8255 = vshrl.u32 %v8254, 7
    %v8256 = vadd.s32 %v8255, 120
    %8257 = vset.pattern.permute.xlu0 %v8256
    %8258 = vperm.xlu0 %8257, %v8163
    %v8259 = vpop.permute.xlu0 %8258
    %v8260 = vperm.slane %v7580, 7
    %v8261 = vlaneseq
    %v8262 = vshrl.u32 %v8261, 7
    %8264 = vset.pattern.permute.xlu0 %v8262
    %8265 = vperm.xlu0 %8264, %v8260
    %v8266 = vpop.permute.xlu0 %8265
    %v8267 = vlaneseq
    %v8268 = vshrl.u32 %v8267, 7
    %v8269 = vadd.s32 %v8268, 8
    %8270 = vset.pattern.permute.xlu0 %v8269
    %8271 = vperm.xlu0 %8270, %v8260
    %v8272 = vpop.permute.xlu0 %8271
    %v8273 = vlaneseq
    %v8274 = vshrl.u32 %v8273, 7
    %v8275 = vadd.s32 %v8274, 16
    %8276 = vset.pattern.permute.xlu0 %v8275
    %8277 = vperm.xlu0 %8276, %v8260
    %v8278 = vpop.permute.xlu0 %8277
    %v8279 = vlaneseq
    %v8280 = vshrl.u32 %v8279, 7
    %v8281 = vadd.s32 %v8280, 24
    %8282 = vset.pattern.permute.xlu0 %v8281
    %8283 = vperm.xlu0 %8282, %v8260
    %v8284 = vpop.permute.xlu0 %8283
    %v8285 = vlaneseq
    %v8286 = vshrl.u32 %v8285, 7
    %v8287 = vadd.s32 %v8286, 32
    %8288 = vset.pattern.permute.xlu0 %v8287
    %8289 = vperm.xlu0 %8288, %v8260
    %v8290 = vpop.permute.xlu0 %8289
    %v8291 = vlaneseq
    %v8292 = vshrl.u32 %v8291, 7
    %v8293 = vadd.s32 %v8292, 40
    %8294 = vset.pattern.permute.xlu0 %v8293
    %8295 = vperm.xlu0 %8294, %v8260
    %v8296 = vpop.permute.xlu0 %8295
    %v8297 = vlaneseq
    %v8298 = vshrl.u32 %v8297, 7
    %v8299 = vadd.s32 %v8298, 48
    %8300 = vset.pattern.permute.xlu0 %v8299
    %8301 = vperm.xlu0 %8300, %v8260
    %v8302 = vpop.permute.xlu0 %8301
    %v8303 = vlaneseq
    %v8304 = vshrl.u32 %v8303, 7
    %v8305 = vadd.s32 %v8304, 56
    %8306 = vset.pattern.permute.xlu0 %v8305
    %8307 = vperm.xlu0 %8306, %v8260
    %v8308 = vpop.permute.xlu0 %8307
    %v8309 = vlaneseq
    %v8310 = vshrl.u32 %v8309, 7
    %v8311 = vadd.s32 %v8310, 64
    %8312 = vset.pattern.permute.xlu0 %v8311
    %8313 = vperm.xlu0 %8312, %v8260
    %v8314 = vpop.permute.xlu0 %8313
    %v8315 = vlaneseq
    %v8316 = vshrl.u32 %v8315, 7
    %v8317 = vadd.s32 %v8316, 72
    %8318 = vset.pattern.permute.xlu0 %v8317
    %8319 = vperm.xlu0 %8318, %v8260
    %v8320 = vpop.permute.xlu0 %8319
    %v8321 = vlaneseq
    %v8322 = vshrl.u32 %v8321, 7
    %v8323 = vadd.s32 %v8322, 80
    %8324 = vset.pattern.permute.xlu0 %v8323
    %8325 = vperm.xlu0 %8324, %v8260
    %v8326 = vpop.permute.xlu0 %8325
    %v8327 = vlaneseq
    %v8328 = vshrl.u32 %v8327, 7
    %v8329 = vadd.s32 %v8328, 88
    %8330 = vset.pattern.permute.xlu0 %v8329
    %8331 = vperm.xlu0 %8330, %v8260
    %v8332 = vpop.permute.xlu0 %8331
    %v8333 = vlaneseq
    %v8334 = vshrl.u32 %v8333, 7
    %v8335 = vadd.s32 %v8334, 96
    %8336 = vset.pattern.permute.xlu0 %v8335
    %8337 = vperm.xlu0 %8336, %v8260
    %v8338 = vpop.permute.xlu0 %8337
    %v8339 = vlaneseq
    %v8340 = vshrl.u32 %v8339, 7
    %v8341 = vadd.s32 %v8340, 104
    %8342 = vset.pattern.permute.xlu0 %v8341
    %8343 = vperm.xlu0 %8342, %v8260
    %v8344 = vpop.permute.xlu0 %8343
    %v8345 = vlaneseq
    %v8346 = vshrl.u32 %v8345, 7
    %v8347 = vadd.s32 %v8346, 112
    %8348 = vset.pattern.permute.xlu0 %v8347
    %8349 = vperm.xlu0 %8348, %v8260
    %v8350 = vpop.permute.xlu0 %8349
    %v8351 = vlaneseq
    %v8352 = vshrl.u32 %v8351, 7
    %v8353 = vadd.s32 %v8352, 120
    %8354 = vset.pattern.permute.xlu0 %v8353
    %8355 = vperm.xlu0 %8354, %v8260
    %v8356 = vpop.permute.xlu0 %8355
    %v8357 = vmul.f32 %v7587, %v7452
    %v8358 = vmul.f32 %v7593, %v7453
    %v8359 = vmul.f32 %v7599, %v7454
    %v8360 = vmul.f32 %v7605, %v7455
    %v8361 = vmul.f32 %v7611, %v7456
    %v8362 = vmul.f32 %v7617, %v7457
    %v8363 = vmul.f32 %v7623, %v7458
    %v8364 = vmul.f32 %v7629, %v7459
    %v8365 = vmul.f32 %v7635, %v7460
    %v8366 = vmul.f32 %v7641, %v7461
    %v8367 = vmul.f32 %v7647, %v7462
    %v8368 = vmul.f32 %v7653, %v7463
    %v8369 = vmul.f32 %v7659, %v7464
    %v8370 = vmul.f32 %v7665, %v7465
    %v8371 = vmul.f32 %v7671, %v7466
    %v8372 = vmul.f32 %v7677, %v7467
    %v8373 = vmul.f32 %v7684, %v7468
    %v8374 = vmul.f32 %v7690, %v7469
    %v8375 = vmul.f32 %v7696, %v7470
    %v8376 = vmul.f32 %v7702, %v7471
    %v8377 = vmul.f32 %v7708, %v7472
    %v8378 = vmul.f32 %v7714, %v7473
    %v8379 = vmul.f32 %v7720, %v7474
    %v8380 = vmul.f32 %v7726, %v7475
    %v8381 = vmul.f32 %v7732, %v7476
    %v8382 = vmul.f32 %v7738, %v7477
    %v8383 = vmul.f32 %v7744, %v7478
    %v8384 = vmul.f32 %v7750, %v7479
    %v8385 = vmul.f32 %v7756, %v7480
    %v8386 = vmul.f32 %v7762, %v7481
    %v8387 = vmul.f32 %v7768, %v7482
    %v8388 = vmul.f32 %v7774, %v7483
    %v8389 = vmul.f32 %v7781, %v7484
    %v8390 = vmul.f32 %v7787, %v7485
    %v8391 = vmul.f32 %v7793, %v7486
    %v8392 = vmul.f32 %v7799, %v7487
    %v8393 = vmul.f32 %v7805, %v7488
    %v8394 = vmul.f32 %v7811, %v7489
    %v8395 = vmul.f32 %v7817, %v7490
    %v8396 = vmul.f32 %v7823, %v7491
    %v8397 = vmul.f32 %v7829, %v7492
    %v8398 = vmul.f32 %v7835, %v7493
    %v8399 = vmul.f32 %v7841, %v7494
    %v8400 = vmul.f32 %v7847, %v7495
    %v8401 = vmul.f32 %v7853, %v7496
    %v8402 = vmul.f32 %v7859, %v7497
    %v8403 = vmul.f32 %v7865, %v7498
    %v8404 = vmul.f32 %v7871, %v7499
    %v8405 = vmul.f32 %v7878, %v7500
    %v8406 = vmul.f32 %v7884, %v7501
    %v8407 = vmul.f32 %v7890, %v7502
    %v8408 = vmul.f32 %v7896, %v7503
    %v8409 = vmul.f32 %v7902, %v7504
    %v8410 = vmul.f32 %v7908, %v7505
    %v8411 = vmul.f32 %v7914, %v7506
    %v8412 = vmul.f32 %v7920, %v7507
    %v8413 = vmul.f32 %v7926, %v7508
    %v8414 = vmul.f32 %v7932, %v7509
    %v8415 = vmul.f32 %v7938, %v7510
    %v8416 = vmul.f32 %v7944, %v7511
    %v8417 = vmul.f32 %v7950, %v7512
    %v8418 = vmul.f32 %v7956, %v7513
    %v8419 = vmul.f32 %v7962, %v7514
    %v8420 = vmul.f32 %v7968, %v7515
    %v8421 = vmul.f32 %v7975, %v7516
    %v8422 = vmul.f32 %v7981, %v7517
    %v8423 = vmul.f32 %v7987, %v7518
    %v8424 = vmul.f32 %v7993, %v7519
    %v8425 = vmul.f32 %v7999, %v7520
    %v8426 = vmul.f32 %v8005, %v7521
    %v8427 = vmul.f32 %v8011, %v7522
    %v8428 = vmul.f32 %v8017, %v7523
    %v8429 = vmul.f32 %v8023, %v7524
    %v8430 = vmul.f32 %v8029, %v7525
    %v8431 = vmul.f32 %v8035, %v7526
    %v8432 = vmul.f32 %v8041, %v7527
    %v8433 = vmul.f32 %v8047, %v7528
    %v8434 = vmul.f32 %v8053, %v7529
    %v8435 = vmul.f32 %v8059, %v7530
    %v8436 = vmul.f32 %v8065, %v7531
    %v8437 = vmul.f32 %v8072, %v7532
    %v8438 = vmul.f32 %v8078, %v7533
    %v8439 = vmul.f32 %v8084, %v7534
    %v8440 = vmul.f32 %v8090, %v7535
    %v8441 = vmul.f32 %v8096, %v7536
    %v8442 = vmul.f32 %v8102, %v7537
    %v8443 = vmul.f32 %v8108, %v7538
    %v8444 = vmul.f32 %v8114, %v7539
    %v8445 = vmul.f32 %v8120, %v7540
    %v8446 = vmul.f32 %v8126, %v7541
    %v8447 = vmul.f32 %v8132, %v7542
    %v8448 = vmul.f32 %v8138, %v7543
    %v8449 = vmul.f32 %v8144, %v7544
    %v8450 = vmul.f32 %v8150, %v7545
    %v8451 = vmul.f32 %v8156, %v7546
    %v8452 = vmul.f32 %v8162, %v7547
    %v8453 = vmul.f32 %v8169, %v7548
    %v8454 = vmul.f32 %v8175, %v7549
    %v8455 = vmul.f32 %v8181, %v7550
    %v8456 = vmul.f32 %v8187, %v7551
    %v8457 = vmul.f32 %v8193, %v7552
    %v8458 = vmul.f32 %v8199, %v7553
    %v8459 = vmul.f32 %v8205, %v7554
    %v8460 = vmul.f32 %v8211, %v7555
    %v8461 = vmul.f32 %v8217, %v7556
    %v8462 = vmul.f32 %v8223, %v7557
    %v8463 = vmul.f32 %v8229, %v7558
    %v8464 = vmul.f32 %v8235, %v7559
    %v8465 = vmul.f32 %v8241, %v7560
    %v8466 = vmul.f32 %v8247, %v7561
    %v8467 = vmul.f32 %v8253, %v7562
    %v8468 = vmul.f32 %v8259, %v7563
    %v8469 = vmul.f32 %v8266, %v7564
    %v8470 = vmul.f32 %v8272, %v7565
    %v8471 = vmul.f32 %v8278, %v7566
    %v8472 = vmul.f32 %v8284, %v7567
    %v8473 = vmul.f32 %v8290, %v7568
    %v8474 = vmul.f32 %v8296, %v7569
    %v8475 = vmul.f32 %v8302, %v7570
    %v8476 = vmul.f32 %v8308, %v7571
    %v8477 = vmul.f32 %v8314, %v7572
    %v8478 = vmul.f32 %v8320, %v7573
    %v8479 = vmul.f32 %v8326, %v7574
    %v8480 = vmul.f32 %v8332, %v7575
    %v8481 = vmul.f32 %v8338, %v7576
    %v8482 = vmul.f32 %v8344, %v7577
    %v8483 = vmul.f32 %v8350, %v7578
    %v8484 = vmul.f32 %v8356, %v7579
    %v8485 = vadd.f32 %v8357, %v8373
    %v8486 = vadd.f32 %v8485, %v8389
    %v8487 = vadd.f32 %v8486, %v8405
    %v8488 = vadd.f32 %v8487, %v8421
    %v8489 = vadd.f32 %v8488, %v8437
    %v8490 = vadd.f32 %v8489, %v8453
    %v8491 = vadd.f32 %v8490, %v8469
    %v8492 = vadd.f32 %v8358, %v8374
    %v8493 = vadd.f32 %v8492, %v8390
    %v8494 = vadd.f32 %v8493, %v8406
    %v8495 = vadd.f32 %v8494, %v8422
    %v8496 = vadd.f32 %v8495, %v8438
    %v8497 = vadd.f32 %v8496, %v8454
    %v8498 = vadd.f32 %v8497, %v8470
    %v8499 = vadd.f32 %v8359, %v8375
    %v8500 = vadd.f32 %v8499, %v8391
    %v8501 = vadd.f32 %v8500, %v8407
    %v8502 = vadd.f32 %v8501, %v8423
    %v8503 = vadd.f32 %v8502, %v8439
    %v8504 = vadd.f32 %v8503, %v8455
    %v8505 = vadd.f32 %v8504, %v8471
    %v8506 = vadd.f32 %v8360, %v8376
    %v8507 = vadd.f32 %v8506, %v8392
    %v8508 = vadd.f32 %v8507, %v8408
    %v8509 = vadd.f32 %v8508, %v8424
    %v8510 = vadd.f32 %v8509, %v8440
    %v8511 = vadd.f32 %v8510, %v8456
    %v8512 = vadd.f32 %v8511, %v8472
    %v8513 = vadd.f32 %v8361, %v8377
    %v8514 = vadd.f32 %v8513, %v8393
    %v8515 = vadd.f32 %v8514, %v8409
    %v8516 = vadd.f32 %v8515, %v8425
    %v8517 = vadd.f32 %v8516, %v8441
    %v8518 = vadd.f32 %v8517, %v8457
    %v8519 = vadd.f32 %v8518, %v8473
    %v8520 = vadd.f32 %v8362, %v8378
    %v8521 = vadd.f32 %v8520, %v8394
    %v8522 = vadd.f32 %v8521, %v8410
    %v8523 = vadd.f32 %v8522, %v8426
    %v8524 = vadd.f32 %v8523, %v8442
    %v8525 = vadd.f32 %v8524, %v8458
    %v8526 = vadd.f32 %v8525, %v8474
    %v8527 = vadd.f32 %v8363, %v8379
    %v8528 = vadd.f32 %v8527, %v8395
    %v8529 = vadd.f32 %v8528, %v8411
    %v8530 = vadd.f32 %v8529, %v8427
    %v8531 = vadd.f32 %v8530, %v8443
    %v8532 = vadd.f32 %v8531, %v8459
    %v8533 = vadd.f32 %v8532, %v8475
    %v8534 = vadd.f32 %v8364, %v8380
    %v8535 = vadd.f32 %v8534, %v8396
    %v8536 = vadd.f32 %v8535, %v8412
    %v8537 = vadd.f32 %v8536, %v8428
    %v8538 = vadd.f32 %v8537, %v8444
    %v8539 = vadd.f32 %v8538, %v8460
    %v8540 = vadd.f32 %v8539, %v8476
    %v8541 = vadd.f32 %v8365, %v8381
    %v8542 = vadd.f32 %v8541, %v8397
    %v8543 = vadd.f32 %v8542, %v8413
    %v8544 = vadd.f32 %v8543, %v8429
    %v8545 = vadd.f32 %v8544, %v8445
    %v8546 = vadd.f32 %v8545, %v8461
    %v8547 = vadd.f32 %v8546, %v8477
    %v8548 = vadd.f32 %v8366, %v8382
    %v8549 = vadd.f32 %v8548, %v8398
    %v8550 = vadd.f32 %v8549, %v8414
    %v8551 = vadd.f32 %v8550, %v8430
    %v8552 = vadd.f32 %v8551, %v8446
    %v8553 = vadd.f32 %v8552, %v8462
    %v8554 = vadd.f32 %v8553, %v8478
    %v8555 = vadd.f32 %v8367, %v8383
    %v8556 = vadd.f32 %v8555, %v8399
    %v8557 = vadd.f32 %v8556, %v8415
    %v8558 = vadd.f32 %v8557, %v8431
    %v8559 = vadd.f32 %v8558, %v8447
    %v8560 = vadd.f32 %v8559, %v8463
    %v8561 = vadd.f32 %v8560, %v8479
    %v8562 = vadd.f32 %v8368, %v8384
    %v8563 = vadd.f32 %v8562, %v8400
    %v8564 = vadd.f32 %v8563, %v8416
    %v8565 = vadd.f32 %v8564, %v8432
    %v8566 = vadd.f32 %v8565, %v8448
    %v8567 = vadd.f32 %v8566, %v8464
    %v8568 = vadd.f32 %v8567, %v8480
    %v8569 = vadd.f32 %v8369, %v8385
    %v8570 = vadd.f32 %v8569, %v8401
    %v8571 = vadd.f32 %v8570, %v8417
    %v8572 = vadd.f32 %v8571, %v8433
    %v8573 = vadd.f32 %v8572, %v8449
    %v8574 = vadd.f32 %v8573, %v8465
    %v8575 = vadd.f32 %v8574, %v8481
    %v8576 = vadd.f32 %v8370, %v8386
    %v8577 = vadd.f32 %v8576, %v8402
    %v8578 = vadd.f32 %v8577, %v8418
    %v8579 = vadd.f32 %v8578, %v8434
    %v8580 = vadd.f32 %v8579, %v8450
    %v8581 = vadd.f32 %v8580, %v8466
    %v8582 = vadd.f32 %v8581, %v8482
    %v8583 = vadd.f32 %v8371, %v8387
    %v8584 = vadd.f32 %v8583, %v8403
    %v8585 = vadd.f32 %v8584, %v8419
    %v8586 = vadd.f32 %v8585, %v8435
    %v8587 = vadd.f32 %v8586, %v8451
    %v8588 = vadd.f32 %v8587, %v8467
    %v8589 = vadd.f32 %v8588, %v8483
    %v8590 = vadd.f32 %v8372, %v8388
    %v8591 = vadd.f32 %v8590, %v8404
    %v8592 = vadd.f32 %v8591, %v8420
    %v8593 = vadd.f32 %v8592, %v8436
    %v8594 = vadd.f32 %v8593, %v8452
    %v8595 = vadd.f32 %v8594, %v8468
    %v8596 = vadd.f32 %v8595, %v8484
    %v8597 = vadd.f32 %v7436, %v8491
    %v8598 = vadd.f32 %v7437, %v8498
    %v8599 = vadd.f32 %v7438, %v8505
    %v8600 = vadd.f32 %v7439, %v8512
    %v8601 = vadd.f32 %v7440, %v8519
    %v8602 = vadd.f32 %v7441, %v8526
    %v8603 = vadd.f32 %v7442, %v8533
    %v8604 = vadd.f32 %v7443, %v8540
    %v8605 = vadd.f32 %v7444, %v8547
    %v8606 = vadd.f32 %v7445, %v8554
    %v8607 = vadd.f32 %v7446, %v8561
    %v8608 = vadd.f32 %v7447, %v8568
    %v8609 = vadd.f32 %v7448, %v8575
    %v8610 = vadd.f32 %v7449, %v8582
    %v8611 = vadd.f32 %v7450, %v8589
    %v8612 = vadd.f32 %v7451, %v8596
    %v8613 = vld [vmem:[#allocation11] sm:$0xff]
    %v8614 = vld [vmem:[#allocation11 + $0x8] sm:$0xff]
    %v8615 = vld [vmem:[#allocation11 + $0x10] sm:$0xff]
    %v8616 = vld [vmem:[#allocation11 + $0x18] sm:$0xff]
    %v8617 = vld [vmem:[#allocation11 + $0x20] sm:$0xff]
    %v8618 = vld [vmem:[#allocation11 + $0x28] sm:$0xff]
    %v8619 = vld [vmem:[#allocation11 + $0x30] sm:$0xff]
    %v8620 = vld [vmem:[#allocation11 + $0x38] sm:$0xff]
    %v8621 = vld [vmem:[#allocation11 + $0x40] sm:$0xff]
    %v8622 = vld [vmem:[#allocation11 + $0x48] sm:$0xff]
    %v8623 = vld [vmem:[#allocation11 + $0x50] sm:$0xff]
    %v8624 = vld [vmem:[#allocation11 + $0x58] sm:$0xff]
    %v8625 = vld [vmem:[#allocation11 + $0x60] sm:$0xff]
    %v8626 = vld [vmem:[#allocation11 + $0x68] sm:$0xff]
    %v8627 = vld [vmem:[#allocation11 + $0x70] sm:$0xff]
    %v8628 = vld [vmem:[#allocation11 + $0x78] sm:$0xff]
    %v8629 = vld [vmem:[#allocation13] sm:$0xff]
    %v8630 = vld [vmem:[#allocation13 + $0x8] sm:$0xff]
    %v8631 = vld [vmem:[#allocation13 + $0x10] sm:$0xff]
    %v8632 = vld [vmem:[#allocation13 + $0x18] sm:$0xff]
    %v8633 = vld [vmem:[#allocation13 + $0x20] sm:$0xff]
    %v8634 = vld [vmem:[#allocation13 + $0x28] sm:$0xff]
    %v8635 = vld [vmem:[#allocation13 + $0x30] sm:$0xff]
    %v8636 = vld [vmem:[#allocation13 + $0x38] sm:$0xff]
    %v8637 = vld [vmem:[#allocation13 + $0x40] sm:$0xff]
    %v8638 = vld [vmem:[#allocation13 + $0x48] sm:$0xff]
    %v8639 = vld [vmem:[#allocation13 + $0x50] sm:$0xff]
    %v8640 = vld [vmem:[#allocation13 + $0x58] sm:$0xff]
    %v8641 = vld [vmem:[#allocation13 + $0x60] sm:$0xff]
    %v8642 = vld [vmem:[#allocation13 + $0x68] sm:$0xff]
    %v8643 = vld [vmem:[#allocation13 + $0x70] sm:$0xff]
    %v8644 = vld [vmem:[#allocation13 + $0x78] sm:$0xff]
    %8645 = vmatpush.msra.mxu0 %v8644
    %8646 = vmatpush.msra.mxu0 %v8643
    %8647 = vmatpush.msra.mxu0 %v8642
    %8648 = vmatpush.msra.mxu0 %v8641
    %8649 = vmatpush.msra.mxu0 %v8640
    %8650 = vmatpush.msra.mxu0 %v8639
    %8651 = vmatpush.msra.mxu0 %v8638
    %8652 = vmatpush.msra.mxu0 %v8637
    %8653 = vmatpush.msra.mxu0 %v8636
    %8654 = vmatpush.msra.mxu0 %v8635
    %8655 = vmatpush.msra.mxu0 %v8634
    %8656 = vmatpush.msra.mxu0 %v8633
    %8657 = vmatpush.msra.mxu0 %v8632
    %8658 = vmatpush.msra.mxu0 %v8631
    %8659 = vmatpush.msra.mxu0 %v8630
    %8660 = vmatpush.msra.mxu0 %v8629
    %8661 = vmatmul.f32.gmra.mxu0 %v142
    %v8662 = vpop.f32.mrf.mxu0
    %v8663 = vadd.f32 0.0, %v8662
    %8664 = vmatmul.f32.gmra.mxu0 %v143
    %v8665 = vpop.f32.mrf.mxu0
    %v8666 = vadd.f32 0.0, %v8665
    %8667 = vmatmul.f32.gmra.mxu0 %v144
    %v8668 = vpop.f32.mrf.mxu0
    %v8669 = vadd.f32 0.0, %v8668
    %8670 = vmatmul.f32.gmra.mxu0 %v145
    %v8671 = vpop.f32.mrf.mxu0
    %v8672 = vadd.f32 0.0, %v8671
    %8673 = vmatmul.f32.gmra.mxu0 %v146
    %v8674 = vpop.f32.mrf.mxu0
    %v8675 = vadd.f32 0.0, %v8674
    %8676 = vmatmul.f32.gmra.mxu0 %v147
    %v8677 = vpop.f32.mrf.mxu0
    %v8678 = vadd.f32 0.0, %v8677
    %8679 = vmatmul.f32.gmra.mxu0 %v148
    %v8680 = vpop.f32.mrf.mxu0
    %v8681 = vadd.f32 0.0, %v8680
    %8682 = vmatmul.f32.gmra.mxu0 %v149
    %v8683 = vpop.f32.mrf.mxu0
    %v8684 = vadd.f32 0.0, %v8683
    %8685 = vmatmul.f32.gmra.mxu0 %v150
    %v8686 = vpop.f32.mrf.mxu0
    %v8687 = vadd.f32 0.0, %v8686
    %8688 = vmatmul.f32.gmra.mxu0 %v151
    %v8689 = vpop.f32.mrf.mxu0
    %v8690 = vadd.f32 0.0, %v8689
    %8691 = vmatmul.f32.gmra.mxu0 %v152
    %v8692 = vpop.f32.mrf.mxu0
    %v8693 = vadd.f32 0.0, %v8692
    %8694 = vmatmul.f32.gmra.mxu0 %v153
    %v8695 = vpop.f32.mrf.mxu0
    %v8696 = vadd.f32 0.0, %v8695
    %8697 = vmatmul.f32.gmra.mxu0 %v154
    %v8698 = vpop.f32.mrf.mxu0
    %v8699 = vadd.f32 0.0, %v8698
    %8700 = vmatmul.f32.gmra.mxu0 %v155
    %v8701 = vpop.f32.mrf.mxu0
    %v8702 = vadd.f32 0.0, %v8701
    %8703 = vmatmul.f32.gmra.mxu0 %v156
    %v8704 = vpop.f32.mrf.mxu0
    %v8705 = vadd.f32 0.0, %v8704
    %8706 = vmatmul.f32.gmra.mxu0 %v157
    %v8707 = vpop.f32.mrf.mxu0
    %v8708 = vadd.f32 0.0, %v8707
    %8709 = vdwg.mxu0
    %8710 = vmatpush.msra.mxu0 %v8628
    %8711 = vmatpush.msra.mxu0 %v8627
    %8712 = vmatpush.msra.mxu0 %v8626
    %8713 = vmatpush.msra.mxu0 %v8625
    %8714 = vmatpush.msra.mxu0 %v8624
    %8715 = vmatpush.msra.mxu0 %v8623
    %8716 = vmatpush.msra.mxu0 %v8622
    %8717 = vmatpush.msra.mxu0 %v8621
    %8718 = vmatpush.msra.mxu0 %v8620
    %8719 = vmatpush.msra.mxu0 %v8619
    %8720 = vmatpush.msra.mxu0 %v8618
    %8721 = vmatpush.msra.mxu0 %v8617
    %8722 = vmatpush.msra.mxu0 %v8616
    %8723 = vmatpush.msra.mxu0 %v8615
    %8724 = vmatpush.msra.mxu0 %v8614
    %8725 = vmatpush.msra.mxu0 %v8613
    %8726 = vmatmul.f32.gmra.mxu0 %v8597
    %v8727 = vpop.f32.mrf.mxu0
    %v8728 = vadd.f32 %v8663, %v8727
    %8729 = vmatmul.f32.gmra.mxu0 %v8598
    %v8730 = vpop.f32.mrf.mxu0
    %v8731 = vadd.f32 %v8666, %v8730
    %8732 = vmatmul.f32.gmra.mxu0 %v8599
    %v8733 = vpop.f32.mrf.mxu0
    %v8734 = vadd.f32 %v8669, %v8733
    %8735 = vmatmul.f32.gmra.mxu0 %v8600
    %v8736 = vpop.f32.mrf.mxu0
    %v8737 = vadd.f32 %v8672, %v8736
    %8738 = vmatmul.f32.gmra.mxu0 %v8601
    %v8739 = vpop.f32.mrf.mxu0
    %v8740 = vadd.f32 %v8675, %v8739
    %8741 = vmatmul.f32.gmra.mxu0 %v8602
    %v8742 = vpop.f32.mrf.mxu0
    %v8743 = vadd.f32 %v8678, %v8742
    %8744 = vmatmul.f32.gmra.mxu0 %v8603
    %v8745 = vpop.f32.mrf.mxu0
    %v8746 = vadd.f32 %v8681, %v8745
    %8747 = vmatmul.f32.gmra.mxu0 %v8604
    %v8748 = vpop.f32.mrf.mxu0
    %v8749 = vadd.f32 %v8684, %v8748
    %8750 = vmatmul.f32.gmra.mxu0 %v8605
    %v8751 = vpop.f32.mrf.mxu0
    %v8752 = vadd.f32 %v8687, %v8751
    %8753 = vmatmul.f32.gmra.mxu0 %v8606
    %v8754 = vpop.f32.mrf.mxu0
    %v8755 = vadd.f32 %v8690, %v8754
    %8756 = vmatmul.f32.gmra.mxu0 %v8607
    %v8757 = vpop.f32.mrf.mxu0
    %v8758 = vadd.f32 %v8693, %v8757
    %8759 = vmatmul.f32.gmra.mxu0 %v8608
    %v8760 = vpop.f32.mrf.mxu0
    %v8761 = vadd.f32 %v8696, %v8760
    %8762 = vmatmul.f32.gmra.mxu0 %v8609
    %v8763 = vpop.f32.mrf.mxu0
    %v8764 = vadd.f32 %v8699, %v8763
    %8765 = vmatmul.f32.gmra.mxu0 %v8610
    %v8766 = vpop.f32.mrf.mxu0
    %v8767 = vadd.f32 %v8702, %v8766
    %8768 = vmatmul.f32.gmra.mxu0 %v8611
    %v8769 = vpop.f32.mrf.mxu0
    %v8770 = vadd.f32 %v8705, %v8769
    %8771 = vmatmul.f32.gmra.mxu0 %v8612
    %v8772 = vpop.f32.mrf.mxu0
    %v8773 = vadd.f32 %v8708, %v8772
    %8774 = vdwg.mxu0
    %v8775 = vtanh.pop %v8728
    %v8776 = vtanh.pop %v8731
    %v8777 = vtanh.pop %v8734
    %v8778 = vtanh.pop %v8737
    %v8779 = vtanh.pop %v8740
    %v8780 = vtanh.pop %v8743
    %v8781 = vtanh.pop %v8746
    %v8782 = vtanh.pop %v8749
    %v8783 = vtanh.pop %v8752
    %v8784 = vtanh.pop %v8755
    %v8785 = vtanh.pop %v8758
    %v8786 = vtanh.pop %v8761
    %v8787 = vtanh.pop %v8764
    %v8788 = vtanh.pop %v8767
    %v8789 = vtanh.pop %v8770
    %v8790 = vtanh.pop %v8773
    %8791 = vst [vmem:[#allocation14] sm:$0xff] %v8775
    %8792 = vst [vmem:[#allocation14 + $0x8] sm:$0xff] %v8776
    %8793 = vst [vmem:[#allocation14 + $0x10] sm:$0xff] %v8777
    %8794 = vst [vmem:[#allocation14 + $0x18] sm:$0xff] %v8778
    %8795 = vst [vmem:[#allocation14 + $0x20] sm:$0xff] %v8779
    %8796 = vst [vmem:[#allocation14 + $0x28] sm:$0xff] %v8780
    %8797 = vst [vmem:[#allocation14 + $0x30] sm:$0xff] %v8781
    %8798 = vst [vmem:[#allocation14 + $0x38] sm:$0xff] %v8782
    %8799 = vst [vmem:[#allocation14 + $0x40] sm:$0xff] %v8783
    %8800 = vst [vmem:[#allocation14 + $0x48] sm:$0xff] %v8784
    %8801 = vst [vmem:[#allocation14 + $0x50] sm:$0xff] %v8785
    %8802 = vst [vmem:[#allocation14 + $0x58] sm:$0xff] %v8786
    %8803 = vst [vmem:[#allocation14 + $0x60] sm:$0xff] %v8787
    %8804 = vst [vmem:[#allocation14 + $0x68] sm:$0xff] %v8788
    %8805 = vst [vmem:[#allocation14 + $0x70] sm:$0xff] %v8789
    %8806 = vst [vmem:[#allocation14 + $0x78] sm:$0xff] %v8790
    // Predicated region
    $region62: #{tpu_custom_call.1} parent=1 // pred_check
      _
    $region63: #{tpu_custom_call.1} parent=1 // pred_check_branch
      %8808 = sbr.rel (0) target = $region65
    $region64: #{tpu_custom_call.1} parent=1 // pred_region
      %8810 = vsyncadd [#allocation4], 0
      %s8811 = sshll.u32 [#allocation14], 4
      %s8812 = int_to_ptr.vmem [resolvable:$true] %s8811
      %s8813 = sshll.u32 %s8, 4
      %s8814 = int_to_ptr.hbm [resolvable:$true] %s8813
      %8819 = dma.vmem_to_hbm [thread:$0]  %s8812, 2048, %s8814, [#allocation4], 128, 128, 8
    $region65: #{tpu_custom_call.1} parent=1 // pred_fallthru
      _
    // Predicated region
    $region66: #{tpu_custom_call.1} parent=1 // pred_check
      _
    $region67: #{tpu_custom_call.1} parent=1 // pred_check_branch
      %8821 = sbr.rel (0) target = $region69
    $region68: #{tpu_custom_call.1} parent=1 // pred_region
      %8823 = vsyncadd [#allocation16], 0
      %s8824 = sshll.u32 [#allocation15], 4
      %s8825 = int_to_ptr.vmem [resolvable:$true] %s8824
      %s8826 = sshll.u32 %s9, 4
      %s8827 = int_to_ptr.hbm [resolvable:$true] %s8826
      %8832 = dma.vmem_to_hbm [thread:$0]  %s8825, 256, %s8827, [#allocation16], 128, 128, 8
    $region69: #{tpu_custom_call.1} parent=1 // pred_fallthru
      _
    // Predicated region
    $region70: #{tpu_custom_call.1} parent=1 // pred_check
      _
    $region71: #{tpu_custom_call.1} parent=1 // pred_check_branch
      %8834 = sbr.rel (0) target = $region73
    $region72: #{tpu_custom_call.1} parent=1 // pred_region
      %8836 = dma.done [#allocation4], 2048
    $region73: #{tpu_custom_call.1} parent=1 // pred_fallthru
      _
    // Predicated region
    $region74: #{tpu_custom_call.1} parent=1 // pred_check
      _
    $region75: #{tpu_custom_call.1} parent=1 // pred_check_branch
      %8838 = sbr.rel (0) target = $region77
    $region76: #{tpu_custom_call.1} parent=1 // pred_region
      %8840 = dma.done [#allocation16], 256
    $region77: #{tpu_custom_call.1} parent=1 // pred_fallthru
      _
    %8841 = vsyncpa [#allocation3], 1
    %8842 = vsyncpa [#allocation6], 1
    %8843 = vsyncpa [#allocation9], 1
    %8844 = vsyncpa [#allocation12], 1
    %8845 = vsyncpa [#allocation4], 1
    %8846 = vsyncpa [#allocation16], 1

</llo_original>
